<compile_context>
chip_gen: v7x
topology: tpu7x:2x2x1
jax: 0.10.0
libtpu: 0.0.40
codegen_flags: <defaults>
</compile_context>

<pallas_src>
import functools

import jax
import jax.numpy as jnp
from jax.experimental import pallas as pl
from jax.experimental.pallas import tpu as pltpu


# ----------------------------------------------------------------------------
# Fused kernel: pad -> conv1 -> BN -> ReLU -> pad -> conv2 -> BN -> (+x)
# ----------------------------------------------------------------------------
def _boundary_refinement_kernel(x_ref, wm1_ref, g1_ref, be1_ref,
                                wm2_ref, g2_ref, be2_ref,
                                o_ref, pad_ref, col_ref,
                                *, N, C, H, W, K, eps):
    HW = H * W
    Hp = H + K - 1
    Wp = W + K - 1

    x = x_ref[...]                                     # (N*C, HW), lane-dense

    def build_im2col(samples):
        """samples: list of N arrays of shape (C, HW) (lanes = h*W + w).

        Fills `pad_ref` (N, Hp, Wp, C) with the replication-padded images and
        `col_ref` (N*HW, K*K*C) with the im2col matrix; returns the latter.
        Only uses thin 2-D transposes and leading-dim (sublane) reshapes.
        """
        for n in range(N):
            img = samples[n].T.reshape(H, W, C)        # spatial-major sample
            # ReplicationPad2d((left=0, right=K-1, top=K-1, bottom=0))
            pad_ref[n, K - 1:Hp, 0:W, :] = img
            if K > 1:
                pad_ref[n, 0:K - 1, 0:W, :] = jnp.broadcast_to(
                    img[0:1, :, :], (K - 1, W, C))     # replicate first row up
        if K > 1:
            edge = pad_ref[:, :, W - 1:W, :]           # (N, Hp, 1, C)
            pad_ref[:, :, W:Wp, :] = jnp.broadcast_to(
                edge, (N, Hp, K - 1, C))               # replicate last col right

        for dy in range(K):
            for dx in range(K):
                t0 = (dy * K + dx) * C
                for n in range(N):
                    tap = pad_ref[n, dy:dy + H, dx:dx + W, :].reshape(HW, C)
                    col_ref[n * HW:(n + 1) * HW, t0:t0 + C] = tap
        return col_ref[...]                            # (N*HW, K*K*C)

    def conv(col, wm_ref):
        # (Cout, K*K*Cin) @ (K*K*Cin, N*HW) -> lane-dense (Cout, N*HW)
        return jnp.dot(wm_ref[...], col.T, preferred_element_type=jnp.float32)

    def batch_norm(y, gamma, beta):
        # training-mode BatchNorm2d: biased batch stats over N,H,W (lane axis),
        # computed in the stable two-pass form.
        mean = jnp.mean(y, axis=1, keepdims=True)
        centered = y - mean
        var = jnp.mean(centered * centered, axis=1, keepdims=True)
        return centered * (gamma * jax.lax.rsqrt(var + eps)) + beta

    # ---- block 1: replication pad -> conv -> BN(train) -> ReLU
    #      (conv bias cancels exactly under training-mode BN, so it is skipped)
    col1 = build_im2col([x[n * C:(n + 1) * C, :] for n in range(N)])
    y1 = conv(col1, wm1_ref)                                          # (C, N*HW)
    h = jnp.maximum(batch_norm(y1, g1_ref[...], be1_ref[...]), 0.0)

    # ---- block 2: replication pad -> conv -> BN(train), no ReLU
    col2 = build_im2col([h[:, n * HW:(n + 1) * HW] for n in range(N)])
    y2 = conv(col2, wm2_ref)
    z = batch_norm(y2, g2_ref[...], be2_ref[...])

    # ---- residual add and lane-dense store
    for n in range(N):
        o_ref[n * C:(n + 1) * C, :] = (
            x[n * C:(n + 1) * C, :] + z[:, n * HW:(n + 1) * HW]
        ).astype(o_ref.dtype)


# ----------------------------------------------------------------------------
# Wrapper: NCHW in / NCHW out, zero-copy views at the boundary
# ----------------------------------------------------------------------------
def boundary_refinement(x_nchw, w1, b1, g1, be1, w2, b2, g2, be2, *, eps=1e-5):
    """x_nchw: (N, C, H, W).  w*: HWIO (K, K, Cin, Cout) with Cin == Cout == C.
    b*: conv biases (unused: they cancel under training-mode BatchNorm).
    g*/be*: BatchNorm gamma/beta of shape (C,)."""
    N, C, H, W = x_nchw.shape
    K = w1.shape[0]
    HW = H * W
    Hp, Wp = H + K - 1, W + K - 1
    KKC = K * K * C

    # zero-copy / tiny one-time reorders at the boundary
    x2 = x_nchw.reshape(N * C, HW)                       # NCHW view, lane-dense
    wm1 = jnp.transpose(w1, (3, 0, 1, 2)).reshape(C, KKC)
    wm2 = jnp.transpose(w2, (3, 0, 1, 2)).reshape(C, KKC)
    del b1, b2  # conv bias has no effect under training-mode BatchNorm

    kernel = functools.partial(_boundary_refinement_kernel,
                               N=N, C=C, H=H, W=W, K=K, eps=eps)

    def full2d(shape):
        return pl.BlockSpec(shape, lambda i: (0, 0))

    out = pl.pallas_call(
        kernel,
        out_shape=jax.ShapeDtypeStruct((N * C, HW), jnp.float32),
        grid_spec=pltpu.PrefetchScalarGridSpec(
            num_scalar_prefetch=0,
            grid=(1,),                      # whole problem fits in VMEM: 1 step
            in_specs=[
                full2d((N * C, HW)),        # x (lane-dense NCHW view)
                full2d((C, KKC)),           # conv1 weight matrix
                full2d((C, 1)),             # gamma1
                full2d((C, 1)),             # beta1
                full2d((C, KKC)),           # conv2 weight matrix
                full2d((C, 1)),             # gamma2
                full2d((C, 1)),             # beta2
            ],
            out_specs=full2d((N * C, HW)),
            scratch_shapes=[
                pltpu.VMEM((N, Hp, Wp, C), jnp.float32),   # padded images
                pltpu.VMEM((N * HW, KKC), jnp.float32),    # im2col matrix
            ],
        ),
        compiler_params=pltpu.CompilerParams(dimension_semantics=("arbitrary",)),
    )(x2, wm1, g1.reshape(C, 1), be1.reshape(C, 1),
      wm2, g2.reshape(C, 1), be2.reshape(C, 1))

    return out.reshape(N, C, H, W)


# ----------------------------------------------------------------------------
# Pure-JAX reference (NHWC) for the correctness check
# ----------------------------------------------------------------------------
def _ref_block(x, w, b, gamma, beta, use_relu, eps=1e-5):
    K = w.shape[0]
    xpad = jnp.pad(x, ((0, 0), (K - 1, 0), (0, K - 1), (0, 0)), mode="edge")
    y = jax.lax.conv_general_dilated(
        xpad, w, (1, 1), "VALID", dimension_numbers=("NHWC", "HWIO", "NHWC")) + b
    mean = jnp.mean(y, axis=(0, 1, 2))
    var = jnp.var(y, axis=(0, 1, 2))
    out = (y - mean) * jax.lax.rsqrt(var + eps) * gamma + beta
    if use_relu:
        out = jnp.maximum(out, 0.0)
    return out


def _ref_boundary_refinement(x, w1, b1, g1, be1, w2, b2, g2, be2):
    h = _ref_block(x, w1, b1, g1, be1, True)
    c = _ref_block(h, w2, b2, g2, be2, False)
    return x + c


if __name__ == "__main__":
    key = jax.random.PRNGKey(0)
    N, C, H, W, K = 2, 4, 16, 16, 3          # in_channels = out_channels = 4
    ks = jax.random.split(key, 5)

    x_nchw = jax.random.normal(ks[0], (N, C, H, W), jnp.float32)   # module input

    fan_in = C * K * K
    bound = 1.0 / (fan_in ** 0.5)            # Conv2d default init bounds
    w1 = jax.random.uniform(ks[1], (K, K, C, C), jnp.float32, -bound, bound)
    b1 = jax.random.uniform(ks[2], (C,), jnp.float32, -bound, bound)
    w2 = jax.random.uniform(ks[3], (K, K, C, C), jnp.float32, -bound, bound)
    b2 = jax.random.uniform(ks[4], (C,), jnp.float32, -bound, bound)
    g1 = jnp.ones((C,), jnp.float32)         # BatchNorm2d default init
    be1 = jnp.zeros((C,), jnp.float32)
    g2 = jnp.ones((C,), jnp.float32)
    be2 = jnp.zeros((C,), jnp.float32)

    out = jax.jit(boundary_refinement)(x_nchw, w1, b1, g1, be1, w2, b2, g2, be2)
    out = jax.block_until_ready(out)

    x_nhwc = jnp.transpose(x_nchw, (0, 2, 3, 1))
    ref = jnp.transpose(
        _ref_boundary_refinement(x_nhwc, w1, b1, g1, be1, w2, b2, g2, be2),
        (0, 3, 1, 2))

    assert out.shape == (N, C, H, W) and out.dtype == jnp.float32
    err = float(jnp.max(jnp.abs(out - ref)))
    assert jnp.allclose(out, ref, atol=2e-4, rtol=2e-4), err

    print("KERNEL_OK")
</pallas_src>

<mosaic_0001>
module attributes {stable_mosaic.version = 11 : i64} {
  func.func @_boundary_refinement_kernel(%arg0: i32, %arg1: memref<8x256xf32, #tpu.memory_space<vmem>>, %arg2: memref<4x36xf32, #tpu.memory_space<vmem>>, %arg3: memref<4x1xf32, #tpu.memory_space<vmem>>, %arg4: memref<4x1xf32, #tpu.memory_space<vmem>>, %arg5: memref<4x36xf32, #tpu.memory_space<vmem>>, %arg6: memref<4x1xf32, #tpu.memory_space<vmem>>, %arg7: memref<4x1xf32, #tpu.memory_space<vmem>>, %arg8: memref<8x256xf32, #tpu.memory_space<vmem>>, %arg9: memref<2x18x18x4xf32, #tpu.memory_space<vmem>>, %arg10: memref<512x36xf32, #tpu.memory_space<vmem>>) attributes {dimension_semantics = [#tpu.dimension_semantics<arbitrary>], iteration_bounds = array<i64: 1>, scalar_prefetch = 0 : i64, scratch_operands = 2 : i64, tpu.core_type = #tpu.core_type<tc>, window_params = [{pipeline_mode = #tpu.pipeline_mode<synchronous>, transform_indices = @transform_0, window_bounds = array<i64: 8, 256>}, {pipeline_mode = #tpu.pipeline_mode<synchronous>, transform_indices = @transform_1, window_bounds = array<i64: 4, 36>}, {pipeline_mode = #tpu.pipeline_mode<synchronous>, transform_indices = @transform_2, window_bounds = array<i64: 4, 1>}, {pipeline_mode = #tpu.pipeline_mode<synchronous>, transform_indices = @transform_3, window_bounds = array<i64: 4, 1>}, {pipeline_mode = #tpu.pipeline_mode<synchronous>, transform_indices = @transform_4, window_bounds = array<i64: 4, 36>}, {pipeline_mode = #tpu.pipeline_mode<synchronous>, transform_indices = @transform_5, window_bounds = array<i64: 4, 1>}, {pipeline_mode = #tpu.pipeline_mode<synchronous>, transform_indices = @transform_6, window_bounds = array<i64: 4, 1>}, {pipeline_mode = #tpu.pipeline_mode<synchronous>, transform_indices = @transform_7, window_bounds = array<i64: 8, 256>}]} {
    %c0 = arith.constant 0 : index
    %c0_0 = arith.constant 0 : index
    %0 = vector.load %arg1[%c0, %c0_0] : memref<8x256xf32, #tpu.memory_space<vmem>>, vector<8x256xf32>
    %1 = vector.extract_strided_slice %0 {offsets = [0, 0], sizes = [4, 256], strides = [1, 1]} : vector<8x256xf32> to vector<4x256xf32>
    %2 = vector.extract_strided_slice %0 {offsets = [4, 0], sizes = [4, 256], strides = [1, 1]} : vector<8x256xf32> to vector<4x256xf32>
    %3 = tpu.transpose %1, [1, 0] : vector<4x256xf32> -> vector<256x4xf32>
    %4 = vector.shape_cast %3 : vector<256x4xf32> to vector<16x16x4xf32>
    %c0_1 = arith.constant 0 : index
    %c2 = arith.constant 2 : index
    %c0_2 = arith.constant 0 : index
    %c0_3 = arith.constant 0 : index
    %5 = vector.load %arg9[%c0_1, %c2, %c0_2, %c0_3] : memref<2x18x18x4xf32, #tpu.memory_space<vmem>>, vector<1x16x16x4xf32>
    %6 = vector.shape_cast %5 : vector<1x16x16x4xf32> to vector<16x16x4xf32>
    %7 = vector.shape_cast %4 : vector<16x16x4xf32> to vector<1x16x16x4xf32>
    tpu.vector_store %arg9[%c0_1, %c2, %c0_2, %c0_3], %7 {strides = array<i32>} : memref<2x18x18x4xf32, #tpu.memory_space<vmem>>, vector<1x16x16x4xf32>,
    %8 = vector.extract_strided_slice %4 {offsets = [0, 0, 0], sizes = [1, 16, 4], strides = [1, 1, 1]} : vector<16x16x4xf32> to vector<1x16x4xf32>
    %9 = vector.shape_cast %8 : vector<1x16x4xf32> to vector<1x16x4xf32>
    %10 = vector.broadcast %9 : vector<1x16x4xf32> to vector<2x16x4xf32>
    %c0_4 = arith.constant 0 : index
    %c0_5 = arith.constant 0 : index
    %c0_6 = arith.constant 0 : index
    %c0_7 = arith.constant 0 : index
    %11 = vector.load %arg9[%c0_4, %c0_5, %c0_6, %c0_7] : memref<2x18x18x4xf32, #tpu.memory_space<vmem>>, vector<1x2x16x4xf32>
    %12 = vector.shape_cast %11 : vector<1x2x16x4xf32> to vector<2x16x4xf32>
    %13 = vector.shape_cast %10 : vector<2x16x4xf32> to vector<1x2x16x4xf32>
    tpu.vector_store %arg9[%c0_4, %c0_5, %c0_6, %c0_7], %13 {strides = array<i32>} : memref<2x18x18x4xf32, #tpu.memory_space<vmem>>, vector<1x2x16x4xf32>,
    %14 = tpu.transpose %2, [1, 0] : vector<4x256xf32> -> vector<256x4xf32>
    %15 = vector.shape_cast %14 : vector<256x4xf32> to vector<16x16x4xf32>
    %c1 = arith.constant 1 : index
    %c2_8 = arith.constant 2 : index
    %c0_9 = arith.constant 0 : index
    %c0_10 = arith.constant 0 : index
    %16 = vector.load %arg9[%c1, %c2_8, %c0_9, %c0_10] : memref<2x18x18x4xf32, #tpu.memory_space<vmem>>, vector<1x16x16x4xf32>
    %17 = vector.shape_cast %16 : vector<1x16x16x4xf32> to vector<16x16x4xf32>
    %18 = vector.shape_cast %15 : vector<16x16x4xf32> to vector<1x16x16x4xf32>
    tpu.vector_store %arg9[%c1, %c2_8, %c0_9, %c0_10], %18 {strides = array<i32>} : memref<2x18x18x4xf32, #tpu.memory_space<vmem>>, vector<1x16x16x4xf32>,
    %19 = vector.extract_strided_slice %15 {offsets = [0, 0, 0], sizes = [1, 16, 4], strides = [1, 1, 1]} : vector<16x16x4xf32> to vector<1x16x4xf32>
    %20 = vector.shape_cast %19 : vector<1x16x4xf32> to vector<1x16x4xf32>
    %21 = vector.broadcast %20 : vector<1x16x4xf32> to vector<2x16x4xf32>
    %c1_11 = arith.constant 1 : index
    %c0_12 = arith.constant 0 : index
    %c0_13 = arith.constant 0 : index
    %c0_14 = arith.constant 0 : index
    %22 = vector.load %arg9[%c1_11, %c0_12, %c0_13, %c0_14] : memref<2x18x18x4xf32, #tpu.memory_space<vmem>>, vector<1x2x16x4xf32>
    %23 = vector.shape_cast %22 : vector<1x2x16x4xf32> to vector<2x16x4xf32>
    %24 = vector.shape_cast %21 : vector<2x16x4xf32> to vector<1x2x16x4xf32>
    tpu.vector_store %arg9[%c1_11, %c0_12, %c0_13, %c0_14], %24 {strides = array<i32>} : memref<2x18x18x4xf32, #tpu.memory_space<vmem>>, vector<1x2x16x4xf32>,
    %c0_15 = arith.constant 0 : index
    %c0_16 = arith.constant 0 : index
    %c15 = arith.constant 15 : index
    %c0_17 = arith.constant 0 : index
    %25 = vector.load %arg9[%c0_15, %c0_16, %c15, %c0_17] : memref<2x18x18x4xf32, #tpu.memory_space<vmem>>, vector<2x18x1x4xf32>
    %26 = vector.shape_cast %25 : vector<2x18x1x4xf32> to vector<2x18x1x4xf32>
    %27 = vector.broadcast %26 : vector<2x18x1x4xf32> to vector<2x18x2x4xf32>
    %c0_18 = arith.constant 0 : index
    %c0_19 = arith.constant 0 : index
    %c16 = arith.constant 16 : index
    %c0_20 = arith.constant 0 : index
    %28 = vector.load %arg9[%c0_18, %c0_19, %c16, %c0_20] : memref<2x18x18x4xf32, #tpu.memory_space<vmem>>, vector<2x18x2x4xf32>
    tpu.vector_store %arg9[%c0_18, %c0_19, %c16, %c0_20], %27 {strides = array<i32>} : memref<2x18x18x4xf32, #tpu.memory_space<vmem>>, vector<2x18x2x4xf32>,
    %c0_21 = arith.constant 0 : index
    %c0_22 = arith.constant 0 : index
    %c0_23 = arith.constant 0 : index
    %c0_24 = arith.constant 0 : index
    %29 = vector.load %arg9[%c0_21, %c0_22, %c0_23, %c0_24] : memref<2x18x18x4xf32, #tpu.memory_space<vmem>>, vector<1x16x16x4xf32>
    %30 = vector.shape_cast %29 : vector<1x16x16x4xf32> to vector<16x16x4xf32>
    %31 = vector.shape_cast %30 : vector<16x16x4xf32> to vector<256x4xf32>
    %c0_25 = arith.constant 0 : index
    %c0_26 = arith.constant 0 : index
    %32 = vector.load %arg10[%c0_25, %c0_26] : memref<512x36xf32, #tpu.memory_space<vmem>>, vector<256x4xf32>
    tpu.vector_store %arg10[%c0_25, %c0_26], %31 {strides = array<i32>} : memref<512x36xf32, #tpu.memory_space<vmem>>, vector<256x4xf32>,
    %c1_27 = arith.constant 1 : index
    %c0_28 = arith.constant 0 : index
    %c0_29 = arith.constant 0 : index
    %c0_30 = arith.constant 0 : index
    %33 = vector.load %arg9[%c1_27, %c0_28, %c0_29, %c0_30] : memref<2x18x18x4xf32, #tpu.memory_space<vmem>>, vector<1x16x16x4xf32>
    %34 = vector.shape_cast %33 : vector<1x16x16x4xf32> to vector<16x16x4xf32>
    %35 = vector.shape_cast %34 : vector<16x16x4xf32> to vector<256x4xf32>
    %c256 = arith.constant 256 : index
    %c0_31 = arith.constant 0 : index
    %36 = vector.load %arg10[%c256, %c0_31] : memref<512x36xf32, #tpu.memory_space<vmem>>, vector<256x4xf32>
    tpu.vector_store %arg10[%c256, %c0_31], %35 {strides = array<i32>} : memref<512x36xf32, #tpu.memory_space<vmem>>, vector<256x4xf32>,
    %c0_32 = arith.constant 0 : index
    %c0_33 = arith.constant 0 : index
    %c1_34 = arith.constant 1 : index
    %c0_35 = arith.constant 0 : index
    %37 = vector.load %arg9[%c0_32, %c0_33, %c1_34, %c0_35] : memref<2x18x18x4xf32, #tpu.memory_space<vmem>>, vector<1x16x16x4xf32>
    %38 = vector.shape_cast %37 : vector<1x16x16x4xf32> to vector<16x16x4xf32>
    %39 = vector.shape_cast %38 : vector<16x16x4xf32> to vector<256x4xf32>
    %c0_36 = arith.constant 0 : index
    %c4 = arith.constant 4 : index
    %40 = vector.load %arg10[%c0_36, %c4] : memref<512x36xf32, #tpu.memory_space<vmem>>, vector<256x4xf32>
    tpu.vector_store %arg10[%c0_36, %c4], %39 {strides = array<i32>} : memref<512x36xf32, #tpu.memory_space<vmem>>, vector<256x4xf32>,
    %c1_37 = arith.constant 1 : index
    %c0_38 = arith.constant 0 : index
    %c1_39 = arith.constant 1 : index
    %c0_40 = arith.constant 0 : index
    %41 = vector.load %arg9[%c1_37, %c0_38, %c1_39, %c0_40] : memref<2x18x18x4xf32, #tpu.memory_space<vmem>>, vector<1x16x16x4xf32>
    %42 = vector.shape_cast %41 : vector<1x16x16x4xf32> to vector<16x16x4xf32>
    %43 = vector.shape_cast %42 : vector<16x16x4xf32> to vector<256x4xf32>
    %c256_41 = arith.constant 256 : index
    %c4_42 = arith.constant 4 : index
    %44 = vector.load %arg10[%c256_41, %c4_42] : memref<512x36xf32, #tpu.memory_space<vmem>>, vector<256x4xf32>
    tpu.vector_store %arg10[%c256_41, %c4_42], %43 {strides = array<i32>} : memref<512x36xf32, #tpu.memory_space<vmem>>, vector<256x4xf32>,
    %c0_43 = arith.constant 0 : index
    %c0_44 = arith.constant 0 : index
    %c2_45 = arith.constant 2 : index
    %c0_46 = arith.constant 0 : index
    %45 = vector.load %arg9[%c0_43, %c0_44, %c2_45, %c0_46] : memref<2x18x18x4xf32, #tpu.memory_space<vmem>>, vector<1x16x16x4xf32>
    %46 = vector.shape_cast %45 : vector<1x16x16x4xf32> to vector<16x16x4xf32>
    %47 = vector.shape_cast %46 : vector<16x16x4xf32> to vector<256x4xf32>
    %c0_47 = arith.constant 0 : index
    %c8 = arith.constant 8 : index
    %48 = vector.load %arg10[%c0_47, %c8] : memref<512x36xf32, #tpu.memory_space<vmem>>, vector<256x4xf32>
    tpu.vector_store %arg10[%c0_47, %c8], %47 {strides = array<i32>} : memref<512x36xf32, #tpu.memory_space<vmem>>, vector<256x4xf32>,
    %c1_48 = arith.constant 1 : index
    %c0_49 = arith.constant 0 : index
    %c2_50 = arith.constant 2 : index
    %c0_51 = arith.constant 0 : index
    %49 = vector.load %arg9[%c1_48, %c0_49, %c2_50, %c0_51] : memref<2x18x18x4xf32, #tpu.memory_space<vmem>>, vector<1x16x16x4xf32>
    %50 = vector.shape_cast %49 : vector<1x16x16x4xf32> to vector<16x16x4xf32>
    %51 = vector.shape_cast %50 : vector<16x16x4xf32> to vector<256x4xf32>
    %c256_52 = arith.constant 256 : index
    %c8_53 = arith.constant 8 : index
    %52 = vector.load %arg10[%c256_52, %c8_53] : memref<512x36xf32, #tpu.memory_space<vmem>>, vector<256x4xf32>
    tpu.vector_store %arg10[%c256_52, %c8_53], %51 {strides = array<i32>} : memref<512x36xf32, #tpu.memory_space<vmem>>, vector<256x4xf32>,
    %c0_54 = arith.constant 0 : index
    %c1_55 = arith.constant 1 : index
    %c0_56 = arith.constant 0 : index
    %c0_57 = arith.constant 0 : index
    %53 = vector.load %arg9[%c0_54, %c1_55, %c0_56, %c0_57] : memref<2x18x18x4xf32, #tpu.memory_space<vmem>>, vector<1x16x16x4xf32>
    %54 = vector.shape_cast %53 : vector<1x16x16x4xf32> to vector<16x16x4xf32>
    %55 = vector.shape_cast %54 : vector<16x16x4xf32> to vector<256x4xf32>
    %c0_58 = arith.constant 0 : index
    %c12 = arith.constant 12 : index
    %56 = vector.load %arg10[%c0_58, %c12] : memref<512x36xf32, #tpu.memory_space<vmem>>, vector<256x4xf32>
    tpu.vector_store %arg10[%c0_58, %c12], %55 {strides = array<i32>} : memref<512x36xf32, #tpu.memory_space<vmem>>, vector<256x4xf32>,
    %c1_59 = arith.constant 1 : index
    %c1_60 = arith.constant 1 : index
    %c0_61 = arith.constant 0 : index
    %c0_62 = arith.constant 0 : index
    %57 = vector.load %arg9[%c1_59, %c1_60, %c0_61, %c0_62] : memref<2x18x18x4xf32, #tpu.memory_space<vmem>>, vector<1x16x16x4xf32>
    %58 = vector.shape_cast %57 : vector<1x16x16x4xf32> to vector<16x16x4xf32>
    %59 = vector.shape_cast %58 : vector<16x16x4xf32> to vector<256x4xf32>
    %c256_63 = arith.constant 256 : index
    %c12_64 = arith.constant 12 : index
    %60 = vector.load %arg10[%c256_63, %c12_64] : memref<512x36xf32, #tpu.memory_space<vmem>>, vector<256x4xf32>
    tpu.vector_store %arg10[%c256_63, %c12_64], %59 {strides = array<i32>} : memref<512x36xf32, #tpu.memory_space<vmem>>, vector<256x4xf32>,
    %c0_65 = arith.constant 0 : index
    %c1_66 = arith.constant 1 : index
    %c1_67 = arith.constant 1 : index
    %c0_68 = arith.constant 0 : index
    %61 = vector.load %arg9[%c0_65, %c1_66, %c1_67, %c0_68] : memref<2x18x18x4xf32, #tpu.memory_space<vmem>>, vector<1x16x16x4xf32>
    %62 = vector.shape_cast %61 : vector<1x16x16x4xf32> to vector<16x16x4xf32>
    %63 = vector.shape_cast %62 : vector<16x16x4xf32> to vector<256x4xf32>
    %c0_69 = arith.constant 0 : index
    %c16_70 = arith.constant 16 : index
    %64 = vector.load %arg10[%c0_69, %c16_70] : memref<512x36xf32, #tpu.memory_space<vmem>>, vector<256x4xf32>
    tpu.vector_store %arg10[%c0_69, %c16_70], %63 {strides = array<i32>} : memref<512x36xf32, #tpu.memory_space<vmem>>, vector<256x4xf32>,
    %c1_71 = arith.constant 1 : index
    %c1_72 = arith.constant 1 : index
    %c1_73 = arith.constant 1 : index
    %c0_74 = arith.constant 0 : index
    %65 = vector.load %arg9[%c1_71, %c1_72, %c1_73, %c0_74] : memref<2x18x18x4xf32, #tpu.memory_space<vmem>>, vector<1x16x16x4xf32>
    %66 = vector.shape_cast %65 : vector<1x16x16x4xf32> to vector<16x16x4xf32>
    %67 = vector.shape_cast %66 : vector<16x16x4xf32> to vector<256x4xf32>
    %c256_75 = arith.constant 256 : index
    %c16_76 = arith.constant 16 : index
    %68 = vector.load %arg10[%c256_75, %c16_76] : memref<512x36xf32, #tpu.memory_space<vmem>>, vector<256x4xf32>
    tpu.vector_store %arg10[%c256_75, %c16_76], %67 {strides = array<i32>} : memref<512x36xf32, #tpu.memory_space<vmem>>, vector<256x4xf32>,
    %c0_77 = arith.constant 0 : index
    %c1_78 = arith.constant 1 : index
    %c2_79 = arith.constant 2 : index
    %c0_80 = arith.constant 0 : index
    %69 = vector.load %arg9[%c0_77, %c1_78, %c2_79, %c0_80] : memref<2x18x18x4xf32, #tpu.memory_space<vmem>>, vector<1x16x16x4xf32>
    %70 = vector.shape_cast %69 : vector<1x16x16x4xf32> to vector<16x16x4xf32>
    %71 = vector.shape_cast %70 : vector<16x16x4xf32> to vector<256x4xf32>
    %c0_81 = arith.constant 0 : index
    %c20 = arith.constant 20 : index
    %72 = vector.load %arg10[%c0_81, %c20] : memref<512x36xf32, #tpu.memory_space<vmem>>, vector<256x4xf32>
    tpu.vector_store %arg10[%c0_81, %c20], %71 {strides = array<i32>} : memref<512x36xf32, #tpu.memory_space<vmem>>, vector<256x4xf32>,
    %c1_82 = arith.constant 1 : index
    %c1_83 = arith.constant 1 : index
    %c2_84 = arith.constant 2 : index
    %c0_85 = arith.constant 0 : index
    %73 = vector.load %arg9[%c1_82, %c1_83, %c2_84, %c0_85] : memref<2x18x18x4xf32, #tpu.memory_space<vmem>>, vector<1x16x16x4xf32>
    %74 = vector.shape_cast %73 : vector<1x16x16x4xf32> to vector<16x16x4xf32>
    %75 = vector.shape_cast %74 : vector<16x16x4xf32> to vector<256x4xf32>
    %c256_86 = arith.constant 256 : index
    %c20_87 = arith.constant 20 : index
    %76 = vector.load %arg10[%c256_86, %c20_87] : memref<512x36xf32, #tpu.memory_space<vmem>>, vector<256x4xf32>
    tpu.vector_store %arg10[%c256_86, %c20_87], %75 {strides = array<i32>} : memref<512x36xf32, #tpu.memory_space<vmem>>, vector<256x4xf32>,
    %c0_88 = arith.constant 0 : index
    %c2_89 = arith.constant 2 : index
    %c0_90 = arith.constant 0 : index
    %c0_91 = arith.constant 0 : index
    %77 = vector.load %arg9[%c0_88, %c2_89, %c0_90, %c0_91] : memref<2x18x18x4xf32, #tpu.memory_space<vmem>>, vector<1x16x16x4xf32>
    %78 = vector.shape_cast %77 : vector<1x16x16x4xf32> to vector<16x16x4xf32>
    %79 = vector.shape_cast %78 : vector<16x16x4xf32> to vector<256x4xf32>
    %c0_92 = arith.constant 0 : index
    %c24 = arith.constant 24 : index
    %80 = vector.load %arg10[%c0_92, %c24] : memref<512x36xf32, #tpu.memory_space<vmem>>, vector<256x4xf32>
    tpu.vector_store %arg10[%c0_92, %c24], %79 {strides = array<i32>} : memref<512x36xf32, #tpu.memory_space<vmem>>, vector<256x4xf32>,
    %c1_93 = arith.constant 1 : index
    %c2_94 = arith.constant 2 : index
    %c0_95 = arith.constant 0 : index
    %c0_96 = arith.constant 0 : index
    %81 = vector.load %arg9[%c1_93, %c2_94, %c0_95, %c0_96] : memref<2x18x18x4xf32, #tpu.memory_space<vmem>>, vector<1x16x16x4xf32>
    %82 = vector.shape_cast %81 : vector<1x16x16x4xf32> to vector<16x16x4xf32>
    %83 = vector.shape_cast %82 : vector<16x16x4xf32> to vector<256x4xf32>
    %c256_97 = arith.constant 256 : index
    %c24_98 = arith.constant 24 : index
    %84 = vector.load %arg10[%c256_97, %c24_98] : memref<512x36xf32, #tpu.memory_space<vmem>>, vector<256x4xf32>
    tpu.vector_store %arg10[%c256_97, %c24_98], %83 {strides = array<i32>} : memref<512x36xf32, #tpu.memory_space<vmem>>, vector<256x4xf32>,
    %c0_99 = arith.constant 0 : index
    %c2_100 = arith.constant 2 : index
    %c1_101 = arith.constant 1 : index
    %c0_102 = arith.constant 0 : index
    %85 = vector.load %arg9[%c0_99, %c2_100, %c1_101, %c0_102] : memref<2x18x18x4xf32, #tpu.memory_space<vmem>>, vector<1x16x16x4xf32>
    %86 = vector.shape_cast %85 : vector<1x16x16x4xf32> to vector<16x16x4xf32>
    %87 = vector.shape_cast %86 : vector<16x16x4xf32> to vector<256x4xf32>
    %c0_103 = arith.constant 0 : index
    %c28 = arith.constant 28 : index
    %88 = vector.load %arg10[%c0_103, %c28] : memref<512x36xf32, #tpu.memory_space<vmem>>, vector<256x4xf32>
    tpu.vector_store %arg10[%c0_103, %c28], %87 {strides = array<i32>} : memref<512x36xf32, #tpu.memory_space<vmem>>, vector<256x4xf32>,
    %c1_104 = arith.constant 1 : index
    %c2_105 = arith.constant 2 : index
    %c1_106 = arith.constant 1 : index
    %c0_107 = arith.constant 0 : index
    %89 = vector.load %arg9[%c1_104, %c2_105, %c1_106, %c0_107] : memref<2x18x18x4xf32, #tpu.memory_space<vmem>>, vector<1x16x16x4xf32>
    %90 = vector.shape_cast %89 : vector<1x16x16x4xf32> to vector<16x16x4xf32>
    %91 = vector.shape_cast %90 : vector<16x16x4xf32> to vector<256x4xf32>
    %c256_108 = arith.constant 256 : index
    %c28_109 = arith.constant 28 : index
    %92 = vector.load %arg10[%c256_108, %c28_109] : memref<512x36xf32, #tpu.memory_space<vmem>>, vector<256x4xf32>
    tpu.vector_store %arg10[%c256_108, %c28_109], %91 {strides = array<i32>} : memref<512x36xf32, #tpu.memory_space<vmem>>, vector<256x4xf32>,
    %c0_110 = arith.constant 0 : index
    %c2_111 = arith.constant 2 : index
    %c2_112 = arith.constant 2 : index
    %c0_113 = arith.constant 0 : index
    %93 = vector.load %arg9[%c0_110, %c2_111, %c2_112, %c0_113] : memref<2x18x18x4xf32, #tpu.memory_space<vmem>>, vector<1x16x16x4xf32>
    %94 = vector.shape_cast %93 : vector<1x16x16x4xf32> to vector<16x16x4xf32>
    %95 = vector.shape_cast %94 : vector<16x16x4xf32> to vector<256x4xf32>
    %c0_114 = arith.constant 0 : index
    %c32 = arith.constant 32 : index
    %96 = vector.load %arg10[%c0_114, %c32] : memref<512x36xf32, #tpu.memory_space<vmem>>, vector<256x4xf32>
    tpu.vector_store %arg10[%c0_114, %c32], %95 {strides = array<i32>} : memref<512x36xf32, #tpu.memory_space<vmem>>, vector<256x4xf32>,
    %c1_115 = arith.constant 1 : index
    %c2_116 = arith.constant 2 : index
    %c2_117 = arith.constant 2 : index
    %c0_118 = arith.constant 0 : index
    %97 = vector.load %arg9[%c1_115, %c2_116, %c2_117, %c0_118] : memref<2x18x18x4xf32, #tpu.memory_space<vmem>>, vector<1x16x16x4xf32>
    %98 = vector.shape_cast %97 : vector<1x16x16x4xf32> to vector<16x16x4xf32>
    %99 = vector.shape_cast %98 : vector<16x16x4xf32> to vector<256x4xf32>
    %c256_119 = arith.constant 256 : index
    %c32_120 = arith.constant 32 : index
    %100 = vector.load %arg10[%c256_119, %c32_120] : memref<512x36xf32, #tpu.memory_space<vmem>>, vector<256x4xf32>
    tpu.vector_store %arg10[%c256_119, %c32_120], %99 {strides = array<i32>} : memref<512x36xf32, #tpu.memory_space<vmem>>, vector<256x4xf32>,
    %c0_121 = arith.constant 0 : index
    %c0_122 = arith.constant 0 : index
    %101 = vector.load %arg10[%c0_121, %c0_122] : memref<512x36xf32, #tpu.memory_space<vmem>>, vector<512x36xf32>
    %c0_123 = arith.constant 0 : index
    %c0_124 = arith.constant 0 : index
    %102 = vector.load %arg2[%c0_123, %c0_124] : memref<4x36xf32, #tpu.memory_space<vmem>>, vector<4x36xf32>
    %103 = tpu.transpose %101, [1, 0] : vector<512x36xf32> -> vector<36x512xf32>
    %cst = arith.constant dense<0.000000e+00> : vector<4x512xf32>
    %104 = tpu.matmul %102, %103, %cst {dimension_numbers = #tpu.dot_dimension_numbers<[1], [0], [0], [1], [0, 0, 1, 1], [], []>} : vector<4x36xf32>, vector<36x512xf32>, vector<4x512xf32> -> vector<4x512xf32>
    %c0_125 = arith.constant 0 : index
    %c0_126 = arith.constant 0 : index
    %105 = vector.load %arg3[%c0_125, %c0_126] : memref<4x1xf32, #tpu.memory_space<vmem>>, vector<4x1xf32>
    %c0_127 = arith.constant 0 : index
    %c0_128 = arith.constant 0 : index
    %106 = vector.load %arg4[%c0_127, %c0_128] : memref<4x1xf32, #tpu.memory_space<vmem>>, vector<4x1xf32>
    %cst_129 = arith.constant dense<0.000000e+00> : vector<4xf32>
    %107 = vector.multi_reduction <add>, %104, %cst_129 [1] : vector<4x512xf32> to vector<4xf32>
    %108 = vector.shape_cast %107 : vector<4xf32> to vector<4x1xf32>
    %cst_130 = arith.constant 5.120000e+02 : f32
    %109 = vector.broadcast %cst_130 : f32 to vector<4x1xf32>
    %110 = arith.divf %108, %109 : vector<4x1xf32>
    %111 = vector.broadcast %110 : vector<4x1xf32> to vector<4x512xf32>
    %112 = arith.subf %104, %111 : vector<4x512xf32>
    %113 = arith.mulf %112, %112 : vector<4x512xf32>
    %cst_131 = arith.constant dense<0.000000e+00> : vector<4xf32>
    %114 = vector.multi_reduction <add>, %113, %cst_131 [1] : vector<4x512xf32> to vector<4xf32>
    %115 = vector.shape_cast %114 : vector<4xf32> to vector<4x1xf32>
    %cst_132 = arith.constant 5.120000e+02 : f32
    %116 = vector.broadcast %cst_132 : f32 to vector<4x1xf32>
    %117 = arith.divf %115, %116 : vector<4x1xf32>
    %cst_133 = arith.constant 9.99999974E-6 : f32
    %118 = vector.broadcast %cst_133 : f32 to vector<4x1xf32>
    %119 = arith.addf %117, %118 : vector<4x1xf32>
    %120 = math.rsqrt %119 : vector<4x1xf32>
    %121 = arith.mulf %105, %120 : vector<4x1xf32>
    %122 = vector.broadcast %121 : vector<4x1xf32> to vector<4x512xf32>
    %123 = arith.mulf %112, %122 : vector<4x512xf32>
    %124 = vector.broadcast %106 : vector<4x1xf32> to vector<4x512xf32>
    %125 = arith.addf %123, %124 : vector<4x512xf32>
    %cst_134 = arith.constant 0.000000e+00 : f32
    %126 = vector.broadcast %cst_134 : f32 to vector<4x512xf32>
    %127 = arith.maximumf %125, %126 : vector<4x512xf32>
    %128 = vector.extract_strided_slice %127 {offsets = [0, 0], sizes = [4, 256], strides = [1, 1]} : vector<4x512xf32> to vector<4x256xf32>
    %129 = vector.extract_strided_slice %127 {offsets = [0, 256], sizes = [4, 256], strides = [1, 1]} : vector<4x512xf32> to vector<4x256xf32>
    %130 = tpu.transpose %128, [1, 0] : vector<4x256xf32> -> vector<256x4xf32>
    %131 = vector.shape_cast %130 : vector<256x4xf32> to vector<16x16x4xf32>
    %c0_135 = arith.constant 0 : index
    %c2_136 = arith.constant 2 : index
    %c0_137 = arith.constant 0 : index
    %c0_138 = arith.constant 0 : index
    %132 = vector.load %arg9[%c0_135, %c2_136, %c0_137, %c0_138] : memref<2x18x18x4xf32, #tpu.memory_space<vmem>>, vector<1x16x16x4xf32>
    %133 = vector.shape_cast %132 : vector<1x16x16x4xf32> to vector<16x16x4xf32>
    %134 = vector.shape_cast %131 : vector<16x16x4xf32> to vector<1x16x16x4xf32>
    tpu.vector_store %arg9[%c0_135, %c2_136, %c0_137, %c0_138], %134 {strides = array<i32>} : memref<2x18x18x4xf32, #tpu.memory_space<vmem>>, vector<1x16x16x4xf32>,
    %135 = vector.extract_strided_slice %131 {offsets = [0, 0, 0], sizes = [1, 16, 4], strides = [1, 1, 1]} : vector<16x16x4xf32> to vector<1x16x4xf32>
    %136 = vector.shape_cast %135 : vector<1x16x4xf32> to vector<1x16x4xf32>
    %137 = vector.broadcast %136 : vector<1x16x4xf32> to vector<2x16x4xf32>
    %c0_139 = arith.constant 0 : index
    %c0_140 = arith.constant 0 : index
    %c0_141 = arith.constant 0 : index
    %c0_142 = arith.constant 0 : index
    %138 = vector.load %arg9[%c0_139, %c0_140, %c0_141, %c0_142] : memref<2x18x18x4xf32, #tpu.memory_space<vmem>>, vector<1x2x16x4xf32>
    %139 = vector.shape_cast %138 : vector<1x2x16x4xf32> to vector<2x16x4xf32>
    %140 = vector.shape_cast %137 : vector<2x16x4xf32> to vector<1x2x16x4xf32>
    tpu.vector_store %arg9[%c0_139, %c0_140, %c0_141, %c0_142], %140 {strides = array<i32>} : memref<2x18x18x4xf32, #tpu.memory_space<vmem>>, vector<1x2x16x4xf32>,
    %141 = tpu.transpose %129, [1, 0] : vector<4x256xf32> -> vector<256x4xf32>
    %142 = vector.shape_cast %141 : vector<256x4xf32> to vector<16x16x4xf32>
    %c1_143 = arith.constant 1 : index
    %c2_144 = arith.constant 2 : index
    %c0_145 = arith.constant 0 : index
    %c0_146 = arith.constant 0 : index
    %143 = vector.load %arg9[%c1_143, %c2_144, %c0_145, %c0_146] : memref<2x18x18x4xf32, #tpu.memory_space<vmem>>, vector<1x16x16x4xf32>
    %144 = vector.shape_cast %143 : vector<1x16x16x4xf32> to vector<16x16x4xf32>
    %145 = vector.shape_cast %142 : vector<16x16x4xf32> to vector<1x16x16x4xf32>
    tpu.vector_store %arg9[%c1_143, %c2_144, %c0_145, %c0_146], %145 {strides = array<i32>} : memref<2x18x18x4xf32, #tpu.memory_space<vmem>>, vector<1x16x16x4xf32>,
    %146 = vector.extract_strided_slice %142 {offsets = [0, 0, 0], sizes = [1, 16, 4], strides = [1, 1, 1]} : vector<16x16x4xf32> to vector<1x16x4xf32>
    %147 = vector.shape_cast %146 : vector<1x16x4xf32> to vector<1x16x4xf32>
    %148 = vector.broadcast %147 : vector<1x16x4xf32> to vector<2x16x4xf32>
    %c1_147 = arith.constant 1 : index
    %c0_148 = arith.constant 0 : index
    %c0_149 = arith.constant 0 : index
    %c0_150 = arith.constant 0 : index
    %149 = vector.load %arg9[%c1_147, %c0_148, %c0_149, %c0_150] : memref<2x18x18x4xf32, #tpu.memory_space<vmem>>, vector<1x2x16x4xf32>
    %150 = vector.shape_cast %149 : vector<1x2x16x4xf32> to vector<2x16x4xf32>
    %151 = vector.shape_cast %148 : vector<2x16x4xf32> to vector<1x2x16x4xf32>
    tpu.vector_store %arg9[%c1_147, %c0_148, %c0_149, %c0_150], %151 {strides = array<i32>} : memref<2x18x18x4xf32, #tpu.memory_space<vmem>>, vector<1x2x16x4xf32>,
    %c0_151 = arith.constant 0 : index
    %c0_152 = arith.constant 0 : index
    %c15_153 = arith.constant 15 : index
    %c0_154 = arith.constant 0 : index
    %152 = vector.load %arg9[%c0_151, %c0_152, %c15_153, %c0_154] : memref<2x18x18x4xf32, #tpu.memory_space<vmem>>, vector<2x18x1x4xf32>
    %153 = vector.shape_cast %152 : vector<2x18x1x4xf32> to vector<2x18x1x4xf32>
    %154 = vector.broadcast %153 : vector<2x18x1x4xf32> to vector<2x18x2x4xf32>
    %c0_155 = arith.constant 0 : index
    %c0_156 = arith.constant 0 : index
    %c16_157 = arith.constant 16 : index
    %c0_158 = arith.constant 0 : index
    %155 = vector.load %arg9[%c0_155, %c0_156, %c16_157, %c0_158] : memref<2x18x18x4xf32, #tpu.memory_space<vmem>>, vector<2x18x2x4xf32>
    tpu.vector_store %arg9[%c0_155, %c0_156, %c16_157, %c0_158], %154 {strides = array<i32>} : memref<2x18x18x4xf32, #tpu.memory_space<vmem>>, vector<2x18x2x4xf32>,
    %c0_159 = arith.constant 0 : index
    %c0_160 = arith.constant 0 : index
    %c0_161 = arith.constant 0 : index
    %c0_162 = arith.constant 0 : index
    %156 = vector.load %arg9[%c0_159, %c0_160, %c0_161, %c0_162] : memref<2x18x18x4xf32, #tpu.memory_space<vmem>>, vector<1x16x16x4xf32>
    %157 = vector.shape_cast %156 : vector<1x16x16x4xf32> to vector<16x16x4xf32>
    %158 = vector.shape_cast %157 : vector<16x16x4xf32> to vector<256x4xf32>
    %c0_163 = arith.constant 0 : index
    %c0_164 = arith.constant 0 : index
    %159 = vector.load %arg10[%c0_163, %c0_164] : memref<512x36xf32, #tpu.memory_space<vmem>>, vector<256x4xf32>
    tpu.vector_store %arg10[%c0_163, %c0_164], %158 {strides = array<i32>} : memref<512x36xf32, #tpu.memory_space<vmem>>, vector<256x4xf32>,
    %c1_165 = arith.constant 1 : index
    %c0_166 = arith.constant 0 : index
    %c0_167 = arith.constant 0 : index
    %c0_168 = arith.constant 0 : index
    %160 = vector.load %arg9[%c1_165, %c0_166, %c0_167, %c0_168] : memref<2x18x18x4xf32, #tpu.memory_space<vmem>>, vector<1x16x16x4xf32>
    %161 = vector.shape_cast %160 : vector<1x16x16x4xf32> to vector<16x16x4xf32>
    %162 = vector.shape_cast %161 : vector<16x16x4xf32> to vector<256x4xf32>
    %c256_169 = arith.constant 256 : index
    %c0_170 = arith.constant 0 : index
    %163 = vector.load %arg10[%c256_169, %c0_170] : memref<512x36xf32, #tpu.memory_space<vmem>>, vector<256x4xf32>
    tpu.vector_store %arg10[%c256_169, %c0_170], %162 {strides = array<i32>} : memref<512x36xf32, #tpu.memory_space<vmem>>, vector<256x4xf32>,
    %c0_171 = arith.constant 0 : index
    %c0_172 = arith.constant 0 : index
    %c1_173 = arith.constant 1 : index
    %c0_174 = arith.constant 0 : index
    %164 = vector.load %arg9[%c0_171, %c0_172, %c1_173, %c0_174] : memref<2x18x18x4xf32, #tpu.memory_space<vmem>>, vector<1x16x16x4xf32>
    %165 = vector.shape_cast %164 : vector<1x16x16x4xf32> to vector<16x16x4xf32>
    %166 = vector.shape_cast %165 : vector<16x16x4xf32> to vector<256x4xf32>
    %c0_175 = arith.constant 0 : index
    %c4_176 = arith.constant 4 : index
    %167 = vector.load %arg10[%c0_175, %c4_176] : memref<512x36xf32, #tpu.memory_space<vmem>>, vector<256x4xf32>
    tpu.vector_store %arg10[%c0_175, %c4_176], %166 {strides = array<i32>} : memref<512x36xf32, #tpu.memory_space<vmem>>, vector<256x4xf32>,
    %c1_177 = arith.constant 1 : index
    %c0_178 = arith.constant 0 : index
    %c1_179 = arith.constant 1 : index
    %c0_180 = arith.constant 0 : index
    %168 = vector.load %arg9[%c1_177, %c0_178, %c1_179, %c0_180] : memref<2x18x18x4xf32, #tpu.memory_space<vmem>>, vector<1x16x16x4xf32>
    %169 = vector.shape_cast %168 : vector<1x16x16x4xf32> to vector<16x16x4xf32>
    %170 = vector.shape_cast %169 : vector<16x16x4xf32> to vector<256x4xf32>
    %c256_181 = arith.constant 256 : index
    %c4_182 = arith.constant 4 : index
    %171 = vector.load %arg10[%c256_181, %c4_182] : memref<512x36xf32, #tpu.memory_space<vmem>>, vector<256x4xf32>
    tpu.vector_store %arg10[%c256_181, %c4_182], %170 {strides = array<i32>} : memref<512x36xf32, #tpu.memory_space<vmem>>, vector<256x4xf32>,
    %c0_183 = arith.constant 0 : index
    %c0_184 = arith.constant 0 : index
    %c2_185 = arith.constant 2 : index
    %c0_186 = arith.constant 0 : index
    %172 = vector.load %arg9[%c0_183, %c0_184, %c2_185, %c0_186] : memref<2x18x18x4xf32, #tpu.memory_space<vmem>>, vector<1x16x16x4xf32>
    %173 = vector.shape_cast %172 : vector<1x16x16x4xf32> to vector<16x16x4xf32>
    %174 = vector.shape_cast %173 : vector<16x16x4xf32> to vector<256x4xf32>
    %c0_187 = arith.constant 0 : index
    %c8_188 = arith.constant 8 : index
    %175 = vector.load %arg10[%c0_187, %c8_188] : memref<512x36xf32, #tpu.memory_space<vmem>>, vector<256x4xf32>
    tpu.vector_store %arg10[%c0_187, %c8_188], %174 {strides = array<i32>} : memref<512x36xf32, #tpu.memory_space<vmem>>, vector<256x4xf32>,
    %c1_189 = arith.constant 1 : index
    %c0_190 = arith.constant 0 : index
    %c2_191 = arith.constant 2 : index
    %c0_192 = arith.constant 0 : index
    %176 = vector.load %arg9[%c1_189, %c0_190, %c2_191, %c0_192] : memref<2x18x18x4xf32, #tpu.memory_space<vmem>>, vector<1x16x16x4xf32>
    %177 = vector.shape_cast %176 : vector<1x16x16x4xf32> to vector<16x16x4xf32>
    %178 = vector.shape_cast %177 : vector<16x16x4xf32> to vector<256x4xf32>
    %c256_193 = arith.constant 256 : index
    %c8_194 = arith.constant 8 : index
    %179 = vector.load %arg10[%c256_193, %c8_194] : memref<512x36xf32, #tpu.memory_space<vmem>>, vector<256x4xf32>
    tpu.vector_store %arg10[%c256_193, %c8_194], %178 {strides = array<i32>} : memref<512x36xf32, #tpu.memory_space<vmem>>, vector<256x4xf32>,
    %c0_195 = arith.constant 0 : index
    %c1_196 = arith.constant 1 : index
    %c0_197 = arith.constant 0 : index
    %c0_198 = arith.constant 0 : index
    %180 = vector.load %arg9[%c0_195, %c1_196, %c0_197, %c0_198] : memref<2x18x18x4xf32, #tpu.memory_space<vmem>>, vector<1x16x16x4xf32>
    %181 = vector.shape_cast %180 : vector<1x16x16x4xf32> to vector<16x16x4xf32>
    %182 = vector.shape_cast %181 : vector<16x16x4xf32> to vector<256x4xf32>
    %c0_199 = arith.constant 0 : index
    %c12_200 = arith.constant 12 : index
    %183 = vector.load %arg10[%c0_199, %c12_200] : memref<512x36xf32, #tpu.memory_space<vmem>>, vector<256x4xf32>
    tpu.vector_store %arg10[%c0_199, %c12_200], %182 {strides = array<i32>} : memref<512x36xf32, #tpu.memory_space<vmem>>, vector<256x4xf32>,
    %c1_201 = arith.constant 1 : index
    %c1_202 = arith.constant 1 : index
    %c0_203 = arith.constant 0 : index
    %c0_204 = arith.constant 0 : index
    %184 = vector.load %arg9[%c1_201, %c1_202, %c0_203, %c0_204] : memref<2x18x18x4xf32, #tpu.memory_space<vmem>>, vector<1x16x16x4xf32>
    %185 = vector.shape_cast %184 : vector<1x16x16x4xf32> to vector<16x16x4xf32>
    %186 = vector.shape_cast %185 : vector<16x16x4xf32> to vector<256x4xf32>
    %c256_205 = arith.constant 256 : index
    %c12_206 = arith.constant 12 : index
    %187 = vector.load %arg10[%c256_205, %c12_206] : memref<512x36xf32, #tpu.memory_space<vmem>>, vector<256x4xf32>
    tpu.vector_store %arg10[%c256_205, %c12_206], %186 {strides = array<i32>} : memref<512x36xf32, #tpu.memory_space<vmem>>, vector<256x4xf32>,
    %c0_207 = arith.constant 0 : index
    %c1_208 = arith.constant 1 : index
    %c1_209 = arith.constant 1 : index
    %c0_210 = arith.constant 0 : index
    %188 = vector.load %arg9[%c0_207, %c1_208, %c1_209, %c0_210] : memref<2x18x18x4xf32, #tpu.memory_space<vmem>>, vector<1x16x16x4xf32>
    %189 = vector.shape_cast %188 : vector<1x16x16x4xf32> to vector<16x16x4xf32>
    %190 = vector.shape_cast %189 : vector<16x16x4xf32> to vector<256x4xf32>
    %c0_211 = arith.constant 0 : index
    %c16_212 = arith.constant 16 : index
    %191 = vector.load %arg10[%c0_211, %c16_212] : memref<512x36xf32, #tpu.memory_space<vmem>>, vector<256x4xf32>
    tpu.vector_store %arg10[%c0_211, %c16_212], %190 {strides = array<i32>} : memref<512x36xf32, #tpu.memory_space<vmem>>, vector<256x4xf32>,
    %c1_213 = arith.constant 1 : index
    %c1_214 = arith.constant 1 : index
    %c1_215 = arith.constant 1 : index
    %c0_216 = arith.constant 0 : index
    %192 = vector.load %arg9[%c1_213, %c1_214, %c1_215, %c0_216] : memref<2x18x18x4xf32, #tpu.memory_space<vmem>>, vector<1x16x16x4xf32>
    %193 = vector.shape_cast %192 : vector<1x16x16x4xf32> to vector<16x16x4xf32>
    %194 = vector.shape_cast %193 : vector<16x16x4xf32> to vector<256x4xf32>
    %c256_217 = arith.constant 256 : index
    %c16_218 = arith.constant 16 : index
    %195 = vector.load %arg10[%c256_217, %c16_218] : memref<512x36xf32, #tpu.memory_space<vmem>>, vector<256x4xf32>
    tpu.vector_store %arg10[%c256_217, %c16_218], %194 {strides = array<i32>} : memref<512x36xf32, #tpu.memory_space<vmem>>, vector<256x4xf32>,
    %c0_219 = arith.constant 0 : index
    %c1_220 = arith.constant 1 : index
    %c2_221 = arith.constant 2 : index
    %c0_222 = arith.constant 0 : index
    %196 = vector.load %arg9[%c0_219, %c1_220, %c2_221, %c0_222] : memref<2x18x18x4xf32, #tpu.memory_space<vmem>>, vector<1x16x16x4xf32>
    %197 = vector.shape_cast %196 : vector<1x16x16x4xf32> to vector<16x16x4xf32>
    %198 = vector.shape_cast %197 : vector<16x16x4xf32> to vector<256x4xf32>
    %c0_223 = arith.constant 0 : index
    %c20_224 = arith.constant 20 : index
    %199 = vector.load %arg10[%c0_223, %c20_224] : memref<512x36xf32, #tpu.memory_space<vmem>>, vector<256x4xf32>
    tpu.vector_store %arg10[%c0_223, %c20_224], %198 {strides = array<i32>} : memref<512x36xf32, #tpu.memory_space<vmem>>, vector<256x4xf32>,
    %c1_225 = arith.constant 1 : index
    %c1_226 = arith.constant 1 : index
    %c2_227 = arith.constant 2 : index
    %c0_228 = arith.constant 0 : index
    %200 = vector.load %arg9[%c1_225, %c1_226, %c2_227, %c0_228] : memref<2x18x18x4xf32, #tpu.memory_space<vmem>>, vector<1x16x16x4xf32>
    %201 = vector.shape_cast %200 : vector<1x16x16x4xf32> to vector<16x16x4xf32>
    %202 = vector.shape_cast %201 : vector<16x16x4xf32> to vector<256x4xf32>
    %c256_229 = arith.constant 256 : index
    %c20_230 = arith.constant 20 : index
    %203 = vector.load %arg10[%c256_229, %c20_230] : memref<512x36xf32, #tpu.memory_space<vmem>>, vector<256x4xf32>
    tpu.vector_store %arg10[%c256_229, %c20_230], %202 {strides = array<i32>} : memref<512x36xf32, #tpu.memory_space<vmem>>, vector<256x4xf32>,
    %c0_231 = arith.constant 0 : index
    %c2_232 = arith.constant 2 : index
    %c0_233 = arith.constant 0 : index
    %c0_234 = arith.constant 0 : index
    %204 = vector.load %arg9[%c0_231, %c2_232, %c0_233, %c0_234] : memref<2x18x18x4xf32, #tpu.memory_space<vmem>>, vector<1x16x16x4xf32>
    %205 = vector.shape_cast %204 : vector<1x16x16x4xf32> to vector<16x16x4xf32>
    %206 = vector.shape_cast %205 : vector<16x16x4xf32> to vector<256x4xf32>
    %c0_235 = arith.constant 0 : index
    %c24_236 = arith.constant 24 : index
    %207 = vector.load %arg10[%c0_235, %c24_236] : memref<512x36xf32, #tpu.memory_space<vmem>>, vector<256x4xf32>
    tpu.vector_store %arg10[%c0_235, %c24_236], %206 {strides = array<i32>} : memref<512x36xf32, #tpu.memory_space<vmem>>, vector<256x4xf32>,
    %c1_237 = arith.constant 1 : index
    %c2_238 = arith.constant 2 : index
    %c0_239 = arith.constant 0 : index
    %c0_240 = arith.constant 0 : index
    %208 = vector.load %arg9[%c1_237, %c2_238, %c0_239, %c0_240] : memref<2x18x18x4xf32, #tpu.memory_space<vmem>>, vector<1x16x16x4xf32>
    %209 = vector.shape_cast %208 : vector<1x16x16x4xf32> to vector<16x16x4xf32>
    %210 = vector.shape_cast %209 : vector<16x16x4xf32> to vector<256x4xf32>
    %c256_241 = arith.constant 256 : index
    %c24_242 = arith.constant 24 : index
    %211 = vector.load %arg10[%c256_241, %c24_242] : memref<512x36xf32, #tpu.memory_space<vmem>>, vector<256x4xf32>
    tpu.vector_store %arg10[%c256_241, %c24_242], %210 {strides = array<i32>} : memref<512x36xf32, #tpu.memory_space<vmem>>, vector<256x4xf32>,
    %c0_243 = arith.constant 0 : index
    %c2_244 = arith.constant 2 : index
    %c1_245 = arith.constant 1 : index
    %c0_246 = arith.constant 0 : index
    %212 = vector.load %arg9[%c0_243, %c2_244, %c1_245, %c0_246] : memref<2x18x18x4xf32, #tpu.memory_space<vmem>>, vector<1x16x16x4xf32>
    %213 = vector.shape_cast %212 : vector<1x16x16x4xf32> to vector<16x16x4xf32>
    %214 = vector.shape_cast %213 : vector<16x16x4xf32> to vector<256x4xf32>
    %c0_247 = arith.constant 0 : index
    %c28_248 = arith.constant 28 : index
    %215 = vector.load %arg10[%c0_247, %c28_248] : memref<512x36xf32, #tpu.memory_space<vmem>>, vector<256x4xf32>
    tpu.vector_store %arg10[%c0_247, %c28_248], %214 {strides = array<i32>} : memref<512x36xf32, #tpu.memory_space<vmem>>, vector<256x4xf32>,
    %c1_249 = arith.constant 1 : index
    %c2_250 = arith.constant 2 : index
    %c1_251 = arith.constant 1 : index
    %c0_252 = arith.constant 0 : index
    %216 = vector.load %arg9[%c1_249, %c2_250, %c1_251, %c0_252] : memref<2x18x18x4xf32, #tpu.memory_space<vmem>>, vector<1x16x16x4xf32>
    %217 = vector.shape_cast %216 : vector<1x16x16x4xf32> to vector<16x16x4xf32>
    %218 = vector.shape_cast %217 : vector<16x16x4xf32> to vector<256x4xf32>
    %c256_253 = arith.constant 256 : index
    %c28_254 = arith.constant 28 : index
    %219 = vector.load %arg10[%c256_253, %c28_254] : memref<512x36xf32, #tpu.memory_space<vmem>>, vector<256x4xf32>
    tpu.vector_store %arg10[%c256_253, %c28_254], %218 {strides = array<i32>} : memref<512x36xf32, #tpu.memory_space<vmem>>, vector<256x4xf32>,
    %c0_255 = arith.constant 0 : index
    %c2_256 = arith.constant 2 : index
    %c2_257 = arith.constant 2 : index
    %c0_258 = arith.constant 0 : index
    %220 = vector.load %arg9[%c0_255, %c2_256, %c2_257, %c0_258] : memref<2x18x18x4xf32, #tpu.memory_space<vmem>>, vector<1x16x16x4xf32>
    %221 = vector.shape_cast %220 : vector<1x16x16x4xf32> to vector<16x16x4xf32>
    %222 = vector.shape_cast %221 : vector<16x16x4xf32> to vector<256x4xf32>
    %c0_259 = arith.constant 0 : index
    %c32_260 = arith.constant 32 : index
    %223 = vector.load %arg10[%c0_259, %c32_260] : memref<512x36xf32, #tpu.memory_space<vmem>>, vector<256x4xf32>
    tpu.vector_store %arg10[%c0_259, %c32_260], %222 {strides = array<i32>} : memref<512x36xf32, #tpu.memory_space<vmem>>, vector<256x4xf32>,
    %c1_261 = arith.constant 1 : index
    %c2_262 = arith.constant 2 : index
    %c2_263 = arith.constant 2 : index
    %c0_264 = arith.constant 0 : index
    %224 = vector.load %arg9[%c1_261, %c2_262, %c2_263, %c0_264] : memref<2x18x18x4xf32, #tpu.memory_space<vmem>>, vector<1x16x16x4xf32>
    %225 = vector.shape_cast %224 : vector<1x16x16x4xf32> to vector<16x16x4xf32>
    %226 = vector.shape_cast %225 : vector<16x16x4xf32> to vector<256x4xf32>
    %c256_265 = arith.constant 256 : index
    %c32_266 = arith.constant 32 : index
    %227 = vector.load %arg10[%c256_265, %c32_266] : memref<512x36xf32, #tpu.memory_space<vmem>>, vector<256x4xf32>
    tpu.vector_store %arg10[%c256_265, %c32_266], %226 {strides = array<i32>} : memref<512x36xf32, #tpu.memory_space<vmem>>, vector<256x4xf32>,
    %c0_267 = arith.constant 0 : index
    %c0_268 = arith.constant 0 : index
    %228 = vector.load %arg10[%c0_267, %c0_268] : memref<512x36xf32, #tpu.memory_space<vmem>>, vector<512x36xf32>
    %c0_269 = arith.constant 0 : index
    %c0_270 = arith.constant 0 : index
    %229 = vector.load %arg5[%c0_269, %c0_270] : memref<4x36xf32, #tpu.memory_space<vmem>>, vector<4x36xf32>
    %230 = tpu.transpose %228, [1, 0] : vector<512x36xf32> -> vector<36x512xf32>
    %cst_271 = arith.constant dense<0.000000e+00> : vector<4x512xf32>
    %231 = tpu.matmul %229, %230, %cst_271 {dimension_numbers = #tpu.dot_dimension_numbers<[1], [0], [0], [1], [0, 0, 1, 1], [], []>} : vector<4x36xf32>, vector<36x512xf32>, vector<4x512xf32> -> vector<4x512xf32>
    %c0_272 = arith.constant 0 : index
    %c0_273 = arith.constant 0 : index
    %232 = vector.load %arg6[%c0_272, %c0_273] : memref<4x1xf32, #tpu.memory_space<vmem>>, vector<4x1xf32>
    %c0_274 = arith.constant 0 : index
    %c0_275 = arith.constant 0 : index
    %233 = vector.load %arg7[%c0_274, %c0_275] : memref<4x1xf32, #tpu.memory_space<vmem>>, vector<4x1xf32>
    %cst_276 = arith.constant dense<0.000000e+00> : vector<4xf32>
    %234 = vector.multi_reduction <add>, %231, %cst_276 [1] : vector<4x512xf32> to vector<4xf32>
    %235 = vector.shape_cast %234 : vector<4xf32> to vector<4x1xf32>
    %cst_277 = arith.constant 5.120000e+02 : f32
    %236 = vector.broadcast %cst_277 : f32 to vector<4x1xf32>
    %237 = arith.divf %235, %236 : vector<4x1xf32>
    %238 = vector.broadcast %237 : vector<4x1xf32> to vector<4x512xf32>
    %239 = arith.subf %231, %238 : vector<4x512xf32>
    %240 = arith.mulf %239, %239 : vector<4x512xf32>
    %cst_278 = arith.constant dense<0.000000e+00> : vector<4xf32>
    %241 = vector.multi_reduction <add>, %240, %cst_278 [1] : vector<4x512xf32> to vector<4xf32>
    %242 = vector.shape_cast %241 : vector<4xf32> to vector<4x1xf32>
    %cst_279 = arith.constant 5.120000e+02 : f32
    %243 = vector.broadcast %cst_279 : f32 to vector<4x1xf32>
    %244 = arith.divf %242, %243 : vector<4x1xf32>
    %cst_280 = arith.constant 9.99999974E-6 : f32
    %245 = vector.broadcast %cst_280 : f32 to vector<4x1xf32>
    %246 = arith.addf %244, %245 : vector<4x1xf32>
    %247 = math.rsqrt %246 : vector<4x1xf32>
    %248 = arith.mulf %232, %247 : vector<4x1xf32>
    %249 = vector.broadcast %248 : vector<4x1xf32> to vector<4x512xf32>
    %250 = arith.mulf %239, %249 : vector<4x512xf32>
    %251 = vector.broadcast %233 : vector<4x1xf32> to vector<4x512xf32>
    %252 = arith.addf %250, %251 : vector<4x512xf32>
    %253 = vector.extract_strided_slice %0 {offsets = [0, 0], sizes = [4, 256], strides = [1, 1]} : vector<8x256xf32> to vector<4x256xf32>
    %254 = vector.extract_strided_slice %252 {offsets = [0, 0], sizes = [4, 256], strides = [1, 1]} : vector<4x512xf32> to vector<4x256xf32>
    %255 = arith.addf %253, %254 : vector<4x256xf32>
    %c0_281 = arith.constant 0 : index
    %c0_282 = arith.constant 0 : index
    %256 = vector.load %arg8[%c0_281, %c0_282] : memref<8x256xf32, #tpu.memory_space<vmem>>, vector<4x256xf32>
    tpu.vector_store %arg8[%c0_281, %c0_282], %255 {strides = array<i32>} : memref<8x256xf32, #tpu.memory_space<vmem>>, vector<4x256xf32>,
    %257 = vector.extract_strided_slice %0 {offsets = [4, 0], sizes = [4, 256], strides = [1, 1]} : vector<8x256xf32> to vector<4x256xf32>
    %258 = vector.extract_strided_slice %252 {offsets = [0, 256], sizes = [4, 256], strides = [1, 1]} : vector<4x512xf32> to vector<4x256xf32>
    %259 = arith.addf %257, %258 : vector<4x256xf32>
    %c4_283 = arith.constant 4 : index
    %c0_284 = arith.constant 0 : index
    %260 = vector.load %arg8[%c4_283, %c0_284] : memref<8x256xf32, #tpu.memory_space<vmem>>, vector<4x256xf32>
    tpu.vector_store %arg8[%c4_283, %c0_284], %259 {strides = array<i32>} : memref<8x256xf32, #tpu.memory_space<vmem>>, vector<4x256xf32>,
    return
  }
  func.func @transform_0(%arg0: i32) -> (i32, i32) {
    %c0_i32 = arith.constant 0 : i32
    %c0_i32_0 = arith.constant 0 : i32
    %c0_i32_1 = arith.constant 0 : i32
    return %c0_i32, %c0_i32_0 : i32, i32
  }
  func.func @transform_1(%arg0: i32) -> (i32, i32) {
    %c0_i32 = arith.constant 0 : i32
    %c0_i32_0 = arith.constant 0 : i32
    %c0_i32_1 = arith.constant 0 : i32
    return %c0_i32, %c0_i32_0 : i32, i32
  }
  func.func @transform_2(%arg0: i32) -> (i32, i32) {
    %c0_i32 = arith.constant 0 : i32
    %c0_i32_0 = arith.constant 0 : i32
    %c0_i32_1 = arith.constant 0 : i32
    return %c0_i32, %c0_i32_0 : i32, i32
  }
  func.func @transform_3(%arg0: i32) -> (i32, i32) {
    %c0_i32 = arith.constant 0 : i32
    %c0_i32_0 = arith.constant 0 : i32
    %c0_i32_1 = arith.constant 0 : i32
    return %c0_i32, %c0_i32_0 : i32, i32
  }
  func.func @transform_4(%arg0: i32) -> (i32, i32) {
    %c0_i32 = arith.constant 0 : i32
    %c0_i32_0 = arith.constant 0 : i32
    %c0_i32_1 = arith.constant 0 : i32
    return %c0_i32, %c0_i32_0 : i32, i32
  }
  func.func @transform_5(%arg0: i32) -> (i32, i32) {
    %c0_i32 = arith.constant 0 : i32
    %c0_i32_0 = arith.constant 0 : i32
    %c0_i32_1 = arith.constant 0 : i32
    return %c0_i32, %c0_i32_0 : i32, i32
  }
  func.func @transform_6(%arg0: i32) -> (i32, i32) {
    %c0_i32 = arith.constant 0 : i32
    %c0_i32_0 = arith.constant 0 : i32
    %c0_i32_1 = arith.constant 0 : i32
    return %c0_i32, %c0_i32_0 : i32, i32
  }
  func.func @transform_7(%arg0: i32) -> (i32, i32) {
    %c0_i32 = arith.constant 0 : i32
    %c0_i32_0 = arith.constant 0 : i32
    %c0_i32_1 = arith.constant 0 : i32
    return %c0_i32, %c0_i32_0 : i32, i32
  }
}

</mosaic_0001>

<llo_original>
// kernel: boundary_refinement.1
$region0: #{boundary_refinement.1}
  #allocation0 [shape = 'u32[]', space=smem, size = 0x4, offset = 0x4, fixed_abs, tag = 'smem constant byte address 0x4 - core index']
  #allocation1 [shape = 'u32[144,128]{1,0:T(1,128)}', space=vmem, size = 0x12000, scoped, tag = 'internal scratch']
  #allocation2 [shape = 'f32[2,18,18,4]{3,2,1,0:T(8,128)}', space=vmem, size = 0x6c000, scoped, tag = 'scratch operand']
  #allocation3 [shape = 'f32[512,36]{1,0:T(8,128)}', space=vmem, size = 0x40000, scoped, tag = 'scratch operand']
  %s0 = inlined_call_operand.vmem [shape: f32[8,256], index: 0, kind: input, shape index: {}]
  %s1 = inlined_call_operand.vmem [shape: f32[4,36], index: 1, kind: input, shape index: {}]
  %s2 = inlined_call_operand.vmem [shape: f32[4,1], index: 2, kind: input, shape index: {}]
  %s3 = inlined_call_operand.vmem [shape: f32[4,1], index: 3, kind: input, shape index: {}]
  %s4 = inlined_call_operand.vmem [shape: f32[4,36], index: 4, kind: input, shape index: {}]
  %s5 = inlined_call_operand.vmem [shape: f32[4,1], index: 5, kind: input, shape index: {}]
  %s6 = inlined_call_operand.vmem [shape: f32[4,1], index: 6, kind: input, shape index: {}]
  %s7 = inlined_call_operand.vmem [shape: f32[8,256], index: 7, kind: output, shape index: {}]
  %s8 = sld [smem:[#allocation0]]
  $region38: #{boundary_refinement.1} parent=0
    _
  %s10 = ssub.s32 1, %s8
  %s11 = scalar_select 0, %s10, %s8
  // Predicated region
  $region2: #{boundary_refinement.1} parent=0 // pred_check
    _
  $region3: #{boundary_refinement.1} parent=0 // pred_check_branch
    %13 = sbr.rel (0) target = $region5
  $region4: #{boundary_refinement.1} parent=0 // pred_region
    _
  $region5: #{boundary_refinement.1} parent=0 // pred_fallthru
    _
  // Predicated region
  $region6: #{boundary_refinement.1} parent=0 // pred_check
    _
  $region7: #{boundary_refinement.1} parent=0 // pred_check_branch
    %15 = sbr.rel (0) target = $region9
  $region8: #{boundary_refinement.1} parent=0 // pred_region
    _
  $region9: #{boundary_refinement.1} parent=0 // pred_fallthru
    _
  // Predicated region
  $region10: #{boundary_refinement.1} parent=0 // pred_check
    _
  $region11: #{boundary_refinement.1} parent=0 // pred_check_branch
    %17 = sbr.rel (0) target = $region13
  $region12: #{boundary_refinement.1} parent=0 // pred_region
    _
  $region13: #{boundary_refinement.1} parent=0 // pred_fallthru
    _
  // Predicated region
  $region14: #{boundary_refinement.1} parent=0 // pred_check
    _
  $region15: #{boundary_refinement.1} parent=0 // pred_check_branch
    %19 = sbr.rel (0) target = $region17
  $region16: #{boundary_refinement.1} parent=0 // pred_region
    _
  $region17: #{boundary_refinement.1} parent=0 // pred_fallthru
    _
  // Predicated region
  $region18: #{boundary_refinement.1} parent=0 // pred_check
    _
  $region19: #{boundary_refinement.1} parent=0 // pred_check_branch
    %21 = sbr.rel (0) target = $region21
  $region20: #{boundary_refinement.1} parent=0 // pred_region
    _
  $region21: #{boundary_refinement.1} parent=0 // pred_fallthru
    _
  // Predicated region
  $region22: #{boundary_refinement.1} parent=0 // pred_check
    _
  $region23: #{boundary_refinement.1} parent=0 // pred_check_branch
    %23 = sbr.rel (0) target = $region25
  $region24: #{boundary_refinement.1} parent=0 // pred_region
    _
  $region25: #{boundary_refinement.1} parent=0 // pred_fallthru
    _
  // Predicated region
  $region26: #{boundary_refinement.1} parent=0 // pred_check
    _
  $region27: #{boundary_refinement.1} parent=0 // pred_check_branch
    %25 = sbr.rel (0) target = $region29
  $region28: #{boundary_refinement.1} parent=0 // pred_region
    _
  $region29: #{boundary_refinement.1} parent=0 // pred_fallthru
    _
  %v26 = vld [vmem:[%s0] sm:$0xff]
  %v27 = vld [vmem:[%s0 + $0x8] sm:$0xff]
  %28 = vxpose.xlu0.b32.start [1/16] %v26, 128
  %29 = vxpose.xlu0.b32.cont [2/16] 0.0, 128
  %30 = vxpose.xlu0.b32.cont [3/16] 0.0, 128
  %31 = vxpose.xlu0.b32.cont [4/16] 0.0, 128
  %32 = vxpose.xlu0.b32.cont [5/16] 0.0, 128
  %33 = vxpose.xlu0.b32.cont [6/16] 0.0, 128
  %34 = vxpose.xlu0.b32.cont [7/16] 0.0, 128
  %35 = vxpose.xlu0.b32.cont [8/16] 0.0, 128
  %36 = vxpose.xlu0.b32.cont [9/16] 0.0, 128
  %37 = vxpose.xlu0.b32.cont [10/16] 0.0, 128
  %38 = vxpose.xlu0.b32.cont [11/16] 0.0, 128
  %39 = vxpose.xlu0.b32.cont [12/16] 0.0, 128
  %40 = vxpose.xlu0.b32.cont [13/16] 0.0, 128
  %41 = vxpose.xlu0.b32.cont [14/16] 0.0, 128
  %42 = vxpose.xlu0.b32.cont [15/16] 0.0, 128
  %43 = vxpose.xlu0.b32.end [16/16] 0.0, 128
  %v44 = vpop.trf.xlu0
  %v45 = vpop.trf.xlu0
  %v46 = vpop.trf.xlu0
  %v47 = vpop.trf.xlu0
  %v48 = vpop.trf.xlu0
  %v49 = vpop.trf.xlu0
  %v50 = vpop.trf.xlu0
  %v51 = vpop.trf.xlu0
  %v52 = vpop.trf.xlu0
  %v53 = vpop.trf.xlu0
  %v54 = vpop.trf.xlu0
  %v55 = vpop.trf.xlu0
  %v56 = vpop.trf.xlu0
  %v57 = vpop.trf.xlu0
  %v58 = vpop.trf.xlu0
  %v59 = vpop.trf.xlu0
  %60 = vxpose.xlu0.b32.start [1/16] %v27, 128
  %61 = vxpose.xlu0.b32.cont [2/16] 0.0, 128
  %62 = vxpose.xlu0.b32.cont [3/16] 0.0, 128
  %63 = vxpose.xlu0.b32.cont [4/16] 0.0, 128
  %64 = vxpose.xlu0.b32.cont [5/16] 0.0, 128
  %65 = vxpose.xlu0.b32.cont [6/16] 0.0, 128
  %66 = vxpose.xlu0.b32.cont [7/16] 0.0, 128
  %67 = vxpose.xlu0.b32.cont [8/16] 0.0, 128
  %68 = vxpose.xlu0.b32.cont [9/16] 0.0, 128
  %69 = vxpose.xlu0.b32.cont [10/16] 0.0, 128
  %70 = vxpose.xlu0.b32.cont [11/16] 0.0, 128
  %71 = vxpose.xlu0.b32.cont [12/16] 0.0, 128
  %72 = vxpose.xlu0.b32.cont [13/16] 0.0, 128
  %73 = vxpose.xlu0.b32.cont [14/16] 0.0, 128
  %74 = vxpose.xlu0.b32.cont [15/16] 0.0, 128
  %75 = vxpose.xlu0.b32.end [16/16] 0.0, 128
  %v76 = vpop.trf.xlu0
  %v77 = vpop.trf.xlu0
  %v78 = vpop.trf.xlu0
  %v79 = vpop.trf.xlu0
  %v80 = vpop.trf.xlu0
  %v81 = vpop.trf.xlu0
  %v82 = vpop.trf.xlu0
  %v83 = vpop.trf.xlu0
  %v84 = vpop.trf.xlu0
  %v85 = vpop.trf.xlu0
  %v86 = vpop.trf.xlu0
  %v87 = vpop.trf.xlu0
  %v88 = vpop.trf.xlu0
  %v89 = vpop.trf.xlu0
  %v90 = vpop.trf.xlu0
  %v91 = vpop.trf.xlu0
  %s92 = scalar_lea.vmem [#allocation2], 48
  %vm93 = vcmask 31744
  %94 = vst.msk [vmem:[%s92] sm:$0xff] %vm93, %v44
  %95 = vst.msk [vmem:[%s92 + $0x8] sm:$0xff] %vm93, %v45
  %96 = vst.msk [vmem:[%s92 + $0x18] sm:$0xff] %vm93, %v46
  %97 = vst.msk [vmem:[%s92 + $0x20] sm:$0xff] %vm93, %v47
  %98 = vst.msk [vmem:[%s92 + $0x30] sm:$0xff] %vm93, %v48
  %99 = vst.msk [vmem:[%s92 + $0x38] sm:$0xff] %vm93, %v49
  %100 = vst.msk [vmem:[%s92 + $0x48] sm:$0xff] %vm93, %v50
  %101 = vst.msk [vmem:[%s92 + $0x50] sm:$0xff] %vm93, %v51
  %102 = vst.msk [vmem:[%s92 + $0x60] sm:$0xff] %vm93, %v52
  %103 = vst.msk [vmem:[%s92 + $0x68] sm:$0xff] %vm93, %v53
  %104 = vst.msk [vmem:[%s92 + $0x78] sm:$0xff] %vm93, %v54
  %105 = vst.msk [vmem:[%s92 + $0x80] sm:$0xff] %vm93, %v55
  %106 = vst.msk [vmem:[%s92 + $0x90] sm:$0xff] %vm93, %v56
  %107 = vst.msk [vmem:[%s92 + $0x98] sm:$0xff] %vm93, %v57
  %108 = vst.msk [vmem:[%s92 + $0xa8] sm:$0xff] %vm93, %v58
  %109 = vst.msk [vmem:[%s92 + $0xb0] sm:$0xff] %vm93, %v59
  %110 = vst.msk [vmem:[%s92 + $0xc0] sm:$0xff] %vm93, %v76
  %111 = vst.msk [vmem:[%s92 + $0xc8] sm:$0xff] %vm93, %v77
  %112 = vst.msk [vmem:[%s92 + $0xd8] sm:$0xff] %vm93, %v78
  %113 = vst.msk [vmem:[%s92 + $0xe0] sm:$0xff] %vm93, %v79
  %114 = vst.msk [vmem:[%s92 + $0xf0] sm:$0xff] %vm93, %v80
  %115 = vst.msk [vmem:[%s92 + $0xf8] sm:$0xff] %vm93, %v81
  %116 = vst.msk [vmem:[%s92 + $0x108] sm:$0xff] %vm93, %v82
  %117 = vst.msk [vmem:[%s92 + $0x110] sm:$0xff] %vm93, %v83
  %118 = vst.msk [vmem:[%s92 + $0x120] sm:$0xff] %vm93, %v84
  %119 = vst.msk [vmem:[%s92 + $0x128] sm:$0xff] %vm93, %v85
  %120 = vst.msk [vmem:[%s92 + $0x138] sm:$0xff] %vm93, %v86
  %121 = vst.msk [vmem:[%s92 + $0x140] sm:$0xff] %vm93, %v87
  %122 = vst.msk [vmem:[%s92 + $0x150] sm:$0xff] %vm93, %v88
  %123 = vst.msk [vmem:[%s92 + $0x158] sm:$0xff] %vm93, %v89
  %124 = vst.msk [vmem:[%s92 + $0x168] sm:$0xff] %vm93, %v90
  %125 = vst.msk [vmem:[%s92 + $0x170] sm:$0xff] %vm93, %v91
  %126 = vst.msk [vmem:[#allocation2] sm:$0xff] %vm93, %v44
  %127 = vst.msk [vmem:[#allocation2 + $0x8] sm:$0xff] %vm93, %v45
  %128 = vst.msk [vmem:[#allocation2 + $0x18] sm:$0xff] %vm93, %v44
  %129 = vst.msk [vmem:[#allocation2 + $0x20] sm:$0xff] %vm93, %v45
  %v132 = vrot.slane %v26, 4
  %v133 = vrot.slane %v27, 4
  %136 = vxpose.xlu0.b32.start [1/16] %v132, 128
  %137 = vxpose.xlu0.b32.cont [2/16] 0.0, 128
  %138 = vxpose.xlu0.b32.cont [3/16] 0.0, 128
  %139 = vxpose.xlu0.b32.cont [4/16] 0.0, 128
  %140 = vxpose.xlu0.b32.cont [5/16] 0.0, 128
  %141 = vxpose.xlu0.b32.cont [6/16] 0.0, 128
  %142 = vxpose.xlu0.b32.cont [7/16] 0.0, 128
  %143 = vxpose.xlu0.b32.cont [8/16] 0.0, 128
  %144 = vxpose.xlu0.b32.cont [9/16] 0.0, 128
  %145 = vxpose.xlu0.b32.cont [10/16] 0.0, 128
  %146 = vxpose.xlu0.b32.cont [11/16] 0.0, 128
  %147 = vxpose.xlu0.b32.cont [12/16] 0.0, 128
  %148 = vxpose.xlu0.b32.cont [13/16] 0.0, 128
  %149 = vxpose.xlu0.b32.cont [14/16] 0.0, 128
  %150 = vxpose.xlu0.b32.cont [15/16] 0.0, 128
  %151 = vxpose.xlu0.b32.end [16/16] 0.0, 128
  %v152 = vpop.trf.xlu0
  %v153 = vpop.trf.xlu0
  %v154 = vpop.trf.xlu0
  %v155 = vpop.trf.xlu0
  %v156 = vpop.trf.xlu0
  %v157 = vpop.trf.xlu0
  %v158 = vpop.trf.xlu0
  %v159 = vpop.trf.xlu0
  %v160 = vpop.trf.xlu0
  %v161 = vpop.trf.xlu0
  %v162 = vpop.trf.xlu0
  %v163 = vpop.trf.xlu0
  %v164 = vpop.trf.xlu0
  %v165 = vpop.trf.xlu0
  %v166 = vpop.trf.xlu0
  %v167 = vpop.trf.xlu0
  %168 = vxpose.xlu0.b32.start [1/16] %v133, 128
  %169 = vxpose.xlu0.b32.cont [2/16] 0.0, 128
  %170 = vxpose.xlu0.b32.cont [3/16] 0.0, 128
  %171 = vxpose.xlu0.b32.cont [4/16] 0.0, 128
  %172 = vxpose.xlu0.b32.cont [5/16] 0.0, 128
  %173 = vxpose.xlu0.b32.cont [6/16] 0.0, 128
  %174 = vxpose.xlu0.b32.cont [7/16] 0.0, 128
  %175 = vxpose.xlu0.b32.cont [8/16] 0.0, 128
  %176 = vxpose.xlu0.b32.cont [9/16] 0.0, 128
  %177 = vxpose.xlu0.b32.cont [10/16] 0.0, 128
  %178 = vxpose.xlu0.b32.cont [11/16] 0.0, 128
  %179 = vxpose.xlu0.b32.cont [12/16] 0.0, 128
  %180 = vxpose.xlu0.b32.cont [13/16] 0.0, 128
  %181 = vxpose.xlu0.b32.cont [14/16] 0.0, 128
  %182 = vxpose.xlu0.b32.cont [15/16] 0.0, 128
  %183 = vxpose.xlu0.b32.end [16/16] 0.0, 128
  %v184 = vpop.trf.xlu0
  %v185 = vpop.trf.xlu0
  %v186 = vpop.trf.xlu0
  %v187 = vpop.trf.xlu0
  %v188 = vpop.trf.xlu0
  %v189 = vpop.trf.xlu0
  %v190 = vpop.trf.xlu0
  %v191 = vpop.trf.xlu0
  %v192 = vpop.trf.xlu0
  %v193 = vpop.trf.xlu0
  %v194 = vpop.trf.xlu0
  %v195 = vpop.trf.xlu0
  %v196 = vpop.trf.xlu0
  %v197 = vpop.trf.xlu0
  %v198 = vpop.trf.xlu0
  %v199 = vpop.trf.xlu0
  %s200 = scalar_lea.vmem [#allocation2], 480
  %201 = vst.msk [vmem:[%s200] sm:$0xff] %vm93, %v152
  %202 = vst.msk [vmem:[%s200 + $0x8] sm:$0xff] %vm93, %v153
  %203 = vst.msk [vmem:[%s200 + $0x18] sm:$0xff] %vm93, %v154
  %204 = vst.msk [vmem:[%s200 + $0x20] sm:$0xff] %vm93, %v155
  %205 = vst.msk [vmem:[%s200 + $0x30] sm:$0xff] %vm93, %v156
  %206 = vst.msk [vmem:[%s200 + $0x38] sm:$0xff] %vm93, %v157
  %207 = vst.msk [vmem:[%s200 + $0x48] sm:$0xff] %vm93, %v158
  %208 = vst.msk [vmem:[%s200 + $0x50] sm:$0xff] %vm93, %v159
  %209 = vst.msk [vmem:[%s200 + $0x60] sm:$0xff] %vm93, %v160
  %210 = vst.msk [vmem:[%s200 + $0x68] sm:$0xff] %vm93, %v161
  %211 = vst.msk [vmem:[%s200 + $0x78] sm:$0xff] %vm93, %v162
  %212 = vst.msk [vmem:[%s200 + $0x80] sm:$0xff] %vm93, %v163
  %213 = vst.msk [vmem:[%s200 + $0x90] sm:$0xff] %vm93, %v164
  %214 = vst.msk [vmem:[%s200 + $0x98] sm:$0xff] %vm93, %v165
  %215 = vst.msk [vmem:[%s200 + $0xa8] sm:$0xff] %vm93, %v166
  %216 = vst.msk [vmem:[%s200 + $0xb0] sm:$0xff] %vm93, %v167
  %217 = vst.msk [vmem:[%s200 + $0xc0] sm:$0xff] %vm93, %v184
  %218 = vst.msk [vmem:[%s200 + $0xc8] sm:$0xff] %vm93, %v185
  %219 = vst.msk [vmem:[%s200 + $0xd8] sm:$0xff] %vm93, %v186
  %220 = vst.msk [vmem:[%s200 + $0xe0] sm:$0xff] %vm93, %v187
  %221 = vst.msk [vmem:[%s200 + $0xf0] sm:$0xff] %vm93, %v188
  %222 = vst.msk [vmem:[%s200 + $0xf8] sm:$0xff] %vm93, %v189
  %223 = vst.msk [vmem:[%s200 + $0x108] sm:$0xff] %vm93, %v190
  %224 = vst.msk [vmem:[%s200 + $0x110] sm:$0xff] %vm93, %v191
  %225 = vst.msk [vmem:[%s200 + $0x120] sm:$0xff] %vm93, %v192
  %226 = vst.msk [vmem:[%s200 + $0x128] sm:$0xff] %vm93, %v193
  %227 = vst.msk [vmem:[%s200 + $0x138] sm:$0xff] %vm93, %v194
  %228 = vst.msk [vmem:[%s200 + $0x140] sm:$0xff] %vm93, %v195
  %229 = vst.msk [vmem:[%s200 + $0x150] sm:$0xff] %vm93, %v196
  %230 = vst.msk [vmem:[%s200 + $0x158] sm:$0xff] %vm93, %v197
  %231 = vst.msk [vmem:[%s200 + $0x168] sm:$0xff] %vm93, %v198
  %232 = vst.msk [vmem:[%s200 + $0x170] sm:$0xff] %vm93, %v199
  %s233 = scalar_lea.vmem [#allocation2], 432
  %234 = vst.msk [vmem:[%s233] sm:$0xff] %vm93, %v152
  %235 = vst.msk [vmem:[%s233 + $0x8] sm:$0xff] %vm93, %v153
  %236 = vst.msk [vmem:[%s233 + $0x18] sm:$0xff] %vm93, %v152
  %237 = vst.msk [vmem:[%s233 + $0x20] sm:$0xff] %vm93, %v153
  %v238 = vld [vmem:[#allocation2 + $0xf] sm:$0x1]
  %v239 = vld [vmem:[#allocation2 + $0x27] sm:$0x1]
  %v240 = vld [vmem:[#allocation2 + $0x3f] sm:$0x1]
  %v241 = vld [vmem:[#allocation2 + $0x57] sm:$0x1]
  %v242 = vld [vmem:[#allocation2 + $0x6f] sm:$0x1]
  %v243 = vld [vmem:[#allocation2 + $0x87] sm:$0x1]
  %v244 = vld [vmem:[#allocation2 + $0x9f] sm:$0x1]
  %v245 = vld [vmem:[#allocation2 + $0xb7] sm:$0x1]
  %v246 = vld [vmem:[#allocation2 + $0xcf] sm:$0x1]
  %v247 = vld [vmem:[#allocation2 + $0xe7] sm:$0x1]
  %v248 = vld [vmem:[#allocation2 + $0xff] sm:$0x1]
  %v249 = vld [vmem:[#allocation2 + $0x117] sm:$0x1]
  %v250 = vld [vmem:[#allocation2 + $0x12f] sm:$0x1]
  %v251 = vld [vmem:[#allocation2 + $0x147] sm:$0x1]
  %v252 = vld [vmem:[#allocation2 + $0x15f] sm:$0x1]
  %v253 = vld [vmem:[#allocation2 + $0x177] sm:$0x1]
  %v254 = vld [vmem:[#allocation2 + $0x18f] sm:$0x1]
  %v255 = vld [vmem:[#allocation2 + $0x1a7] sm:$0x1]
  %v256 = vld [vmem:[#allocation2 + $0x1bf] sm:$0x1]
  %v257 = vld [vmem:[#allocation2 + $0x1d7] sm:$0x1]
  %v258 = vld [vmem:[#allocation2 + $0x1ef] sm:$0x1]
  %v259 = vld [vmem:[#allocation2 + $0x207] sm:$0x1]
  %v260 = vld [vmem:[#allocation2 + $0x21f] sm:$0x1]
  %v261 = vld [vmem:[#allocation2 + $0x237] sm:$0x1]
  %v262 = vld [vmem:[#allocation2 + $0x24f] sm:$0x1]
  %v263 = vld [vmem:[#allocation2 + $0x267] sm:$0x1]
  %v264 = vld [vmem:[#allocation2 + $0x27f] sm:$0x1]
  %v265 = vld [vmem:[#allocation2 + $0x297] sm:$0x1]
  %v266 = vld [vmem:[#allocation2 + $0x2af] sm:$0x1]
  %v267 = vld [vmem:[#allocation2 + $0x2c7] sm:$0x1]
  %v268 = vld [vmem:[#allocation2 + $0x2df] sm:$0x1]
  %v269 = vld [vmem:[#allocation2 + $0x2f7] sm:$0x1]
  %v270 = vld [vmem:[#allocation2 + $0x30f] sm:$0x1]
  %v271 = vld [vmem:[#allocation2 + $0x327] sm:$0x1]
  %v272 = vld [vmem:[#allocation2 + $0x33f] sm:$0x1]
  %v273 = vld [vmem:[#allocation2 + $0x357] sm:$0x1]
  %v274 = vlaneseq
  %v275 = vshrl.u32 %v274, 7
  %v276 = vsub.s32 0, %v275
  %v277 = vrot.slane %v238, %v276
  %v278 = vlaneseq
  %v279 = vshrl.u32 %v278, 7
  %v280 = vsub.s32 0, %v279
  %v281 = vrot.slane %v239, %v280
  %v282 = vlaneseq
  %v283 = vshrl.u32 %v282, 7
  %v284 = vsub.s32 0, %v283
  %v285 = vrot.slane %v240, %v284
  %v286 = vlaneseq
  %v287 = vshrl.u32 %v286, 7
  %v288 = vsub.s32 0, %v287
  %v289 = vrot.slane %v241, %v288
  %v290 = vlaneseq
  %v291 = vshrl.u32 %v290, 7
  %v292 = vsub.s32 0, %v291
  %v293 = vrot.slane %v242, %v292
  %v294 = vlaneseq
  %v295 = vshrl.u32 %v294, 7
  %v296 = vsub.s32 0, %v295
  %v297 = vrot.slane %v243, %v296
  %v298 = vlaneseq
  %v299 = vshrl.u32 %v298, 7
  %v300 = vsub.s32 0, %v299
  %v301 = vrot.slane %v244, %v300
  %v302 = vlaneseq
  %v303 = vshrl.u32 %v302, 7
  %v304 = vsub.s32 0, %v303
  %v305 = vrot.slane %v245, %v304
  %v306 = vlaneseq
  %v307 = vshrl.u32 %v306, 7
  %v308 = vsub.s32 0, %v307
  %v309 = vrot.slane %v246, %v308
  %v310 = vlaneseq
  %v311 = vshrl.u32 %v310, 7
  %v312 = vsub.s32 0, %v311
  %v313 = vrot.slane %v247, %v312
  %v314 = vlaneseq
  %v315 = vshrl.u32 %v314, 7
  %v316 = vsub.s32 0, %v315
  %v317 = vrot.slane %v248, %v316
  %v318 = vlaneseq
  %v319 = vshrl.u32 %v318, 7
  %v320 = vsub.s32 0, %v319
  %v321 = vrot.slane %v249, %v320
  %v322 = vlaneseq
  %v323 = vshrl.u32 %v322, 7
  %v324 = vsub.s32 0, %v323
  %v325 = vrot.slane %v250, %v324
  %v326 = vlaneseq
  %v327 = vshrl.u32 %v326, 7
  %v328 = vsub.s32 0, %v327
  %v329 = vrot.slane %v251, %v328
  %v330 = vlaneseq
  %v331 = vshrl.u32 %v330, 7
  %v332 = vsub.s32 0, %v331
  %v333 = vrot.slane %v252, %v332
  %v334 = vlaneseq
  %v335 = vshrl.u32 %v334, 7
  %v336 = vsub.s32 0, %v335
  %v337 = vrot.slane %v253, %v336
  %v338 = vlaneseq
  %v339 = vshrl.u32 %v338, 7
  %v340 = vsub.s32 0, %v339
  %v341 = vrot.slane %v254, %v340
  %v342 = vlaneseq
  %v343 = vshrl.u32 %v342, 7
  %v344 = vsub.s32 0, %v343
  %v345 = vrot.slane %v255, %v344
  %v346 = vlaneseq
  %v347 = vshrl.u32 %v346, 7
  %v348 = vsub.s32 0, %v347
  %v349 = vrot.slane %v256, %v348
  %v350 = vlaneseq
  %v351 = vshrl.u32 %v350, 7
  %v352 = vsub.s32 0, %v351
  %v353 = vrot.slane %v257, %v352
  %v354 = vlaneseq
  %v355 = vshrl.u32 %v354, 7
  %v356 = vsub.s32 0, %v355
  %v357 = vrot.slane %v258, %v356
  %v358 = vlaneseq
  %v359 = vshrl.u32 %v358, 7
  %v360 = vsub.s32 0, %v359
  %v361 = vrot.slane %v259, %v360
  %v362 = vlaneseq
  %v363 = vshrl.u32 %v362, 7
  %v364 = vsub.s32 0, %v363
  %v365 = vrot.slane %v260, %v364
  %v366 = vlaneseq
  %v367 = vshrl.u32 %v366, 7
  %v368 = vsub.s32 0, %v367
  %v369 = vrot.slane %v261, %v368
  %v370 = vlaneseq
  %v371 = vshrl.u32 %v370, 7
  %v372 = vsub.s32 0, %v371
  %v373 = vrot.slane %v262, %v372
  %v374 = vlaneseq
  %v375 = vshrl.u32 %v374, 7
  %v376 = vsub.s32 0, %v375
  %v377 = vrot.slane %v263, %v376
  %v378 = vlaneseq
  %v379 = vshrl.u32 %v378, 7
  %v380 = vsub.s32 0, %v379
  %v381 = vrot.slane %v264, %v380
  %v382 = vlaneseq
  %v383 = vshrl.u32 %v382, 7
  %v384 = vsub.s32 0, %v383
  %v385 = vrot.slane %v265, %v384
  %v386 = vlaneseq
  %v387 = vshrl.u32 %v386, 7
  %v388 = vsub.s32 0, %v387
  %v389 = vrot.slane %v266, %v388
  %v390 = vlaneseq
  %v391 = vshrl.u32 %v390, 7
  %v392 = vsub.s32 0, %v391
  %v393 = vrot.slane %v267, %v392
  %v394 = vlaneseq
  %v395 = vshrl.u32 %v394, 7
  %v396 = vsub.s32 0, %v395
  %v397 = vrot.slane %v268, %v396
  %v398 = vlaneseq
  %v399 = vshrl.u32 %v398, 7
  %v400 = vsub.s32 0, %v399
  %v401 = vrot.slane %v269, %v400
  %v402 = vlaneseq
  %v403 = vshrl.u32 %v402, 7
  %v404 = vsub.s32 0, %v403
  %v405 = vrot.slane %v270, %v404
  %v406 = vlaneseq
  %v407 = vshrl.u32 %v406, 7
  %v408 = vsub.s32 0, %v407
  %v409 = vrot.slane %v271, %v408
  %v410 = vlaneseq
  %v411 = vshrl.u32 %v410, 7
  %v412 = vsub.s32 0, %v411
  %v413 = vrot.slane %v272, %v412
  %v414 = vlaneseq
  %v415 = vshrl.u32 %v414, 7
  %v416 = vsub.s32 0, %v415
  %v417 = vrot.slane %v273, %v416
  %vm418 = vcmask 25600
  %419 = vst.msk [vmem:[#allocation2 + $0x10] sm:$0x3] %vm418, %v277
  %420 = vst.msk [vmem:[#allocation2 + $0x28] sm:$0x3] %vm418, %v281
  %421 = vst.msk [vmem:[#allocation2 + $0x40] sm:$0x3] %vm418, %v285
  %422 = vst.msk [vmem:[#allocation2 + $0x58] sm:$0x3] %vm418, %v289
  %423 = vst.msk [vmem:[#allocation2 + $0x70] sm:$0x3] %vm418, %v293
  %424 = vst.msk [vmem:[#allocation2 + $0x88] sm:$0x3] %vm418, %v297
  %425 = vst.msk [vmem:[#allocation2 + $0xa0] sm:$0x3] %vm418, %v301
  %426 = vst.msk [vmem:[#allocation2 + $0xb8] sm:$0x3] %vm418, %v305
  %427 = vst.msk [vmem:[#allocation2 + $0xd0] sm:$0x3] %vm418, %v309
  %428 = vst.msk [vmem:[#allocation2 + $0xe8] sm:$0x3] %vm418, %v313
  %429 = vst.msk [vmem:[#allocation2 + $0x100] sm:$0x3] %vm418, %v317
  %430 = vst.msk [vmem:[#allocation2 + $0x118] sm:$0x3] %vm418, %v321
  %431 = vst.msk [vmem:[#allocation2 + $0x130] sm:$0x3] %vm418, %v325
  %432 = vst.msk [vmem:[#allocation2 + $0x148] sm:$0x3] %vm418, %v329
  %433 = vst.msk [vmem:[#allocation2 + $0x160] sm:$0x3] %vm418, %v333
  %434 = vst.msk [vmem:[#allocation2 + $0x178] sm:$0x3] %vm418, %v337
  %435 = vst.msk [vmem:[#allocation2 + $0x190] sm:$0x3] %vm418, %v341
  %436 = vst.msk [vmem:[#allocation2 + $0x1a8] sm:$0x3] %vm418, %v345
  %437 = vst.msk [vmem:[#allocation2 + $0x1c0] sm:$0x3] %vm418, %v349
  %438 = vst.msk [vmem:[#allocation2 + $0x1d8] sm:$0x3] %vm418, %v353
  %439 = vst.msk [vmem:[#allocation2 + $0x1f0] sm:$0x3] %vm418, %v357
  %440 = vst.msk [vmem:[#allocation2 + $0x208] sm:$0x3] %vm418, %v361
  %441 = vst.msk [vmem:[#allocation2 + $0x220] sm:$0x3] %vm418, %v365
  %442 = vst.msk [vmem:[#allocation2 + $0x238] sm:$0x3] %vm418, %v369
  %443 = vst.msk [vmem:[#allocation2 + $0x250] sm:$0x3] %vm418, %v373
  %444 = vst.msk [vmem:[#allocation2 + $0x268] sm:$0x3] %vm418, %v377
  %445 = vst.msk [vmem:[#allocation2 + $0x280] sm:$0x3] %vm418, %v381
  %446 = vst.msk [vmem:[#allocation2 + $0x298] sm:$0x3] %vm418, %v385
  %447 = vst.msk [vmem:[#allocation2 + $0x2b0] sm:$0x3] %vm418, %v389
  %448 = vst.msk [vmem:[#allocation2 + $0x2c8] sm:$0x3] %vm418, %v393
  %449 = vst.msk [vmem:[#allocation2 + $0x2e0] sm:$0x3] %vm418, %v397
  %450 = vst.msk [vmem:[#allocation2 + $0x2f8] sm:$0x3] %vm418, %v401
  %451 = vst.msk [vmem:[#allocation2 + $0x310] sm:$0x3] %vm418, %v405
  %452 = vst.msk [vmem:[#allocation2 + $0x328] sm:$0x3] %vm418, %v409
  %453 = vst.msk [vmem:[#allocation2 + $0x340] sm:$0x3] %vm418, %v413
  %454 = vst.msk [vmem:[#allocation2 + $0x358] sm:$0x3] %vm418, %v417
  %v455 = vld [vmem:[#allocation2] sm:$0xff]
  %v456 = vld [vmem:[#allocation2 + $0x8] sm:$0xff]
  %v457 = vld [vmem:[#allocation2 + $0x18] sm:$0xff]
  %v458 = vld [vmem:[#allocation2 + $0x20] sm:$0xff]
  %v459 = vld [vmem:[#allocation2 + $0x30] sm:$0xff]
  %v460 = vld [vmem:[#allocation2 + $0x38] sm:$0xff]
  %v461 = vld [vmem:[#allocation2 + $0x48] sm:$0xff]
  %v462 = vld [vmem:[#allocation2 + $0x50] sm:$0xff]
  %v463 = vld [vmem:[#allocation2 + $0x60] sm:$0xff]
  %v464 = vld [vmem:[#allocation2 + $0x68] sm:$0xff]
  %v465 = vld [vmem:[#allocation2 + $0x78] sm:$0xff]
  %v466 = vld [vmem:[#allocation2 + $0x80] sm:$0xff]
  %v467 = vld [vmem:[#allocation2 + $0x90] sm:$0xff]
  %v468 = vld [vmem:[#allocation2 + $0x98] sm:$0xff]
  %v469 = vld [vmem:[#allocation2 + $0xa8] sm:$0xff]
  %v470 = vld [vmem:[#allocation2 + $0xb0] sm:$0xff]
  %v471 = vld [vmem:[#allocation2 + $0xc0] sm:$0xff]
  %v472 = vld [vmem:[#allocation2 + $0xc8] sm:$0xff]
  %v473 = vld [vmem:[#allocation2 + $0xd8] sm:$0xff]
  %v474 = vld [vmem:[#allocation2 + $0xe0] sm:$0xff]
  %v475 = vld [vmem:[#allocation2 + $0xf0] sm:$0xff]
  %v476 = vld [vmem:[#allocation2 + $0xf8] sm:$0xff]
  %v477 = vld [vmem:[#allocation2 + $0x108] sm:$0xff]
  %v478 = vld [vmem:[#allocation2 + $0x110] sm:$0xff]
  %v479 = vld [vmem:[#allocation2 + $0x120] sm:$0xff]
  %v480 = vld [vmem:[#allocation2 + $0x128] sm:$0xff]
  %v481 = vld [vmem:[#allocation2 + $0x138] sm:$0xff]
  %v482 = vld [vmem:[#allocation2 + $0x140] sm:$0xff]
  %v483 = vld [vmem:[#allocation2 + $0x150] sm:$0xff]
  %v484 = vld [vmem:[#allocation2 + $0x158] sm:$0xff]
  %v485 = vld [vmem:[#allocation2 + $0x168] sm:$0xff]
  %v486 = vld [vmem:[#allocation2 + $0x170] sm:$0xff]
  %487 = vst.msk [vmem:[#allocation3] sm:$0xff] %vm93, %v455
  %488 = vst.msk [vmem:[#allocation3 + $0x8] sm:$0xff] %vm93, %v456
  %489 = vst.msk [vmem:[#allocation3 + $0x10] sm:$0xff] %vm93, %v457
  %490 = vst.msk [vmem:[#allocation3 + $0x18] sm:$0xff] %vm93, %v458
  %491 = vst.msk [vmem:[#allocation3 + $0x20] sm:$0xff] %vm93, %v459
  %492 = vst.msk [vmem:[#allocation3 + $0x28] sm:$0xff] %vm93, %v460
  %493 = vst.msk [vmem:[#allocation3 + $0x30] sm:$0xff] %vm93, %v461
  %494 = vst.msk [vmem:[#allocation3 + $0x38] sm:$0xff] %vm93, %v462
  %495 = vst.msk [vmem:[#allocation3 + $0x40] sm:$0xff] %vm93, %v463
  %496 = vst.msk [vmem:[#allocation3 + $0x48] sm:$0xff] %vm93, %v464
  %497 = vst.msk [vmem:[#allocation3 + $0x50] sm:$0xff] %vm93, %v465
  %498 = vst.msk [vmem:[#allocation3 + $0x58] sm:$0xff] %vm93, %v466
  %499 = vst.msk [vmem:[#allocation3 + $0x60] sm:$0xff] %vm93, %v467
  %500 = vst.msk [vmem:[#allocation3 + $0x68] sm:$0xff] %vm93, %v468
  %501 = vst.msk [vmem:[#allocation3 + $0x70] sm:$0xff] %vm93, %v469
  %502 = vst.msk [vmem:[#allocation3 + $0x78] sm:$0xff] %vm93, %v470
  %503 = vst.msk [vmem:[#allocation3 + $0x80] sm:$0xff] %vm93, %v471
  %504 = vst.msk [vmem:[#allocation3 + $0x88] sm:$0xff] %vm93, %v472
  %505 = vst.msk [vmem:[#allocation3 + $0x90] sm:$0xff] %vm93, %v473
  %506 = vst.msk [vmem:[#allocation3 + $0x98] sm:$0xff] %vm93, %v474
  %507 = vst.msk [vmem:[#allocation3 + $0xa0] sm:$0xff] %vm93, %v475
  %508 = vst.msk [vmem:[#allocation3 + $0xa8] sm:$0xff] %vm93, %v476
  %509 = vst.msk [vmem:[#allocation3 + $0xb0] sm:$0xff] %vm93, %v477
  %510 = vst.msk [vmem:[#allocation3 + $0xb8] sm:$0xff] %vm93, %v478
  %511 = vst.msk [vmem:[#allocation3 + $0xc0] sm:$0xff] %vm93, %v479
  %512 = vst.msk [vmem:[#allocation3 + $0xc8] sm:$0xff] %vm93, %v480
  %513 = vst.msk [vmem:[#allocation3 + $0xd0] sm:$0xff] %vm93, %v481
  %514 = vst.msk [vmem:[#allocation3 + $0xd8] sm:$0xff] %vm93, %v482
  %515 = vst.msk [vmem:[#allocation3 + $0xe0] sm:$0xff] %vm93, %v483
  %516 = vst.msk [vmem:[#allocation3 + $0xe8] sm:$0xff] %vm93, %v484
  %517 = vst.msk [vmem:[#allocation3 + $0xf0] sm:$0xff] %vm93, %v485
  %518 = vst.msk [vmem:[#allocation3 + $0xf8] sm:$0xff] %vm93, %v486
  %v519 = vld [vmem:[%s233] sm:$0xff]
  %v520 = vld [vmem:[%s233 + $0x8] sm:$0xff]
  %v521 = vld [vmem:[%s233 + $0x18] sm:$0xff]
  %v522 = vld [vmem:[%s233 + $0x20] sm:$0xff]
  %v523 = vld [vmem:[%s233 + $0x30] sm:$0xff]
  %v524 = vld [vmem:[%s233 + $0x38] sm:$0xff]
  %v525 = vld [vmem:[%s233 + $0x48] sm:$0xff]
  %v526 = vld [vmem:[%s233 + $0x50] sm:$0xff]
  %v527 = vld [vmem:[%s233 + $0x60] sm:$0xff]
  %v528 = vld [vmem:[%s233 + $0x68] sm:$0xff]
  %v529 = vld [vmem:[%s233 + $0x78] sm:$0xff]
  %v530 = vld [vmem:[%s233 + $0x80] sm:$0xff]
  %v531 = vld [vmem:[%s233 + $0x90] sm:$0xff]
  %v532 = vld [vmem:[%s233 + $0x98] sm:$0xff]
  %v533 = vld [vmem:[%s233 + $0xa8] sm:$0xff]
  %v534 = vld [vmem:[%s233 + $0xb0] sm:$0xff]
  %v535 = vld [vmem:[%s233 + $0xc0] sm:$0xff]
  %v536 = vld [vmem:[%s233 + $0xc8] sm:$0xff]
  %v537 = vld [vmem:[%s233 + $0xd8] sm:$0xff]
  %v538 = vld [vmem:[%s233 + $0xe0] sm:$0xff]
  %v539 = vld [vmem:[%s233 + $0xf0] sm:$0xff]
  %v540 = vld [vmem:[%s233 + $0xf8] sm:$0xff]
  %v541 = vld [vmem:[%s233 + $0x108] sm:$0xff]
  %v542 = vld [vmem:[%s233 + $0x110] sm:$0xff]
  %v543 = vld [vmem:[%s233 + $0x120] sm:$0xff]
  %v544 = vld [vmem:[%s233 + $0x128] sm:$0xff]
  %v545 = vld [vmem:[%s233 + $0x138] sm:$0xff]
  %v546 = vld [vmem:[%s233 + $0x140] sm:$0xff]
  %v547 = vld [vmem:[%s233 + $0x150] sm:$0xff]
  %v548 = vld [vmem:[%s233 + $0x158] sm:$0xff]
  %v549 = vld [vmem:[%s233 + $0x168] sm:$0xff]
  %v550 = vld [vmem:[%s233 + $0x170] sm:$0xff]
  %551 = vst.msk [vmem:[#allocation3 + $0x100] sm:$0xff] %vm93, %v519
  %552 = vst.msk [vmem:[#allocation3 + $0x108] sm:$0xff] %vm93, %v520
  %553 = vst.msk [vmem:[#allocation3 + $0x110] sm:$0xff] %vm93, %v521
  %554 = vst.msk [vmem:[#allocation3 + $0x118] sm:$0xff] %vm93, %v522
  %555 = vst.msk [vmem:[#allocation3 + $0x120] sm:$0xff] %vm93, %v523
  %556 = vst.msk [vmem:[#allocation3 + $0x128] sm:$0xff] %vm93, %v524
  %557 = vst.msk [vmem:[#allocation3 + $0x130] sm:$0xff] %vm93, %v525
  %558 = vst.msk [vmem:[#allocation3 + $0x138] sm:$0xff] %vm93, %v526
  %559 = vst.msk [vmem:[#allocation3 + $0x140] sm:$0xff] %vm93, %v527
  %560 = vst.msk [vmem:[#allocation3 + $0x148] sm:$0xff] %vm93, %v528
  %561 = vst.msk [vmem:[#allocation3 + $0x150] sm:$0xff] %vm93, %v529
  %562 = vst.msk [vmem:[#allocation3 + $0x158] sm:$0xff] %vm93, %v530
  %563 = vst.msk [vmem:[#allocation3 + $0x160] sm:$0xff] %vm93, %v531
  %564 = vst.msk [vmem:[#allocation3 + $0x168] sm:$0xff] %vm93, %v532
  %565 = vst.msk [vmem:[#allocation3 + $0x170] sm:$0xff] %vm93, %v533
  %566 = vst.msk [vmem:[#allocation3 + $0x178] sm:$0xff] %vm93, %v534
  %567 = vst.msk [vmem:[#allocation3 + $0x180] sm:$0xff] %vm93, %v535
  %568 = vst.msk [vmem:[#allocation3 + $0x188] sm:$0xff] %vm93, %v536
  %569 = vst.msk [vmem:[#allocation3 + $0x190] sm:$0xff] %vm93, %v537
  %570 = vst.msk [vmem:[#allocation3 + $0x198] sm:$0xff] %vm93, %v538
  %571 = vst.msk [vmem:[#allocation3 + $0x1a0] sm:$0xff] %vm93, %v539
  %572 = vst.msk [vmem:[#allocation3 + $0x1a8] sm:$0xff] %vm93, %v540
  %573 = vst.msk [vmem:[#allocation3 + $0x1b0] sm:$0xff] %vm93, %v541
  %574 = vst.msk [vmem:[#allocation3 + $0x1b8] sm:$0xff] %vm93, %v542
  %575 = vst.msk [vmem:[#allocation3 + $0x1c0] sm:$0xff] %vm93, %v543
  %576 = vst.msk [vmem:[#allocation3 + $0x1c8] sm:$0xff] %vm93, %v544
  %577 = vst.msk [vmem:[#allocation3 + $0x1d0] sm:$0xff] %vm93, %v545
  %578 = vst.msk [vmem:[#allocation3 + $0x1d8] sm:$0xff] %vm93, %v546
  %579 = vst.msk [vmem:[#allocation3 + $0x1e0] sm:$0xff] %vm93, %v547
  %580 = vst.msk [vmem:[#allocation3 + $0x1e8] sm:$0xff] %vm93, %v548
  %581 = vst.msk [vmem:[#allocation3 + $0x1f0] sm:$0xff] %vm93, %v549
  %582 = vst.msk [vmem:[#allocation3 + $0x1f8] sm:$0xff] %vm93, %v550
  %v583 = vld [vmem:[#allocation2 + $0x1] sm:$0xff]
  %v584 = vld [vmem:[#allocation2 + $0x9] sm:$0xff]
  %v585 = vld [vmem:[#allocation2 + $0x19] sm:$0xff]
  %v586 = vld [vmem:[#allocation2 + $0x21] sm:$0xff]
  %v587 = vld [vmem:[#allocation2 + $0x31] sm:$0xff]
  %v588 = vld [vmem:[#allocation2 + $0x39] sm:$0xff]
  %v589 = vld [vmem:[#allocation2 + $0x49] sm:$0xff]
  %v590 = vld [vmem:[#allocation2 + $0x51] sm:$0xff]
  %v591 = vld [vmem:[#allocation2 + $0x61] sm:$0xff]
  %v592 = vld [vmem:[#allocation2 + $0x69] sm:$0xff]
  %v593 = vld [vmem:[#allocation2 + $0x79] sm:$0xff]
  %v594 = vld [vmem:[#allocation2 + $0x81] sm:$0xff]
  %v595 = vld [vmem:[#allocation2 + $0x91] sm:$0xff]
  %v596 = vld [vmem:[#allocation2 + $0x99] sm:$0xff]
  %v597 = vld [vmem:[#allocation2 + $0xa9] sm:$0xff]
  %v598 = vld [vmem:[#allocation2 + $0xb1] sm:$0xff]
  %v599 = vld [vmem:[#allocation2 + $0xc1] sm:$0xff]
  %v600 = vld [vmem:[#allocation2 + $0xc9] sm:$0xff]
  %v601 = vld [vmem:[#allocation2 + $0xd9] sm:$0xff]
  %v602 = vld [vmem:[#allocation2 + $0xe1] sm:$0xff]
  %v603 = vld [vmem:[#allocation2 + $0xf1] sm:$0xff]
  %v604 = vld [vmem:[#allocation2 + $0xf9] sm:$0xff]
  %v605 = vld [vmem:[#allocation2 + $0x109] sm:$0xff]
  %v606 = vld [vmem:[#allocation2 + $0x111] sm:$0xff]
  %v607 = vld [vmem:[#allocation2 + $0x121] sm:$0xff]
  %v608 = vld [vmem:[#allocation2 + $0x129] sm:$0xff]
  %v609 = vld [vmem:[#allocation2 + $0x139] sm:$0xff]
  %v610 = vld [vmem:[#allocation2 + $0x141] sm:$0xff]
  %v611 = vld [vmem:[#allocation2 + $0x151] sm:$0xff]
  %v612 = vld [vmem:[#allocation2 + $0x159] sm:$0xff]
  %v613 = vld [vmem:[#allocation2 + $0x169] sm:$0xff]
  %v614 = vld [vmem:[#allocation2 + $0x171] sm:$0xff]
  %647 = vrot.lane.b32.xlu0 %v583, 4
  %v648 = vpop.permute.xlu0 %647
  %649 = vrot.lane.b32.xlu0 %v584, 4
  %v650 = vpop.permute.xlu0 %649
  %651 = vrot.lane.b32.xlu0 %v585, 4
  %v652 = vpop.permute.xlu0 %651
  %653 = vrot.lane.b32.xlu0 %v586, 4
  %v654 = vpop.permute.xlu0 %653
  %655 = vrot.lane.b32.xlu0 %v587, 4
  %v656 = vpop.permute.xlu0 %655
  %657 = vrot.lane.b32.xlu0 %v588, 4
  %v658 = vpop.permute.xlu0 %657
  %659 = vrot.lane.b32.xlu0 %v589, 4
  %v660 = vpop.permute.xlu0 %659
  %661 = vrot.lane.b32.xlu0 %v590, 4
  %v662 = vpop.permute.xlu0 %661
  %663 = vrot.lane.b32.xlu0 %v591, 4
  %v664 = vpop.permute.xlu0 %663
  %665 = vrot.lane.b32.xlu0 %v592, 4
  %v666 = vpop.permute.xlu0 %665
  %667 = vrot.lane.b32.xlu0 %v593, 4
  %v668 = vpop.permute.xlu0 %667
  %669 = vrot.lane.b32.xlu0 %v594, 4
  %v670 = vpop.permute.xlu0 %669
  %671 = vrot.lane.b32.xlu0 %v595, 4
  %v672 = vpop.permute.xlu0 %671
  %673 = vrot.lane.b32.xlu0 %v596, 4
  %v674 = vpop.permute.xlu0 %673
  %675 = vrot.lane.b32.xlu0 %v597, 4
  %v676 = vpop.permute.xlu0 %675
  %677 = vrot.lane.b32.xlu0 %v598, 4
  %v678 = vpop.permute.xlu0 %677
  %679 = vrot.lane.b32.xlu0 %v599, 4
  %v680 = vpop.permute.xlu0 %679
  %681 = vrot.lane.b32.xlu0 %v600, 4
  %v682 = vpop.permute.xlu0 %681
  %683 = vrot.lane.b32.xlu0 %v601, 4
  %v684 = vpop.permute.xlu0 %683
  %685 = vrot.lane.b32.xlu0 %v602, 4
  %v686 = vpop.permute.xlu0 %685
  %687 = vrot.lane.b32.xlu0 %v603, 4
  %v688 = vpop.permute.xlu0 %687
  %689 = vrot.lane.b32.xlu0 %v604, 4
  %v690 = vpop.permute.xlu0 %689
  %691 = vrot.lane.b32.xlu0 %v605, 4
  %v692 = vpop.permute.xlu0 %691
  %693 = vrot.lane.b32.xlu0 %v606, 4
  %v694 = vpop.permute.xlu0 %693
  %695 = vrot.lane.b32.xlu0 %v607, 4
  %v696 = vpop.permute.xlu0 %695
  %697 = vrot.lane.b32.xlu0 %v608, 4
  %v698 = vpop.permute.xlu0 %697
  %699 = vrot.lane.b32.xlu0 %v609, 4
  %v700 = vpop.permute.xlu0 %699
  %701 = vrot.lane.b32.xlu0 %v610, 4
  %v702 = vpop.permute.xlu0 %701
  %703 = vrot.lane.b32.xlu0 %v611, 4
  %v704 = vpop.permute.xlu0 %703
  %705 = vrot.lane.b32.xlu0 %v612, 4
  %v706 = vpop.permute.xlu0 %705
  %707 = vrot.lane.b32.xlu0 %v613, 4
  %v708 = vpop.permute.xlu0 %707
  %709 = vrot.lane.b32.xlu0 %v614, 4
  %v710 = vpop.permute.xlu0 %709
  %vm743 = vcmask 64544
  %744 = vst.msk [vmem:[#allocation3] sm:$0xff] %vm743, %v648
  %745 = vst.msk [vmem:[#allocation3 + $0x8] sm:$0xff] %vm743, %v650
  %746 = vst.msk [vmem:[#allocation3 + $0x10] sm:$0xff] %vm743, %v652
  %747 = vst.msk [vmem:[#allocation3 + $0x18] sm:$0xff] %vm743, %v654
  %748 = vst.msk [vmem:[#allocation3 + $0x20] sm:$0xff] %vm743, %v656
  %749 = vst.msk [vmem:[#allocation3 + $0x28] sm:$0xff] %vm743, %v658
  %750 = vst.msk [vmem:[#allocation3 + $0x30] sm:$0xff] %vm743, %v660
  %751 = vst.msk [vmem:[#allocation3 + $0x38] sm:$0xff] %vm743, %v662
  %752 = vst.msk [vmem:[#allocation3 + $0x40] sm:$0xff] %vm743, %v664
  %753 = vst.msk [vmem:[#allocation3 + $0x48] sm:$0xff] %vm743, %v666
  %754 = vst.msk [vmem:[#allocation3 + $0x50] sm:$0xff] %vm743, %v668
  %755 = vst.msk [vmem:[#allocation3 + $0x58] sm:$0xff] %vm743, %v670
  %756 = vst.msk [vmem:[#allocation3 + $0x60] sm:$0xff] %vm743, %v672
  %757 = vst.msk [vmem:[#allocation3 + $0x68] sm:$0xff] %vm743, %v674
  %758 = vst.msk [vmem:[#allocation3 + $0x70] sm:$0xff] %vm743, %v676
  %759 = vst.msk [vmem:[#allocation3 + $0x78] sm:$0xff] %vm743, %v678
  %760 = vst.msk [vmem:[#allocation3 + $0x80] sm:$0xff] %vm743, %v680
  %761 = vst.msk [vmem:[#allocation3 + $0x88] sm:$0xff] %vm743, %v682
  %762 = vst.msk [vmem:[#allocation3 + $0x90] sm:$0xff] %vm743, %v684
  %763 = vst.msk [vmem:[#allocation3 + $0x98] sm:$0xff] %vm743, %v686
  %764 = vst.msk [vmem:[#allocation3 + $0xa0] sm:$0xff] %vm743, %v688
  %765 = vst.msk [vmem:[#allocation3 + $0xa8] sm:$0xff] %vm743, %v690
  %766 = vst.msk [vmem:[#allocation3 + $0xb0] sm:$0xff] %vm743, %v692
  %767 = vst.msk [vmem:[#allocation3 + $0xb8] sm:$0xff] %vm743, %v694
  %768 = vst.msk [vmem:[#allocation3 + $0xc0] sm:$0xff] %vm743, %v696
  %769 = vst.msk [vmem:[#allocation3 + $0xc8] sm:$0xff] %vm743, %v698
  %770 = vst.msk [vmem:[#allocation3 + $0xd0] sm:$0xff] %vm743, %v700
  %771 = vst.msk [vmem:[#allocation3 + $0xd8] sm:$0xff] %vm743, %v702
  %772 = vst.msk [vmem:[#allocation3 + $0xe0] sm:$0xff] %vm743, %v704
  %773 = vst.msk [vmem:[#allocation3 + $0xe8] sm:$0xff] %vm743, %v706
  %774 = vst.msk [vmem:[#allocation3 + $0xf0] sm:$0xff] %vm743, %v708
  %775 = vst.msk [vmem:[#allocation3 + $0xf8] sm:$0xff] %vm743, %v710
  %v776 = vld [vmem:[%s233 + $0x1] sm:$0xff]
  %v777 = vld [vmem:[%s233 + $0x9] sm:$0xff]
  %v778 = vld [vmem:[%s233 + $0x19] sm:$0xff]
  %v779 = vld [vmem:[%s233 + $0x21] sm:$0xff]
  %v780 = vld [vmem:[%s233 + $0x31] sm:$0xff]
  %v781 = vld [vmem:[%s233 + $0x39] sm:$0xff]
  %v782 = vld [vmem:[%s233 + $0x49] sm:$0xff]
  %v783 = vld [vmem:[%s233 + $0x51] sm:$0xff]
  %v784 = vld [vmem:[%s233 + $0x61] sm:$0xff]
  %v785 = vld [vmem:[%s233 + $0x69] sm:$0xff]
  %v786 = vld [vmem:[%s233 + $0x79] sm:$0xff]
  %v787 = vld [vmem:[%s233 + $0x81] sm:$0xff]
  %v788 = vld [vmem:[%s233 + $0x91] sm:$0xff]
  %v789 = vld [vmem:[%s233 + $0x99] sm:$0xff]
  %v790 = vld [vmem:[%s233 + $0xa9] sm:$0xff]
  %v791 = vld [vmem:[%s233 + $0xb1] sm:$0xff]
  %v792 = vld [vmem:[%s233 + $0xc1] sm:$0xff]
  %v793 = vld [vmem:[%s233 + $0xc9] sm:$0xff]
  %v794 = vld [vmem:[%s233 + $0xd9] sm:$0xff]
  %v795 = vld [vmem:[%s233 + $0xe1] sm:$0xff]
  %v796 = vld [vmem:[%s233 + $0xf1] sm:$0xff]
  %v797 = vld [vmem:[%s233 + $0xf9] sm:$0xff]
  %v798 = vld [vmem:[%s233 + $0x109] sm:$0xff]
  %v799 = vld [vmem:[%s233 + $0x111] sm:$0xff]
  %v800 = vld [vmem:[%s233 + $0x121] sm:$0xff]
  %v801 = vld [vmem:[%s233 + $0x129] sm:$0xff]
  %v802 = vld [vmem:[%s233 + $0x139] sm:$0xff]
  %v803 = vld [vmem:[%s233 + $0x141] sm:$0xff]
  %v804 = vld [vmem:[%s233 + $0x151] sm:$0xff]
  %v805 = vld [vmem:[%s233 + $0x159] sm:$0xff]
  %v806 = vld [vmem:[%s233 + $0x169] sm:$0xff]
  %v807 = vld [vmem:[%s233 + $0x171] sm:$0xff]
  %840 = vrot.lane.b32.xlu0 %v776, 4
  %v841 = vpop.permute.xlu0 %840
  %842 = vrot.lane.b32.xlu0 %v777, 4
  %v843 = vpop.permute.xlu0 %842
  %844 = vrot.lane.b32.xlu0 %v778, 4
  %v845 = vpop.permute.xlu0 %844
  %846 = vrot.lane.b32.xlu0 %v779, 4
  %v847 = vpop.permute.xlu0 %846
  %848 = vrot.lane.b32.xlu0 %v780, 4
  %v849 = vpop.permute.xlu0 %848
  %850 = vrot.lane.b32.xlu0 %v781, 4
  %v851 = vpop.permute.xlu0 %850
  %852 = vrot.lane.b32.xlu0 %v782, 4
  %v853 = vpop.permute.xlu0 %852
  %854 = vrot.lane.b32.xlu0 %v783, 4
  %v855 = vpop.permute.xlu0 %854
  %856 = vrot.lane.b32.xlu0 %v784, 4
  %v857 = vpop.permute.xlu0 %856
  %858 = vrot.lane.b32.xlu0 %v785, 4
  %v859 = vpop.permute.xlu0 %858
  %860 = vrot.lane.b32.xlu0 %v786, 4
  %v861 = vpop.permute.xlu0 %860
  %862 = vrot.lane.b32.xlu0 %v787, 4
  %v863 = vpop.permute.xlu0 %862
  %864 = vrot.lane.b32.xlu0 %v788, 4
  %v865 = vpop.permute.xlu0 %864
  %866 = vrot.lane.b32.xlu0 %v789, 4
  %v867 = vpop.permute.xlu0 %866
  %868 = vrot.lane.b32.xlu0 %v790, 4
  %v869 = vpop.permute.xlu0 %868
  %870 = vrot.lane.b32.xlu0 %v791, 4
  %v871 = vpop.permute.xlu0 %870
  %872 = vrot.lane.b32.xlu0 %v792, 4
  %v873 = vpop.permute.xlu0 %872
  %874 = vrot.lane.b32.xlu0 %v793, 4
  %v875 = vpop.permute.xlu0 %874
  %876 = vrot.lane.b32.xlu0 %v794, 4
  %v877 = vpop.permute.xlu0 %876
  %878 = vrot.lane.b32.xlu0 %v795, 4
  %v879 = vpop.permute.xlu0 %878
  %880 = vrot.lane.b32.xlu0 %v796, 4
  %v881 = vpop.permute.xlu0 %880
  %882 = vrot.lane.b32.xlu0 %v797, 4
  %v883 = vpop.permute.xlu0 %882
  %884 = vrot.lane.b32.xlu0 %v798, 4
  %v885 = vpop.permute.xlu0 %884
  %886 = vrot.lane.b32.xlu0 %v799, 4
  %v887 = vpop.permute.xlu0 %886
  %888 = vrot.lane.b32.xlu0 %v800, 4
  %v889 = vpop.permute.xlu0 %888
  %890 = vrot.lane.b32.xlu0 %v801, 4
  %v891 = vpop.permute.xlu0 %890
  %892 = vrot.lane.b32.xlu0 %v802, 4
  %v893 = vpop.permute.xlu0 %892
  %894 = vrot.lane.b32.xlu0 %v803, 4
  %v895 = vpop.permute.xlu0 %894
  %896 = vrot.lane.b32.xlu0 %v804, 4
  %v897 = vpop.permute.xlu0 %896
  %898 = vrot.lane.b32.xlu0 %v805, 4
  %v899 = vpop.permute.xlu0 %898
  %900 = vrot.lane.b32.xlu0 %v806, 4
  %v901 = vpop.permute.xlu0 %900
  %902 = vrot.lane.b32.xlu0 %v807, 4
  %v903 = vpop.permute.xlu0 %902
  %936 = vst.msk [vmem:[#allocation3 + $0x100] sm:$0xff] %vm743, %v841
  %937 = vst.msk [vmem:[#allocation3 + $0x108] sm:$0xff] %vm743, %v843
  %938 = vst.msk [vmem:[#allocation3 + $0x110] sm:$0xff] %vm743, %v845
  %939 = vst.msk [vmem:[#allocation3 + $0x118] sm:$0xff] %vm743, %v847
  %940 = vst.msk [vmem:[#allocation3 + $0x120] sm:$0xff] %vm743, %v849
  %941 = vst.msk [vmem:[#allocation3 + $0x128] sm:$0xff] %vm743, %v851
  %942 = vst.msk [vmem:[#allocation3 + $0x130] sm:$0xff] %vm743, %v853
  %943 = vst.msk [vmem:[#allocation3 + $0x138] sm:$0xff] %vm743, %v855
  %944 = vst.msk [vmem:[#allocation3 + $0x140] sm:$0xff] %vm743, %v857
  %945 = vst.msk [vmem:[#allocation3 + $0x148] sm:$0xff] %vm743, %v859
  %946 = vst.msk [vmem:[#allocation3 + $0x150] sm:$0xff] %vm743, %v861
  %947 = vst.msk [vmem:[#allocation3 + $0x158] sm:$0xff] %vm743, %v863
  %948 = vst.msk [vmem:[#allocation3 + $0x160] sm:$0xff] %vm743, %v865
  %949 = vst.msk [vmem:[#allocation3 + $0x168] sm:$0xff] %vm743, %v867
  %950 = vst.msk [vmem:[#allocation3 + $0x170] sm:$0xff] %vm743, %v869
  %951 = vst.msk [vmem:[#allocation3 + $0x178] sm:$0xff] %vm743, %v871
  %952 = vst.msk [vmem:[#allocation3 + $0x180] sm:$0xff] %vm743, %v873
  %953 = vst.msk [vmem:[#allocation3 + $0x188] sm:$0xff] %vm743, %v875
  %954 = vst.msk [vmem:[#allocation3 + $0x190] sm:$0xff] %vm743, %v877
  %955 = vst.msk [vmem:[#allocation3 + $0x198] sm:$0xff] %vm743, %v879
  %956 = vst.msk [vmem:[#allocation3 + $0x1a0] sm:$0xff] %vm743, %v881
  %957 = vst.msk [vmem:[#allocation3 + $0x1a8] sm:$0xff] %vm743, %v883
  %958 = vst.msk [vmem:[#allocation3 + $0x1b0] sm:$0xff] %vm743, %v885
  %959 = vst.msk [vmem:[#allocation3 + $0x1b8] sm:$0xff] %vm743, %v887
  %960 = vst.msk [vmem:[#allocation3 + $0x1c0] sm:$0xff] %vm743, %v889
  %961 = vst.msk [vmem:[#allocation3 + $0x1c8] sm:$0xff] %vm743, %v891
  %962 = vst.msk [vmem:[#allocation3 + $0x1d0] sm:$0xff] %vm743, %v893
  %963 = vst.msk [vmem:[#allocation3 + $0x1d8] sm:$0xff] %vm743, %v895
  %964 = vst.msk [vmem:[#allocation3 + $0x1e0] sm:$0xff] %vm743, %v897
  %965 = vst.msk [vmem:[#allocation3 + $0x1e8] sm:$0xff] %vm743, %v899
  %966 = vst.msk [vmem:[#allocation3 + $0x1f0] sm:$0xff] %vm743, %v901
  %967 = vst.msk [vmem:[#allocation3 + $0x1f8] sm:$0xff] %vm743, %v903
  %v968 = vld [vmem:[#allocation2 + $0x2] sm:$0xff]
  %v969 = vld [vmem:[#allocation2 + $0xa] sm:$0xff]
  %v970 = vld [vmem:[#allocation2 + $0x1a] sm:$0xff]
  %v971 = vld [vmem:[#allocation2 + $0x22] sm:$0xff]
  %v972 = vld [vmem:[#allocation2 + $0x32] sm:$0xff]
  %v973 = vld [vmem:[#allocation2 + $0x3a] sm:$0xff]
  %v974 = vld [vmem:[#allocation2 + $0x4a] sm:$0xff]
  %v975 = vld [vmem:[#allocation2 + $0x52] sm:$0xff]
  %v976 = vld [vmem:[#allocation2 + $0x62] sm:$0xff]
  %v977 = vld [vmem:[#allocation2 + $0x6a] sm:$0xff]
  %v978 = vld [vmem:[#allocation2 + $0x7a] sm:$0xff]
  %v979 = vld [vmem:[#allocation2 + $0x82] sm:$0xff]
  %v980 = vld [vmem:[#allocation2 + $0x92] sm:$0xff]
  %v981 = vld [vmem:[#allocation2 + $0x9a] sm:$0xff]
  %v982 = vld [vmem:[#allocation2 + $0xaa] sm:$0xff]
  %v983 = vld [vmem:[#allocation2 + $0xb2] sm:$0xff]
  %v984 = vld [vmem:[#allocation2 + $0xc2] sm:$0xff]
  %v985 = vld [vmem:[#allocation2 + $0xca] sm:$0xff]
  %v986 = vld [vmem:[#allocation2 + $0xda] sm:$0xff]
  %v987 = vld [vmem:[#allocation2 + $0xe2] sm:$0xff]
  %v988 = vld [vmem:[#allocation2 + $0xf2] sm:$0xff]
  %v989 = vld [vmem:[#allocation2 + $0xfa] sm:$0xff]
  %v990 = vld [vmem:[#allocation2 + $0x10a] sm:$0xff]
  %v991 = vld [vmem:[#allocation2 + $0x112] sm:$0xff]
  %v992 = vld [vmem:[#allocation2 + $0x122] sm:$0xff]
  %v993 = vld [vmem:[#allocation2 + $0x12a] sm:$0xff]
  %v994 = vld [vmem:[#allocation2 + $0x13a] sm:$0xff]
  %v995 = vld [vmem:[#allocation2 + $0x142] sm:$0xff]
  %v996 = vld [vmem:[#allocation2 + $0x152] sm:$0xff]
  %v997 = vld [vmem:[#allocation2 + $0x15a] sm:$0xff]
  %v998 = vld [vmem:[#allocation2 + $0x16a] sm:$0xff]
  %v999 = vld [vmem:[#allocation2 + $0x172] sm:$0xff]
  %1032 = vrot.lane.b32.xlu0 %v968, 8
  %v1033 = vpop.permute.xlu0 %1032
  %1034 = vrot.lane.b32.xlu0 %v969, 8
  %v1035 = vpop.permute.xlu0 %1034
  %1036 = vrot.lane.b32.xlu0 %v970, 8
  %v1037 = vpop.permute.xlu0 %1036
  %1038 = vrot.lane.b32.xlu0 %v971, 8
  %v1039 = vpop.permute.xlu0 %1038
  %1040 = vrot.lane.b32.xlu0 %v972, 8
  %v1041 = vpop.permute.xlu0 %1040
  %1042 = vrot.lane.b32.xlu0 %v973, 8
  %v1043 = vpop.permute.xlu0 %1042
  %1044 = vrot.lane.b32.xlu0 %v974, 8
  %v1045 = vpop.permute.xlu0 %1044
  %1046 = vrot.lane.b32.xlu0 %v975, 8
  %v1047 = vpop.permute.xlu0 %1046
  %1048 = vrot.lane.b32.xlu0 %v976, 8
  %v1049 = vpop.permute.xlu0 %1048
  %1050 = vrot.lane.b32.xlu0 %v977, 8
  %v1051 = vpop.permute.xlu0 %1050
  %1052 = vrot.lane.b32.xlu0 %v978, 8
  %v1053 = vpop.permute.xlu0 %1052
  %1054 = vrot.lane.b32.xlu0 %v979, 8
  %v1055 = vpop.permute.xlu0 %1054
  %1056 = vrot.lane.b32.xlu0 %v980, 8
  %v1057 = vpop.permute.xlu0 %1056
  %1058 = vrot.lane.b32.xlu0 %v981, 8
  %v1059 = vpop.permute.xlu0 %1058
  %1060 = vrot.lane.b32.xlu0 %v982, 8
  %v1061 = vpop.permute.xlu0 %1060
  %1062 = vrot.lane.b32.xlu0 %v983, 8
  %v1063 = vpop.permute.xlu0 %1062
  %1064 = vrot.lane.b32.xlu0 %v984, 8
  %v1065 = vpop.permute.xlu0 %1064
  %1066 = vrot.lane.b32.xlu0 %v985, 8
  %v1067 = vpop.permute.xlu0 %1066
  %1068 = vrot.lane.b32.xlu0 %v986, 8
  %v1069 = vpop.permute.xlu0 %1068
  %1070 = vrot.lane.b32.xlu0 %v987, 8
  %v1071 = vpop.permute.xlu0 %1070
  %1072 = vrot.lane.b32.xlu0 %v988, 8
  %v1073 = vpop.permute.xlu0 %1072
  %1074 = vrot.lane.b32.xlu0 %v989, 8
  %v1075 = vpop.permute.xlu0 %1074
  %1076 = vrot.lane.b32.xlu0 %v990, 8
  %v1077 = vpop.permute.xlu0 %1076
  %1078 = vrot.lane.b32.xlu0 %v991, 8
  %v1079 = vpop.permute.xlu0 %1078
  %1080 = vrot.lane.b32.xlu0 %v992, 8
  %v1081 = vpop.permute.xlu0 %1080
  %1082 = vrot.lane.b32.xlu0 %v993, 8
  %v1083 = vpop.permute.xlu0 %1082
  %1084 = vrot.lane.b32.xlu0 %v994, 8
  %v1085 = vpop.permute.xlu0 %1084
  %1086 = vrot.lane.b32.xlu0 %v995, 8
  %v1087 = vpop.permute.xlu0 %1086
  %1088 = vrot.lane.b32.xlu0 %v996, 8
  %v1089 = vpop.permute.xlu0 %1088
  %1090 = vrot.lane.b32.xlu0 %v997, 8
  %v1091 = vpop.permute.xlu0 %1090
  %1092 = vrot.lane.b32.xlu0 %v998, 8
  %v1093 = vpop.permute.xlu0 %1092
  %1094 = vrot.lane.b32.xlu0 %v999, 8
  %v1095 = vpop.permute.xlu0 %1094
  %vm1128 = vcmask 97344
  %1129 = vst.msk [vmem:[#allocation3] sm:$0xff] %vm1128, %v1033
  %1130 = vst.msk [vmem:[#allocation3 + $0x8] sm:$0xff] %vm1128, %v1035
  %1131 = vst.msk [vmem:[#allocation3 + $0x10] sm:$0xff] %vm1128, %v1037
  %1132 = vst.msk [vmem:[#allocation3 + $0x18] sm:$0xff] %vm1128, %v1039
  %1133 = vst.msk [vmem:[#allocation3 + $0x20] sm:$0xff] %vm1128, %v1041
  %1134 = vst.msk [vmem:[#allocation3 + $0x28] sm:$0xff] %vm1128, %v1043
  %1135 = vst.msk [vmem:[#allocation3 + $0x30] sm:$0xff] %vm1128, %v1045
  %1136 = vst.msk [vmem:[#allocation3 + $0x38] sm:$0xff] %vm1128, %v1047
  %1137 = vst.msk [vmem:[#allocation3 + $0x40] sm:$0xff] %vm1128, %v1049
  %1138 = vst.msk [vmem:[#allocation3 + $0x48] sm:$0xff] %vm1128, %v1051
  %1139 = vst.msk [vmem:[#allocation3 + $0x50] sm:$0xff] %vm1128, %v1053
  %1140 = vst.msk [vmem:[#allocation3 + $0x58] sm:$0xff] %vm1128, %v1055
  %1141 = vst.msk [vmem:[#allocation3 + $0x60] sm:$0xff] %vm1128, %v1057
  %1142 = vst.msk [vmem:[#allocation3 + $0x68] sm:$0xff] %vm1128, %v1059
  %1143 = vst.msk [vmem:[#allocation3 + $0x70] sm:$0xff] %vm1128, %v1061
  %1144 = vst.msk [vmem:[#allocation3 + $0x78] sm:$0xff] %vm1128, %v1063
  %1145 = vst.msk [vmem:[#allocation3 + $0x80] sm:$0xff] %vm1128, %v1065
  %1146 = vst.msk [vmem:[#allocation3 + $0x88] sm:$0xff] %vm1128, %v1067
  %1147 = vst.msk [vmem:[#allocation3 + $0x90] sm:$0xff] %vm1128, %v1069
  %1148 = vst.msk [vmem:[#allocation3 + $0x98] sm:$0xff] %vm1128, %v1071
  %1149 = vst.msk [vmem:[#allocation3 + $0xa0] sm:$0xff] %vm1128, %v1073
  %1150 = vst.msk [vmem:[#allocation3 + $0xa8] sm:$0xff] %vm1128, %v1075
  %1151 = vst.msk [vmem:[#allocation3 + $0xb0] sm:$0xff] %vm1128, %v1077
  %1152 = vst.msk [vmem:[#allocation3 + $0xb8] sm:$0xff] %vm1128, %v1079
  %1153 = vst.msk [vmem:[#allocation3 + $0xc0] sm:$0xff] %vm1128, %v1081
  %1154 = vst.msk [vmem:[#allocation3 + $0xc8] sm:$0xff] %vm1128, %v1083
  %1155 = vst.msk [vmem:[#allocation3 + $0xd0] sm:$0xff] %vm1128, %v1085
  %1156 = vst.msk [vmem:[#allocation3 + $0xd8] sm:$0xff] %vm1128, %v1087
  %1157 = vst.msk [vmem:[#allocation3 + $0xe0] sm:$0xff] %vm1128, %v1089
  %1158 = vst.msk [vmem:[#allocation3 + $0xe8] sm:$0xff] %vm1128, %v1091
  %1159 = vst.msk [vmem:[#allocation3 + $0xf0] sm:$0xff] %vm1128, %v1093
  %1160 = vst.msk [vmem:[#allocation3 + $0xf8] sm:$0xff] %vm1128, %v1095
  %v1161 = vld [vmem:[%s233 + $0x2] sm:$0xff]
  %v1162 = vld [vmem:[%s233 + $0xa] sm:$0xff]
  %v1163 = vld [vmem:[%s233 + $0x1a] sm:$0xff]
  %v1164 = vld [vmem:[%s233 + $0x22] sm:$0xff]
  %v1165 = vld [vmem:[%s233 + $0x32] sm:$0xff]
  %v1166 = vld [vmem:[%s233 + $0x3a] sm:$0xff]
  %v1167 = vld [vmem:[%s233 + $0x4a] sm:$0xff]
  %v1168 = vld [vmem:[%s233 + $0x52] sm:$0xff]
  %v1169 = vld [vmem:[%s233 + $0x62] sm:$0xff]
  %v1170 = vld [vmem:[%s233 + $0x6a] sm:$0xff]
  %v1171 = vld [vmem:[%s233 + $0x7a] sm:$0xff]
  %v1172 = vld [vmem:[%s233 + $0x82] sm:$0xff]
  %v1173 = vld [vmem:[%s233 + $0x92] sm:$0xff]
  %v1174 = vld [vmem:[%s233 + $0x9a] sm:$0xff]
  %v1175 = vld [vmem:[%s233 + $0xaa] sm:$0xff]
  %v1176 = vld [vmem:[%s233 + $0xb2] sm:$0xff]
  %v1177 = vld [vmem:[%s233 + $0xc2] sm:$0xff]
  %v1178 = vld [vmem:[%s233 + $0xca] sm:$0xff]
  %v1179 = vld [vmem:[%s233 + $0xda] sm:$0xff]
  %v1180 = vld [vmem:[%s233 + $0xe2] sm:$0xff]
  %v1181 = vld [vmem:[%s233 + $0xf2] sm:$0xff]
  %v1182 = vld [vmem:[%s233 + $0xfa] sm:$0xff]
  %v1183 = vld [vmem:[%s233 + $0x10a] sm:$0xff]
  %v1184 = vld [vmem:[%s233 + $0x112] sm:$0xff]
  %v1185 = vld [vmem:[%s233 + $0x122] sm:$0xff]
  %v1186 = vld [vmem:[%s233 + $0x12a] sm:$0xff]
  %v1187 = vld [vmem:[%s233 + $0x13a] sm:$0xff]
  %v1188 = vld [vmem:[%s233 + $0x142] sm:$0xff]
  %v1189 = vld [vmem:[%s233 + $0x152] sm:$0xff]
  %v1190 = vld [vmem:[%s233 + $0x15a] sm:$0xff]
  %v1191 = vld [vmem:[%s233 + $0x16a] sm:$0xff]
  %v1192 = vld [vmem:[%s233 + $0x172] sm:$0xff]
  %1225 = vrot.lane.b32.xlu0 %v1161, 8
  %v1226 = vpop.permute.xlu0 %1225
  %1227 = vrot.lane.b32.xlu0 %v1162, 8
  %v1228 = vpop.permute.xlu0 %1227
  %1229 = vrot.lane.b32.xlu0 %v1163, 8
  %v1230 = vpop.permute.xlu0 %1229
  %1231 = vrot.lane.b32.xlu0 %v1164, 8
  %v1232 = vpop.permute.xlu0 %1231
  %1233 = vrot.lane.b32.xlu0 %v1165, 8
  %v1234 = vpop.permute.xlu0 %1233
  %1235 = vrot.lane.b32.xlu0 %v1166, 8
  %v1236 = vpop.permute.xlu0 %1235
  %1237 = vrot.lane.b32.xlu0 %v1167, 8
  %v1238 = vpop.permute.xlu0 %1237
  %1239 = vrot.lane.b32.xlu0 %v1168, 8
  %v1240 = vpop.permute.xlu0 %1239
  %1241 = vrot.lane.b32.xlu0 %v1169, 8
  %v1242 = vpop.permute.xlu0 %1241
  %1243 = vrot.lane.b32.xlu0 %v1170, 8
  %v1244 = vpop.permute.xlu0 %1243
  %1245 = vrot.lane.b32.xlu0 %v1171, 8
  %v1246 = vpop.permute.xlu0 %1245
  %1247 = vrot.lane.b32.xlu0 %v1172, 8
  %v1248 = vpop.permute.xlu0 %1247
  %1249 = vrot.lane.b32.xlu0 %v1173, 8
  %v1250 = vpop.permute.xlu0 %1249
  %1251 = vrot.lane.b32.xlu0 %v1174, 8
  %v1252 = vpop.permute.xlu0 %1251
  %1253 = vrot.lane.b32.xlu0 %v1175, 8
  %v1254 = vpop.permute.xlu0 %1253
  %1255 = vrot.lane.b32.xlu0 %v1176, 8
  %v1256 = vpop.permute.xlu0 %1255
  %1257 = vrot.lane.b32.xlu0 %v1177, 8
  %v1258 = vpop.permute.xlu0 %1257
  %1259 = vrot.lane.b32.xlu0 %v1178, 8
  %v1260 = vpop.permute.xlu0 %1259
  %1261 = vrot.lane.b32.xlu0 %v1179, 8
  %v1262 = vpop.permute.xlu0 %1261
  %1263 = vrot.lane.b32.xlu0 %v1180, 8
  %v1264 = vpop.permute.xlu0 %1263
  %1265 = vrot.lane.b32.xlu0 %v1181, 8
  %v1266 = vpop.permute.xlu0 %1265
  %1267 = vrot.lane.b32.xlu0 %v1182, 8
  %v1268 = vpop.permute.xlu0 %1267
  %1269 = vrot.lane.b32.xlu0 %v1183, 8
  %v1270 = vpop.permute.xlu0 %1269
  %1271 = vrot.lane.b32.xlu0 %v1184, 8
  %v1272 = vpop.permute.xlu0 %1271
  %1273 = vrot.lane.b32.xlu0 %v1185, 8
  %v1274 = vpop.permute.xlu0 %1273
  %1275 = vrot.lane.b32.xlu0 %v1186, 8
  %v1276 = vpop.permute.xlu0 %1275
  %1277 = vrot.lane.b32.xlu0 %v1187, 8
  %v1278 = vpop.permute.xlu0 %1277
  %1279 = vrot.lane.b32.xlu0 %v1188, 8
  %v1280 = vpop.permute.xlu0 %1279
  %1281 = vrot.lane.b32.xlu0 %v1189, 8
  %v1282 = vpop.permute.xlu0 %1281
  %1283 = vrot.lane.b32.xlu0 %v1190, 8
  %v1284 = vpop.permute.xlu0 %1283
  %1285 = vrot.lane.b32.xlu0 %v1191, 8
  %v1286 = vpop.permute.xlu0 %1285
  %1287 = vrot.lane.b32.xlu0 %v1192, 8
  %v1288 = vpop.permute.xlu0 %1287
  %1321 = vst.msk [vmem:[#allocation3 + $0x100] sm:$0xff] %vm1128, %v1226
  %1322 = vst.msk [vmem:[#allocation3 + $0x108] sm:$0xff] %vm1128, %v1228
  %1323 = vst.msk [vmem:[#allocation3 + $0x110] sm:$0xff] %vm1128, %v1230
  %1324 = vst.msk [vmem:[#allocation3 + $0x118] sm:$0xff] %vm1128, %v1232
  %1325 = vst.msk [vmem:[#allocation3 + $0x120] sm:$0xff] %vm1128, %v1234
  %1326 = vst.msk [vmem:[#allocation3 + $0x128] sm:$0xff] %vm1128, %v1236
  %1327 = vst.msk [vmem:[#allocation3 + $0x130] sm:$0xff] %vm1128, %v1238
  %1328 = vst.msk [vmem:[#allocation3 + $0x138] sm:$0xff] %vm1128, %v1240
  %1329 = vst.msk [vmem:[#allocation3 + $0x140] sm:$0xff] %vm1128, %v1242
  %1330 = vst.msk [vmem:[#allocation3 + $0x148] sm:$0xff] %vm1128, %v1244
  %1331 = vst.msk [vmem:[#allocation3 + $0x150] sm:$0xff] %vm1128, %v1246
  %1332 = vst.msk [vmem:[#allocation3 + $0x158] sm:$0xff] %vm1128, %v1248
  %1333 = vst.msk [vmem:[#allocation3 + $0x160] sm:$0xff] %vm1128, %v1250
  %1334 = vst.msk [vmem:[#allocation3 + $0x168] sm:$0xff] %vm1128, %v1252
  %1335 = vst.msk [vmem:[#allocation3 + $0x170] sm:$0xff] %vm1128, %v1254
  %1336 = vst.msk [vmem:[#allocation3 + $0x178] sm:$0xff] %vm1128, %v1256
  %1337 = vst.msk [vmem:[#allocation3 + $0x180] sm:$0xff] %vm1128, %v1258
  %1338 = vst.msk [vmem:[#allocation3 + $0x188] sm:$0xff] %vm1128, %v1260
  %1339 = vst.msk [vmem:[#allocation3 + $0x190] sm:$0xff] %vm1128, %v1262
  %1340 = vst.msk [vmem:[#allocation3 + $0x198] sm:$0xff] %vm1128, %v1264
  %1341 = vst.msk [vmem:[#allocation3 + $0x1a0] sm:$0xff] %vm1128, %v1266
  %1342 = vst.msk [vmem:[#allocation3 + $0x1a8] sm:$0xff] %vm1128, %v1268
  %1343 = vst.msk [vmem:[#allocation3 + $0x1b0] sm:$0xff] %vm1128, %v1270
  %1344 = vst.msk [vmem:[#allocation3 + $0x1b8] sm:$0xff] %vm1128, %v1272
  %1345 = vst.msk [vmem:[#allocation3 + $0x1c0] sm:$0xff] %vm1128, %v1274
  %1346 = vst.msk [vmem:[#allocation3 + $0x1c8] sm:$0xff] %vm1128, %v1276
  %1347 = vst.msk [vmem:[#allocation3 + $0x1d0] sm:$0xff] %vm1128, %v1278
  %1348 = vst.msk [vmem:[#allocation3 + $0x1d8] sm:$0xff] %vm1128, %v1280
  %1349 = vst.msk [vmem:[#allocation3 + $0x1e0] sm:$0xff] %vm1128, %v1282
  %1350 = vst.msk [vmem:[#allocation3 + $0x1e8] sm:$0xff] %vm1128, %v1284
  %1351 = vst.msk [vmem:[#allocation3 + $0x1f0] sm:$0xff] %vm1128, %v1286
  %1352 = vst.msk [vmem:[#allocation3 + $0x1f8] sm:$0xff] %vm1128, %v1288
  %s1353 = scalar_lea.vmem [#allocation2], 24
  %v1354 = vld [vmem:[%s1353] sm:$0xff]
  %v1355 = vld [vmem:[%s1353 + $0x8] sm:$0xff]
  %v1356 = vld [vmem:[%s1353 + $0x18] sm:$0xff]
  %v1357 = vld [vmem:[%s1353 + $0x20] sm:$0xff]
  %v1358 = vld [vmem:[%s1353 + $0x30] sm:$0xff]
  %v1359 = vld [vmem:[%s1353 + $0x38] sm:$0xff]
  %v1360 = vld [vmem:[%s1353 + $0x48] sm:$0xff]
  %v1361 = vld [vmem:[%s1353 + $0x50] sm:$0xff]
  %v1362 = vld [vmem:[%s1353 + $0x60] sm:$0xff]
  %v1363 = vld [vmem:[%s1353 + $0x68] sm:$0xff]
  %v1364 = vld [vmem:[%s1353 + $0x78] sm:$0xff]
  %v1365 = vld [vmem:[%s1353 + $0x80] sm:$0xff]
  %v1366 = vld [vmem:[%s1353 + $0x90] sm:$0xff]
  %v1367 = vld [vmem:[%s1353 + $0x98] sm:$0xff]
  %v1368 = vld [vmem:[%s1353 + $0xa8] sm:$0xff]
  %v1369 = vld [vmem:[%s1353 + $0xb0] sm:$0xff]
  %v1370 = vld [vmem:[%s1353 + $0xc0] sm:$0xff]
  %v1371 = vld [vmem:[%s1353 + $0xc8] sm:$0xff]
  %v1372 = vld [vmem:[%s1353 + $0xd8] sm:$0xff]
  %v1373 = vld [vmem:[%s1353 + $0xe0] sm:$0xff]
  %v1374 = vld [vmem:[%s1353 + $0xf0] sm:$0xff]
  %v1375 = vld [vmem:[%s1353 + $0xf8] sm:$0xff]
  %v1376 = vld [vmem:[%s1353 + $0x108] sm:$0xff]
  %v1377 = vld [vmem:[%s1353 + $0x110] sm:$0xff]
  %v1378 = vld [vmem:[%s1353 + $0x120] sm:$0xff]
  %v1379 = vld [vmem:[%s1353 + $0x128] sm:$0xff]
  %v1380 = vld [vmem:[%s1353 + $0x138] sm:$0xff]
  %v1381 = vld [vmem:[%s1353 + $0x140] sm:$0xff]
  %v1382 = vld [vmem:[%s1353 + $0x150] sm:$0xff]
  %v1383 = vld [vmem:[%s1353 + $0x158] sm:$0xff]
  %v1384 = vld [vmem:[%s1353 + $0x168] sm:$0xff]
  %v1385 = vld [vmem:[%s1353 + $0x170] sm:$0xff]
  %1418 = vrot.lane.b32.xlu0 %v1354, 12
  %v1419 = vpop.permute.xlu0 %1418
  %1420 = vrot.lane.b32.xlu0 %v1355, 12
  %v1421 = vpop.permute.xlu0 %1420
  %1422 = vrot.lane.b32.xlu0 %v1356, 12
  %v1423 = vpop.permute.xlu0 %1422
  %1424 = vrot.lane.b32.xlu0 %v1357, 12
  %v1425 = vpop.permute.xlu0 %1424
  %1426 = vrot.lane.b32.xlu0 %v1358, 12
  %v1427 = vpop.permute.xlu0 %1426
  %1428 = vrot.lane.b32.xlu0 %v1359, 12
  %v1429 = vpop.permute.xlu0 %1428
  %1430 = vrot.lane.b32.xlu0 %v1360, 12
  %v1431 = vpop.permute.xlu0 %1430
  %1432 = vrot.lane.b32.xlu0 %v1361, 12
  %v1433 = vpop.permute.xlu0 %1432
  %1434 = vrot.lane.b32.xlu0 %v1362, 12
  %v1435 = vpop.permute.xlu0 %1434
  %1436 = vrot.lane.b32.xlu0 %v1363, 12
  %v1437 = vpop.permute.xlu0 %1436
  %1438 = vrot.lane.b32.xlu0 %v1364, 12
  %v1439 = vpop.permute.xlu0 %1438
  %1440 = vrot.lane.b32.xlu0 %v1365, 12
  %v1441 = vpop.permute.xlu0 %1440
  %1442 = vrot.lane.b32.xlu0 %v1366, 12
  %v1443 = vpop.permute.xlu0 %1442
  %1444 = vrot.lane.b32.xlu0 %v1367, 12
  %v1445 = vpop.permute.xlu0 %1444
  %1446 = vrot.lane.b32.xlu0 %v1368, 12
  %v1447 = vpop.permute.xlu0 %1446
  %1448 = vrot.lane.b32.xlu0 %v1369, 12
  %v1449 = vpop.permute.xlu0 %1448
  %1450 = vrot.lane.b32.xlu0 %v1370, 12
  %v1451 = vpop.permute.xlu0 %1450
  %1452 = vrot.lane.b32.xlu0 %v1371, 12
  %v1453 = vpop.permute.xlu0 %1452
  %1454 = vrot.lane.b32.xlu0 %v1372, 12
  %v1455 = vpop.permute.xlu0 %1454
  %1456 = vrot.lane.b32.xlu0 %v1373, 12
  %v1457 = vpop.permute.xlu0 %1456
  %1458 = vrot.lane.b32.xlu0 %v1374, 12
  %v1459 = vpop.permute.xlu0 %1458
  %1460 = vrot.lane.b32.xlu0 %v1375, 12
  %v1461 = vpop.permute.xlu0 %1460
  %1462 = vrot.lane.b32.xlu0 %v1376, 12
  %v1463 = vpop.permute.xlu0 %1462
  %1464 = vrot.lane.b32.xlu0 %v1377, 12
  %v1465 = vpop.permute.xlu0 %1464
  %1466 = vrot.lane.b32.xlu0 %v1378, 12
  %v1467 = vpop.permute.xlu0 %1466
  %1468 = vrot.lane.b32.xlu0 %v1379, 12
  %v1469 = vpop.permute.xlu0 %1468
  %1470 = vrot.lane.b32.xlu0 %v1380, 12
  %v1471 = vpop.permute.xlu0 %1470
  %1472 = vrot.lane.b32.xlu0 %v1381, 12
  %v1473 = vpop.permute.xlu0 %1472
  %1474 = vrot.lane.b32.xlu0 %v1382, 12
  %v1475 = vpop.permute.xlu0 %1474
  %1476 = vrot.lane.b32.xlu0 %v1383, 12
  %v1477 = vpop.permute.xlu0 %1476
  %1478 = vrot.lane.b32.xlu0 %v1384, 12
  %v1479 = vpop.permute.xlu0 %1478
  %1480 = vrot.lane.b32.xlu0 %v1385, 12
  %v1481 = vpop.permute.xlu0 %1480
  %vm1514 = vcmask 130144
  %1515 = vst.msk [vmem:[#allocation3] sm:$0xff] %vm1514, %v1419
  %1516 = vst.msk [vmem:[#allocation3 + $0x8] sm:$0xff] %vm1514, %v1421
  %1517 = vst.msk [vmem:[#allocation3 + $0x10] sm:$0xff] %vm1514, %v1423
  %1518 = vst.msk [vmem:[#allocation3 + $0x18] sm:$0xff] %vm1514, %v1425
  %1519 = vst.msk [vmem:[#allocation3 + $0x20] sm:$0xff] %vm1514, %v1427
  %1520 = vst.msk [vmem:[#allocation3 + $0x28] sm:$0xff] %vm1514, %v1429
  %1521 = vst.msk [vmem:[#allocation3 + $0x30] sm:$0xff] %vm1514, %v1431
  %1522 = vst.msk [vmem:[#allocation3 + $0x38] sm:$0xff] %vm1514, %v1433
  %1523 = vst.msk [vmem:[#allocation3 + $0x40] sm:$0xff] %vm1514, %v1435
  %1524 = vst.msk [vmem:[#allocation3 + $0x48] sm:$0xff] %vm1514, %v1437
  %1525 = vst.msk [vmem:[#allocation3 + $0x50] sm:$0xff] %vm1514, %v1439
  %1526 = vst.msk [vmem:[#allocation3 + $0x58] sm:$0xff] %vm1514, %v1441
  %1527 = vst.msk [vmem:[#allocation3 + $0x60] sm:$0xff] %vm1514, %v1443
  %1528 = vst.msk [vmem:[#allocation3 + $0x68] sm:$0xff] %vm1514, %v1445
  %1529 = vst.msk [vmem:[#allocation3 + $0x70] sm:$0xff] %vm1514, %v1447
  %1530 = vst.msk [vmem:[#allocation3 + $0x78] sm:$0xff] %vm1514, %v1449
  %1531 = vst.msk [vmem:[#allocation3 + $0x80] sm:$0xff] %vm1514, %v1451
  %1532 = vst.msk [vmem:[#allocation3 + $0x88] sm:$0xff] %vm1514, %v1453
  %1533 = vst.msk [vmem:[#allocation3 + $0x90] sm:$0xff] %vm1514, %v1455
  %1534 = vst.msk [vmem:[#allocation3 + $0x98] sm:$0xff] %vm1514, %v1457
  %1535 = vst.msk [vmem:[#allocation3 + $0xa0] sm:$0xff] %vm1514, %v1459
  %1536 = vst.msk [vmem:[#allocation3 + $0xa8] sm:$0xff] %vm1514, %v1461
  %1537 = vst.msk [vmem:[#allocation3 + $0xb0] sm:$0xff] %vm1514, %v1463
  %1538 = vst.msk [vmem:[#allocation3 + $0xb8] sm:$0xff] %vm1514, %v1465
  %1539 = vst.msk [vmem:[#allocation3 + $0xc0] sm:$0xff] %vm1514, %v1467
  %1540 = vst.msk [vmem:[#allocation3 + $0xc8] sm:$0xff] %vm1514, %v1469
  %1541 = vst.msk [vmem:[#allocation3 + $0xd0] sm:$0xff] %vm1514, %v1471
  %1542 = vst.msk [vmem:[#allocation3 + $0xd8] sm:$0xff] %vm1514, %v1473
  %1543 = vst.msk [vmem:[#allocation3 + $0xe0] sm:$0xff] %vm1514, %v1475
  %1544 = vst.msk [vmem:[#allocation3 + $0xe8] sm:$0xff] %vm1514, %v1477
  %1545 = vst.msk [vmem:[#allocation3 + $0xf0] sm:$0xff] %vm1514, %v1479
  %1546 = vst.msk [vmem:[#allocation3 + $0xf8] sm:$0xff] %vm1514, %v1481
  %s1547 = scalar_lea.vmem [#allocation2], 456
  %v1548 = vld [vmem:[%s1547] sm:$0xff]
  %v1549 = vld [vmem:[%s1547 + $0x8] sm:$0xff]
  %v1550 = vld [vmem:[%s1547 + $0x18] sm:$0xff]
  %v1551 = vld [vmem:[%s1547 + $0x20] sm:$0xff]
  %v1552 = vld [vmem:[%s1547 + $0x30] sm:$0xff]
  %v1553 = vld [vmem:[%s1547 + $0x38] sm:$0xff]
  %v1554 = vld [vmem:[%s1547 + $0x48] sm:$0xff]
  %v1555 = vld [vmem:[%s1547 + $0x50] sm:$0xff]
  %v1556 = vld [vmem:[%s1547 + $0x60] sm:$0xff]
  %v1557 = vld [vmem:[%s1547 + $0x68] sm:$0xff]
  %v1558 = vld [vmem:[%s1547 + $0x78] sm:$0xff]
  %v1559 = vld [vmem:[%s1547 + $0x80] sm:$0xff]
  %v1560 = vld [vmem:[%s1547 + $0x90] sm:$0xff]
  %v1561 = vld [vmem:[%s1547 + $0x98] sm:$0xff]
  %v1562 = vld [vmem:[%s1547 + $0xa8] sm:$0xff]
  %v1563 = vld [vmem:[%s1547 + $0xb0] sm:$0xff]
  %v1564 = vld [vmem:[%s1547 + $0xc0] sm:$0xff]
  %v1565 = vld [vmem:[%s1547 + $0xc8] sm:$0xff]
  %v1566 = vld [vmem:[%s1547 + $0xd8] sm:$0xff]
  %v1567 = vld [vmem:[%s1547 + $0xe0] sm:$0xff]
  %v1568 = vld [vmem:[%s1547 + $0xf0] sm:$0xff]
  %v1569 = vld [vmem:[%s1547 + $0xf8] sm:$0xff]
  %v1570 = vld [vmem:[%s1547 + $0x108] sm:$0xff]
  %v1571 = vld [vmem:[%s1547 + $0x110] sm:$0xff]
  %v1572 = vld [vmem:[%s1547 + $0x120] sm:$0xff]
  %v1573 = vld [vmem:[%s1547 + $0x128] sm:$0xff]
  %v1574 = vld [vmem:[%s1547 + $0x138] sm:$0xff]
  %v1575 = vld [vmem:[%s1547 + $0x140] sm:$0xff]
  %v1576 = vld [vmem:[%s1547 + $0x150] sm:$0xff]
  %v1577 = vld [vmem:[%s1547 + $0x158] sm:$0xff]
  %v1578 = vld [vmem:[%s1547 + $0x168] sm:$0xff]
  %v1579 = vld [vmem:[%s1547 + $0x170] sm:$0xff]
  %1612 = vrot.lane.b32.xlu0 %v1548, 12
  %v1613 = vpop.permute.xlu0 %1612
  %1614 = vrot.lane.b32.xlu0 %v1549, 12
  %v1615 = vpop.permute.xlu0 %1614
  %1616 = vrot.lane.b32.xlu0 %v1550, 12
  %v1617 = vpop.permute.xlu0 %1616
  %1618 = vrot.lane.b32.xlu0 %v1551, 12
  %v1619 = vpop.permute.xlu0 %1618
  %1620 = vrot.lane.b32.xlu0 %v1552, 12
  %v1621 = vpop.permute.xlu0 %1620
  %1622 = vrot.lane.b32.xlu0 %v1553, 12
  %v1623 = vpop.permute.xlu0 %1622
  %1624 = vrot.lane.b32.xlu0 %v1554, 12
  %v1625 = vpop.permute.xlu0 %1624
  %1626 = vrot.lane.b32.xlu0 %v1555, 12
  %v1627 = vpop.permute.xlu0 %1626
  %1628 = vrot.lane.b32.xlu0 %v1556, 12
  %v1629 = vpop.permute.xlu0 %1628
  %1630 = vrot.lane.b32.xlu0 %v1557, 12
  %v1631 = vpop.permute.xlu0 %1630
  %1632 = vrot.lane.b32.xlu0 %v1558, 12
  %v1633 = vpop.permute.xlu0 %1632
  %1634 = vrot.lane.b32.xlu0 %v1559, 12
  %v1635 = vpop.permute.xlu0 %1634
  %1636 = vrot.lane.b32.xlu0 %v1560, 12
  %v1637 = vpop.permute.xlu0 %1636
  %1638 = vrot.lane.b32.xlu0 %v1561, 12
  %v1639 = vpop.permute.xlu0 %1638
  %1640 = vrot.lane.b32.xlu0 %v1562, 12
  %v1641 = vpop.permute.xlu0 %1640
  %1642 = vrot.lane.b32.xlu0 %v1563, 12
  %v1643 = vpop.permute.xlu0 %1642
  %1644 = vrot.lane.b32.xlu0 %v1564, 12
  %v1645 = vpop.permute.xlu0 %1644
  %1646 = vrot.lane.b32.xlu0 %v1565, 12
  %v1647 = vpop.permute.xlu0 %1646
  %1648 = vrot.lane.b32.xlu0 %v1566, 12
  %v1649 = vpop.permute.xlu0 %1648
  %1650 = vrot.lane.b32.xlu0 %v1567, 12
  %v1651 = vpop.permute.xlu0 %1650
  %1652 = vrot.lane.b32.xlu0 %v1568, 12
  %v1653 = vpop.permute.xlu0 %1652
  %1654 = vrot.lane.b32.xlu0 %v1569, 12
  %v1655 = vpop.permute.xlu0 %1654
  %1656 = vrot.lane.b32.xlu0 %v1570, 12
  %v1657 = vpop.permute.xlu0 %1656
  %1658 = vrot.lane.b32.xlu0 %v1571, 12
  %v1659 = vpop.permute.xlu0 %1658
  %1660 = vrot.lane.b32.xlu0 %v1572, 12
  %v1661 = vpop.permute.xlu0 %1660
  %1662 = vrot.lane.b32.xlu0 %v1573, 12
  %v1663 = vpop.permute.xlu0 %1662
  %1664 = vrot.lane.b32.xlu0 %v1574, 12
  %v1665 = vpop.permute.xlu0 %1664
  %1666 = vrot.lane.b32.xlu0 %v1575, 12
  %v1667 = vpop.permute.xlu0 %1666
  %1668 = vrot.lane.b32.xlu0 %v1576, 12
  %v1669 = vpop.permute.xlu0 %1668
  %1670 = vrot.lane.b32.xlu0 %v1577, 12
  %v1671 = vpop.permute.xlu0 %1670
  %1672 = vrot.lane.b32.xlu0 %v1578, 12
  %v1673 = vpop.permute.xlu0 %1672
  %1674 = vrot.lane.b32.xlu0 %v1579, 12
  %v1675 = vpop.permute.xlu0 %1674
  %1708 = vst.msk [vmem:[#allocation3 + $0x100] sm:$0xff] %vm1514, %v1613
  %1709 = vst.msk [vmem:[#allocation3 + $0x108] sm:$0xff] %vm1514, %v1615
  %1710 = vst.msk [vmem:[#allocation3 + $0x110] sm:$0xff] %vm1514, %v1617
  %1711 = vst.msk [vmem:[#allocation3 + $0x118] sm:$0xff] %vm1514, %v1619
  %1712 = vst.msk [vmem:[#allocation3 + $0x120] sm:$0xff] %vm1514, %v1621
  %1713 = vst.msk [vmem:[#allocation3 + $0x128] sm:$0xff] %vm1514, %v1623
  %1714 = vst.msk [vmem:[#allocation3 + $0x130] sm:$0xff] %vm1514, %v1625
  %1715 = vst.msk [vmem:[#allocation3 + $0x138] sm:$0xff] %vm1514, %v1627
  %1716 = vst.msk [vmem:[#allocation3 + $0x140] sm:$0xff] %vm1514, %v1629
  %1717 = vst.msk [vmem:[#allocation3 + $0x148] sm:$0xff] %vm1514, %v1631
  %1718 = vst.msk [vmem:[#allocation3 + $0x150] sm:$0xff] %vm1514, %v1633
  %1719 = vst.msk [vmem:[#allocation3 + $0x158] sm:$0xff] %vm1514, %v1635
  %1720 = vst.msk [vmem:[#allocation3 + $0x160] sm:$0xff] %vm1514, %v1637
  %1721 = vst.msk [vmem:[#allocation3 + $0x168] sm:$0xff] %vm1514, %v1639
  %1722 = vst.msk [vmem:[#allocation3 + $0x170] sm:$0xff] %vm1514, %v1641
  %1723 = vst.msk [vmem:[#allocation3 + $0x178] sm:$0xff] %vm1514, %v1643
  %1724 = vst.msk [vmem:[#allocation3 + $0x180] sm:$0xff] %vm1514, %v1645
  %1725 = vst.msk [vmem:[#allocation3 + $0x188] sm:$0xff] %vm1514, %v1647
  %1726 = vst.msk [vmem:[#allocation3 + $0x190] sm:$0xff] %vm1514, %v1649
  %1727 = vst.msk [vmem:[#allocation3 + $0x198] sm:$0xff] %vm1514, %v1651
  %1728 = vst.msk [vmem:[#allocation3 + $0x1a0] sm:$0xff] %vm1514, %v1653
  %1729 = vst.msk [vmem:[#allocation3 + $0x1a8] sm:$0xff] %vm1514, %v1655
  %1730 = vst.msk [vmem:[#allocation3 + $0x1b0] sm:$0xff] %vm1514, %v1657
  %1731 = vst.msk [vmem:[#allocation3 + $0x1b8] sm:$0xff] %vm1514, %v1659
  %1732 = vst.msk [vmem:[#allocation3 + $0x1c0] sm:$0xff] %vm1514, %v1661
  %1733 = vst.msk [vmem:[#allocation3 + $0x1c8] sm:$0xff] %vm1514, %v1663
  %1734 = vst.msk [vmem:[#allocation3 + $0x1d0] sm:$0xff] %vm1514, %v1665
  %1735 = vst.msk [vmem:[#allocation3 + $0x1d8] sm:$0xff] %vm1514, %v1667
  %1736 = vst.msk [vmem:[#allocation3 + $0x1e0] sm:$0xff] %vm1514, %v1669
  %1737 = vst.msk [vmem:[#allocation3 + $0x1e8] sm:$0xff] %vm1514, %v1671
  %1738 = vst.msk [vmem:[#allocation3 + $0x1f0] sm:$0xff] %vm1514, %v1673
  %1739 = vst.msk [vmem:[#allocation3 + $0x1f8] sm:$0xff] %vm1514, %v1675
  %v1740 = vld [vmem:[%s1353 + $0x1] sm:$0xff]
  %v1741 = vld [vmem:[%s1353 + $0x9] sm:$0xff]
  %v1742 = vld [vmem:[%s1353 + $0x19] sm:$0xff]
  %v1743 = vld [vmem:[%s1353 + $0x21] sm:$0xff]
  %v1744 = vld [vmem:[%s1353 + $0x31] sm:$0xff]
  %v1745 = vld [vmem:[%s1353 + $0x39] sm:$0xff]
  %v1746 = vld [vmem:[%s1353 + $0x49] sm:$0xff]
  %v1747 = vld [vmem:[%s1353 + $0x51] sm:$0xff]
  %v1748 = vld [vmem:[%s1353 + $0x61] sm:$0xff]
  %v1749 = vld [vmem:[%s1353 + $0x69] sm:$0xff]
  %v1750 = vld [vmem:[%s1353 + $0x79] sm:$0xff]
  %v1751 = vld [vmem:[%s1353 + $0x81] sm:$0xff]
  %v1752 = vld [vmem:[%s1353 + $0x91] sm:$0xff]
  %v1753 = vld [vmem:[%s1353 + $0x99] sm:$0xff]
  %v1754 = vld [vmem:[%s1353 + $0xa9] sm:$0xff]
  %v1755 = vld [vmem:[%s1353 + $0xb1] sm:$0xff]
  %v1756 = vld [vmem:[%s1353 + $0xc1] sm:$0xff]
  %v1757 = vld [vmem:[%s1353 + $0xc9] sm:$0xff]
  %v1758 = vld [vmem:[%s1353 + $0xd9] sm:$0xff]
  %v1759 = vld [vmem:[%s1353 + $0xe1] sm:$0xff]
  %v1760 = vld [vmem:[%s1353 + $0xf1] sm:$0xff]
  %v1761 = vld [vmem:[%s1353 + $0xf9] sm:$0xff]
  %v1762 = vld [vmem:[%s1353 + $0x109] sm:$0xff]
  %v1763 = vld [vmem:[%s1353 + $0x111] sm:$0xff]
  %v1764 = vld [vmem:[%s1353 + $0x121] sm:$0xff]
  %v1765 = vld [vmem:[%s1353 + $0x129] sm:$0xff]
  %v1766 = vld [vmem:[%s1353 + $0x139] sm:$0xff]
  %v1767 = vld [vmem:[%s1353 + $0x141] sm:$0xff]
  %v1768 = vld [vmem:[%s1353 + $0x151] sm:$0xff]
  %v1769 = vld [vmem:[%s1353 + $0x159] sm:$0xff]
  %v1770 = vld [vmem:[%s1353 + $0x169] sm:$0xff]
  %v1771 = vld [vmem:[%s1353 + $0x171] sm:$0xff]
  %1804 = vrot.lane.b32.xlu0 %v1740, 16
  %v1805 = vpop.permute.xlu0 %1804
  %1806 = vrot.lane.b32.xlu0 %v1741, 16
  %v1807 = vpop.permute.xlu0 %1806
  %1808 = vrot.lane.b32.xlu0 %v1742, 16
  %v1809 = vpop.permute.xlu0 %1808
  %1810 = vrot.lane.b32.xlu0 %v1743, 16
  %v1811 = vpop.permute.xlu0 %1810
  %1812 = vrot.lane.b32.xlu0 %v1744, 16
  %v1813 = vpop.permute.xlu0 %1812
  %1814 = vrot.lane.b32.xlu0 %v1745, 16
  %v1815 = vpop.permute.xlu0 %1814
  %1816 = vrot.lane.b32.xlu0 %v1746, 16
  %v1817 = vpop.permute.xlu0 %1816
  %1818 = vrot.lane.b32.xlu0 %v1747, 16
  %v1819 = vpop.permute.xlu0 %1818
  %1820 = vrot.lane.b32.xlu0 %v1748, 16
  %v1821 = vpop.permute.xlu0 %1820
  %1822 = vrot.lane.b32.xlu0 %v1749, 16
  %v1823 = vpop.permute.xlu0 %1822
  %1824 = vrot.lane.b32.xlu0 %v1750, 16
  %v1825 = vpop.permute.xlu0 %1824
  %1826 = vrot.lane.b32.xlu0 %v1751, 16
  %v1827 = vpop.permute.xlu0 %1826
  %1828 = vrot.lane.b32.xlu0 %v1752, 16
  %v1829 = vpop.permute.xlu0 %1828
  %1830 = vrot.lane.b32.xlu0 %v1753, 16
  %v1831 = vpop.permute.xlu0 %1830
  %1832 = vrot.lane.b32.xlu0 %v1754, 16
  %v1833 = vpop.permute.xlu0 %1832
  %1834 = vrot.lane.b32.xlu0 %v1755, 16
  %v1835 = vpop.permute.xlu0 %1834
  %1836 = vrot.lane.b32.xlu0 %v1756, 16
  %v1837 = vpop.permute.xlu0 %1836
  %1838 = vrot.lane.b32.xlu0 %v1757, 16
  %v1839 = vpop.permute.xlu0 %1838
  %1840 = vrot.lane.b32.xlu0 %v1758, 16
  %v1841 = vpop.permute.xlu0 %1840
  %1842 = vrot.lane.b32.xlu0 %v1759, 16
  %v1843 = vpop.permute.xlu0 %1842
  %1844 = vrot.lane.b32.xlu0 %v1760, 16
  %v1845 = vpop.permute.xlu0 %1844
  %1846 = vrot.lane.b32.xlu0 %v1761, 16
  %v1847 = vpop.permute.xlu0 %1846
  %1848 = vrot.lane.b32.xlu0 %v1762, 16
  %v1849 = vpop.permute.xlu0 %1848
  %1850 = vrot.lane.b32.xlu0 %v1763, 16
  %v1851 = vpop.permute.xlu0 %1850
  %1852 = vrot.lane.b32.xlu0 %v1764, 16
  %v1853 = vpop.permute.xlu0 %1852
  %1854 = vrot.lane.b32.xlu0 %v1765, 16
  %v1855 = vpop.permute.xlu0 %1854
  %1856 = vrot.lane.b32.xlu0 %v1766, 16
  %v1857 = vpop.permute.xlu0 %1856
  %1858 = vrot.lane.b32.xlu0 %v1767, 16
  %v1859 = vpop.permute.xlu0 %1858
  %1860 = vrot.lane.b32.xlu0 %v1768, 16
  %v1861 = vpop.permute.xlu0 %1860
  %1862 = vrot.lane.b32.xlu0 %v1769, 16
  %v1863 = vpop.permute.xlu0 %1862
  %1864 = vrot.lane.b32.xlu0 %v1770, 16
  %v1865 = vpop.permute.xlu0 %1864
  %1866 = vrot.lane.b32.xlu0 %v1771, 16
  %v1867 = vpop.permute.xlu0 %1866
  %vm1900 = vcmask 162944
  %1901 = vst.msk [vmem:[#allocation3] sm:$0xff] %vm1900, %v1805
  %1902 = vst.msk [vmem:[#allocation3 + $0x8] sm:$0xff] %vm1900, %v1807
  %1903 = vst.msk [vmem:[#allocation3 + $0x10] sm:$0xff] %vm1900, %v1809
  %1904 = vst.msk [vmem:[#allocation3 + $0x18] sm:$0xff] %vm1900, %v1811
  %1905 = vst.msk [vmem:[#allocation3 + $0x20] sm:$0xff] %vm1900, %v1813
  %1906 = vst.msk [vmem:[#allocation3 + $0x28] sm:$0xff] %vm1900, %v1815
  %1907 = vst.msk [vmem:[#allocation3 + $0x30] sm:$0xff] %vm1900, %v1817
  %1908 = vst.msk [vmem:[#allocation3 + $0x38] sm:$0xff] %vm1900, %v1819
  %1909 = vst.msk [vmem:[#allocation3 + $0x40] sm:$0xff] %vm1900, %v1821
  %1910 = vst.msk [vmem:[#allocation3 + $0x48] sm:$0xff] %vm1900, %v1823
  %1911 = vst.msk [vmem:[#allocation3 + $0x50] sm:$0xff] %vm1900, %v1825
  %1912 = vst.msk [vmem:[#allocation3 + $0x58] sm:$0xff] %vm1900, %v1827
  %1913 = vst.msk [vmem:[#allocation3 + $0x60] sm:$0xff] %vm1900, %v1829
  %1914 = vst.msk [vmem:[#allocation3 + $0x68] sm:$0xff] %vm1900, %v1831
  %1915 = vst.msk [vmem:[#allocation3 + $0x70] sm:$0xff] %vm1900, %v1833
  %1916 = vst.msk [vmem:[#allocation3 + $0x78] sm:$0xff] %vm1900, %v1835
  %1917 = vst.msk [vmem:[#allocation3 + $0x80] sm:$0xff] %vm1900, %v1837
  %1918 = vst.msk [vmem:[#allocation3 + $0x88] sm:$0xff] %vm1900, %v1839
  %1919 = vst.msk [vmem:[#allocation3 + $0x90] sm:$0xff] %vm1900, %v1841
  %1920 = vst.msk [vmem:[#allocation3 + $0x98] sm:$0xff] %vm1900, %v1843
  %1921 = vst.msk [vmem:[#allocation3 + $0xa0] sm:$0xff] %vm1900, %v1845
  %1922 = vst.msk [vmem:[#allocation3 + $0xa8] sm:$0xff] %vm1900, %v1847
  %1923 = vst.msk [vmem:[#allocation3 + $0xb0] sm:$0xff] %vm1900, %v1849
  %1924 = vst.msk [vmem:[#allocation3 + $0xb8] sm:$0xff] %vm1900, %v1851
  %1925 = vst.msk [vmem:[#allocation3 + $0xc0] sm:$0xff] %vm1900, %v1853
  %1926 = vst.msk [vmem:[#allocation3 + $0xc8] sm:$0xff] %vm1900, %v1855
  %1927 = vst.msk [vmem:[#allocation3 + $0xd0] sm:$0xff] %vm1900, %v1857
  %1928 = vst.msk [vmem:[#allocation3 + $0xd8] sm:$0xff] %vm1900, %v1859
  %1929 = vst.msk [vmem:[#allocation3 + $0xe0] sm:$0xff] %vm1900, %v1861
  %1930 = vst.msk [vmem:[#allocation3 + $0xe8] sm:$0xff] %vm1900, %v1863
  %1931 = vst.msk [vmem:[#allocation3 + $0xf0] sm:$0xff] %vm1900, %v1865
  %1932 = vst.msk [vmem:[#allocation3 + $0xf8] sm:$0xff] %vm1900, %v1867
  %v1933 = vld [vmem:[%s1547 + $0x1] sm:$0xff]
  %v1934 = vld [vmem:[%s1547 + $0x9] sm:$0xff]
  %v1935 = vld [vmem:[%s1547 + $0x19] sm:$0xff]
  %v1936 = vld [vmem:[%s1547 + $0x21] sm:$0xff]
  %v1937 = vld [vmem:[%s1547 + $0x31] sm:$0xff]
  %v1938 = vld [vmem:[%s1547 + $0x39] sm:$0xff]
  %v1939 = vld [vmem:[%s1547 + $0x49] sm:$0xff]
  %v1940 = vld [vmem:[%s1547 + $0x51] sm:$0xff]
  %v1941 = vld [vmem:[%s1547 + $0x61] sm:$0xff]
  %v1942 = vld [vmem:[%s1547 + $0x69] sm:$0xff]
  %v1943 = vld [vmem:[%s1547 + $0x79] sm:$0xff]
  %v1944 = vld [vmem:[%s1547 + $0x81] sm:$0xff]
  %v1945 = vld [vmem:[%s1547 + $0x91] sm:$0xff]
  %v1946 = vld [vmem:[%s1547 + $0x99] sm:$0xff]
  %v1947 = vld [vmem:[%s1547 + $0xa9] sm:$0xff]
  %v1948 = vld [vmem:[%s1547 + $0xb1] sm:$0xff]
  %v1949 = vld [vmem:[%s1547 + $0xc1] sm:$0xff]
  %v1950 = vld [vmem:[%s1547 + $0xc9] sm:$0xff]
  %v1951 = vld [vmem:[%s1547 + $0xd9] sm:$0xff]
  %v1952 = vld [vmem:[%s1547 + $0xe1] sm:$0xff]
  %v1953 = vld [vmem:[%s1547 + $0xf1] sm:$0xff]
  %v1954 = vld [vmem:[%s1547 + $0xf9] sm:$0xff]
  %v1955 = vld [vmem:[%s1547 + $0x109] sm:$0xff]
  %v1956 = vld [vmem:[%s1547 + $0x111] sm:$0xff]
  %v1957 = vld [vmem:[%s1547 + $0x121] sm:$0xff]
  %v1958 = vld [vmem:[%s1547 + $0x129] sm:$0xff]
  %v1959 = vld [vmem:[%s1547 + $0x139] sm:$0xff]
  %v1960 = vld [vmem:[%s1547 + $0x141] sm:$0xff]
  %v1961 = vld [vmem:[%s1547 + $0x151] sm:$0xff]
  %v1962 = vld [vmem:[%s1547 + $0x159] sm:$0xff]
  %v1963 = vld [vmem:[%s1547 + $0x169] sm:$0xff]
  %v1964 = vld [vmem:[%s1547 + $0x171] sm:$0xff]
  %1997 = vrot.lane.b32.xlu0 %v1933, 16
  %v1998 = vpop.permute.xlu0 %1997
  %1999 = vrot.lane.b32.xlu0 %v1934, 16
  %v2000 = vpop.permute.xlu0 %1999
  %2001 = vrot.lane.b32.xlu0 %v1935, 16
  %v2002 = vpop.permute.xlu0 %2001
  %2003 = vrot.lane.b32.xlu0 %v1936, 16
  %v2004 = vpop.permute.xlu0 %2003
  %2005 = vrot.lane.b32.xlu0 %v1937, 16
  %v2006 = vpop.permute.xlu0 %2005
  %2007 = vrot.lane.b32.xlu0 %v1938, 16
  %v2008 = vpop.permute.xlu0 %2007
  %2009 = vrot.lane.b32.xlu0 %v1939, 16
  %v2010 = vpop.permute.xlu0 %2009
  %2011 = vrot.lane.b32.xlu0 %v1940, 16
  %v2012 = vpop.permute.xlu0 %2011
  %2013 = vrot.lane.b32.xlu0 %v1941, 16
  %v2014 = vpop.permute.xlu0 %2013
  %2015 = vrot.lane.b32.xlu0 %v1942, 16
  %v2016 = vpop.permute.xlu0 %2015
  %2017 = vrot.lane.b32.xlu0 %v1943, 16
  %v2018 = vpop.permute.xlu0 %2017
  %2019 = vrot.lane.b32.xlu0 %v1944, 16
  %v2020 = vpop.permute.xlu0 %2019
  %2021 = vrot.lane.b32.xlu0 %v1945, 16
  %v2022 = vpop.permute.xlu0 %2021
  %2023 = vrot.lane.b32.xlu0 %v1946, 16
  %v2024 = vpop.permute.xlu0 %2023
  %2025 = vrot.lane.b32.xlu0 %v1947, 16
  %v2026 = vpop.permute.xlu0 %2025
  %2027 = vrot.lane.b32.xlu0 %v1948, 16
  %v2028 = vpop.permute.xlu0 %2027
  %2029 = vrot.lane.b32.xlu0 %v1949, 16
  %v2030 = vpop.permute.xlu0 %2029
  %2031 = vrot.lane.b32.xlu0 %v1950, 16
  %v2032 = vpop.permute.xlu0 %2031
  %2033 = vrot.lane.b32.xlu0 %v1951, 16
  %v2034 = vpop.permute.xlu0 %2033
  %2035 = vrot.lane.b32.xlu0 %v1952, 16
  %v2036 = vpop.permute.xlu0 %2035
  %2037 = vrot.lane.b32.xlu0 %v1953, 16
  %v2038 = vpop.permute.xlu0 %2037
  %2039 = vrot.lane.b32.xlu0 %v1954, 16
  %v2040 = vpop.permute.xlu0 %2039
  %2041 = vrot.lane.b32.xlu0 %v1955, 16
  %v2042 = vpop.permute.xlu0 %2041
  %2043 = vrot.lane.b32.xlu0 %v1956, 16
  %v2044 = vpop.permute.xlu0 %2043
  %2045 = vrot.lane.b32.xlu0 %v1957, 16
  %v2046 = vpop.permute.xlu0 %2045
  %2047 = vrot.lane.b32.xlu0 %v1958, 16
  %v2048 = vpop.permute.xlu0 %2047
  %2049 = vrot.lane.b32.xlu0 %v1959, 16
  %v2050 = vpop.permute.xlu0 %2049
  %2051 = vrot.lane.b32.xlu0 %v1960, 16
  %v2052 = vpop.permute.xlu0 %2051
  %2053 = vrot.lane.b32.xlu0 %v1961, 16
  %v2054 = vpop.permute.xlu0 %2053
  %2055 = vrot.lane.b32.xlu0 %v1962, 16
  %v2056 = vpop.permute.xlu0 %2055
  %2057 = vrot.lane.b32.xlu0 %v1963, 16
  %v2058 = vpop.permute.xlu0 %2057
  %2059 = vrot.lane.b32.xlu0 %v1964, 16
  %v2060 = vpop.permute.xlu0 %2059
  %2093 = vst.msk [vmem:[#allocation3 + $0x100] sm:$0xff] %vm1900, %v1998
  %2094 = vst.msk [vmem:[#allocation3 + $0x108] sm:$0xff] %vm1900, %v2000
  %2095 = vst.msk [vmem:[#allocation3 + $0x110] sm:$0xff] %vm1900, %v2002
  %2096 = vst.msk [vmem:[#allocation3 + $0x118] sm:$0xff] %vm1900, %v2004
  %2097 = vst.msk [vmem:[#allocation3 + $0x120] sm:$0xff] %vm1900, %v2006
  %2098 = vst.msk [vmem:[#allocation3 + $0x128] sm:$0xff] %vm1900, %v2008
  %2099 = vst.msk [vmem:[#allocation3 + $0x130] sm:$0xff] %vm1900, %v2010
  %2100 = vst.msk [vmem:[#allocation3 + $0x138] sm:$0xff] %vm1900, %v2012
  %2101 = vst.msk [vmem:[#allocation3 + $0x140] sm:$0xff] %vm1900, %v2014
  %2102 = vst.msk [vmem:[#allocation3 + $0x148] sm:$0xff] %vm1900, %v2016
  %2103 = vst.msk [vmem:[#allocation3 + $0x150] sm:$0xff] %vm1900, %v2018
  %2104 = vst.msk [vmem:[#allocation3 + $0x158] sm:$0xff] %vm1900, %v2020
  %2105 = vst.msk [vmem:[#allocation3 + $0x160] sm:$0xff] %vm1900, %v2022
  %2106 = vst.msk [vmem:[#allocation3 + $0x168] sm:$0xff] %vm1900, %v2024
  %2107 = vst.msk [vmem:[#allocation3 + $0x170] sm:$0xff] %vm1900, %v2026
  %2108 = vst.msk [vmem:[#allocation3 + $0x178] sm:$0xff] %vm1900, %v2028
  %2109 = vst.msk [vmem:[#allocation3 + $0x180] sm:$0xff] %vm1900, %v2030
  %2110 = vst.msk [vmem:[#allocation3 + $0x188] sm:$0xff] %vm1900, %v2032
  %2111 = vst.msk [vmem:[#allocation3 + $0x190] sm:$0xff] %vm1900, %v2034
  %2112 = vst.msk [vmem:[#allocation3 + $0x198] sm:$0xff] %vm1900, %v2036
  %2113 = vst.msk [vmem:[#allocation3 + $0x1a0] sm:$0xff] %vm1900, %v2038
  %2114 = vst.msk [vmem:[#allocation3 + $0x1a8] sm:$0xff] %vm1900, %v2040
  %2115 = vst.msk [vmem:[#allocation3 + $0x1b0] sm:$0xff] %vm1900, %v2042
  %2116 = vst.msk [vmem:[#allocation3 + $0x1b8] sm:$0xff] %vm1900, %v2044
  %2117 = vst.msk [vmem:[#allocation3 + $0x1c0] sm:$0xff] %vm1900, %v2046
  %2118 = vst.msk [vmem:[#allocation3 + $0x1c8] sm:$0xff] %vm1900, %v2048
  %2119 = vst.msk [vmem:[#allocation3 + $0x1d0] sm:$0xff] %vm1900, %v2050
  %2120 = vst.msk [vmem:[#allocation3 + $0x1d8] sm:$0xff] %vm1900, %v2052
  %2121 = vst.msk [vmem:[#allocation3 + $0x1e0] sm:$0xff] %vm1900, %v2054
  %2122 = vst.msk [vmem:[#allocation3 + $0x1e8] sm:$0xff] %vm1900, %v2056
  %2123 = vst.msk [vmem:[#allocation3 + $0x1f0] sm:$0xff] %vm1900, %v2058
  %2124 = vst.msk [vmem:[#allocation3 + $0x1f8] sm:$0xff] %vm1900, %v2060
  %v2125 = vld [vmem:[%s1353 + $0x2] sm:$0xff]
  %v2126 = vld [vmem:[%s1353 + $0xa] sm:$0xff]
  %v2127 = vld [vmem:[%s1353 + $0x1a] sm:$0xff]
  %v2128 = vld [vmem:[%s1353 + $0x22] sm:$0xff]
  %v2129 = vld [vmem:[%s1353 + $0x32] sm:$0xff]
  %v2130 = vld [vmem:[%s1353 + $0x3a] sm:$0xff]
  %v2131 = vld [vmem:[%s1353 + $0x4a] sm:$0xff]
  %v2132 = vld [vmem:[%s1353 + $0x52] sm:$0xff]
  %v2133 = vld [vmem:[%s1353 + $0x62] sm:$0xff]
  %v2134 = vld [vmem:[%s1353 + $0x6a] sm:$0xff]
  %v2135 = vld [vmem:[%s1353 + $0x7a] sm:$0xff]
  %v2136 = vld [vmem:[%s1353 + $0x82] sm:$0xff]
  %v2137 = vld [vmem:[%s1353 + $0x92] sm:$0xff]
  %v2138 = vld [vmem:[%s1353 + $0x9a] sm:$0xff]
  %v2139 = vld [vmem:[%s1353 + $0xaa] sm:$0xff]
  %v2140 = vld [vmem:[%s1353 + $0xb2] sm:$0xff]
  %v2141 = vld [vmem:[%s1353 + $0xc2] sm:$0xff]
  %v2142 = vld [vmem:[%s1353 + $0xca] sm:$0xff]
  %v2143 = vld [vmem:[%s1353 + $0xda] sm:$0xff]
  %v2144 = vld [vmem:[%s1353 + $0xe2] sm:$0xff]
  %v2145 = vld [vmem:[%s1353 + $0xf2] sm:$0xff]
  %v2146 = vld [vmem:[%s1353 + $0xfa] sm:$0xff]
  %v2147 = vld [vmem:[%s1353 + $0x10a] sm:$0xff]
  %v2148 = vld [vmem:[%s1353 + $0x112] sm:$0xff]
  %v2149 = vld [vmem:[%s1353 + $0x122] sm:$0xff]
  %v2150 = vld [vmem:[%s1353 + $0x12a] sm:$0xff]
  %v2151 = vld [vmem:[%s1353 + $0x13a] sm:$0xff]
  %v2152 = vld [vmem:[%s1353 + $0x142] sm:$0xff]
  %v2153 = vld [vmem:[%s1353 + $0x152] sm:$0xff]
  %v2154 = vld [vmem:[%s1353 + $0x15a] sm:$0xff]
  %v2155 = vld [vmem:[%s1353 + $0x16a] sm:$0xff]
  %v2156 = vld [vmem:[%s1353 + $0x172] sm:$0xff]
  %2189 = vrot.lane.b32.xlu0 %v2125, 20
  %v2190 = vpop.permute.xlu0 %2189
  %2191 = vrot.lane.b32.xlu0 %v2126, 20
  %v2192 = vpop.permute.xlu0 %2191
  %2193 = vrot.lane.b32.xlu0 %v2127, 20
  %v2194 = vpop.permute.xlu0 %2193
  %2195 = vrot.lane.b32.xlu0 %v2128, 20
  %v2196 = vpop.permute.xlu0 %2195
  %2197 = vrot.lane.b32.xlu0 %v2129, 20
  %v2198 = vpop.permute.xlu0 %2197
  %2199 = vrot.lane.b32.xlu0 %v2130, 20
  %v2200 = vpop.permute.xlu0 %2199
  %2201 = vrot.lane.b32.xlu0 %v2131, 20
  %v2202 = vpop.permute.xlu0 %2201
  %2203 = vrot.lane.b32.xlu0 %v2132, 20
  %v2204 = vpop.permute.xlu0 %2203
  %2205 = vrot.lane.b32.xlu0 %v2133, 20
  %v2206 = vpop.permute.xlu0 %2205
  %2207 = vrot.lane.b32.xlu0 %v2134, 20
  %v2208 = vpop.permute.xlu0 %2207
  %2209 = vrot.lane.b32.xlu0 %v2135, 20
  %v2210 = vpop.permute.xlu0 %2209
  %2211 = vrot.lane.b32.xlu0 %v2136, 20
  %v2212 = vpop.permute.xlu0 %2211
  %2213 = vrot.lane.b32.xlu0 %v2137, 20
  %v2214 = vpop.permute.xlu0 %2213
  %2215 = vrot.lane.b32.xlu0 %v2138, 20
  %v2216 = vpop.permute.xlu0 %2215
  %2217 = vrot.lane.b32.xlu0 %v2139, 20
  %v2218 = vpop.permute.xlu0 %2217
  %2219 = vrot.lane.b32.xlu0 %v2140, 20
  %v2220 = vpop.permute.xlu0 %2219
  %2221 = vrot.lane.b32.xlu0 %v2141, 20
  %v2222 = vpop.permute.xlu0 %2221
  %2223 = vrot.lane.b32.xlu0 %v2142, 20
  %v2224 = vpop.permute.xlu0 %2223
  %2225 = vrot.lane.b32.xlu0 %v2143, 20
  %v2226 = vpop.permute.xlu0 %2225
  %2227 = vrot.lane.b32.xlu0 %v2144, 20
  %v2228 = vpop.permute.xlu0 %2227
  %2229 = vrot.lane.b32.xlu0 %v2145, 20
  %v2230 = vpop.permute.xlu0 %2229
  %2231 = vrot.lane.b32.xlu0 %v2146, 20
  %v2232 = vpop.permute.xlu0 %2231
  %2233 = vrot.lane.b32.xlu0 %v2147, 20
  %v2234 = vpop.permute.xlu0 %2233
  %2235 = vrot.lane.b32.xlu0 %v2148, 20
  %v2236 = vpop.permute.xlu0 %2235
  %2237 = vrot.lane.b32.xlu0 %v2149, 20
  %v2238 = vpop.permute.xlu0 %2237
  %2239 = vrot.lane.b32.xlu0 %v2150, 20
  %v2240 = vpop.permute.xlu0 %2239
  %2241 = vrot.lane.b32.xlu0 %v2151, 20
  %v2242 = vpop.permute.xlu0 %2241
  %2243 = vrot.lane.b32.xlu0 %v2152, 20
  %v2244 = vpop.permute.xlu0 %2243
  %2245 = vrot.lane.b32.xlu0 %v2153, 20
  %v2246 = vpop.permute.xlu0 %2245
  %2247 = vrot.lane.b32.xlu0 %v2154, 20
  %v2248 = vpop.permute.xlu0 %2247
  %2249 = vrot.lane.b32.xlu0 %v2155, 20
  %v2250 = vpop.permute.xlu0 %2249
  %2251 = vrot.lane.b32.xlu0 %v2156, 20
  %v2252 = vpop.permute.xlu0 %2251
  %vm2285 = vcmask 195744
  %2286 = vst.msk [vmem:[#allocation3] sm:$0xff] %vm2285, %v2190
  %2287 = vst.msk [vmem:[#allocation3 + $0x8] sm:$0xff] %vm2285, %v2192
  %2288 = vst.msk [vmem:[#allocation3 + $0x10] sm:$0xff] %vm2285, %v2194
  %2289 = vst.msk [vmem:[#allocation3 + $0x18] sm:$0xff] %vm2285, %v2196
  %2290 = vst.msk [vmem:[#allocation3 + $0x20] sm:$0xff] %vm2285, %v2198
  %2291 = vst.msk [vmem:[#allocation3 + $0x28] sm:$0xff] %vm2285, %v2200
  %2292 = vst.msk [vmem:[#allocation3 + $0x30] sm:$0xff] %vm2285, %v2202
  %2293 = vst.msk [vmem:[#allocation3 + $0x38] sm:$0xff] %vm2285, %v2204
  %2294 = vst.msk [vmem:[#allocation3 + $0x40] sm:$0xff] %vm2285, %v2206
  %2295 = vst.msk [vmem:[#allocation3 + $0x48] sm:$0xff] %vm2285, %v2208
  %2296 = vst.msk [vmem:[#allocation3 + $0x50] sm:$0xff] %vm2285, %v2210
  %2297 = vst.msk [vmem:[#allocation3 + $0x58] sm:$0xff] %vm2285, %v2212
  %2298 = vst.msk [vmem:[#allocation3 + $0x60] sm:$0xff] %vm2285, %v2214
  %2299 = vst.msk [vmem:[#allocation3 + $0x68] sm:$0xff] %vm2285, %v2216
  %2300 = vst.msk [vmem:[#allocation3 + $0x70] sm:$0xff] %vm2285, %v2218
  %2301 = vst.msk [vmem:[#allocation3 + $0x78] sm:$0xff] %vm2285, %v2220
  %2302 = vst.msk [vmem:[#allocation3 + $0x80] sm:$0xff] %vm2285, %v2222
  %2303 = vst.msk [vmem:[#allocation3 + $0x88] sm:$0xff] %vm2285, %v2224
  %2304 = vst.msk [vmem:[#allocation3 + $0x90] sm:$0xff] %vm2285, %v2226
  %2305 = vst.msk [vmem:[#allocation3 + $0x98] sm:$0xff] %vm2285, %v2228
  %2306 = vst.msk [vmem:[#allocation3 + $0xa0] sm:$0xff] %vm2285, %v2230
  %2307 = vst.msk [vmem:[#allocation3 + $0xa8] sm:$0xff] %vm2285, %v2232
  %2308 = vst.msk [vmem:[#allocation3 + $0xb0] sm:$0xff] %vm2285, %v2234
  %2309 = vst.msk [vmem:[#allocation3 + $0xb8] sm:$0xff] %vm2285, %v2236
  %2310 = vst.msk [vmem:[#allocation3 + $0xc0] sm:$0xff] %vm2285, %v2238
  %2311 = vst.msk [vmem:[#allocation3 + $0xc8] sm:$0xff] %vm2285, %v2240
  %2312 = vst.msk [vmem:[#allocation3 + $0xd0] sm:$0xff] %vm2285, %v2242
  %2313 = vst.msk [vmem:[#allocation3 + $0xd8] sm:$0xff] %vm2285, %v2244
  %2314 = vst.msk [vmem:[#allocation3 + $0xe0] sm:$0xff] %vm2285, %v2246
  %2315 = vst.msk [vmem:[#allocation3 + $0xe8] sm:$0xff] %vm2285, %v2248
  %2316 = vst.msk [vmem:[#allocation3 + $0xf0] sm:$0xff] %vm2285, %v2250
  %2317 = vst.msk [vmem:[#allocation3 + $0xf8] sm:$0xff] %vm2285, %v2252
  %v2318 = vld [vmem:[%s1547 + $0x2] sm:$0xff]
  %v2319 = vld [vmem:[%s1547 + $0xa] sm:$0xff]
  %v2320 = vld [vmem:[%s1547 + $0x1a] sm:$0xff]
  %v2321 = vld [vmem:[%s1547 + $0x22] sm:$0xff]
  %v2322 = vld [vmem:[%s1547 + $0x32] sm:$0xff]
  %v2323 = vld [vmem:[%s1547 + $0x3a] sm:$0xff]
  %v2324 = vld [vmem:[%s1547 + $0x4a] sm:$0xff]
  %v2325 = vld [vmem:[%s1547 + $0x52] sm:$0xff]
  %v2326 = vld [vmem:[%s1547 + $0x62] sm:$0xff]
  %v2327 = vld [vmem:[%s1547 + $0x6a] sm:$0xff]
  %v2328 = vld [vmem:[%s1547 + $0x7a] sm:$0xff]
  %v2329 = vld [vmem:[%s1547 + $0x82] sm:$0xff]
  %v2330 = vld [vmem:[%s1547 + $0x92] sm:$0xff]
  %v2331 = vld [vmem:[%s1547 + $0x9a] sm:$0xff]
  %v2332 = vld [vmem:[%s1547 + $0xaa] sm:$0xff]
  %v2333 = vld [vmem:[%s1547 + $0xb2] sm:$0xff]
  %v2334 = vld [vmem:[%s1547 + $0xc2] sm:$0xff]
  %v2335 = vld [vmem:[%s1547 + $0xca] sm:$0xff]
  %v2336 = vld [vmem:[%s1547 + $0xda] sm:$0xff]
  %v2337 = vld [vmem:[%s1547 + $0xe2] sm:$0xff]
  %v2338 = vld [vmem:[%s1547 + $0xf2] sm:$0xff]
  %v2339 = vld [vmem:[%s1547 + $0xfa] sm:$0xff]
  %v2340 = vld [vmem:[%s1547 + $0x10a] sm:$0xff]
  %v2341 = vld [vmem:[%s1547 + $0x112] sm:$0xff]
  %v2342 = vld [vmem:[%s1547 + $0x122] sm:$0xff]
  %v2343 = vld [vmem:[%s1547 + $0x12a] sm:$0xff]
  %v2344 = vld [vmem:[%s1547 + $0x13a] sm:$0xff]
  %v2345 = vld [vmem:[%s1547 + $0x142] sm:$0xff]
  %v2346 = vld [vmem:[%s1547 + $0x152] sm:$0xff]
  %v2347 = vld [vmem:[%s1547 + $0x15a] sm:$0xff]
  %v2348 = vld [vmem:[%s1547 + $0x16a] sm:$0xff]
  %v2349 = vld [vmem:[%s1547 + $0x172] sm:$0xff]
  %2382 = vrot.lane.b32.xlu0 %v2318, 20
  %v2383 = vpop.permute.xlu0 %2382
  %2384 = vrot.lane.b32.xlu0 %v2319, 20
  %v2385 = vpop.permute.xlu0 %2384
  %2386 = vrot.lane.b32.xlu0 %v2320, 20
  %v2387 = vpop.permute.xlu0 %2386
  %2388 = vrot.lane.b32.xlu0 %v2321, 20
  %v2389 = vpop.permute.xlu0 %2388
  %2390 = vrot.lane.b32.xlu0 %v2322, 20
  %v2391 = vpop.permute.xlu0 %2390
  %2392 = vrot.lane.b32.xlu0 %v2323, 20
  %v2393 = vpop.permute.xlu0 %2392
  %2394 = vrot.lane.b32.xlu0 %v2324, 20
  %v2395 = vpop.permute.xlu0 %2394
  %2396 = vrot.lane.b32.xlu0 %v2325, 20
  %v2397 = vpop.permute.xlu0 %2396
  %2398 = vrot.lane.b32.xlu0 %v2326, 20
  %v2399 = vpop.permute.xlu0 %2398
  %2400 = vrot.lane.b32.xlu0 %v2327, 20
  %v2401 = vpop.permute.xlu0 %2400
  %2402 = vrot.lane.b32.xlu0 %v2328, 20
  %v2403 = vpop.permute.xlu0 %2402
  %2404 = vrot.lane.b32.xlu0 %v2329, 20
  %v2405 = vpop.permute.xlu0 %2404
  %2406 = vrot.lane.b32.xlu0 %v2330, 20
  %v2407 = vpop.permute.xlu0 %2406
  %2408 = vrot.lane.b32.xlu0 %v2331, 20
  %v2409 = vpop.permute.xlu0 %2408
  %2410 = vrot.lane.b32.xlu0 %v2332, 20
  %v2411 = vpop.permute.xlu0 %2410
  %2412 = vrot.lane.b32.xlu0 %v2333, 20
  %v2413 = vpop.permute.xlu0 %2412
  %2414 = vrot.lane.b32.xlu0 %v2334, 20
  %v2415 = vpop.permute.xlu0 %2414
  %2416 = vrot.lane.b32.xlu0 %v2335, 20
  %v2417 = vpop.permute.xlu0 %2416
  %2418 = vrot.lane.b32.xlu0 %v2336, 20
  %v2419 = vpop.permute.xlu0 %2418
  %2420 = vrot.lane.b32.xlu0 %v2337, 20
  %v2421 = vpop.permute.xlu0 %2420
  %2422 = vrot.lane.b32.xlu0 %v2338, 20
  %v2423 = vpop.permute.xlu0 %2422
  %2424 = vrot.lane.b32.xlu0 %v2339, 20
  %v2425 = vpop.permute.xlu0 %2424
  %2426 = vrot.lane.b32.xlu0 %v2340, 20
  %v2427 = vpop.permute.xlu0 %2426
  %2428 = vrot.lane.b32.xlu0 %v2341, 20
  %v2429 = vpop.permute.xlu0 %2428
  %2430 = vrot.lane.b32.xlu0 %v2342, 20
  %v2431 = vpop.permute.xlu0 %2430
  %2432 = vrot.lane.b32.xlu0 %v2343, 20
  %v2433 = vpop.permute.xlu0 %2432
  %2434 = vrot.lane.b32.xlu0 %v2344, 20
  %v2435 = vpop.permute.xlu0 %2434
  %2436 = vrot.lane.b32.xlu0 %v2345, 20
  %v2437 = vpop.permute.xlu0 %2436
  %2438 = vrot.lane.b32.xlu0 %v2346, 20
  %v2439 = vpop.permute.xlu0 %2438
  %2440 = vrot.lane.b32.xlu0 %v2347, 20
  %v2441 = vpop.permute.xlu0 %2440
  %2442 = vrot.lane.b32.xlu0 %v2348, 20
  %v2443 = vpop.permute.xlu0 %2442
  %2444 = vrot.lane.b32.xlu0 %v2349, 20
  %v2445 = vpop.permute.xlu0 %2444
  %2478 = vst.msk [vmem:[#allocation3 + $0x100] sm:$0xff] %vm2285, %v2383
  %2479 = vst.msk [vmem:[#allocation3 + $0x108] sm:$0xff] %vm2285, %v2385
  %2480 = vst.msk [vmem:[#allocation3 + $0x110] sm:$0xff] %vm2285, %v2387
  %2481 = vst.msk [vmem:[#allocation3 + $0x118] sm:$0xff] %vm2285, %v2389
  %2482 = vst.msk [vmem:[#allocation3 + $0x120] sm:$0xff] %vm2285, %v2391
  %2483 = vst.msk [vmem:[#allocation3 + $0x128] sm:$0xff] %vm2285, %v2393
  %2484 = vst.msk [vmem:[#allocation3 + $0x130] sm:$0xff] %vm2285, %v2395
  %2485 = vst.msk [vmem:[#allocation3 + $0x138] sm:$0xff] %vm2285, %v2397
  %2486 = vst.msk [vmem:[#allocation3 + $0x140] sm:$0xff] %vm2285, %v2399
  %2487 = vst.msk [vmem:[#allocation3 + $0x148] sm:$0xff] %vm2285, %v2401
  %2488 = vst.msk [vmem:[#allocation3 + $0x150] sm:$0xff] %vm2285, %v2403
  %2489 = vst.msk [vmem:[#allocation3 + $0x158] sm:$0xff] %vm2285, %v2405
  %2490 = vst.msk [vmem:[#allocation3 + $0x160] sm:$0xff] %vm2285, %v2407
  %2491 = vst.msk [vmem:[#allocation3 + $0x168] sm:$0xff] %vm2285, %v2409
  %2492 = vst.msk [vmem:[#allocation3 + $0x170] sm:$0xff] %vm2285, %v2411
  %2493 = vst.msk [vmem:[#allocation3 + $0x178] sm:$0xff] %vm2285, %v2413
  %2494 = vst.msk [vmem:[#allocation3 + $0x180] sm:$0xff] %vm2285, %v2415
  %2495 = vst.msk [vmem:[#allocation3 + $0x188] sm:$0xff] %vm2285, %v2417
  %2496 = vst.msk [vmem:[#allocation3 + $0x190] sm:$0xff] %vm2285, %v2419
  %2497 = vst.msk [vmem:[#allocation3 + $0x198] sm:$0xff] %vm2285, %v2421
  %2498 = vst.msk [vmem:[#allocation3 + $0x1a0] sm:$0xff] %vm2285, %v2423
  %2499 = vst.msk [vmem:[#allocation3 + $0x1a8] sm:$0xff] %vm2285, %v2425
  %2500 = vst.msk [vmem:[#allocation3 + $0x1b0] sm:$0xff] %vm2285, %v2427
  %2501 = vst.msk [vmem:[#allocation3 + $0x1b8] sm:$0xff] %vm2285, %v2429
  %2502 = vst.msk [vmem:[#allocation3 + $0x1c0] sm:$0xff] %vm2285, %v2431
  %2503 = vst.msk [vmem:[#allocation3 + $0x1c8] sm:$0xff] %vm2285, %v2433
  %2504 = vst.msk [vmem:[#allocation3 + $0x1d0] sm:$0xff] %vm2285, %v2435
  %2505 = vst.msk [vmem:[#allocation3 + $0x1d8] sm:$0xff] %vm2285, %v2437
  %2506 = vst.msk [vmem:[#allocation3 + $0x1e0] sm:$0xff] %vm2285, %v2439
  %2507 = vst.msk [vmem:[#allocation3 + $0x1e8] sm:$0xff] %vm2285, %v2441
  %2508 = vst.msk [vmem:[#allocation3 + $0x1f0] sm:$0xff] %vm2285, %v2443
  %2509 = vst.msk [vmem:[#allocation3 + $0x1f8] sm:$0xff] %vm2285, %v2445
  %v2510 = vld [vmem:[%s92] sm:$0xff]
  %v2511 = vld [vmem:[%s92 + $0x8] sm:$0xff]
  %v2512 = vld [vmem:[%s92 + $0x18] sm:$0xff]
  %v2513 = vld [vmem:[%s92 + $0x20] sm:$0xff]
  %v2514 = vld [vmem:[%s92 + $0x30] sm:$0xff]
  %v2515 = vld [vmem:[%s92 + $0x38] sm:$0xff]
  %v2516 = vld [vmem:[%s92 + $0x48] sm:$0xff]
  %v2517 = vld [vmem:[%s92 + $0x50] sm:$0xff]
  %v2518 = vld [vmem:[%s92 + $0x60] sm:$0xff]
  %v2519 = vld [vmem:[%s92 + $0x68] sm:$0xff]
  %v2520 = vld [vmem:[%s92 + $0x78] sm:$0xff]
  %v2521 = vld [vmem:[%s92 + $0x80] sm:$0xff]
  %v2522 = vld [vmem:[%s92 + $0x90] sm:$0xff]
  %v2523 = vld [vmem:[%s92 + $0x98] sm:$0xff]
  %v2524 = vld [vmem:[%s92 + $0xa8] sm:$0xff]
  %v2525 = vld [vmem:[%s92 + $0xb0] sm:$0xff]
  %v2526 = vld [vmem:[%s92 + $0xc0] sm:$0xff]
  %v2527 = vld [vmem:[%s92 + $0xc8] sm:$0xff]
  %v2528 = vld [vmem:[%s92 + $0xd8] sm:$0xff]
  %v2529 = vld [vmem:[%s92 + $0xe0] sm:$0xff]
  %v2530 = vld [vmem:[%s92 + $0xf0] sm:$0xff]
  %v2531 = vld [vmem:[%s92 + $0xf8] sm:$0xff]
  %v2532 = vld [vmem:[%s92 + $0x108] sm:$0xff]
  %v2533 = vld [vmem:[%s92 + $0x110] sm:$0xff]
  %v2534 = vld [vmem:[%s92 + $0x120] sm:$0xff]
  %v2535 = vld [vmem:[%s92 + $0x128] sm:$0xff]
  %v2536 = vld [vmem:[%s92 + $0x138] sm:$0xff]
  %v2537 = vld [vmem:[%s92 + $0x140] sm:$0xff]
  %v2538 = vld [vmem:[%s92 + $0x150] sm:$0xff]
  %v2539 = vld [vmem:[%s92 + $0x158] sm:$0xff]
  %v2540 = vld [vmem:[%s92 + $0x168] sm:$0xff]
  %v2541 = vld [vmem:[%s92 + $0x170] sm:$0xff]
  %2574 = vrot.lane.b32.xlu0 %v2510, 24
  %v2575 = vpop.permute.xlu0 %2574
  %2576 = vrot.lane.b32.xlu0 %v2511, 24
  %v2577 = vpop.permute.xlu0 %2576
  %2578 = vrot.lane.b32.xlu0 %v2512, 24
  %v2579 = vpop.permute.xlu0 %2578
  %2580 = vrot.lane.b32.xlu0 %v2513, 24
  %v2581 = vpop.permute.xlu0 %2580
  %2582 = vrot.lane.b32.xlu0 %v2514, 24
  %v2583 = vpop.permute.xlu0 %2582
  %2584 = vrot.lane.b32.xlu0 %v2515, 24
  %v2585 = vpop.permute.xlu0 %2584
  %2586 = vrot.lane.b32.xlu0 %v2516, 24
  %v2587 = vpop.permute.xlu0 %2586
  %2588 = vrot.lane.b32.xlu0 %v2517, 24
  %v2589 = vpop.permute.xlu0 %2588
  %2590 = vrot.lane.b32.xlu0 %v2518, 24
  %v2591 = vpop.permute.xlu0 %2590
  %2592 = vrot.lane.b32.xlu0 %v2519, 24
  %v2593 = vpop.permute.xlu0 %2592
  %2594 = vrot.lane.b32.xlu0 %v2520, 24
  %v2595 = vpop.permute.xlu0 %2594
  %2596 = vrot.lane.b32.xlu0 %v2521, 24
  %v2597 = vpop.permute.xlu0 %2596
  %2598 = vrot.lane.b32.xlu0 %v2522, 24
  %v2599 = vpop.permute.xlu0 %2598
  %2600 = vrot.lane.b32.xlu0 %v2523, 24
  %v2601 = vpop.permute.xlu0 %2600
  %2602 = vrot.lane.b32.xlu0 %v2524, 24
  %v2603 = vpop.permute.xlu0 %2602
  %2604 = vrot.lane.b32.xlu0 %v2525, 24
  %v2605 = vpop.permute.xlu0 %2604
  %2606 = vrot.lane.b32.xlu0 %v2526, 24
  %v2607 = vpop.permute.xlu0 %2606
  %2608 = vrot.lane.b32.xlu0 %v2527, 24
  %v2609 = vpop.permute.xlu0 %2608
  %2610 = vrot.lane.b32.xlu0 %v2528, 24
  %v2611 = vpop.permute.xlu0 %2610
  %2612 = vrot.lane.b32.xlu0 %v2529, 24
  %v2613 = vpop.permute.xlu0 %2612
  %2614 = vrot.lane.b32.xlu0 %v2530, 24
  %v2615 = vpop.permute.xlu0 %2614
  %2616 = vrot.lane.b32.xlu0 %v2531, 24
  %v2617 = vpop.permute.xlu0 %2616
  %2618 = vrot.lane.b32.xlu0 %v2532, 24
  %v2619 = vpop.permute.xlu0 %2618
  %2620 = vrot.lane.b32.xlu0 %v2533, 24
  %v2621 = vpop.permute.xlu0 %2620
  %2622 = vrot.lane.b32.xlu0 %v2534, 24
  %v2623 = vpop.permute.xlu0 %2622
  %2624 = vrot.lane.b32.xlu0 %v2535, 24
  %v2625 = vpop.permute.xlu0 %2624
  %2626 = vrot.lane.b32.xlu0 %v2536, 24
  %v2627 = vpop.permute.xlu0 %2626
  %2628 = vrot.lane.b32.xlu0 %v2537, 24
  %v2629 = vpop.permute.xlu0 %2628
  %2630 = vrot.lane.b32.xlu0 %v2538, 24
  %v2631 = vpop.permute.xlu0 %2630
  %2632 = vrot.lane.b32.xlu0 %v2539, 24
  %v2633 = vpop.permute.xlu0 %2632
  %2634 = vrot.lane.b32.xlu0 %v2540, 24
  %v2635 = vpop.permute.xlu0 %2634
  %2636 = vrot.lane.b32.xlu0 %v2541, 24
  %v2637 = vpop.permute.xlu0 %2636
  %vm2670 = vcmask 228544
  %2671 = vst.msk [vmem:[#allocation3] sm:$0xff] %vm2670, %v2575
  %2672 = vst.msk [vmem:[#allocation3 + $0x8] sm:$0xff] %vm2670, %v2577
  %2673 = vst.msk [vmem:[#allocation3 + $0x10] sm:$0xff] %vm2670, %v2579
  %2674 = vst.msk [vmem:[#allocation3 + $0x18] sm:$0xff] %vm2670, %v2581
  %2675 = vst.msk [vmem:[#allocation3 + $0x20] sm:$0xff] %vm2670, %v2583
  %2676 = vst.msk [vmem:[#allocation3 + $0x28] sm:$0xff] %vm2670, %v2585
  %2677 = vst.msk [vmem:[#allocation3 + $0x30] sm:$0xff] %vm2670, %v2587
  %2678 = vst.msk [vmem:[#allocation3 + $0x38] sm:$0xff] %vm2670, %v2589
  %2679 = vst.msk [vmem:[#allocation3 + $0x40] sm:$0xff] %vm2670, %v2591
  %2680 = vst.msk [vmem:[#allocation3 + $0x48] sm:$0xff] %vm2670, %v2593
  %2681 = vst.msk [vmem:[#allocation3 + $0x50] sm:$0xff] %vm2670, %v2595
  %2682 = vst.msk [vmem:[#allocation3 + $0x58] sm:$0xff] %vm2670, %v2597
  %2683 = vst.msk [vmem:[#allocation3 + $0x60] sm:$0xff] %vm2670, %v2599
  %2684 = vst.msk [vmem:[#allocation3 + $0x68] sm:$0xff] %vm2670, %v2601
  %2685 = vst.msk [vmem:[#allocation3 + $0x70] sm:$0xff] %vm2670, %v2603
  %2686 = vst.msk [vmem:[#allocation3 + $0x78] sm:$0xff] %vm2670, %v2605
  %2687 = vst.msk [vmem:[#allocation3 + $0x80] sm:$0xff] %vm2670, %v2607
  %2688 = vst.msk [vmem:[#allocation3 + $0x88] sm:$0xff] %vm2670, %v2609
  %2689 = vst.msk [vmem:[#allocation3 + $0x90] sm:$0xff] %vm2670, %v2611
  %2690 = vst.msk [vmem:[#allocation3 + $0x98] sm:$0xff] %vm2670, %v2613
  %2691 = vst.msk [vmem:[#allocation3 + $0xa0] sm:$0xff] %vm2670, %v2615
  %2692 = vst.msk [vmem:[#allocation3 + $0xa8] sm:$0xff] %vm2670, %v2617
  %2693 = vst.msk [vmem:[#allocation3 + $0xb0] sm:$0xff] %vm2670, %v2619
  %2694 = vst.msk [vmem:[#allocation3 + $0xb8] sm:$0xff] %vm2670, %v2621
  %2695 = vst.msk [vmem:[#allocation3 + $0xc0] sm:$0xff] %vm2670, %v2623
  %2696 = vst.msk [vmem:[#allocation3 + $0xc8] sm:$0xff] %vm2670, %v2625
  %2697 = vst.msk [vmem:[#allocation3 + $0xd0] sm:$0xff] %vm2670, %v2627
  %2698 = vst.msk [vmem:[#allocation3 + $0xd8] sm:$0xff] %vm2670, %v2629
  %2699 = vst.msk [vmem:[#allocation3 + $0xe0] sm:$0xff] %vm2670, %v2631
  %2700 = vst.msk [vmem:[#allocation3 + $0xe8] sm:$0xff] %vm2670, %v2633
  %2701 = vst.msk [vmem:[#allocation3 + $0xf0] sm:$0xff] %vm2670, %v2635
  %2702 = vst.msk [vmem:[#allocation3 + $0xf8] sm:$0xff] %vm2670, %v2637
  %v2703 = vld [vmem:[%s200] sm:$0xff]
  %v2704 = vld [vmem:[%s200 + $0x8] sm:$0xff]
  %v2705 = vld [vmem:[%s200 + $0x18] sm:$0xff]
  %v2706 = vld [vmem:[%s200 + $0x20] sm:$0xff]
  %v2707 = vld [vmem:[%s200 + $0x30] sm:$0xff]
  %v2708 = vld [vmem:[%s200 + $0x38] sm:$0xff]
  %v2709 = vld [vmem:[%s200 + $0x48] sm:$0xff]
  %v2710 = vld [vmem:[%s200 + $0x50] sm:$0xff]
  %v2711 = vld [vmem:[%s200 + $0x60] sm:$0xff]
  %v2712 = vld [vmem:[%s200 + $0x68] sm:$0xff]
  %v2713 = vld [vmem:[%s200 + $0x78] sm:$0xff]
  %v2714 = vld [vmem:[%s200 + $0x80] sm:$0xff]
  %v2715 = vld [vmem:[%s200 + $0x90] sm:$0xff]
  %v2716 = vld [vmem:[%s200 + $0x98] sm:$0xff]
  %v2717 = vld [vmem:[%s200 + $0xa8] sm:$0xff]
  %v2718 = vld [vmem:[%s200 + $0xb0] sm:$0xff]
  %v2719 = vld [vmem:[%s200 + $0xc0] sm:$0xff]
  %v2720 = vld [vmem:[%s200 + $0xc8] sm:$0xff]
  %v2721 = vld [vmem:[%s200 + $0xd8] sm:$0xff]
  %v2722 = vld [vmem:[%s200 + $0xe0] sm:$0xff]
  %v2723 = vld [vmem:[%s200 + $0xf0] sm:$0xff]
  %v2724 = vld [vmem:[%s200 + $0xf8] sm:$0xff]
  %v2725 = vld [vmem:[%s200 + $0x108] sm:$0xff]
  %v2726 = vld [vmem:[%s200 + $0x110] sm:$0xff]
  %v2727 = vld [vmem:[%s200 + $0x120] sm:$0xff]
  %v2728 = vld [vmem:[%s200 + $0x128] sm:$0xff]
  %v2729 = vld [vmem:[%s200 + $0x138] sm:$0xff]
  %v2730 = vld [vmem:[%s200 + $0x140] sm:$0xff]
  %v2731 = vld [vmem:[%s200 + $0x150] sm:$0xff]
  %v2732 = vld [vmem:[%s200 + $0x158] sm:$0xff]
  %v2733 = vld [vmem:[%s200 + $0x168] sm:$0xff]
  %v2734 = vld [vmem:[%s200 + $0x170] sm:$0xff]
  %2767 = vrot.lane.b32.xlu0 %v2703, 24
  %v2768 = vpop.permute.xlu0 %2767
  %2769 = vrot.lane.b32.xlu0 %v2704, 24
  %v2770 = vpop.permute.xlu0 %2769
  %2771 = vrot.lane.b32.xlu0 %v2705, 24
  %v2772 = vpop.permute.xlu0 %2771
  %2773 = vrot.lane.b32.xlu0 %v2706, 24
  %v2774 = vpop.permute.xlu0 %2773
  %2775 = vrot.lane.b32.xlu0 %v2707, 24
  %v2776 = vpop.permute.xlu0 %2775
  %2777 = vrot.lane.b32.xlu0 %v2708, 24
  %v2778 = vpop.permute.xlu0 %2777
  %2779 = vrot.lane.b32.xlu0 %v2709, 24
  %v2780 = vpop.permute.xlu0 %2779
  %2781 = vrot.lane.b32.xlu0 %v2710, 24
  %v2782 = vpop.permute.xlu0 %2781
  %2783 = vrot.lane.b32.xlu0 %v2711, 24
  %v2784 = vpop.permute.xlu0 %2783
  %2785 = vrot.lane.b32.xlu0 %v2712, 24
  %v2786 = vpop.permute.xlu0 %2785
  %2787 = vrot.lane.b32.xlu0 %v2713, 24
  %v2788 = vpop.permute.xlu0 %2787
  %2789 = vrot.lane.b32.xlu0 %v2714, 24
  %v2790 = vpop.permute.xlu0 %2789
  %2791 = vrot.lane.b32.xlu0 %v2715, 24
  %v2792 = vpop.permute.xlu0 %2791
  %2793 = vrot.lane.b32.xlu0 %v2716, 24
  %v2794 = vpop.permute.xlu0 %2793
  %2795 = vrot.lane.b32.xlu0 %v2717, 24
  %v2796 = vpop.permute.xlu0 %2795
  %2797 = vrot.lane.b32.xlu0 %v2718, 24
  %v2798 = vpop.permute.xlu0 %2797
  %2799 = vrot.lane.b32.xlu0 %v2719, 24
  %v2800 = vpop.permute.xlu0 %2799
  %2801 = vrot.lane.b32.xlu0 %v2720, 24
  %v2802 = vpop.permute.xlu0 %2801
  %2803 = vrot.lane.b32.xlu0 %v2721, 24
  %v2804 = vpop.permute.xlu0 %2803
  %2805 = vrot.lane.b32.xlu0 %v2722, 24
  %v2806 = vpop.permute.xlu0 %2805
  %2807 = vrot.lane.b32.xlu0 %v2723, 24
  %v2808 = vpop.permute.xlu0 %2807
  %2809 = vrot.lane.b32.xlu0 %v2724, 24
  %v2810 = vpop.permute.xlu0 %2809
  %2811 = vrot.lane.b32.xlu0 %v2725, 24
  %v2812 = vpop.permute.xlu0 %2811
  %2813 = vrot.lane.b32.xlu0 %v2726, 24
  %v2814 = vpop.permute.xlu0 %2813
  %2815 = vrot.lane.b32.xlu0 %v2727, 24
  %v2816 = vpop.permute.xlu0 %2815
  %2817 = vrot.lane.b32.xlu0 %v2728, 24
  %v2818 = vpop.permute.xlu0 %2817
  %2819 = vrot.lane.b32.xlu0 %v2729, 24
  %v2820 = vpop.permute.xlu0 %2819
  %2821 = vrot.lane.b32.xlu0 %v2730, 24
  %v2822 = vpop.permute.xlu0 %2821
  %2823 = vrot.lane.b32.xlu0 %v2731, 24
  %v2824 = vpop.permute.xlu0 %2823
  %2825 = vrot.lane.b32.xlu0 %v2732, 24
  %v2826 = vpop.permute.xlu0 %2825
  %2827 = vrot.lane.b32.xlu0 %v2733, 24
  %v2828 = vpop.permute.xlu0 %2827
  %2829 = vrot.lane.b32.xlu0 %v2734, 24
  %v2830 = vpop.permute.xlu0 %2829
  %2863 = vst.msk [vmem:[#allocation3 + $0x100] sm:$0xff] %vm2670, %v2768
  %2864 = vst.msk [vmem:[#allocation3 + $0x108] sm:$0xff] %vm2670, %v2770
  %2865 = vst.msk [vmem:[#allocation3 + $0x110] sm:$0xff] %vm2670, %v2772
  %2866 = vst.msk [vmem:[#allocation3 + $0x118] sm:$0xff] %vm2670, %v2774
  %2867 = vst.msk [vmem:[#allocation3 + $0x120] sm:$0xff] %vm2670, %v2776
  %2868 = vst.msk [vmem:[#allocation3 + $0x128] sm:$0xff] %vm2670, %v2778
  %2869 = vst.msk [vmem:[#allocation3 + $0x130] sm:$0xff] %vm2670, %v2780
  %2870 = vst.msk [vmem:[#allocation3 + $0x138] sm:$0xff] %vm2670, %v2782
  %2871 = vst.msk [vmem:[#allocation3 + $0x140] sm:$0xff] %vm2670, %v2784
  %2872 = vst.msk [vmem:[#allocation3 + $0x148] sm:$0xff] %vm2670, %v2786
  %2873 = vst.msk [vmem:[#allocation3 + $0x150] sm:$0xff] %vm2670, %v2788
  %2874 = vst.msk [vmem:[#allocation3 + $0x158] sm:$0xff] %vm2670, %v2790
  %2875 = vst.msk [vmem:[#allocation3 + $0x160] sm:$0xff] %vm2670, %v2792
  %2876 = vst.msk [vmem:[#allocation3 + $0x168] sm:$0xff] %vm2670, %v2794
  %2877 = vst.msk [vmem:[#allocation3 + $0x170] sm:$0xff] %vm2670, %v2796
  %2878 = vst.msk [vmem:[#allocation3 + $0x178] sm:$0xff] %vm2670, %v2798
  %2879 = vst.msk [vmem:[#allocation3 + $0x180] sm:$0xff] %vm2670, %v2800
  %2880 = vst.msk [vmem:[#allocation3 + $0x188] sm:$0xff] %vm2670, %v2802
  %2881 = vst.msk [vmem:[#allocation3 + $0x190] sm:$0xff] %vm2670, %v2804
  %2882 = vst.msk [vmem:[#allocation3 + $0x198] sm:$0xff] %vm2670, %v2806
  %2883 = vst.msk [vmem:[#allocation3 + $0x1a0] sm:$0xff] %vm2670, %v2808
  %2884 = vst.msk [vmem:[#allocation3 + $0x1a8] sm:$0xff] %vm2670, %v2810
  %2885 = vst.msk [vmem:[#allocation3 + $0x1b0] sm:$0xff] %vm2670, %v2812
  %2886 = vst.msk [vmem:[#allocation3 + $0x1b8] sm:$0xff] %vm2670, %v2814
  %2887 = vst.msk [vmem:[#allocation3 + $0x1c0] sm:$0xff] %vm2670, %v2816
  %2888 = vst.msk [vmem:[#allocation3 + $0x1c8] sm:$0xff] %vm2670, %v2818
  %2889 = vst.msk [vmem:[#allocation3 + $0x1d0] sm:$0xff] %vm2670, %v2820
  %2890 = vst.msk [vmem:[#allocation3 + $0x1d8] sm:$0xff] %vm2670, %v2822
  %2891 = vst.msk [vmem:[#allocation3 + $0x1e0] sm:$0xff] %vm2670, %v2824
  %2892 = vst.msk [vmem:[#allocation3 + $0x1e8] sm:$0xff] %vm2670, %v2826
  %2893 = vst.msk [vmem:[#allocation3 + $0x1f0] sm:$0xff] %vm2670, %v2828
  %2894 = vst.msk [vmem:[#allocation3 + $0x1f8] sm:$0xff] %vm2670, %v2830
  %v2895 = vld [vmem:[%s92 + $0x1] sm:$0xff]
  %v2896 = vld [vmem:[%s92 + $0x9] sm:$0xff]
  %v2897 = vld [vmem:[%s92 + $0x19] sm:$0xff]
  %v2898 = vld [vmem:[%s92 + $0x21] sm:$0xff]
  %v2899 = vld [vmem:[%s92 + $0x31] sm:$0xff]
  %v2900 = vld [vmem:[%s92 + $0x39] sm:$0xff]
  %v2901 = vld [vmem:[%s92 + $0x49] sm:$0xff]
  %v2902 = vld [vmem:[%s92 + $0x51] sm:$0xff]
  %v2903 = vld [vmem:[%s92 + $0x61] sm:$0xff]
  %v2904 = vld [vmem:[%s92 + $0x69] sm:$0xff]
  %v2905 = vld [vmem:[%s92 + $0x79] sm:$0xff]
  %v2906 = vld [vmem:[%s92 + $0x81] sm:$0xff]
  %v2907 = vld [vmem:[%s92 + $0x91] sm:$0xff]
  %v2908 = vld [vmem:[%s92 + $0x99] sm:$0xff]
  %v2909 = vld [vmem:[%s92 + $0xa9] sm:$0xff]
  %v2910 = vld [vmem:[%s92 + $0xb1] sm:$0xff]
  %v2911 = vld [vmem:[%s92 + $0xc1] sm:$0xff]
  %v2912 = vld [vmem:[%s92 + $0xc9] sm:$0xff]
  %v2913 = vld [vmem:[%s92 + $0xd9] sm:$0xff]
  %v2914 = vld [vmem:[%s92 + $0xe1] sm:$0xff]
  %v2915 = vld [vmem:[%s92 + $0xf1] sm:$0xff]
  %v2916 = vld [vmem:[%s92 + $0xf9] sm:$0xff]
  %v2917 = vld [vmem:[%s92 + $0x109] sm:$0xff]
  %v2918 = vld [vmem:[%s92 + $0x111] sm:$0xff]
  %v2919 = vld [vmem:[%s92 + $0x121] sm:$0xff]
  %v2920 = vld [vmem:[%s92 + $0x129] sm:$0xff]
  %v2921 = vld [vmem:[%s92 + $0x139] sm:$0xff]
  %v2922 = vld [vmem:[%s92 + $0x141] sm:$0xff]
  %v2923 = vld [vmem:[%s92 + $0x151] sm:$0xff]
  %v2924 = vld [vmem:[%s92 + $0x159] sm:$0xff]
  %v2925 = vld [vmem:[%s92 + $0x169] sm:$0xff]
  %v2926 = vld [vmem:[%s92 + $0x171] sm:$0xff]
  %2959 = vrot.lane.b32.xlu0 %v2895, 28
  %v2960 = vpop.permute.xlu0 %2959
  %2961 = vrot.lane.b32.xlu0 %v2896, 28
  %v2962 = vpop.permute.xlu0 %2961
  %2963 = vrot.lane.b32.xlu0 %v2897, 28
  %v2964 = vpop.permute.xlu0 %2963
  %2965 = vrot.lane.b32.xlu0 %v2898, 28
  %v2966 = vpop.permute.xlu0 %2965
  %2967 = vrot.lane.b32.xlu0 %v2899, 28
  %v2968 = vpop.permute.xlu0 %2967
  %2969 = vrot.lane.b32.xlu0 %v2900, 28
  %v2970 = vpop.permute.xlu0 %2969
  %2971 = vrot.lane.b32.xlu0 %v2901, 28
  %v2972 = vpop.permute.xlu0 %2971
  %2973 = vrot.lane.b32.xlu0 %v2902, 28
  %v2974 = vpop.permute.xlu0 %2973
  %2975 = vrot.lane.b32.xlu0 %v2903, 28
  %v2976 = vpop.permute.xlu0 %2975
  %2977 = vrot.lane.b32.xlu0 %v2904, 28
  %v2978 = vpop.permute.xlu0 %2977
  %2979 = vrot.lane.b32.xlu0 %v2905, 28
  %v2980 = vpop.permute.xlu0 %2979
  %2981 = vrot.lane.b32.xlu0 %v2906, 28
  %v2982 = vpop.permute.xlu0 %2981
  %2983 = vrot.lane.b32.xlu0 %v2907, 28
  %v2984 = vpop.permute.xlu0 %2983
  %2985 = vrot.lane.b32.xlu0 %v2908, 28
  %v2986 = vpop.permute.xlu0 %2985
  %2987 = vrot.lane.b32.xlu0 %v2909, 28
  %v2988 = vpop.permute.xlu0 %2987
  %2989 = vrot.lane.b32.xlu0 %v2910, 28
  %v2990 = vpop.permute.xlu0 %2989
  %2991 = vrot.lane.b32.xlu0 %v2911, 28
  %v2992 = vpop.permute.xlu0 %2991
  %2993 = vrot.lane.b32.xlu0 %v2912, 28
  %v2994 = vpop.permute.xlu0 %2993
  %2995 = vrot.lane.b32.xlu0 %v2913, 28
  %v2996 = vpop.permute.xlu0 %2995
  %2997 = vrot.lane.b32.xlu0 %v2914, 28
  %v2998 = vpop.permute.xlu0 %2997
  %2999 = vrot.lane.b32.xlu0 %v2915, 28
  %v3000 = vpop.permute.xlu0 %2999
  %3001 = vrot.lane.b32.xlu0 %v2916, 28
  %v3002 = vpop.permute.xlu0 %3001
  %3003 = vrot.lane.b32.xlu0 %v2917, 28
  %v3004 = vpop.permute.xlu0 %3003
  %3005 = vrot.lane.b32.xlu0 %v2918, 28
  %v3006 = vpop.permute.xlu0 %3005
  %3007 = vrot.lane.b32.xlu0 %v2919, 28
  %v3008 = vpop.permute.xlu0 %3007
  %3009 = vrot.lane.b32.xlu0 %v2920, 28
  %v3010 = vpop.permute.xlu0 %3009
  %3011 = vrot.lane.b32.xlu0 %v2921, 28
  %v3012 = vpop.permute.xlu0 %3011
  %3013 = vrot.lane.b32.xlu0 %v2922, 28
  %v3014 = vpop.permute.xlu0 %3013
  %3015 = vrot.lane.b32.xlu0 %v2923, 28
  %v3016 = vpop.permute.xlu0 %3015
  %3017 = vrot.lane.b32.xlu0 %v2924, 28
  %v3018 = vpop.permute.xlu0 %3017
  %3019 = vrot.lane.b32.xlu0 %v2925, 28
  %v3020 = vpop.permute.xlu0 %3019
  %3021 = vrot.lane.b32.xlu0 %v2926, 28
  %v3022 = vpop.permute.xlu0 %3021
  %vm3055 = vcmask 261344
  %3056 = vst.msk [vmem:[#allocation3] sm:$0xff] %vm3055, %v2960
  %3057 = vst.msk [vmem:[#allocation3 + $0x8] sm:$0xff] %vm3055, %v2962
  %3058 = vst.msk [vmem:[#allocation3 + $0x10] sm:$0xff] %vm3055, %v2964
  %3059 = vst.msk [vmem:[#allocation3 + $0x18] sm:$0xff] %vm3055, %v2966
  %3060 = vst.msk [vmem:[#allocation3 + $0x20] sm:$0xff] %vm3055, %v2968
  %3061 = vst.msk [vmem:[#allocation3 + $0x28] sm:$0xff] %vm3055, %v2970
  %3062 = vst.msk [vmem:[#allocation3 + $0x30] sm:$0xff] %vm3055, %v2972
  %3063 = vst.msk [vmem:[#allocation3 + $0x38] sm:$0xff] %vm3055, %v2974
  %3064 = vst.msk [vmem:[#allocation3 + $0x40] sm:$0xff] %vm3055, %v2976
  %3065 = vst.msk [vmem:[#allocation3 + $0x48] sm:$0xff] %vm3055, %v2978
  %3066 = vst.msk [vmem:[#allocation3 + $0x50] sm:$0xff] %vm3055, %v2980
  %3067 = vst.msk [vmem:[#allocation3 + $0x58] sm:$0xff] %vm3055, %v2982
  %3068 = vst.msk [vmem:[#allocation3 + $0x60] sm:$0xff] %vm3055, %v2984
  %3069 = vst.msk [vmem:[#allocation3 + $0x68] sm:$0xff] %vm3055, %v2986
  %3070 = vst.msk [vmem:[#allocation3 + $0x70] sm:$0xff] %vm3055, %v2988
  %3071 = vst.msk [vmem:[#allocation3 + $0x78] sm:$0xff] %vm3055, %v2990
  %3072 = vst.msk [vmem:[#allocation3 + $0x80] sm:$0xff] %vm3055, %v2992
  %3073 = vst.msk [vmem:[#allocation3 + $0x88] sm:$0xff] %vm3055, %v2994
  %3074 = vst.msk [vmem:[#allocation3 + $0x90] sm:$0xff] %vm3055, %v2996
  %3075 = vst.msk [vmem:[#allocation3 + $0x98] sm:$0xff] %vm3055, %v2998
  %3076 = vst.msk [vmem:[#allocation3 + $0xa0] sm:$0xff] %vm3055, %v3000
  %3077 = vst.msk [vmem:[#allocation3 + $0xa8] sm:$0xff] %vm3055, %v3002
  %3078 = vst.msk [vmem:[#allocation3 + $0xb0] sm:$0xff] %vm3055, %v3004
  %3079 = vst.msk [vmem:[#allocation3 + $0xb8] sm:$0xff] %vm3055, %v3006
  %3080 = vst.msk [vmem:[#allocation3 + $0xc0] sm:$0xff] %vm3055, %v3008
  %3081 = vst.msk [vmem:[#allocation3 + $0xc8] sm:$0xff] %vm3055, %v3010
  %3082 = vst.msk [vmem:[#allocation3 + $0xd0] sm:$0xff] %vm3055, %v3012
  %3083 = vst.msk [vmem:[#allocation3 + $0xd8] sm:$0xff] %vm3055, %v3014
  %3084 = vst.msk [vmem:[#allocation3 + $0xe0] sm:$0xff] %vm3055, %v3016
  %3085 = vst.msk [vmem:[#allocation3 + $0xe8] sm:$0xff] %vm3055, %v3018
  %3086 = vst.msk [vmem:[#allocation3 + $0xf0] sm:$0xff] %vm3055, %v3020
  %3087 = vst.msk [vmem:[#allocation3 + $0xf8] sm:$0xff] %vm3055, %v3022
  %v3088 = vld [vmem:[%s200 + $0x1] sm:$0xff]
  %v3089 = vld [vmem:[%s200 + $0x9] sm:$0xff]
  %v3090 = vld [vmem:[%s200 + $0x19] sm:$0xff]
  %v3091 = vld [vmem:[%s200 + $0x21] sm:$0xff]
  %v3092 = vld [vmem:[%s200 + $0x31] sm:$0xff]
  %v3093 = vld [vmem:[%s200 + $0x39] sm:$0xff]
  %v3094 = vld [vmem:[%s200 + $0x49] sm:$0xff]
  %v3095 = vld [vmem:[%s200 + $0x51] sm:$0xff]
  %v3096 = vld [vmem:[%s200 + $0x61] sm:$0xff]
  %v3097 = vld [vmem:[%s200 + $0x69] sm:$0xff]
  %v3098 = vld [vmem:[%s200 + $0x79] sm:$0xff]
  %v3099 = vld [vmem:[%s200 + $0x81] sm:$0xff]
  %v3100 = vld [vmem:[%s200 + $0x91] sm:$0xff]
  %v3101 = vld [vmem:[%s200 + $0x99] sm:$0xff]
  %v3102 = vld [vmem:[%s200 + $0xa9] sm:$0xff]
  %v3103 = vld [vmem:[%s200 + $0xb1] sm:$0xff]
  %v3104 = vld [vmem:[%s200 + $0xc1] sm:$0xff]
  %v3105 = vld [vmem:[%s200 + $0xc9] sm:$0xff]
  %v3106 = vld [vmem:[%s200 + $0xd9] sm:$0xff]
  %v3107 = vld [vmem:[%s200 + $0xe1] sm:$0xff]
  %v3108 = vld [vmem:[%s200 + $0xf1] sm:$0xff]
  %v3109 = vld [vmem:[%s200 + $0xf9] sm:$0xff]
  %v3110 = vld [vmem:[%s200 + $0x109] sm:$0xff]
  %v3111 = vld [vmem:[%s200 + $0x111] sm:$0xff]
  %v3112 = vld [vmem:[%s200 + $0x121] sm:$0xff]
  %v3113 = vld [vmem:[%s200 + $0x129] sm:$0xff]
  %v3114 = vld [vmem:[%s200 + $0x139] sm:$0xff]
  %v3115 = vld [vmem:[%s200 + $0x141] sm:$0xff]
  %v3116 = vld [vmem:[%s200 + $0x151] sm:$0xff]
  %v3117 = vld [vmem:[%s200 + $0x159] sm:$0xff]
  %v3118 = vld [vmem:[%s200 + $0x169] sm:$0xff]
  %v3119 = vld [vmem:[%s200 + $0x171] sm:$0xff]
  %3152 = vrot.lane.b32.xlu0 %v3088, 28
  %v3153 = vpop.permute.xlu0 %3152
  %3154 = vrot.lane.b32.xlu0 %v3089, 28
  %v3155 = vpop.permute.xlu0 %3154
  %3156 = vrot.lane.b32.xlu0 %v3090, 28
  %v3157 = vpop.permute.xlu0 %3156
  %3158 = vrot.lane.b32.xlu0 %v3091, 28
  %v3159 = vpop.permute.xlu0 %3158
  %3160 = vrot.lane.b32.xlu0 %v3092, 28
  %v3161 = vpop.permute.xlu0 %3160
  %3162 = vrot.lane.b32.xlu0 %v3093, 28
  %v3163 = vpop.permute.xlu0 %3162
  %3164 = vrot.lane.b32.xlu0 %v3094, 28
  %v3165 = vpop.permute.xlu0 %3164
  %3166 = vrot.lane.b32.xlu0 %v3095, 28
  %v3167 = vpop.permute.xlu0 %3166
  %3168 = vrot.lane.b32.xlu0 %v3096, 28
  %v3169 = vpop.permute.xlu0 %3168
  %3170 = vrot.lane.b32.xlu0 %v3097, 28
  %v3171 = vpop.permute.xlu0 %3170
  %3172 = vrot.lane.b32.xlu0 %v3098, 28
  %v3173 = vpop.permute.xlu0 %3172
  %3174 = vrot.lane.b32.xlu0 %v3099, 28
  %v3175 = vpop.permute.xlu0 %3174
  %3176 = vrot.lane.b32.xlu0 %v3100, 28
  %v3177 = vpop.permute.xlu0 %3176
  %3178 = vrot.lane.b32.xlu0 %v3101, 28
  %v3179 = vpop.permute.xlu0 %3178
  %3180 = vrot.lane.b32.xlu0 %v3102, 28
  %v3181 = vpop.permute.xlu0 %3180
  %3182 = vrot.lane.b32.xlu0 %v3103, 28
  %v3183 = vpop.permute.xlu0 %3182
  %3184 = vrot.lane.b32.xlu0 %v3104, 28
  %v3185 = vpop.permute.xlu0 %3184
  %3186 = vrot.lane.b32.xlu0 %v3105, 28
  %v3187 = vpop.permute.xlu0 %3186
  %3188 = vrot.lane.b32.xlu0 %v3106, 28
  %v3189 = vpop.permute.xlu0 %3188
  %3190 = vrot.lane.b32.xlu0 %v3107, 28
  %v3191 = vpop.permute.xlu0 %3190
  %3192 = vrot.lane.b32.xlu0 %v3108, 28
  %v3193 = vpop.permute.xlu0 %3192
  %3194 = vrot.lane.b32.xlu0 %v3109, 28
  %v3195 = vpop.permute.xlu0 %3194
  %3196 = vrot.lane.b32.xlu0 %v3110, 28
  %v3197 = vpop.permute.xlu0 %3196
  %3198 = vrot.lane.b32.xlu0 %v3111, 28
  %v3199 = vpop.permute.xlu0 %3198
  %3200 = vrot.lane.b32.xlu0 %v3112, 28
  %v3201 = vpop.permute.xlu0 %3200
  %3202 = vrot.lane.b32.xlu0 %v3113, 28
  %v3203 = vpop.permute.xlu0 %3202
  %3204 = vrot.lane.b32.xlu0 %v3114, 28
  %v3205 = vpop.permute.xlu0 %3204
  %3206 = vrot.lane.b32.xlu0 %v3115, 28
  %v3207 = vpop.permute.xlu0 %3206
  %3208 = vrot.lane.b32.xlu0 %v3116, 28
  %v3209 = vpop.permute.xlu0 %3208
  %3210 = vrot.lane.b32.xlu0 %v3117, 28
  %v3211 = vpop.permute.xlu0 %3210
  %3212 = vrot.lane.b32.xlu0 %v3118, 28
  %v3213 = vpop.permute.xlu0 %3212
  %3214 = vrot.lane.b32.xlu0 %v3119, 28
  %v3215 = vpop.permute.xlu0 %3214
  %3248 = vst.msk [vmem:[#allocation3 + $0x100] sm:$0xff] %vm3055, %v3153
  %3249 = vst.msk [vmem:[#allocation3 + $0x108] sm:$0xff] %vm3055, %v3155
  %3250 = vst.msk [vmem:[#allocation3 + $0x110] sm:$0xff] %vm3055, %v3157
  %3251 = vst.msk [vmem:[#allocation3 + $0x118] sm:$0xff] %vm3055, %v3159
  %3252 = vst.msk [vmem:[#allocation3 + $0x120] sm:$0xff] %vm3055, %v3161
  %3253 = vst.msk [vmem:[#allocation3 + $0x128] sm:$0xff] %vm3055, %v3163
  %3254 = vst.msk [vmem:[#allocation3 + $0x130] sm:$0xff] %vm3055, %v3165
  %3255 = vst.msk [vmem:[#allocation3 + $0x138] sm:$0xff] %vm3055, %v3167
  %3256 = vst.msk [vmem:[#allocation3 + $0x140] sm:$0xff] %vm3055, %v3169
  %3257 = vst.msk [vmem:[#allocation3 + $0x148] sm:$0xff] %vm3055, %v3171
  %3258 = vst.msk [vmem:[#allocation3 + $0x150] sm:$0xff] %vm3055, %v3173
  %3259 = vst.msk [vmem:[#allocation3 + $0x158] sm:$0xff] %vm3055, %v3175
  %3260 = vst.msk [vmem:[#allocation3 + $0x160] sm:$0xff] %vm3055, %v3177
  %3261 = vst.msk [vmem:[#allocation3 + $0x168] sm:$0xff] %vm3055, %v3179
  %3262 = vst.msk [vmem:[#allocation3 + $0x170] sm:$0xff] %vm3055, %v3181
  %3263 = vst.msk [vmem:[#allocation3 + $0x178] sm:$0xff] %vm3055, %v3183
  %3264 = vst.msk [vmem:[#allocation3 + $0x180] sm:$0xff] %vm3055, %v3185
  %3265 = vst.msk [vmem:[#allocation3 + $0x188] sm:$0xff] %vm3055, %v3187
  %3266 = vst.msk [vmem:[#allocation3 + $0x190] sm:$0xff] %vm3055, %v3189
  %3267 = vst.msk [vmem:[#allocation3 + $0x198] sm:$0xff] %vm3055, %v3191
  %3268 = vst.msk [vmem:[#allocation3 + $0x1a0] sm:$0xff] %vm3055, %v3193
  %3269 = vst.msk [vmem:[#allocation3 + $0x1a8] sm:$0xff] %vm3055, %v3195
  %3270 = vst.msk [vmem:[#allocation3 + $0x1b0] sm:$0xff] %vm3055, %v3197
  %3271 = vst.msk [vmem:[#allocation3 + $0x1b8] sm:$0xff] %vm3055, %v3199
  %3272 = vst.msk [vmem:[#allocation3 + $0x1c0] sm:$0xff] %vm3055, %v3201
  %3273 = vst.msk [vmem:[#allocation3 + $0x1c8] sm:$0xff] %vm3055, %v3203
  %3274 = vst.msk [vmem:[#allocation3 + $0x1d0] sm:$0xff] %vm3055, %v3205
  %3275 = vst.msk [vmem:[#allocation3 + $0x1d8] sm:$0xff] %vm3055, %v3207
  %3276 = vst.msk [vmem:[#allocation3 + $0x1e0] sm:$0xff] %vm3055, %v3209
  %3277 = vst.msk [vmem:[#allocation3 + $0x1e8] sm:$0xff] %vm3055, %v3211
  %3278 = vst.msk [vmem:[#allocation3 + $0x1f0] sm:$0xff] %vm3055, %v3213
  %3279 = vst.msk [vmem:[#allocation3 + $0x1f8] sm:$0xff] %vm3055, %v3215
  %v3280 = vld [vmem:[%s92 + $0x2] sm:$0xff]
  %v3281 = vld [vmem:[%s92 + $0xa] sm:$0xff]
  %v3282 = vld [vmem:[%s92 + $0x1a] sm:$0xff]
  %v3283 = vld [vmem:[%s92 + $0x22] sm:$0xff]
  %v3284 = vld [vmem:[%s92 + $0x32] sm:$0xff]
  %v3285 = vld [vmem:[%s92 + $0x3a] sm:$0xff]
  %v3286 = vld [vmem:[%s92 + $0x4a] sm:$0xff]
  %v3287 = vld [vmem:[%s92 + $0x52] sm:$0xff]
  %v3288 = vld [vmem:[%s92 + $0x62] sm:$0xff]
  %v3289 = vld [vmem:[%s92 + $0x6a] sm:$0xff]
  %v3290 = vld [vmem:[%s92 + $0x7a] sm:$0xff]
  %v3291 = vld [vmem:[%s92 + $0x82] sm:$0xff]
  %v3292 = vld [vmem:[%s92 + $0x92] sm:$0xff]
  %v3293 = vld [vmem:[%s92 + $0x9a] sm:$0xff]
  %v3294 = vld [vmem:[%s92 + $0xaa] sm:$0xff]
  %v3295 = vld [vmem:[%s92 + $0xb2] sm:$0xff]
  %v3296 = vld [vmem:[%s92 + $0xc2] sm:$0xff]
  %v3297 = vld [vmem:[%s92 + $0xca] sm:$0xff]
  %v3298 = vld [vmem:[%s92 + $0xda] sm:$0xff]
  %v3299 = vld [vmem:[%s92 + $0xe2] sm:$0xff]
  %v3300 = vld [vmem:[%s92 + $0xf2] sm:$0xff]
  %v3301 = vld [vmem:[%s92 + $0xfa] sm:$0xff]
  %v3302 = vld [vmem:[%s92 + $0x10a] sm:$0xff]
  %v3303 = vld [vmem:[%s92 + $0x112] sm:$0xff]
  %v3304 = vld [vmem:[%s92 + $0x122] sm:$0xff]
  %v3305 = vld [vmem:[%s92 + $0x12a] sm:$0xff]
  %v3306 = vld [vmem:[%s92 + $0x13a] sm:$0xff]
  %v3307 = vld [vmem:[%s92 + $0x142] sm:$0xff]
  %v3308 = vld [vmem:[%s92 + $0x152] sm:$0xff]
  %v3309 = vld [vmem:[%s92 + $0x15a] sm:$0xff]
  %v3310 = vld [vmem:[%s92 + $0x16a] sm:$0xff]
  %v3311 = vld [vmem:[%s92 + $0x172] sm:$0xff]
  %3344 = vrot.lane.b32.xlu0 %v3280, 32
  %v3345 = vpop.permute.xlu0 %3344
  %3346 = vrot.lane.b32.xlu0 %v3281, 32
  %v3347 = vpop.permute.xlu0 %3346
  %3348 = vrot.lane.b32.xlu0 %v3282, 32
  %v3349 = vpop.permute.xlu0 %3348
  %3350 = vrot.lane.b32.xlu0 %v3283, 32
  %v3351 = vpop.permute.xlu0 %3350
  %3352 = vrot.lane.b32.xlu0 %v3284, 32
  %v3353 = vpop.permute.xlu0 %3352
  %3354 = vrot.lane.b32.xlu0 %v3285, 32
  %v3355 = vpop.permute.xlu0 %3354
  %3356 = vrot.lane.b32.xlu0 %v3286, 32
  %v3357 = vpop.permute.xlu0 %3356
  %3358 = vrot.lane.b32.xlu0 %v3287, 32
  %v3359 = vpop.permute.xlu0 %3358
  %3360 = vrot.lane.b32.xlu0 %v3288, 32
  %v3361 = vpop.permute.xlu0 %3360
  %3362 = vrot.lane.b32.xlu0 %v3289, 32
  %v3363 = vpop.permute.xlu0 %3362
  %3364 = vrot.lane.b32.xlu0 %v3290, 32
  %v3365 = vpop.permute.xlu0 %3364
  %3366 = vrot.lane.b32.xlu0 %v3291, 32
  %v3367 = vpop.permute.xlu0 %3366
  %3368 = vrot.lane.b32.xlu0 %v3292, 32
  %v3369 = vpop.permute.xlu0 %3368
  %3370 = vrot.lane.b32.xlu0 %v3293, 32
  %v3371 = vpop.permute.xlu0 %3370
  %3372 = vrot.lane.b32.xlu0 %v3294, 32
  %v3373 = vpop.permute.xlu0 %3372
  %3374 = vrot.lane.b32.xlu0 %v3295, 32
  %v3375 = vpop.permute.xlu0 %3374
  %3376 = vrot.lane.b32.xlu0 %v3296, 32
  %v3377 = vpop.permute.xlu0 %3376
  %3378 = vrot.lane.b32.xlu0 %v3297, 32
  %v3379 = vpop.permute.xlu0 %3378
  %3380 = vrot.lane.b32.xlu0 %v3298, 32
  %v3381 = vpop.permute.xlu0 %3380
  %3382 = vrot.lane.b32.xlu0 %v3299, 32
  %v3383 = vpop.permute.xlu0 %3382
  %3384 = vrot.lane.b32.xlu0 %v3300, 32
  %v3385 = vpop.permute.xlu0 %3384
  %3386 = vrot.lane.b32.xlu0 %v3301, 32
  %v3387 = vpop.permute.xlu0 %3386
  %3388 = vrot.lane.b32.xlu0 %v3302, 32
  %v3389 = vpop.permute.xlu0 %3388
  %3390 = vrot.lane.b32.xlu0 %v3303, 32
  %v3391 = vpop.permute.xlu0 %3390
  %3392 = vrot.lane.b32.xlu0 %v3304, 32
  %v3393 = vpop.permute.xlu0 %3392
  %3394 = vrot.lane.b32.xlu0 %v3305, 32
  %v3395 = vpop.permute.xlu0 %3394
  %3396 = vrot.lane.b32.xlu0 %v3306, 32
  %v3397 = vpop.permute.xlu0 %3396
  %3398 = vrot.lane.b32.xlu0 %v3307, 32
  %v3399 = vpop.permute.xlu0 %3398
  %3400 = vrot.lane.b32.xlu0 %v3308, 32
  %v3401 = vpop.permute.xlu0 %3400
  %3402 = vrot.lane.b32.xlu0 %v3309, 32
  %v3403 = vpop.permute.xlu0 %3402
  %3404 = vrot.lane.b32.xlu0 %v3310, 32
  %v3405 = vpop.permute.xlu0 %3404
  %3406 = vrot.lane.b32.xlu0 %v3311, 32
  %v3407 = vpop.permute.xlu0 %3406
  %vm3440 = vcmask 294144
  %3441 = vst.msk [vmem:[#allocation3] sm:$0xff] %vm3440, %v3345
  %3442 = vst.msk [vmem:[#allocation3 + $0x8] sm:$0xff] %vm3440, %v3347
  %3443 = vst.msk [vmem:[#allocation3 + $0x10] sm:$0xff] %vm3440, %v3349
  %3444 = vst.msk [vmem:[#allocation3 + $0x18] sm:$0xff] %vm3440, %v3351
  %3445 = vst.msk [vmem:[#allocation3 + $0x20] sm:$0xff] %vm3440, %v3353
  %3446 = vst.msk [vmem:[#allocation3 + $0x28] sm:$0xff] %vm3440, %v3355
  %3447 = vst.msk [vmem:[#allocation3 + $0x30] sm:$0xff] %vm3440, %v3357
  %3448 = vst.msk [vmem:[#allocation3 + $0x38] sm:$0xff] %vm3440, %v3359
  %3449 = vst.msk [vmem:[#allocation3 + $0x40] sm:$0xff] %vm3440, %v3361
  %3450 = vst.msk [vmem:[#allocation3 + $0x48] sm:$0xff] %vm3440, %v3363
  %3451 = vst.msk [vmem:[#allocation3 + $0x50] sm:$0xff] %vm3440, %v3365
  %3452 = vst.msk [vmem:[#allocation3 + $0x58] sm:$0xff] %vm3440, %v3367
  %3453 = vst.msk [vmem:[#allocation3 + $0x60] sm:$0xff] %vm3440, %v3369
  %3454 = vst.msk [vmem:[#allocation3 + $0x68] sm:$0xff] %vm3440, %v3371
  %3455 = vst.msk [vmem:[#allocation3 + $0x70] sm:$0xff] %vm3440, %v3373
  %3456 = vst.msk [vmem:[#allocation3 + $0x78] sm:$0xff] %vm3440, %v3375
  %3457 = vst.msk [vmem:[#allocation3 + $0x80] sm:$0xff] %vm3440, %v3377
  %3458 = vst.msk [vmem:[#allocation3 + $0x88] sm:$0xff] %vm3440, %v3379
  %3459 = vst.msk [vmem:[#allocation3 + $0x90] sm:$0xff] %vm3440, %v3381
  %3460 = vst.msk [vmem:[#allocation3 + $0x98] sm:$0xff] %vm3440, %v3383
  %3461 = vst.msk [vmem:[#allocation3 + $0xa0] sm:$0xff] %vm3440, %v3385
  %3462 = vst.msk [vmem:[#allocation3 + $0xa8] sm:$0xff] %vm3440, %v3387
  %3463 = vst.msk [vmem:[#allocation3 + $0xb0] sm:$0xff] %vm3440, %v3389
  %3464 = vst.msk [vmem:[#allocation3 + $0xb8] sm:$0xff] %vm3440, %v3391
  %3465 = vst.msk [vmem:[#allocation3 + $0xc0] sm:$0xff] %vm3440, %v3393
  %3466 = vst.msk [vmem:[#allocation3 + $0xc8] sm:$0xff] %vm3440, %v3395
  %3467 = vst.msk [vmem:[#allocation3 + $0xd0] sm:$0xff] %vm3440, %v3397
  %3468 = vst.msk [vmem:[#allocation3 + $0xd8] sm:$0xff] %vm3440, %v3399
  %3469 = vst.msk [vmem:[#allocation3 + $0xe0] sm:$0xff] %vm3440, %v3401
  %3470 = vst.msk [vmem:[#allocation3 + $0xe8] sm:$0xff] %vm3440, %v3403
  %3471 = vst.msk [vmem:[#allocation3 + $0xf0] sm:$0xff] %vm3440, %v3405
  %3472 = vst.msk [vmem:[#allocation3 + $0xf8] sm:$0xff] %vm3440, %v3407
  %v3473 = vld [vmem:[%s200 + $0x2] sm:$0xff]
  %v3474 = vld [vmem:[%s200 + $0xa] sm:$0xff]
  %v3475 = vld [vmem:[%s200 + $0x1a] sm:$0xff]
  %v3476 = vld [vmem:[%s200 + $0x22] sm:$0xff]
  %v3477 = vld [vmem:[%s200 + $0x32] sm:$0xff]
  %v3478 = vld [vmem:[%s200 + $0x3a] sm:$0xff]
  %v3479 = vld [vmem:[%s200 + $0x4a] sm:$0xff]
  %v3480 = vld [vmem:[%s200 + $0x52] sm:$0xff]
  %v3481 = vld [vmem:[%s200 + $0x62] sm:$0xff]
  %v3482 = vld [vmem:[%s200 + $0x6a] sm:$0xff]
  %v3483 = vld [vmem:[%s200 + $0x7a] sm:$0xff]
  %v3484 = vld [vmem:[%s200 + $0x82] sm:$0xff]
  %v3485 = vld [vmem:[%s200 + $0x92] sm:$0xff]
  %v3486 = vld [vmem:[%s200 + $0x9a] sm:$0xff]
  %v3487 = vld [vmem:[%s200 + $0xaa] sm:$0xff]
  %v3488 = vld [vmem:[%s200 + $0xb2] sm:$0xff]
  %v3489 = vld [vmem:[%s200 + $0xc2] sm:$0xff]
  %v3490 = vld [vmem:[%s200 + $0xca] sm:$0xff]
  %v3491 = vld [vmem:[%s200 + $0xda] sm:$0xff]
  %v3492 = vld [vmem:[%s200 + $0xe2] sm:$0xff]
  %v3493 = vld [vmem:[%s200 + $0xf2] sm:$0xff]
  %v3494 = vld [vmem:[%s200 + $0xfa] sm:$0xff]
  %v3495 = vld [vmem:[%s200 + $0x10a] sm:$0xff]
  %v3496 = vld [vmem:[%s200 + $0x112] sm:$0xff]
  %v3497 = vld [vmem:[%s200 + $0x122] sm:$0xff]
  %v3498 = vld [vmem:[%s200 + $0x12a] sm:$0xff]
  %v3499 = vld [vmem:[%s200 + $0x13a] sm:$0xff]
  %v3500 = vld [vmem:[%s200 + $0x142] sm:$0xff]
  %v3501 = vld [vmem:[%s200 + $0x152] sm:$0xff]
  %v3502 = vld [vmem:[%s200 + $0x15a] sm:$0xff]
  %v3503 = vld [vmem:[%s200 + $0x16a] sm:$0xff]
  %v3504 = vld [vmem:[%s200 + $0x172] sm:$0xff]
  %3537 = vrot.lane.b32.xlu0 %v3473, 32
  %v3538 = vpop.permute.xlu0 %3537
  %3539 = vrot.lane.b32.xlu0 %v3474, 32
  %v3540 = vpop.permute.xlu0 %3539
  %3541 = vrot.lane.b32.xlu0 %v3475, 32
  %v3542 = vpop.permute.xlu0 %3541
  %3543 = vrot.lane.b32.xlu0 %v3476, 32
  %v3544 = vpop.permute.xlu0 %3543
  %3545 = vrot.lane.b32.xlu0 %v3477, 32
  %v3546 = vpop.permute.xlu0 %3545
  %3547 = vrot.lane.b32.xlu0 %v3478, 32
  %v3548 = vpop.permute.xlu0 %3547
  %3549 = vrot.lane.b32.xlu0 %v3479, 32
  %v3550 = vpop.permute.xlu0 %3549
  %3551 = vrot.lane.b32.xlu0 %v3480, 32
  %v3552 = vpop.permute.xlu0 %3551
  %3553 = vrot.lane.b32.xlu0 %v3481, 32
  %v3554 = vpop.permute.xlu0 %3553
  %3555 = vrot.lane.b32.xlu0 %v3482, 32
  %v3556 = vpop.permute.xlu0 %3555
  %3557 = vrot.lane.b32.xlu0 %v3483, 32
  %v3558 = vpop.permute.xlu0 %3557
  %3559 = vrot.lane.b32.xlu0 %v3484, 32
  %v3560 = vpop.permute.xlu0 %3559
  %3561 = vrot.lane.b32.xlu0 %v3485, 32
  %v3562 = vpop.permute.xlu0 %3561
  %3563 = vrot.lane.b32.xlu0 %v3486, 32
  %v3564 = vpop.permute.xlu0 %3563
  %3565 = vrot.lane.b32.xlu0 %v3487, 32
  %v3566 = vpop.permute.xlu0 %3565
  %3567 = vrot.lane.b32.xlu0 %v3488, 32
  %v3568 = vpop.permute.xlu0 %3567
  %3569 = vrot.lane.b32.xlu0 %v3489, 32
  %v3570 = vpop.permute.xlu0 %3569
  %3571 = vrot.lane.b32.xlu0 %v3490, 32
  %v3572 = vpop.permute.xlu0 %3571
  %3573 = vrot.lane.b32.xlu0 %v3491, 32
  %v3574 = vpop.permute.xlu0 %3573
  %3575 = vrot.lane.b32.xlu0 %v3492, 32
  %v3576 = vpop.permute.xlu0 %3575
  %3577 = vrot.lane.b32.xlu0 %v3493, 32
  %v3578 = vpop.permute.xlu0 %3577
  %3579 = vrot.lane.b32.xlu0 %v3494, 32
  %v3580 = vpop.permute.xlu0 %3579
  %3581 = vrot.lane.b32.xlu0 %v3495, 32
  %v3582 = vpop.permute.xlu0 %3581
  %3583 = vrot.lane.b32.xlu0 %v3496, 32
  %v3584 = vpop.permute.xlu0 %3583
  %3585 = vrot.lane.b32.xlu0 %v3497, 32
  %v3586 = vpop.permute.xlu0 %3585
  %3587 = vrot.lane.b32.xlu0 %v3498, 32
  %v3588 = vpop.permute.xlu0 %3587
  %3589 = vrot.lane.b32.xlu0 %v3499, 32
  %v3590 = vpop.permute.xlu0 %3589
  %3591 = vrot.lane.b32.xlu0 %v3500, 32
  %v3592 = vpop.permute.xlu0 %3591
  %3593 = vrot.lane.b32.xlu0 %v3501, 32
  %v3594 = vpop.permute.xlu0 %3593
  %3595 = vrot.lane.b32.xlu0 %v3502, 32
  %v3596 = vpop.permute.xlu0 %3595
  %3597 = vrot.lane.b32.xlu0 %v3503, 32
  %v3598 = vpop.permute.xlu0 %3597
  %3599 = vrot.lane.b32.xlu0 %v3504, 32
  %v3600 = vpop.permute.xlu0 %3599
  %3633 = vst.msk [vmem:[#allocation3 + $0x100] sm:$0xff] %vm3440, %v3538
  %3634 = vst.msk [vmem:[#allocation3 + $0x108] sm:$0xff] %vm3440, %v3540
  %3635 = vst.msk [vmem:[#allocation3 + $0x110] sm:$0xff] %vm3440, %v3542
  %3636 = vst.msk [vmem:[#allocation3 + $0x118] sm:$0xff] %vm3440, %v3544
  %3637 = vst.msk [vmem:[#allocation3 + $0x120] sm:$0xff] %vm3440, %v3546
  %3638 = vst.msk [vmem:[#allocation3 + $0x128] sm:$0xff] %vm3440, %v3548
  %3639 = vst.msk [vmem:[#allocation3 + $0x130] sm:$0xff] %vm3440, %v3550
  %3640 = vst.msk [vmem:[#allocation3 + $0x138] sm:$0xff] %vm3440, %v3552
  %3641 = vst.msk [vmem:[#allocation3 + $0x140] sm:$0xff] %vm3440, %v3554
  %3642 = vst.msk [vmem:[#allocation3 + $0x148] sm:$0xff] %vm3440, %v3556
  %3643 = vst.msk [vmem:[#allocation3 + $0x150] sm:$0xff] %vm3440, %v3558
  %3644 = vst.msk [vmem:[#allocation3 + $0x158] sm:$0xff] %vm3440, %v3560
  %3645 = vst.msk [vmem:[#allocation3 + $0x160] sm:$0xff] %vm3440, %v3562
  %3646 = vst.msk [vmem:[#allocation3 + $0x168] sm:$0xff] %vm3440, %v3564
  %3647 = vst.msk [vmem:[#allocation3 + $0x170] sm:$0xff] %vm3440, %v3566
  %3648 = vst.msk [vmem:[#allocation3 + $0x178] sm:$0xff] %vm3440, %v3568
  %3649 = vst.msk [vmem:[#allocation3 + $0x180] sm:$0xff] %vm3440, %v3570
  %3650 = vst.msk [vmem:[#allocation3 + $0x188] sm:$0xff] %vm3440, %v3572
  %3651 = vst.msk [vmem:[#allocation3 + $0x190] sm:$0xff] %vm3440, %v3574
  %3652 = vst.msk [vmem:[#allocation3 + $0x198] sm:$0xff] %vm3440, %v3576
  %3653 = vst.msk [vmem:[#allocation3 + $0x1a0] sm:$0xff] %vm3440, %v3578
  %3654 = vst.msk [vmem:[#allocation3 + $0x1a8] sm:$0xff] %vm3440, %v3580
  %3655 = vst.msk [vmem:[#allocation3 + $0x1b0] sm:$0xff] %vm3440, %v3582
  %3656 = vst.msk [vmem:[#allocation3 + $0x1b8] sm:$0xff] %vm3440, %v3584
  %3657 = vst.msk [vmem:[#allocation3 + $0x1c0] sm:$0xff] %vm3440, %v3586
  %3658 = vst.msk [vmem:[#allocation3 + $0x1c8] sm:$0xff] %vm3440, %v3588
  %3659 = vst.msk [vmem:[#allocation3 + $0x1d0] sm:$0xff] %vm3440, %v3590
  %3660 = vst.msk [vmem:[#allocation3 + $0x1d8] sm:$0xff] %vm3440, %v3592
  %3661 = vst.msk [vmem:[#allocation3 + $0x1e0] sm:$0xff] %vm3440, %v3594
  %3662 = vst.msk [vmem:[#allocation3 + $0x1e8] sm:$0xff] %vm3440, %v3596
  %3663 = vst.msk [vmem:[#allocation3 + $0x1f0] sm:$0xff] %vm3440, %v3598
  %3664 = vst.msk [vmem:[#allocation3 + $0x1f8] sm:$0xff] %vm3440, %v3600
  %v3665 = vld [vmem:[#allocation3] sm:$0xff]
  %v3666 = vld [vmem:[#allocation3 + $0x8] sm:$0xff]
  %v3667 = vld [vmem:[#allocation3 + $0x10] sm:$0xff]
  %v3668 = vld [vmem:[#allocation3 + $0x18] sm:$0xff]
  %v3669 = vld [vmem:[#allocation3 + $0x20] sm:$0xff]
  %v3670 = vld [vmem:[#allocation3 + $0x28] sm:$0xff]
  %v3671 = vld [vmem:[#allocation3 + $0x30] sm:$0xff]
  %v3672 = vld [vmem:[#allocation3 + $0x38] sm:$0xff]
  %v3673 = vld [vmem:[#allocation3 + $0x40] sm:$0xff]
  %v3674 = vld [vmem:[#allocation3 + $0x48] sm:$0xff]
  %v3675 = vld [vmem:[#allocation3 + $0x50] sm:$0xff]
  %v3676 = vld [vmem:[#allocation3 + $0x58] sm:$0xff]
  %v3677 = vld [vmem:[#allocation3 + $0x60] sm:$0xff]
  %v3678 = vld [vmem:[#allocation3 + $0x68] sm:$0xff]
  %v3679 = vld [vmem:[#allocation3 + $0x70] sm:$0xff]
  %v3680 = vld [vmem:[#allocation3 + $0x78] sm:$0xff]
  %v3681 = vld [vmem:[#allocation3 + $0x80] sm:$0xff]
  %v3682 = vld [vmem:[#allocation3 + $0x88] sm:$0xff]
  %v3683 = vld [vmem:[#allocation3 + $0x90] sm:$0xff]
  %v3684 = vld [vmem:[#allocation3 + $0x98] sm:$0xff]
  %v3685 = vld [vmem:[#allocation3 + $0xa0] sm:$0xff]
  %v3686 = vld [vmem:[#allocation3 + $0xa8] sm:$0xff]
  %v3687 = vld [vmem:[#allocation3 + $0xb0] sm:$0xff]
  %v3688 = vld [vmem:[#allocation3 + $0xb8] sm:$0xff]
  %v3689 = vld [vmem:[#allocation3 + $0xc0] sm:$0xff]
  %v3690 = vld [vmem:[#allocation3 + $0xc8] sm:$0xff]
  %v3691 = vld [vmem:[#allocation3 + $0xd0] sm:$0xff]
  %v3692 = vld [vmem:[#allocation3 + $0xd8] sm:$0xff]
  %v3693 = vld [vmem:[#allocation3 + $0xe0] sm:$0xff]
  %v3694 = vld [vmem:[#allocation3 + $0xe8] sm:$0xff]
  %v3695 = vld [vmem:[#allocation3 + $0xf0] sm:$0xff]
  %v3696 = vld [vmem:[#allocation3 + $0xf8] sm:$0xff]
  %v3697 = vld [vmem:[#allocation3 + $0x100] sm:$0xff]
  %v3698 = vld [vmem:[#allocation3 + $0x108] sm:$0xff]
  %v3699 = vld [vmem:[#allocation3 + $0x110] sm:$0xff]
  %v3700 = vld [vmem:[#allocation3 + $0x118] sm:$0xff]
  %v3701 = vld [vmem:[#allocation3 + $0x120] sm:$0xff]
  %v3702 = vld [vmem:[#allocation3 + $0x128] sm:$0xff]
  %v3703 = vld [vmem:[#allocation3 + $0x130] sm:$0xff]
  %v3704 = vld [vmem:[#allocation3 + $0x138] sm:$0xff]
  %v3705 = vld [vmem:[#allocation3 + $0x140] sm:$0xff]
  %v3706 = vld [vmem:[#allocation3 + $0x148] sm:$0xff]
  %v3707 = vld [vmem:[#allocation3 + $0x150] sm:$0xff]
  %v3708 = vld [vmem:[#allocation3 + $0x158] sm:$0xff]
  %v3709 = vld [vmem:[#allocation3 + $0x160] sm:$0xff]
  %v3710 = vld [vmem:[#allocation3 + $0x168] sm:$0xff]
  %v3711 = vld [vmem:[#allocation3 + $0x170] sm:$0xff]
  %v3712 = vld [vmem:[#allocation3 + $0x178] sm:$0xff]
  %v3713 = vld [vmem:[#allocation3 + $0x180] sm:$0xff]
  %v3714 = vld [vmem:[#allocation3 + $0x188] sm:$0xff]
  %v3715 = vld [vmem:[#allocation3 + $0x190] sm:$0xff]
  %v3716 = vld [vmem:[#allocation3 + $0x198] sm:$0xff]
  %v3717 = vld [vmem:[#allocation3 + $0x1a0] sm:$0xff]
  %v3718 = vld [vmem:[#allocation3 + $0x1a8] sm:$0xff]
  %v3719 = vld [vmem:[#allocation3 + $0x1b0] sm:$0xff]
  %v3720 = vld [vmem:[#allocation3 + $0x1b8] sm:$0xff]
  %v3721 = vld [vmem:[#allocation3 + $0x1c0] sm:$0xff]
  %v3722 = vld [vmem:[#allocation3 + $0x1c8] sm:$0xff]
  %v3723 = vld [vmem:[#allocation3 + $0x1d0] sm:$0xff]
  %v3724 = vld [vmem:[#allocation3 + $0x1d8] sm:$0xff]
  %v3725 = vld [vmem:[#allocation3 + $0x1e0] sm:$0xff]
  %v3726 = vld [vmem:[#allocation3 + $0x1e8] sm:$0xff]
  %v3727 = vld [vmem:[#allocation3 + $0x1f0] sm:$0xff]
  %v3728 = vld [vmem:[#allocation3 + $0x1f8] sm:$0xff]
  %v3729 = vld [vmem:[%s1] sm:$0xf]
  %vm3730 = vcmask 293888
  %v3732 = vsel %vm3730, %v3729, 0
  %v3735 = vsel %vm3730, %v3665, 0
  %v3738 = vsel %vm3730, %v3666, 0
  %v3741 = vsel %vm3730, %v3667, 0
  %v3744 = vsel %vm3730, %v3668, 0
  %v3747 = vsel %vm3730, %v3669, 0
  %v3750 = vsel %vm3730, %v3670, 0
  %v3753 = vsel %vm3730, %v3671, 0
  %v3756 = vsel %vm3730, %v3672, 0
  %v3759 = vsel %vm3730, %v3673, 0
  %v3762 = vsel %vm3730, %v3674, 0
  %v3765 = vsel %vm3730, %v3675, 0
  %v3768 = vsel %vm3730, %v3676, 0
  %v3771 = vsel %vm3730, %v3677, 0
  %v3774 = vsel %vm3730, %v3678, 0
  %v3777 = vsel %vm3730, %v3679, 0
  %v3780 = vsel %vm3730, %v3680, 0
  %v3783 = vsel %vm3730, %v3681, 0
  %v3786 = vsel %vm3730, %v3682, 0
  %v3789 = vsel %vm3730, %v3683, 0
  %v3792 = vsel %vm3730, %v3684, 0
  %v3795 = vsel %vm3730, %v3685, 0
  %v3798 = vsel %vm3730, %v3686, 0
  %v3801 = vsel %vm3730, %v3687, 0
  %v3804 = vsel %vm3730, %v3688, 0
  %v3807 = vsel %vm3730, %v3689, 0
  %v3810 = vsel %vm3730, %v3690, 0
  %v3813 = vsel %vm3730, %v3691, 0
  %v3816 = vsel %vm3730, %v3692, 0
  %v3819 = vsel %vm3730, %v3693, 0
  %v3822 = vsel %vm3730, %v3694, 0
  %v3825 = vsel %vm3730, %v3695, 0
  %v3828 = vsel %vm3730, %v3696, 0
  %v3831 = vsel %vm3730, %v3697, 0
  %v3834 = vsel %vm3730, %v3698, 0
  %v3837 = vsel %vm3730, %v3699, 0
  %v3840 = vsel %vm3730, %v3700, 0
  %v3843 = vsel %vm3730, %v3701, 0
  %v3846 = vsel %vm3730, %v3702, 0
  %v3849 = vsel %vm3730, %v3703, 0
  %v3852 = vsel %vm3730, %v3704, 0
  %v3855 = vsel %vm3730, %v3705, 0
  %v3858 = vsel %vm3730, %v3706, 0
  %v3861 = vsel %vm3730, %v3707, 0
  %v3864 = vsel %vm3730, %v3708, 0
  %v3867 = vsel %vm3730, %v3709, 0
  %v3870 = vsel %vm3730, %v3710, 0
  %v3873 = vsel %vm3730, %v3711, 0
  %v3876 = vsel %vm3730, %v3712, 0
  %v3879 = vsel %vm3730, %v3713, 0
  %v3882 = vsel %vm3730, %v3714, 0
  %v3885 = vsel %vm3730, %v3715, 0
  %v3888 = vsel %vm3730, %v3716, 0
  %v3891 = vsel %vm3730, %v3717, 0
  %v3894 = vsel %vm3730, %v3718, 0
  %v3897 = vsel %vm3730, %v3719, 0
  %v3900 = vsel %vm3730, %v3720, 0
  %v3903 = vsel %vm3730, %v3721, 0
  %v3906 = vsel %vm3730, %v3722, 0
  %v3909 = vsel %vm3730, %v3723, 0
  %v3912 = vsel %vm3730, %v3724, 0
  %v3915 = vsel %vm3730, %v3725, 0
  %v3918 = vsel %vm3730, %v3726, 0
  %v3921 = vsel %vm3730, %v3727, 0
  %v3924 = vsel %vm3730, %v3728, 0
  %3926 = vmatprep.subr.mxu0 0.0
  %3927 = vmatpush1.xpose.msra.mxu0 %v3735
  %3928 = vmatprep.subr.mxu0 0.0
  %3929 = vmatpush1.xpose.msra.mxu0 %v3738
  %3930 = vmatprep.subr.mxu0 0.0
  %3931 = vmatpush1.xpose.msra.mxu0 %v3741
  %3932 = vmatprep.subr.mxu0 0.0
  %3933 = vmatpush1.xpose.msra.mxu0 %v3744
  %3934 = vmatprep.subr.mxu0 0.0
  %3935 = vmatpush1.xpose.msra.mxu0 %v3747
  %3936 = vmatprep.subr.mxu0 0.0
  %3937 = vmatpush1.xpose.msra.mxu0 %v3750
  %3938 = vmatprep.subr.mxu0 0.0
  %3939 = vmatpush1.xpose.msra.mxu0 %v3753
  %3940 = vmatprep.subr.mxu0 0.0
  %3941 = vmatpush1.xpose.msra.mxu0 %v3756
  %3942 = vmatprep.subr.mxu0 0.0
  %3943 = vmatpush1.xpose.msra.mxu0 %v3759
  %3944 = vmatprep.subr.mxu0 0.0
  %3945 = vmatpush1.xpose.msra.mxu0 %v3762
  %3946 = vmatprep.subr.mxu0 0.0
  %3947 = vmatpush1.xpose.msra.mxu0 %v3765
  %3948 = vmatprep.subr.mxu0 0.0
  %3949 = vmatpush1.xpose.msra.mxu0 %v3768
  %3950 = vmatprep.subr.mxu0 0.0
  %3951 = vmatpush1.xpose.msra.mxu0 %v3771
  %3952 = vmatprep.subr.mxu0 0.0
  %3953 = vmatpush1.xpose.msra.mxu0 %v3774
  %3954 = vmatprep.subr.mxu0 0.0
  %3955 = vmatpush1.xpose.msra.mxu0 %v3777
  %3956 = vmatprep.subr.mxu0 0.0
  %3957 = vmatpush1.xpose.msra.mxu0 %v3780
  %3958 = vmatprep.subr.mxu0 0.0
  %3959 = vmatpush1.xpose.msra.mxu0 %v3783
  %3960 = vmatprep.subr.mxu0 0.0
  %3961 = vmatpush1.xpose.msra.mxu0 %v3786
  %3962 = vmatprep.subr.mxu0 0.0
  %3963 = vmatpush1.xpose.msra.mxu0 %v3789
  %3964 = vmatprep.subr.mxu0 0.0
  %3965 = vmatpush1.xpose.msra.mxu0 %v3792
  %3966 = vmatprep.subr.mxu0 0.0
  %3967 = vmatpush1.xpose.msra.mxu0 %v3795
  %3968 = vmatprep.subr.mxu0 0.0
  %3969 = vmatpush1.xpose.msra.mxu0 %v3798
  %3970 = vmatprep.subr.mxu0 0.0
  %3971 = vmatpush1.xpose.msra.mxu0 %v3801
  %3972 = vmatprep.subr.mxu0 0.0
  %3973 = vmatpush1.xpose.msra.mxu0 %v3804
  %3974 = vmatprep.subr.mxu0 0.0
  %3975 = vmatpush1.xpose.msra.mxu0 %v3807
  %3976 = vmatprep.subr.mxu0 0.0
  %3977 = vmatpush1.xpose.msra.mxu0 %v3810
  %3978 = vmatprep.subr.mxu0 0.0
  %3979 = vmatpush1.xpose.msra.mxu0 %v3813
  %3980 = vmatprep.subr.mxu0 0.0
  %3981 = vmatpush1.xpose.msra.mxu0 %v3816
  %3982 = vmatprep.subr.mxu0 0.0
  %3983 = vmatpush1.xpose.msra.mxu0 %v3819
  %3984 = vmatprep.subr.mxu0 0.0
  %3985 = vmatpush1.xpose.msra.mxu0 %v3822
  %3986 = vmatprep.subr.mxu0 0.0
  %3987 = vmatpush1.xpose.msra.mxu0 %v3825
  %3988 = vmatprep.subr.mxu0 0.0
  %3989 = vmatpush1.xpose.msra.mxu0 %v3828
  %3990 = vmatprep.mubr.f32.mxu0 0.0
  %3991 = vmatmul.mubr.f32.gmra.mrb[0].mxu0 %v3732
  %v3992 = vpop.f32.mrb[0].mxu0
  %v3993 = vadd.f32 0.0, %v3992
  %v3994 = vpop.f32.mrb[0].mxu0
  %v3995 = vadd.f32 0.0, %v3994
  %3996 = vdwg.mxu0
  %3997 = vmatprep.subr.mxu0 0.0
  %3998 = vmatpush1.xpose.msra.mxu0 %v3831
  %3999 = vmatprep.subr.mxu0 0.0
  %4000 = vmatpush1.xpose.msra.mxu0 %v3834
  %4001 = vmatprep.subr.mxu0 0.0
  %4002 = vmatpush1.xpose.msra.mxu0 %v3837
  %4003 = vmatprep.subr.mxu0 0.0
  %4004 = vmatpush1.xpose.msra.mxu0 %v3840
  %4005 = vmatprep.subr.mxu0 0.0
  %4006 = vmatpush1.xpose.msra.mxu0 %v3843
  %4007 = vmatprep.subr.mxu0 0.0
  %4008 = vmatpush1.xpose.msra.mxu0 %v3846
  %4009 = vmatprep.subr.mxu0 0.0
  %4010 = vmatpush1.xpose.msra.mxu0 %v3849
  %4011 = vmatprep.subr.mxu0 0.0
  %4012 = vmatpush1.xpose.msra.mxu0 %v3852
  %4013 = vmatprep.subr.mxu0 0.0
  %4014 = vmatpush1.xpose.msra.mxu0 %v3855
  %4015 = vmatprep.subr.mxu0 0.0
  %4016 = vmatpush1.xpose.msra.mxu0 %v3858
  %4017 = vmatprep.subr.mxu0 0.0
  %4018 = vmatpush1.xpose.msra.mxu0 %v3861
  %4019 = vmatprep.subr.mxu0 0.0
  %4020 = vmatpush1.xpose.msra.mxu0 %v3864
  %4021 = vmatprep.subr.mxu0 0.0
  %4022 = vmatpush1.xpose.msra.mxu0 %v3867
  %4023 = vmatprep.subr.mxu0 0.0
  %4024 = vmatpush1.xpose.msra.mxu0 %v3870
  %4025 = vmatprep.subr.mxu0 0.0
  %4026 = vmatpush1.xpose.msra.mxu0 %v3873
  %4027 = vmatprep.subr.mxu0 0.0
  %4028 = vmatpush1.xpose.msra.mxu0 %v3876
  %4029 = vmatprep.subr.mxu0 0.0
  %4030 = vmatpush1.xpose.msra.mxu0 %v3879
  %4031 = vmatprep.subr.mxu0 0.0
  %4032 = vmatpush1.xpose.msra.mxu0 %v3882
  %4033 = vmatprep.subr.mxu0 0.0
  %4034 = vmatpush1.xpose.msra.mxu0 %v3885
  %4035 = vmatprep.subr.mxu0 0.0
  %4036 = vmatpush1.xpose.msra.mxu0 %v3888
  %4037 = vmatprep.subr.mxu0 0.0
  %4038 = vmatpush1.xpose.msra.mxu0 %v3891
  %4039 = vmatprep.subr.mxu0 0.0
  %4040 = vmatpush1.xpose.msra.mxu0 %v3894
  %4041 = vmatprep.subr.mxu0 0.0
  %4042 = vmatpush1.xpose.msra.mxu0 %v3897
  %4043 = vmatprep.subr.mxu0 0.0
  %4044 = vmatpush1.xpose.msra.mxu0 %v3900
  %4045 = vmatprep.subr.mxu0 0.0
  %4046 = vmatpush1.xpose.msra.mxu0 %v3903
  %4047 = vmatprep.subr.mxu0 0.0
  %4048 = vmatpush1.xpose.msra.mxu0 %v3906
  %4049 = vmatprep.subr.mxu0 0.0
  %4050 = vmatpush1.xpose.msra.mxu0 %v3909
  %4051 = vmatprep.subr.mxu0 0.0
  %4052 = vmatpush1.xpose.msra.mxu0 %v3912
  %4053 = vmatprep.subr.mxu0 0.0
  %4054 = vmatpush1.xpose.msra.mxu0 %v3915
  %4055 = vmatprep.subr.mxu0 0.0
  %4056 = vmatpush1.xpose.msra.mxu0 %v3918
  %4057 = vmatprep.subr.mxu0 0.0
  %4058 = vmatpush1.xpose.msra.mxu0 %v3921
  %4059 = vmatprep.subr.mxu0 0.0
  %4060 = vmatpush1.xpose.msra.mxu0 %v3924
  %4061 = vmatprep.mubr.f32.mxu0 0.0
  %4062 = vmatmul.mubr.f32.gmra.mrb[0].mxu0 %v3732
  %v4063 = vpop.f32.mrb[0].mxu0
  %v4064 = vadd.f32 0.0, %v4063
  %v4065 = vpop.f32.mrb[0].mxu0
  %v4066 = vadd.f32 0.0, %v4065
  %4067 = vdwg.mxu0
  %v4068 = vld [vmem:[%s2] sm:$0xf]
  %v4069 = vld [vmem:[%s3] sm:$0xf]
  %vm4070 = vcmask 1043456
  %v4071 = vsel %vm4070, %v3993, 0.0
  %v4072 = vsel %vm4070, %v3995, 0.0
  %v4073 = vadd.f32 %v4071, %v4072
  %v4074 = vsel %vm4070, %v4064, 0.0
  %v4075 = vadd.f32 %v4073, %v4074
  %v4076 = vsel %vm4070, %v4066, 0.0
  %v4077 = vadd.f32 %v4075, %v4076
  %4078 = vadd.xlane.f32.xlu0 %v4077
  %v4079 = vpop.xlane.xlu0 %4078
  %v4080 = vrcp.pop 512.0
  %v4081 = vmul.f32 %v4079, %v4080
  %v4082 = vsub.f32 %v3993, %v4081
  %v4083 = vsub.f32 %v3995, %v4081
  %v4084 = vsub.f32 %v4064, %v4081
  %v4085 = vsub.f32 %v4066, %v4081
  %v4086 = vmul.f32 %v4082, %v4082
  %v4087 = vmul.f32 %v4083, %v4083
  %v4088 = vmul.f32 %v4084, %v4084
  %v4089 = vmul.f32 %v4085, %v4085
  %v4090 = vsel %vm4070, %v4086, 0.0
  %v4091 = vsel %vm4070, %v4087, 0.0
  %v4092 = vadd.f32 %v4090, %v4091
  %v4093 = vsel %vm4070, %v4088, 0.0
  %v4094 = vadd.f32 %v4092, %v4093
  %v4095 = vsel %vm4070, %v4089, 0.0
  %v4096 = vadd.f32 %v4094, %v4095
  %4097 = vadd.xlane.f32.xlu0 %v4096
  %v4098 = vpop.xlane.xlu0 %4097
  %v4099 = vmul.f32 %v4098, %v4080
  %v4100 = vadd.f32 %v4099, 1e-05
  %v4101 = vrsqrt.pop %v4100
  %v4102 = vmul.f32 %v4068, %v4101
  %4104 = vset.pattern.permute.xlu0 0
  %4105 = vperm.xlu0 %4104, %v4102
  %v4106 = vpop.permute.xlu0 %4105
  %v4108 = vmul.f32 %v4082, %v4106
  %v4109 = vmul.f32 %v4083, %v4106
  %v4110 = vmul.f32 %v4084, %v4106
  %v4111 = vmul.f32 %v4085, %v4106
  %4113 = vset.pattern.permute.xlu0 0
  %4114 = vperm.xlu0 %4113, %v4069
  %v4115 = vpop.permute.xlu0 %4114
  %v4117 = vadd.f32 %v4108, %v4115
  %v4118 = vadd.f32 %v4109, %v4115
  %v4119 = vadd.f32 %v4110, %v4115
  %v4120 = vadd.f32 %v4111, %v4115
  %v4121 = vmax.f32 %v4117, 0.0
  %v4122 = vmax.f32 %v4118, 0.0
  %v4123 = vmax.f32 %v4119, 0.0
  %v4124 = vmax.f32 %v4120, 0.0
  %4125 = vxpose.xlu0.b32.start [1/16] %v4121, 128
  %4126 = vxpose.xlu0.b32.cont [2/16] 0.0, 128
  %4127 = vxpose.xlu0.b32.cont [3/16] 0.0, 128
  %4128 = vxpose.xlu0.b32.cont [4/16] 0.0, 128
  %4129 = vxpose.xlu0.b32.cont [5/16] 0.0, 128
  %4130 = vxpose.xlu0.b32.cont [6/16] 0.0, 128
  %4131 = vxpose.xlu0.b32.cont [7/16] 0.0, 128
  %4132 = vxpose.xlu0.b32.cont [8/16] 0.0, 128
  %4133 = vxpose.xlu0.b32.cont [9/16] 0.0, 128
  %4134 = vxpose.xlu0.b32.cont [10/16] 0.0, 128
  %4135 = vxpose.xlu0.b32.cont [11/16] 0.0, 128
  %4136 = vxpose.xlu0.b32.cont [12/16] 0.0, 128
  %4137 = vxpose.xlu0.b32.cont [13/16] 0.0, 128
  %4138 = vxpose.xlu0.b32.cont [14/16] 0.0, 128
  %4139 = vxpose.xlu0.b32.cont [15/16] 0.0, 128
  %4140 = vxpose.xlu0.b32.end [16/16] 0.0, 128
  %v4141 = vpop.trf.xlu0
  %v4142 = vpop.trf.xlu0
  %v4143 = vpop.trf.xlu0
  %v4144 = vpop.trf.xlu0
  %v4145 = vpop.trf.xlu0
  %v4146 = vpop.trf.xlu0
  %v4147 = vpop.trf.xlu0
  %v4148 = vpop.trf.xlu0
  %v4149 = vpop.trf.xlu0
  %v4150 = vpop.trf.xlu0
  %v4151 = vpop.trf.xlu0
  %v4152 = vpop.trf.xlu0
  %v4153 = vpop.trf.xlu0
  %v4154 = vpop.trf.xlu0
  %v4155 = vpop.trf.xlu0
  %v4156 = vpop.trf.xlu0
  %4157 = vxpose.xlu0.b32.start [1/16] %v4122, 128
  %4158 = vxpose.xlu0.b32.cont [2/16] 0.0, 128
  %4159 = vxpose.xlu0.b32.cont [3/16] 0.0, 128
  %4160 = vxpose.xlu0.b32.cont [4/16] 0.0, 128
  %4161 = vxpose.xlu0.b32.cont [5/16] 0.0, 128
  %4162 = vxpose.xlu0.b32.cont [6/16] 0.0, 128
  %4163 = vxpose.xlu0.b32.cont [7/16] 0.0, 128
  %4164 = vxpose.xlu0.b32.cont [8/16] 0.0, 128
  %4165 = vxpose.xlu0.b32.cont [9/16] 0.0, 128
  %4166 = vxpose.xlu0.b32.cont [10/16] 0.0, 128
  %4167 = vxpose.xlu0.b32.cont [11/16] 0.0, 128
  %4168 = vxpose.xlu0.b32.cont [12/16] 0.0, 128
  %4169 = vxpose.xlu0.b32.cont [13/16] 0.0, 128
  %4170 = vxpose.xlu0.b32.cont [14/16] 0.0, 128
  %4171 = vxpose.xlu0.b32.cont [15/16] 0.0, 128
  %4172 = vxpose.xlu0.b32.end [16/16] 0.0, 128
  %v4173 = vpop.trf.xlu0
  %v4174 = vpop.trf.xlu0
  %v4175 = vpop.trf.xlu0
  %v4176 = vpop.trf.xlu0
  %v4177 = vpop.trf.xlu0
  %v4178 = vpop.trf.xlu0
  %v4179 = vpop.trf.xlu0
  %v4180 = vpop.trf.xlu0
  %v4181 = vpop.trf.xlu0
  %v4182 = vpop.trf.xlu0
  %v4183 = vpop.trf.xlu0
  %v4184 = vpop.trf.xlu0
  %v4185 = vpop.trf.xlu0
  %v4186 = vpop.trf.xlu0
  %v4187 = vpop.trf.xlu0
  %v4188 = vpop.trf.xlu0
  %4189 = vst.msk [vmem:[%s92] sm:$0xff] %vm93, %v4141
  %4190 = vst.msk [vmem:[%s92 + $0x8] sm:$0xff] %vm93, %v4142
  %4191 = vst.msk [vmem:[%s92 + $0x18] sm:$0xff] %vm93, %v4143
  %4192 = vst.msk [vmem:[%s92 + $0x20] sm:$0xff] %vm93, %v4144
  %4193 = vst.msk [vmem:[%s92 + $0x30] sm:$0xff] %vm93, %v4145
  %4194 = vst.msk [vmem:[%s92 + $0x38] sm:$0xff] %vm93, %v4146
  %4195 = vst.msk [vmem:[%s92 + $0x48] sm:$0xff] %vm93, %v4147
  %4196 = vst.msk [vmem:[%s92 + $0x50] sm:$0xff] %vm93, %v4148
  %4197 = vst.msk [vmem:[%s92 + $0x60] sm:$0xff] %vm93, %v4149
  %4198 = vst.msk [vmem:[%s92 + $0x68] sm:$0xff] %vm93, %v4150
  %4199 = vst.msk [vmem:[%s92 + $0x78] sm:$0xff] %vm93, %v4151
  %4200 = vst.msk [vmem:[%s92 + $0x80] sm:$0xff] %vm93, %v4152
  %4201 = vst.msk [vmem:[%s92 + $0x90] sm:$0xff] %vm93, %v4153
  %4202 = vst.msk [vmem:[%s92 + $0x98] sm:$0xff] %vm93, %v4154
  %4203 = vst.msk [vmem:[%s92 + $0xa8] sm:$0xff] %vm93, %v4155
  %4204 = vst.msk [vmem:[%s92 + $0xb0] sm:$0xff] %vm93, %v4156
  %4205 = vst.msk [vmem:[%s92 + $0xc0] sm:$0xff] %vm93, %v4173
  %4206 = vst.msk [vmem:[%s92 + $0xc8] sm:$0xff] %vm93, %v4174
  %4207 = vst.msk [vmem:[%s92 + $0xd8] sm:$0xff] %vm93, %v4175
  %4208 = vst.msk [vmem:[%s92 + $0xe0] sm:$0xff] %vm93, %v4176
  %4209 = vst.msk [vmem:[%s92 + $0xf0] sm:$0xff] %vm93, %v4177
  %4210 = vst.msk [vmem:[%s92 + $0xf8] sm:$0xff] %vm93, %v4178
  %4211 = vst.msk [vmem:[%s92 + $0x108] sm:$0xff] %vm93, %v4179
  %4212 = vst.msk [vmem:[%s92 + $0x110] sm:$0xff] %vm93, %v4180
  %4213 = vst.msk [vmem:[%s92 + $0x120] sm:$0xff] %vm93, %v4181
  %4214 = vst.msk [vmem:[%s92 + $0x128] sm:$0xff] %vm93, %v4182
  %4215 = vst.msk [vmem:[%s92 + $0x138] sm:$0xff] %vm93, %v4183
  %4216 = vst.msk [vmem:[%s92 + $0x140] sm:$0xff] %vm93, %v4184
  %4217 = vst.msk [vmem:[%s92 + $0x150] sm:$0xff] %vm93, %v4185
  %4218 = vst.msk [vmem:[%s92 + $0x158] sm:$0xff] %vm93, %v4186
  %4219 = vst.msk [vmem:[%s92 + $0x168] sm:$0xff] %vm93, %v4187
  %4220 = vst.msk [vmem:[%s92 + $0x170] sm:$0xff] %vm93, %v4188
  %4221 = vst.msk [vmem:[#allocation2] sm:$0xff] %vm93, %v4141
  %4222 = vst.msk [vmem:[#allocation2 + $0x8] sm:$0xff] %vm93, %v4142
  %4223 = vst.msk [vmem:[#allocation2 + $0x18] sm:$0xff] %vm93, %v4141
  %4224 = vst.msk [vmem:[#allocation2 + $0x20] sm:$0xff] %vm93, %v4142
  %4225 = vxpose.xlu0.b32.start [1/16] %v4123, 128
  %4226 = vxpose.xlu0.b32.cont [2/16] 0.0, 128
  %4227 = vxpose.xlu0.b32.cont [3/16] 0.0, 128
  %4228 = vxpose.xlu0.b32.cont [4/16] 0.0, 128
  %4229 = vxpose.xlu0.b32.cont [5/16] 0.0, 128
  %4230 = vxpose.xlu0.b32.cont [6/16] 0.0, 128
  %4231 = vxpose.xlu0.b32.cont [7/16] 0.0, 128
  %4232 = vxpose.xlu0.b32.cont [8/16] 0.0, 128
  %4233 = vxpose.xlu0.b32.cont [9/16] 0.0, 128
  %4234 = vxpose.xlu0.b32.cont [10/16] 0.0, 128
  %4235 = vxpose.xlu0.b32.cont [11/16] 0.0, 128
  %4236 = vxpose.xlu0.b32.cont [12/16] 0.0, 128
  %4237 = vxpose.xlu0.b32.cont [13/16] 0.0, 128
  %4238 = vxpose.xlu0.b32.cont [14/16] 0.0, 128
  %4239 = vxpose.xlu0.b32.cont [15/16] 0.0, 128
  %4240 = vxpose.xlu0.b32.end [16/16] 0.0, 128
  %v4241 = vpop.trf.xlu0
  %v4242 = vpop.trf.xlu0
  %v4243 = vpop.trf.xlu0
  %v4244 = vpop.trf.xlu0
  %v4245 = vpop.trf.xlu0
  %v4246 = vpop.trf.xlu0
  %v4247 = vpop.trf.xlu0
  %v4248 = vpop.trf.xlu0
  %v4249 = vpop.trf.xlu0
  %v4250 = vpop.trf.xlu0
  %v4251 = vpop.trf.xlu0
  %v4252 = vpop.trf.xlu0
  %v4253 = vpop.trf.xlu0
  %v4254 = vpop.trf.xlu0
  %v4255 = vpop.trf.xlu0
  %v4256 = vpop.trf.xlu0
  %4257 = vxpose.xlu0.b32.start [1/16] %v4124, 128
  %4258 = vxpose.xlu0.b32.cont [2/16] 0.0, 128
  %4259 = vxpose.xlu0.b32.cont [3/16] 0.0, 128
  %4260 = vxpose.xlu0.b32.cont [4/16] 0.0, 128
  %4261 = vxpose.xlu0.b32.cont [5/16] 0.0, 128
  %4262 = vxpose.xlu0.b32.cont [6/16] 0.0, 128
  %4263 = vxpose.xlu0.b32.cont [7/16] 0.0, 128
  %4264 = vxpose.xlu0.b32.cont [8/16] 0.0, 128
  %4265 = vxpose.xlu0.b32.cont [9/16] 0.0, 128
  %4266 = vxpose.xlu0.b32.cont [10/16] 0.0, 128
  %4267 = vxpose.xlu0.b32.cont [11/16] 0.0, 128
  %4268 = vxpose.xlu0.b32.cont [12/16] 0.0, 128
  %4269 = vxpose.xlu0.b32.cont [13/16] 0.0, 128
  %4270 = vxpose.xlu0.b32.cont [14/16] 0.0, 128
  %4271 = vxpose.xlu0.b32.cont [15/16] 0.0, 128
  %4272 = vxpose.xlu0.b32.end [16/16] 0.0, 128
  %v4273 = vpop.trf.xlu0
  %v4274 = vpop.trf.xlu0
  %v4275 = vpop.trf.xlu0
  %v4276 = vpop.trf.xlu0
  %v4277 = vpop.trf.xlu0
  %v4278 = vpop.trf.xlu0
  %v4279 = vpop.trf.xlu0
  %v4280 = vpop.trf.xlu0
  %v4281 = vpop.trf.xlu0
  %v4282 = vpop.trf.xlu0
  %v4283 = vpop.trf.xlu0
  %v4284 = vpop.trf.xlu0
  %v4285 = vpop.trf.xlu0
  %v4286 = vpop.trf.xlu0
  %v4287 = vpop.trf.xlu0
  %v4288 = vpop.trf.xlu0
  %4289 = vst.msk [vmem:[%s200] sm:$0xff] %vm93, %v4241
  %4290 = vst.msk [vmem:[%s200 + $0x8] sm:$0xff] %vm93, %v4242
  %4291 = vst.msk [vmem:[%s200 + $0x18] sm:$0xff] %vm93, %v4243
  %4292 = vst.msk [vmem:[%s200 + $0x20] sm:$0xff] %vm93, %v4244
  %4293 = vst.msk [vmem:[%s200 + $0x30] sm:$0xff] %vm93, %v4245
  %4294 = vst.msk [vmem:[%s200 + $0x38] sm:$0xff] %vm93, %v4246
  %4295 = vst.msk [vmem:[%s200 + $0x48] sm:$0xff] %vm93, %v4247
  %4296 = vst.msk [vmem:[%s200 + $0x50] sm:$0xff] %vm93, %v4248
  %4297 = vst.msk [vmem:[%s200 + $0x60] sm:$0xff] %vm93, %v4249
  %4298 = vst.msk [vmem:[%s200 + $0x68] sm:$0xff] %vm93, %v4250
  %4299 = vst.msk [vmem:[%s200 + $0x78] sm:$0xff] %vm93, %v4251
  %4300 = vst.msk [vmem:[%s200 + $0x80] sm:$0xff] %vm93, %v4252
  %4301 = vst.msk [vmem:[%s200 + $0x90] sm:$0xff] %vm93, %v4253
  %4302 = vst.msk [vmem:[%s200 + $0x98] sm:$0xff] %vm93, %v4254
  %4303 = vst.msk [vmem:[%s200 + $0xa8] sm:$0xff] %vm93, %v4255
  %4304 = vst.msk [vmem:[%s200 + $0xb0] sm:$0xff] %vm93, %v4256
  %4305 = vst.msk [vmem:[%s200 + $0xc0] sm:$0xff] %vm93, %v4273
  %4306 = vst.msk [vmem:[%s200 + $0xc8] sm:$0xff] %vm93, %v4274
  %4307 = vst.msk [vmem:[%s200 + $0xd8] sm:$0xff] %vm93, %v4275
  %4308 = vst.msk [vmem:[%s200 + $0xe0] sm:$0xff] %vm93, %v4276
  %4309 = vst.msk [vmem:[%s200 + $0xf0] sm:$0xff] %vm93, %v4277
  %4310 = vst.msk [vmem:[%s200 + $0xf8] sm:$0xff] %vm93, %v4278
  %4311 = vst.msk [vmem:[%s200 + $0x108] sm:$0xff] %vm93, %v4279
  %4312 = vst.msk [vmem:[%s200 + $0x110] sm:$0xff] %vm93, %v4280
  %4313 = vst.msk [vmem:[%s200 + $0x120] sm:$0xff] %vm93, %v4281
  %4314 = vst.msk [vmem:[%s200 + $0x128] sm:$0xff] %vm93, %v4282
  %4315 = vst.msk [vmem:[%s200 + $0x138] sm:$0xff] %vm93, %v4283
  %4316 = vst.msk [vmem:[%s200 + $0x140] sm:$0xff] %vm93, %v4284
  %4317 = vst.msk [vmem:[%s200 + $0x150] sm:$0xff] %vm93, %v4285
  %4318 = vst.msk [vmem:[%s200 + $0x158] sm:$0xff] %vm93, %v4286
  %4319 = vst.msk [vmem:[%s200 + $0x168] sm:$0xff] %vm93, %v4287
  %4320 = vst.msk [vmem:[%s200 + $0x170] sm:$0xff] %vm93, %v4288
  %4321 = vst.msk [vmem:[%s233] sm:$0xff] %vm93, %v4241
  %4322 = vst.msk [vmem:[%s233 + $0x8] sm:$0xff] %vm93, %v4242
  %4323 = vst.msk [vmem:[%s233 + $0x18] sm:$0xff] %vm93, %v4241
  %4324 = vst.msk [vmem:[%s233 + $0x20] sm:$0xff] %vm93, %v4242
  %v4325 = vld [vmem:[#allocation2 + $0xf] sm:$0x1]
  %v4326 = vld [vmem:[#allocation2 + $0x27] sm:$0x1]
  %v4327 = vld [vmem:[#allocation2 + $0x3f] sm:$0x1]
  %v4328 = vld [vmem:[#allocation2 + $0x57] sm:$0x1]
  %v4329 = vld [vmem:[#allocation2 + $0x6f] sm:$0x1]
  %v4330 = vld [vmem:[#allocation2 + $0x87] sm:$0x1]
  %v4331 = vld [vmem:[#allocation2 + $0x9f] sm:$0x1]
  %v4332 = vld [vmem:[#allocation2 + $0xb7] sm:$0x1]
  %v4333 = vld [vmem:[#allocation2 + $0xcf] sm:$0x1]
  %v4334 = vld [vmem:[#allocation2 + $0xe7] sm:$0x1]
  %v4335 = vld [vmem:[#allocation2 + $0xff] sm:$0x1]
  %v4336 = vld [vmem:[#allocation2 + $0x117] sm:$0x1]
  %v4337 = vld [vmem:[#allocation2 + $0x12f] sm:$0x1]
  %v4338 = vld [vmem:[#allocation2 + $0x147] sm:$0x1]
  %v4339 = vld [vmem:[#allocation2 + $0x15f] sm:$0x1]
  %v4340 = vld [vmem:[#allocation2 + $0x177] sm:$0x1]
  %v4341 = vld [vmem:[#allocation2 + $0x18f] sm:$0x1]
  %v4342 = vld [vmem:[#allocation2 + $0x1a7] sm:$0x1]
  %v4343 = vld [vmem:[#allocation2 + $0x1bf] sm:$0x1]
  %v4344 = vld [vmem:[#allocation2 + $0x1d7] sm:$0x1]
  %v4345 = vld [vmem:[#allocation2 + $0x1ef] sm:$0x1]
  %v4346 = vld [vmem:[#allocation2 + $0x207] sm:$0x1]
  %v4347 = vld [vmem:[#allocation2 + $0x21f] sm:$0x1]
  %v4348 = vld [vmem:[#allocation2 + $0x237] sm:$0x1]
  %v4349 = vld [vmem:[#allocation2 + $0x24f] sm:$0x1]
  %v4350 = vld [vmem:[#allocation2 + $0x267] sm:$0x1]
  %v4351 = vld [vmem:[#allocation2 + $0x27f] sm:$0x1]
  %v4352 = vld [vmem:[#allocation2 + $0x297] sm:$0x1]
  %v4353 = vld [vmem:[#allocation2 + $0x2af] sm:$0x1]
  %v4354 = vld [vmem:[#allocation2 + $0x2c7] sm:$0x1]
  %v4355 = vld [vmem:[#allocation2 + $0x2df] sm:$0x1]
  %v4356 = vld [vmem:[#allocation2 + $0x2f7] sm:$0x1]
  %v4357 = vld [vmem:[#allocation2 + $0x30f] sm:$0x1]
  %v4358 = vld [vmem:[#allocation2 + $0x327] sm:$0x1]
  %v4359 = vld [vmem:[#allocation2 + $0x33f] sm:$0x1]
  %v4360 = vld [vmem:[#allocation2 + $0x357] sm:$0x1]
  %v4361 = vlaneseq
  %v4362 = vshrl.u32 %v4361, 7
  %v4363 = vsub.s32 0, %v4362
  %v4364 = vrot.slane %v4325, %v4363
  %v4365 = vlaneseq
  %v4366 = vshrl.u32 %v4365, 7
  %v4367 = vsub.s32 0, %v4366
  %v4368 = vrot.slane %v4326, %v4367
  %v4369 = vlaneseq
  %v4370 = vshrl.u32 %v4369, 7
  %v4371 = vsub.s32 0, %v4370
  %v4372 = vrot.slane %v4327, %v4371
  %v4373 = vlaneseq
  %v4374 = vshrl.u32 %v4373, 7
  %v4375 = vsub.s32 0, %v4374
  %v4376 = vrot.slane %v4328, %v4375
  %v4377 = vlaneseq
  %v4378 = vshrl.u32 %v4377, 7
  %v4379 = vsub.s32 0, %v4378
  %v4380 = vrot.slane %v4329, %v4379
  %v4381 = vlaneseq
  %v4382 = vshrl.u32 %v4381, 7
  %v4383 = vsub.s32 0, %v4382
  %v4384 = vrot.slane %v4330, %v4383
  %v4385 = vlaneseq
  %v4386 = vshrl.u32 %v4385, 7
  %v4387 = vsub.s32 0, %v4386
  %v4388 = vrot.slane %v4331, %v4387
  %v4389 = vlaneseq
  %v4390 = vshrl.u32 %v4389, 7
  %v4391 = vsub.s32 0, %v4390
  %v4392 = vrot.slane %v4332, %v4391
  %v4393 = vlaneseq
  %v4394 = vshrl.u32 %v4393, 7
  %v4395 = vsub.s32 0, %v4394
  %v4396 = vrot.slane %v4333, %v4395
  %v4397 = vlaneseq
  %v4398 = vshrl.u32 %v4397, 7
  %v4399 = vsub.s32 0, %v4398
  %v4400 = vrot.slane %v4334, %v4399
  %v4401 = vlaneseq
  %v4402 = vshrl.u32 %v4401, 7
  %v4403 = vsub.s32 0, %v4402
  %v4404 = vrot.slane %v4335, %v4403
  %v4405 = vlaneseq
  %v4406 = vshrl.u32 %v4405, 7
  %v4407 = vsub.s32 0, %v4406
  %v4408 = vrot.slane %v4336, %v4407
  %v4409 = vlaneseq
  %v4410 = vshrl.u32 %v4409, 7
  %v4411 = vsub.s32 0, %v4410
  %v4412 = vrot.slane %v4337, %v4411
  %v4413 = vlaneseq
  %v4414 = vshrl.u32 %v4413, 7
  %v4415 = vsub.s32 0, %v4414
  %v4416 = vrot.slane %v4338, %v4415
  %v4417 = vlaneseq
  %v4418 = vshrl.u32 %v4417, 7
  %v4419 = vsub.s32 0, %v4418
  %v4420 = vrot.slane %v4339, %v4419
  %v4421 = vlaneseq
  %v4422 = vshrl.u32 %v4421, 7
  %v4423 = vsub.s32 0, %v4422
  %v4424 = vrot.slane %v4340, %v4423
  %v4425 = vlaneseq
  %v4426 = vshrl.u32 %v4425, 7
  %v4427 = vsub.s32 0, %v4426
  %v4428 = vrot.slane %v4341, %v4427
  %v4429 = vlaneseq
  %v4430 = vshrl.u32 %v4429, 7
  %v4431 = vsub.s32 0, %v4430
  %v4432 = vrot.slane %v4342, %v4431
  %v4433 = vlaneseq
  %v4434 = vshrl.u32 %v4433, 7
  %v4435 = vsub.s32 0, %v4434
  %v4436 = vrot.slane %v4343, %v4435
  %v4437 = vlaneseq
  %v4438 = vshrl.u32 %v4437, 7
  %v4439 = vsub.s32 0, %v4438
  %v4440 = vrot.slane %v4344, %v4439
  %v4441 = vlaneseq
  %v4442 = vshrl.u32 %v4441, 7
  %v4443 = vsub.s32 0, %v4442
  %v4444 = vrot.slane %v4345, %v4443
  %v4445 = vlaneseq
  %v4446 = vshrl.u32 %v4445, 7
  %v4447 = vsub.s32 0, %v4446
  %v4448 = vrot.slane %v4346, %v4447
  %v4449 = vlaneseq
  %v4450 = vshrl.u32 %v4449, 7
  %v4451 = vsub.s32 0, %v4450
  %v4452 = vrot.slane %v4347, %v4451
  %v4453 = vlaneseq
  %v4454 = vshrl.u32 %v4453, 7
  %v4455 = vsub.s32 0, %v4454
  %v4456 = vrot.slane %v4348, %v4455
  %v4457 = vlaneseq
  %v4458 = vshrl.u32 %v4457, 7
  %v4459 = vsub.s32 0, %v4458
  %v4460 = vrot.slane %v4349, %v4459
  %v4461 = vlaneseq
  %v4462 = vshrl.u32 %v4461, 7
  %v4463 = vsub.s32 0, %v4462
  %v4464 = vrot.slane %v4350, %v4463
  %v4465 = vlaneseq
  %v4466 = vshrl.u32 %v4465, 7
  %v4467 = vsub.s32 0, %v4466
  %v4468 = vrot.slane %v4351, %v4467
  %v4469 = vlaneseq
  %v4470 = vshrl.u32 %v4469, 7
  %v4471 = vsub.s32 0, %v4470
  %v4472 = vrot.slane %v4352, %v4471
  %v4473 = vlaneseq
  %v4474 = vshrl.u32 %v4473, 7
  %v4475 = vsub.s32 0, %v4474
  %v4476 = vrot.slane %v4353, %v4475
  %v4477 = vlaneseq
  %v4478 = vshrl.u32 %v4477, 7
  %v4479 = vsub.s32 0, %v4478
  %v4480 = vrot.slane %v4354, %v4479
  %v4481 = vlaneseq
  %v4482 = vshrl.u32 %v4481, 7
  %v4483 = vsub.s32 0, %v4482
  %v4484 = vrot.slane %v4355, %v4483
  %v4485 = vlaneseq
  %v4486 = vshrl.u32 %v4485, 7
  %v4487 = vsub.s32 0, %v4486
  %v4488 = vrot.slane %v4356, %v4487
  %v4489 = vlaneseq
  %v4490 = vshrl.u32 %v4489, 7
  %v4491 = vsub.s32 0, %v4490
  %v4492 = vrot.slane %v4357, %v4491
  %v4493 = vlaneseq
  %v4494 = vshrl.u32 %v4493, 7
  %v4495 = vsub.s32 0, %v4494
  %v4496 = vrot.slane %v4358, %v4495
  %v4497 = vlaneseq
  %v4498 = vshrl.u32 %v4497, 7
  %v4499 = vsub.s32 0, %v4498
  %v4500 = vrot.slane %v4359, %v4499
  %v4501 = vlaneseq
  %v4502 = vshrl.u32 %v4501, 7
  %v4503 = vsub.s32 0, %v4502
  %v4504 = vrot.slane %v4360, %v4503
  %4505 = vst.msk [vmem:[#allocation2 + $0x10] sm:$0x3] %vm418, %v4364
  %4506 = vst.msk [vmem:[#allocation2 + $0x28] sm:$0x3] %vm418, %v4368
  %4507 = vst.msk [vmem:[#allocation2 + $0x40] sm:$0x3] %vm418, %v4372
  %4508 = vst.msk [vmem:[#allocation2 + $0x58] sm:$0x3] %vm418, %v4376
  %4509 = vst.msk [vmem:[#allocation2 + $0x70] sm:$0x3] %vm418, %v4380
  %4510 = vst.msk [vmem:[#allocation2 + $0x88] sm:$0x3] %vm418, %v4384
  %4511 = vst.msk [vmem:[#allocation2 + $0xa0] sm:$0x3] %vm418, %v4388
  %4512 = vst.msk [vmem:[#allocation2 + $0xb8] sm:$0x3] %vm418, %v4392
  %4513 = vst.msk [vmem:[#allocation2 + $0xd0] sm:$0x3] %vm418, %v4396
  %4514 = vst.msk [vmem:[#allocation2 + $0xe8] sm:$0x3] %vm418, %v4400
  %4515 = vst.msk [vmem:[#allocation2 + $0x100] sm:$0x3] %vm418, %v4404
  %4516 = vst.msk [vmem:[#allocation2 + $0x118] sm:$0x3] %vm418, %v4408
  %4517 = vst.msk [vmem:[#allocation2 + $0x130] sm:$0x3] %vm418, %v4412
  %4518 = vst.msk [vmem:[#allocation2 + $0x148] sm:$0x3] %vm418, %v4416
  %4519 = vst.msk [vmem:[#allocation2 + $0x160] sm:$0x3] %vm418, %v4420
  %4520 = vst.msk [vmem:[#allocation2 + $0x178] sm:$0x3] %vm418, %v4424
  %4521 = vst.msk [vmem:[#allocation2 + $0x190] sm:$0x3] %vm418, %v4428
  %4522 = vst.msk [vmem:[#allocation2 + $0x1a8] sm:$0x3] %vm418, %v4432
  %4523 = vst.msk [vmem:[#allocation2 + $0x1c0] sm:$0x3] %vm418, %v4436
  %4524 = vst.msk [vmem:[#allocation2 + $0x1d8] sm:$0x3] %vm418, %v4440
  %4525 = vst.msk [vmem:[#allocation2 + $0x1f0] sm:$0x3] %vm418, %v4444
  %4526 = vst.msk [vmem:[#allocation2 + $0x208] sm:$0x3] %vm418, %v4448
  %4527 = vst.msk [vmem:[#allocation2 + $0x220] sm:$0x3] %vm418, %v4452
  %4528 = vst.msk [vmem:[#allocation2 + $0x238] sm:$0x3] %vm418, %v4456
  %4529 = vst.msk [vmem:[#allocation2 + $0x250] sm:$0x3] %vm418, %v4460
  %4530 = vst.msk [vmem:[#allocation2 + $0x268] sm:$0x3] %vm418, %v4464
  %4531 = vst.msk [vmem:[#allocation2 + $0x280] sm:$0x3] %vm418, %v4468
  %4532 = vst.msk [vmem:[#allocation2 + $0x298] sm:$0x3] %vm418, %v4472
  %4533 = vst.msk [vmem:[#allocation2 + $0x2b0] sm:$0x3] %vm418, %v4476
  %4534 = vst.msk [vmem:[#allocation2 + $0x2c8] sm:$0x3] %vm418, %v4480
  %4535 = vst.msk [vmem:[#allocation2 + $0x2e0] sm:$0x3] %vm418, %v4484
  %4536 = vst.msk [vmem:[#allocation2 + $0x2f8] sm:$0x3] %vm418, %v4488
  %4537 = vst.msk [vmem:[#allocation2 + $0x310] sm:$0x3] %vm418, %v4492
  %4538 = vst.msk [vmem:[#allocation2 + $0x328] sm:$0x3] %vm418, %v4496
  %4539 = vst.msk [vmem:[#allocation2 + $0x340] sm:$0x3] %vm418, %v4500
  %4540 = vst.msk [vmem:[#allocation2 + $0x358] sm:$0x3] %vm418, %v4504
  %v4541 = vld [vmem:[#allocation2] sm:$0xff]
  %v4542 = vld [vmem:[#allocation2 + $0x8] sm:$0xff]
  %v4543 = vld [vmem:[#allocation2 + $0x18] sm:$0xff]
  %v4544 = vld [vmem:[#allocation2 + $0x20] sm:$0xff]
  %v4545 = vld [vmem:[#allocation2 + $0x30] sm:$0xff]
  %v4546 = vld [vmem:[#allocation2 + $0x38] sm:$0xff]
  %v4547 = vld [vmem:[#allocation2 + $0x48] sm:$0xff]
  %v4548 = vld [vmem:[#allocation2 + $0x50] sm:$0xff]
  %v4549 = vld [vmem:[#allocation2 + $0x60] sm:$0xff]
  %v4550 = vld [vmem:[#allocation2 + $0x68] sm:$0xff]
  %v4551 = vld [vmem:[#allocation2 + $0x78] sm:$0xff]
  %v4552 = vld [vmem:[#allocation2 + $0x80] sm:$0xff]
  %v4553 = vld [vmem:[#allocation2 + $0x90] sm:$0xff]
  %v4554 = vld [vmem:[#allocation2 + $0x98] sm:$0xff]
  %v4555 = vld [vmem:[#allocation2 + $0xa8] sm:$0xff]
  %v4556 = vld [vmem:[#allocation2 + $0xb0] sm:$0xff]
  %v4557 = vld [vmem:[#allocation2 + $0xc0] sm:$0xff]
  %v4558 = vld [vmem:[#allocation2 + $0xc8] sm:$0xff]
  %v4559 = vld [vmem:[#allocation2 + $0xd8] sm:$0xff]
  %v4560 = vld [vmem:[#allocation2 + $0xe0] sm:$0xff]
  %v4561 = vld [vmem:[#allocation2 + $0xf0] sm:$0xff]
  %v4562 = vld [vmem:[#allocation2 + $0xf8] sm:$0xff]
  %v4563 = vld [vmem:[#allocation2 + $0x108] sm:$0xff]
  %v4564 = vld [vmem:[#allocation2 + $0x110] sm:$0xff]
  %v4565 = vld [vmem:[#allocation2 + $0x120] sm:$0xff]
  %v4566 = vld [vmem:[#allocation2 + $0x128] sm:$0xff]
  %v4567 = vld [vmem:[#allocation2 + $0x138] sm:$0xff]
  %v4568 = vld [vmem:[#allocation2 + $0x140] sm:$0xff]
  %v4569 = vld [vmem:[#allocation2 + $0x150] sm:$0xff]
  %v4570 = vld [vmem:[#allocation2 + $0x158] sm:$0xff]
  %v4571 = vld [vmem:[#allocation2 + $0x168] sm:$0xff]
  %v4572 = vld [vmem:[#allocation2 + $0x170] sm:$0xff]
  %4573 = vst.msk [vmem:[#allocation3] sm:$0xff] %vm93, %v4541
  %4574 = vst.msk [vmem:[#allocation3 + $0x8] sm:$0xff] %vm93, %v4542
  %4575 = vst.msk [vmem:[#allocation3 + $0x10] sm:$0xff] %vm93, %v4543
  %4576 = vst.msk [vmem:[#allocation3 + $0x18] sm:$0xff] %vm93, %v4544
  %4577 = vst.msk [vmem:[#allocation3 + $0x20] sm:$0xff] %vm93, %v4545
  %4578 = vst.msk [vmem:[#allocation3 + $0x28] sm:$0xff] %vm93, %v4546
  %4579 = vst.msk [vmem:[#allocation3 + $0x30] sm:$0xff] %vm93, %v4547
  %4580 = vst.msk [vmem:[#allocation3 + $0x38] sm:$0xff] %vm93, %v4548
  %4581 = vst.msk [vmem:[#allocation3 + $0x40] sm:$0xff] %vm93, %v4549
  %4582 = vst.msk [vmem:[#allocation3 + $0x48] sm:$0xff] %vm93, %v4550
  %4583 = vst.msk [vmem:[#allocation3 + $0x50] sm:$0xff] %vm93, %v4551
  %4584 = vst.msk [vmem:[#allocation3 + $0x58] sm:$0xff] %vm93, %v4552
  %4585 = vst.msk [vmem:[#allocation3 + $0x60] sm:$0xff] %vm93, %v4553
  %4586 = vst.msk [vmem:[#allocation3 + $0x68] sm:$0xff] %vm93, %v4554
  %4587 = vst.msk [vmem:[#allocation3 + $0x70] sm:$0xff] %vm93, %v4555
  %4588 = vst.msk [vmem:[#allocation3 + $0x78] sm:$0xff] %vm93, %v4556
  %4589 = vst.msk [vmem:[#allocation3 + $0x80] sm:$0xff] %vm93, %v4557
  %4590 = vst.msk [vmem:[#allocation3 + $0x88] sm:$0xff] %vm93, %v4558
  %4591 = vst.msk [vmem:[#allocation3 + $0x90] sm:$0xff] %vm93, %v4559
  %4592 = vst.msk [vmem:[#allocation3 + $0x98] sm:$0xff] %vm93, %v4560
  %4593 = vst.msk [vmem:[#allocation3 + $0xa0] sm:$0xff] %vm93, %v4561
  %4594 = vst.msk [vmem:[#allocation3 + $0xa8] sm:$0xff] %vm93, %v4562
  %4595 = vst.msk [vmem:[#allocation3 + $0xb0] sm:$0xff] %vm93, %v4563
  %4596 = vst.msk [vmem:[#allocation3 + $0xb8] sm:$0xff] %vm93, %v4564
  %4597 = vst.msk [vmem:[#allocation3 + $0xc0] sm:$0xff] %vm93, %v4565
  %4598 = vst.msk [vmem:[#allocation3 + $0xc8] sm:$0xff] %vm93, %v4566
  %4599 = vst.msk [vmem:[#allocation3 + $0xd0] sm:$0xff] %vm93, %v4567
  %4600 = vst.msk [vmem:[#allocation3 + $0xd8] sm:$0xff] %vm93, %v4568
  %4601 = vst.msk [vmem:[#allocation3 + $0xe0] sm:$0xff] %vm93, %v4569
  %4602 = vst.msk [vmem:[#allocation3 + $0xe8] sm:$0xff] %vm93, %v4570
  %4603 = vst.msk [vmem:[#allocation3 + $0xf0] sm:$0xff] %vm93, %v4571
  %4604 = vst.msk [vmem:[#allocation3 + $0xf8] sm:$0xff] %vm93, %v4572
  %v4605 = vld [vmem:[%s233] sm:$0xff]
  %v4606 = vld [vmem:[%s233 + $0x8] sm:$0xff]
  %v4607 = vld [vmem:[%s233 + $0x18] sm:$0xff]
  %v4608 = vld [vmem:[%s233 + $0x20] sm:$0xff]
  %v4609 = vld [vmem:[%s233 + $0x30] sm:$0xff]
  %v4610 = vld [vmem:[%s233 + $0x38] sm:$0xff]
  %v4611 = vld [vmem:[%s233 + $0x48] sm:$0xff]
  %v4612 = vld [vmem:[%s233 + $0x50] sm:$0xff]
  %v4613 = vld [vmem:[%s233 + $0x60] sm:$0xff]
  %v4614 = vld [vmem:[%s233 + $0x68] sm:$0xff]
  %v4615 = vld [vmem:[%s233 + $0x78] sm:$0xff]
  %v4616 = vld [vmem:[%s233 + $0x80] sm:$0xff]
  %v4617 = vld [vmem:[%s233 + $0x90] sm:$0xff]
  %v4618 = vld [vmem:[%s233 + $0x98] sm:$0xff]
  %v4619 = vld [vmem:[%s233 + $0xa8] sm:$0xff]
  %v4620 = vld [vmem:[%s233 + $0xb0] sm:$0xff]
  %v4621 = vld [vmem:[%s233 + $0xc0] sm:$0xff]
  %v4622 = vld [vmem:[%s233 + $0xc8] sm:$0xff]
  %v4623 = vld [vmem:[%s233 + $0xd8] sm:$0xff]
  %v4624 = vld [vmem:[%s233 + $0xe0] sm:$0xff]
  %v4625 = vld [vmem:[%s233 + $0xf0] sm:$0xff]
  %v4626 = vld [vmem:[%s233 + $0xf8] sm:$0xff]
  %v4627 = vld [vmem:[%s233 + $0x108] sm:$0xff]
  %v4628 = vld [vmem:[%s233 + $0x110] sm:$0xff]
  %v4629 = vld [vmem:[%s233 + $0x120] sm:$0xff]
  %v4630 = vld [vmem:[%s233 + $0x128] sm:$0xff]
  %v4631 = vld [vmem:[%s233 + $0x138] sm:$0xff]
  %v4632 = vld [vmem:[%s233 + $0x140] sm:$0xff]
  %v4633 = vld [vmem:[%s233 + $0x150] sm:$0xff]
  %v4634 = vld [vmem:[%s233 + $0x158] sm:$0xff]
  %v4635 = vld [vmem:[%s233 + $0x168] sm:$0xff]
  %v4636 = vld [vmem:[%s233 + $0x170] sm:$0xff]
  %4637 = vst.msk [vmem:[#allocation3 + $0x100] sm:$0xff] %vm93, %v4605
  %4638 = vst.msk [vmem:[#allocation3 + $0x108] sm:$0xff] %vm93, %v4606
  %4639 = vst.msk [vmem:[#allocation3 + $0x110] sm:$0xff] %vm93, %v4607
  %4640 = vst.msk [vmem:[#allocation3 + $0x118] sm:$0xff] %vm93, %v4608
  %4641 = vst.msk [vmem:[#allocation3 + $0x120] sm:$0xff] %vm93, %v4609
  %4642 = vst.msk [vmem:[#allocation3 + $0x128] sm:$0xff] %vm93, %v4610
  %4643 = vst.msk [vmem:[#allocation3 + $0x130] sm:$0xff] %vm93, %v4611
  %4644 = vst.msk [vmem:[#allocation3 + $0x138] sm:$0xff] %vm93, %v4612
  %4645 = vst.msk [vmem:[#allocation3 + $0x140] sm:$0xff] %vm93, %v4613
  %4646 = vst.msk [vmem:[#allocation3 + $0x148] sm:$0xff] %vm93, %v4614
  %4647 = vst.msk [vmem:[#allocation3 + $0x150] sm:$0xff] %vm93, %v4615
  %4648 = vst.msk [vmem:[#allocation3 + $0x158] sm:$0xff] %vm93, %v4616
  %4649 = vst.msk [vmem:[#allocation3 + $0x160] sm:$0xff] %vm93, %v4617
  %4650 = vst.msk [vmem:[#allocation3 + $0x168] sm:$0xff] %vm93, %v4618
  %4651 = vst.msk [vmem:[#allocation3 + $0x170] sm:$0xff] %vm93, %v4619
  %4652 = vst.msk [vmem:[#allocation3 + $0x178] sm:$0xff] %vm93, %v4620
  %4653 = vst.msk [vmem:[#allocation3 + $0x180] sm:$0xff] %vm93, %v4621
  %4654 = vst.msk [vmem:[#allocation3 + $0x188] sm:$0xff] %vm93, %v4622
  %4655 = vst.msk [vmem:[#allocation3 + $0x190] sm:$0xff] %vm93, %v4623
  %4656 = vst.msk [vmem:[#allocation3 + $0x198] sm:$0xff] %vm93, %v4624
  %4657 = vst.msk [vmem:[#allocation3 + $0x1a0] sm:$0xff] %vm93, %v4625
  %4658 = vst.msk [vmem:[#allocation3 + $0x1a8] sm:$0xff] %vm93, %v4626
  %4659 = vst.msk [vmem:[#allocation3 + $0x1b0] sm:$0xff] %vm93, %v4627
  %4660 = vst.msk [vmem:[#allocation3 + $0x1b8] sm:$0xff] %vm93, %v4628
  %4661 = vst.msk [vmem:[#allocation3 + $0x1c0] sm:$0xff] %vm93, %v4629
  %4662 = vst.msk [vmem:[#allocation3 + $0x1c8] sm:$0xff] %vm93, %v4630
  %4663 = vst.msk [vmem:[#allocation3 + $0x1d0] sm:$0xff] %vm93, %v4631
  %4664 = vst.msk [vmem:[#allocation3 + $0x1d8] sm:$0xff] %vm93, %v4632
  %4665 = vst.msk [vmem:[#allocation3 + $0x1e0] sm:$0xff] %vm93, %v4633
  %4666 = vst.msk [vmem:[#allocation3 + $0x1e8] sm:$0xff] %vm93, %v4634
  %4667 = vst.msk [vmem:[#allocation3 + $0x1f0] sm:$0xff] %vm93, %v4635
  %4668 = vst.msk [vmem:[#allocation3 + $0x1f8] sm:$0xff] %vm93, %v4636
  %v4669 = vld [vmem:[#allocation2 + $0x1] sm:$0xff]
  %v4670 = vld [vmem:[#allocation2 + $0x9] sm:$0xff]
  %v4671 = vld [vmem:[#allocation2 + $0x19] sm:$0xff]
  %v4672 = vld [vmem:[#allocation2 + $0x21] sm:$0xff]
  %v4673 = vld [vmem:[#allocation2 + $0x31] sm:$0xff]
  %v4674 = vld [vmem:[#allocation2 + $0x39] sm:$0xff]
  %v4675 = vld [vmem:[#allocation2 + $0x49] sm:$0xff]
  %v4676 = vld [vmem:[#allocation2 + $0x51] sm:$0xff]
  %v4677 = vld [vmem:[#allocation2 + $0x61] sm:$0xff]
  %v4678 = vld [vmem:[#allocation2 + $0x69] sm:$0xff]
  %v4679 = vld [vmem:[#allocation2 + $0x79] sm:$0xff]
  %v4680 = vld [vmem:[#allocation2 + $0x81] sm:$0xff]
  %v4681 = vld [vmem:[#allocation2 + $0x91] sm:$0xff]
  %v4682 = vld [vmem:[#allocation2 + $0x99] sm:$0xff]
  %v4683 = vld [vmem:[#allocation2 + $0xa9] sm:$0xff]
  %v4684 = vld [vmem:[#allocation2 + $0xb1] sm:$0xff]
  %v4685 = vld [vmem:[#allocation2 + $0xc1] sm:$0xff]
  %v4686 = vld [vmem:[#allocation2 + $0xc9] sm:$0xff]
  %v4687 = vld [vmem:[#allocation2 + $0xd9] sm:$0xff]
  %v4688 = vld [vmem:[#allocation2 + $0xe1] sm:$0xff]
  %v4689 = vld [vmem:[#allocation2 + $0xf1] sm:$0xff]
  %v4690 = vld [vmem:[#allocation2 + $0xf9] sm:$0xff]
  %v4691 = vld [vmem:[#allocation2 + $0x109] sm:$0xff]
  %v4692 = vld [vmem:[#allocation2 + $0x111] sm:$0xff]
  %v4693 = vld [vmem:[#allocation2 + $0x121] sm:$0xff]
  %v4694 = vld [vmem:[#allocation2 + $0x129] sm:$0xff]
  %v4695 = vld [vmem:[#allocation2 + $0x139] sm:$0xff]
  %v4696 = vld [vmem:[#allocation2 + $0x141] sm:$0xff]
  %v4697 = vld [vmem:[#allocation2 + $0x151] sm:$0xff]
  %v4698 = vld [vmem:[#allocation2 + $0x159] sm:$0xff]
  %v4699 = vld [vmem:[#allocation2 + $0x169] sm:$0xff]
  %v4700 = vld [vmem:[#allocation2 + $0x171] sm:$0xff]
  %4733 = vrot.lane.b32.xlu0 %v4669, 4
  %v4734 = vpop.permute.xlu0 %4733
  %4735 = vrot.lane.b32.xlu0 %v4670, 4
  %v4736 = vpop.permute.xlu0 %4735
  %4737 = vrot.lane.b32.xlu0 %v4671, 4
  %v4738 = vpop.permute.xlu0 %4737
  %4739 = vrot.lane.b32.xlu0 %v4672, 4
  %v4740 = vpop.permute.xlu0 %4739
  %4741 = vrot.lane.b32.xlu0 %v4673, 4
  %v4742 = vpop.permute.xlu0 %4741
  %4743 = vrot.lane.b32.xlu0 %v4674, 4
  %v4744 = vpop.permute.xlu0 %4743
  %4745 = vrot.lane.b32.xlu0 %v4675, 4
  %v4746 = vpop.permute.xlu0 %4745
  %4747 = vrot.lane.b32.xlu0 %v4676, 4
  %v4748 = vpop.permute.xlu0 %4747
  %4749 = vrot.lane.b32.xlu0 %v4677, 4
  %v4750 = vpop.permute.xlu0 %4749
  %4751 = vrot.lane.b32.xlu0 %v4678, 4
  %v4752 = vpop.permute.xlu0 %4751
  %4753 = vrot.lane.b32.xlu0 %v4679, 4
  %v4754 = vpop.permute.xlu0 %4753
  %4755 = vrot.lane.b32.xlu0 %v4680, 4
  %v4756 = vpop.permute.xlu0 %4755
  %4757 = vrot.lane.b32.xlu0 %v4681, 4
  %v4758 = vpop.permute.xlu0 %4757
  %4759 = vrot.lane.b32.xlu0 %v4682, 4
  %v4760 = vpop.permute.xlu0 %4759
  %4761 = vrot.lane.b32.xlu0 %v4683, 4
  %v4762 = vpop.permute.xlu0 %4761
  %4763 = vrot.lane.b32.xlu0 %v4684, 4
  %v4764 = vpop.permute.xlu0 %4763
  %4765 = vrot.lane.b32.xlu0 %v4685, 4
  %v4766 = vpop.permute.xlu0 %4765
  %4767 = vrot.lane.b32.xlu0 %v4686, 4
  %v4768 = vpop.permute.xlu0 %4767
  %4769 = vrot.lane.b32.xlu0 %v4687, 4
  %v4770 = vpop.permute.xlu0 %4769
  %4771 = vrot.lane.b32.xlu0 %v4688, 4
  %v4772 = vpop.permute.xlu0 %4771
  %4773 = vrot.lane.b32.xlu0 %v4689, 4
  %v4774 = vpop.permute.xlu0 %4773
  %4775 = vrot.lane.b32.xlu0 %v4690, 4
  %v4776 = vpop.permute.xlu0 %4775
  %4777 = vrot.lane.b32.xlu0 %v4691, 4
  %v4778 = vpop.permute.xlu0 %4777
  %4779 = vrot.lane.b32.xlu0 %v4692, 4
  %v4780 = vpop.permute.xlu0 %4779
  %4781 = vrot.lane.b32.xlu0 %v4693, 4
  %v4782 = vpop.permute.xlu0 %4781
  %4783 = vrot.lane.b32.xlu0 %v4694, 4
  %v4784 = vpop.permute.xlu0 %4783
  %4785 = vrot.lane.b32.xlu0 %v4695, 4
  %v4786 = vpop.permute.xlu0 %4785
  %4787 = vrot.lane.b32.xlu0 %v4696, 4
  %v4788 = vpop.permute.xlu0 %4787
  %4789 = vrot.lane.b32.xlu0 %v4697, 4
  %v4790 = vpop.permute.xlu0 %4789
  %4791 = vrot.lane.b32.xlu0 %v4698, 4
  %v4792 = vpop.permute.xlu0 %4791
  %4793 = vrot.lane.b32.xlu0 %v4699, 4
  %v4794 = vpop.permute.xlu0 %4793
  %4795 = vrot.lane.b32.xlu0 %v4700, 4
  %v4796 = vpop.permute.xlu0 %4795
  %4829 = vst.msk [vmem:[#allocation3] sm:$0xff] %vm743, %v4734
  %4830 = vst.msk [vmem:[#allocation3 + $0x8] sm:$0xff] %vm743, %v4736
  %4831 = vst.msk [vmem:[#allocation3 + $0x10] sm:$0xff] %vm743, %v4738
  %4832 = vst.msk [vmem:[#allocation3 + $0x18] sm:$0xff] %vm743, %v4740
  %4833 = vst.msk [vmem:[#allocation3 + $0x20] sm:$0xff] %vm743, %v4742
  %4834 = vst.msk [vmem:[#allocation3 + $0x28] sm:$0xff] %vm743, %v4744
  %4835 = vst.msk [vmem:[#allocation3 + $0x30] sm:$0xff] %vm743, %v4746
  %4836 = vst.msk [vmem:[#allocation3 + $0x38] sm:$0xff] %vm743, %v4748
  %4837 = vst.msk [vmem:[#allocation3 + $0x40] sm:$0xff] %vm743, %v4750
  %4838 = vst.msk [vmem:[#allocation3 + $0x48] sm:$0xff] %vm743, %v4752
  %4839 = vst.msk [vmem:[#allocation3 + $0x50] sm:$0xff] %vm743, %v4754
  %4840 = vst.msk [vmem:[#allocation3 + $0x58] sm:$0xff] %vm743, %v4756
  %4841 = vst.msk [vmem:[#allocation3 + $0x60] sm:$0xff] %vm743, %v4758
  %4842 = vst.msk [vmem:[#allocation3 + $0x68] sm:$0xff] %vm743, %v4760
  %4843 = vst.msk [vmem:[#allocation3 + $0x70] sm:$0xff] %vm743, %v4762
  %4844 = vst.msk [vmem:[#allocation3 + $0x78] sm:$0xff] %vm743, %v4764
  %4845 = vst.msk [vmem:[#allocation3 + $0x80] sm:$0xff] %vm743, %v4766
  %4846 = vst.msk [vmem:[#allocation3 + $0x88] sm:$0xff] %vm743, %v4768
  %4847 = vst.msk [vmem:[#allocation3 + $0x90] sm:$0xff] %vm743, %v4770
  %4848 = vst.msk [vmem:[#allocation3 + $0x98] sm:$0xff] %vm743, %v4772
  %4849 = vst.msk [vmem:[#allocation3 + $0xa0] sm:$0xff] %vm743, %v4774
  %4850 = vst.msk [vmem:[#allocation3 + $0xa8] sm:$0xff] %vm743, %v4776
  %4851 = vst.msk [vmem:[#allocation3 + $0xb0] sm:$0xff] %vm743, %v4778
  %4852 = vst.msk [vmem:[#allocation3 + $0xb8] sm:$0xff] %vm743, %v4780
  %4853 = vst.msk [vmem:[#allocation3 + $0xc0] sm:$0xff] %vm743, %v4782
  %4854 = vst.msk [vmem:[#allocation3 + $0xc8] sm:$0xff] %vm743, %v4784
  %4855 = vst.msk [vmem:[#allocation3 + $0xd0] sm:$0xff] %vm743, %v4786
  %4856 = vst.msk [vmem:[#allocation3 + $0xd8] sm:$0xff] %vm743, %v4788
  %4857 = vst.msk [vmem:[#allocation3 + $0xe0] sm:$0xff] %vm743, %v4790
  %4858 = vst.msk [vmem:[#allocation3 + $0xe8] sm:$0xff] %vm743, %v4792
  %4859 = vst.msk [vmem:[#allocation3 + $0xf0] sm:$0xff] %vm743, %v4794
  %4860 = vst.msk [vmem:[#allocation3 + $0xf8] sm:$0xff] %vm743, %v4796
  %v4861 = vld [vmem:[%s233 + $0x1] sm:$0xff]
  %v4862 = vld [vmem:[%s233 + $0x9] sm:$0xff]
  %v4863 = vld [vmem:[%s233 + $0x19] sm:$0xff]
  %v4864 = vld [vmem:[%s233 + $0x21] sm:$0xff]
  %v4865 = vld [vmem:[%s233 + $0x31] sm:$0xff]
  %v4866 = vld [vmem:[%s233 + $0x39] sm:$0xff]
  %v4867 = vld [vmem:[%s233 + $0x49] sm:$0xff]
  %v4868 = vld [vmem:[%s233 + $0x51] sm:$0xff]
  %v4869 = vld [vmem:[%s233 + $0x61] sm:$0xff]
  %v4870 = vld [vmem:[%s233 + $0x69] sm:$0xff]
  %v4871 = vld [vmem:[%s233 + $0x79] sm:$0xff]
  %v4872 = vld [vmem:[%s233 + $0x81] sm:$0xff]
  %v4873 = vld [vmem:[%s233 + $0x91] sm:$0xff]
  %v4874 = vld [vmem:[%s233 + $0x99] sm:$0xff]
  %v4875 = vld [vmem:[%s233 + $0xa9] sm:$0xff]
  %v4876 = vld [vmem:[%s233 + $0xb1] sm:$0xff]
  %v4877 = vld [vmem:[%s233 + $0xc1] sm:$0xff]
  %v4878 = vld [vmem:[%s233 + $0xc9] sm:$0xff]
  %v4879 = vld [vmem:[%s233 + $0xd9] sm:$0xff]
  %v4880 = vld [vmem:[%s233 + $0xe1] sm:$0xff]
  %v4881 = vld [vmem:[%s233 + $0xf1] sm:$0xff]
  %v4882 = vld [vmem:[%s233 + $0xf9] sm:$0xff]
  %v4883 = vld [vmem:[%s233 + $0x109] sm:$0xff]
  %v4884 = vld [vmem:[%s233 + $0x111] sm:$0xff]
  %v4885 = vld [vmem:[%s233 + $0x121] sm:$0xff]
  %v4886 = vld [vmem:[%s233 + $0x129] sm:$0xff]
  %v4887 = vld [vmem:[%s233 + $0x139] sm:$0xff]
  %v4888 = vld [vmem:[%s233 + $0x141] sm:$0xff]
  %v4889 = vld [vmem:[%s233 + $0x151] sm:$0xff]
  %v4890 = vld [vmem:[%s233 + $0x159] sm:$0xff]
  %v4891 = vld [vmem:[%s233 + $0x169] sm:$0xff]
  %v4892 = vld [vmem:[%s233 + $0x171] sm:$0xff]
  %4925 = vrot.lane.b32.xlu0 %v4861, 4
  %v4926 = vpop.permute.xlu0 %4925
  %4927 = vrot.lane.b32.xlu0 %v4862, 4
  %v4928 = vpop.permute.xlu0 %4927
  %4929 = vrot.lane.b32.xlu0 %v4863, 4
  %v4930 = vpop.permute.xlu0 %4929
  %4931 = vrot.lane.b32.xlu0 %v4864, 4
  %v4932 = vpop.permute.xlu0 %4931
  %4933 = vrot.lane.b32.xlu0 %v4865, 4
  %v4934 = vpop.permute.xlu0 %4933
  %4935 = vrot.lane.b32.xlu0 %v4866, 4
  %v4936 = vpop.permute.xlu0 %4935
  %4937 = vrot.lane.b32.xlu0 %v4867, 4
  %v4938 = vpop.permute.xlu0 %4937
  %4939 = vrot.lane.b32.xlu0 %v4868, 4
  %v4940 = vpop.permute.xlu0 %4939
  %4941 = vrot.lane.b32.xlu0 %v4869, 4
  %v4942 = vpop.permute.xlu0 %4941
  %4943 = vrot.lane.b32.xlu0 %v4870, 4
  %v4944 = vpop.permute.xlu0 %4943
  %4945 = vrot.lane.b32.xlu0 %v4871, 4
  %v4946 = vpop.permute.xlu0 %4945
  %4947 = vrot.lane.b32.xlu0 %v4872, 4
  %v4948 = vpop.permute.xlu0 %4947
  %4949 = vrot.lane.b32.xlu0 %v4873, 4
  %v4950 = vpop.permute.xlu0 %4949
  %4951 = vrot.lane.b32.xlu0 %v4874, 4
  %v4952 = vpop.permute.xlu0 %4951
  %4953 = vrot.lane.b32.xlu0 %v4875, 4
  %v4954 = vpop.permute.xlu0 %4953
  %4955 = vrot.lane.b32.xlu0 %v4876, 4
  %v4956 = vpop.permute.xlu0 %4955
  %4957 = vrot.lane.b32.xlu0 %v4877, 4
  %v4958 = vpop.permute.xlu0 %4957
  %4959 = vrot.lane.b32.xlu0 %v4878, 4
  %v4960 = vpop.permute.xlu0 %4959
  %4961 = vrot.lane.b32.xlu0 %v4879, 4
  %v4962 = vpop.permute.xlu0 %4961
  %4963 = vrot.lane.b32.xlu0 %v4880, 4
  %v4964 = vpop.permute.xlu0 %4963
  %4965 = vrot.lane.b32.xlu0 %v4881, 4
  %v4966 = vpop.permute.xlu0 %4965
  %4967 = vrot.lane.b32.xlu0 %v4882, 4
  %v4968 = vpop.permute.xlu0 %4967
  %4969 = vrot.lane.b32.xlu0 %v4883, 4
  %v4970 = vpop.permute.xlu0 %4969
  %4971 = vrot.lane.b32.xlu0 %v4884, 4
  %v4972 = vpop.permute.xlu0 %4971
  %4973 = vrot.lane.b32.xlu0 %v4885, 4
  %v4974 = vpop.permute.xlu0 %4973
  %4975 = vrot.lane.b32.xlu0 %v4886, 4
  %v4976 = vpop.permute.xlu0 %4975
  %4977 = vrot.lane.b32.xlu0 %v4887, 4
  %v4978 = vpop.permute.xlu0 %4977
  %4979 = vrot.lane.b32.xlu0 %v4888, 4
  %v4980 = vpop.permute.xlu0 %4979
  %4981 = vrot.lane.b32.xlu0 %v4889, 4
  %v4982 = vpop.permute.xlu0 %4981
  %4983 = vrot.lane.b32.xlu0 %v4890, 4
  %v4984 = vpop.permute.xlu0 %4983
  %4985 = vrot.lane.b32.xlu0 %v4891, 4
  %v4986 = vpop.permute.xlu0 %4985
  %4987 = vrot.lane.b32.xlu0 %v4892, 4
  %v4988 = vpop.permute.xlu0 %4987
  %5021 = vst.msk [vmem:[#allocation3 + $0x100] sm:$0xff] %vm743, %v4926
  %5022 = vst.msk [vmem:[#allocation3 + $0x108] sm:$0xff] %vm743, %v4928
  %5023 = vst.msk [vmem:[#allocation3 + $0x110] sm:$0xff] %vm743, %v4930
  %5024 = vst.msk [vmem:[#allocation3 + $0x118] sm:$0xff] %vm743, %v4932
  %5025 = vst.msk [vmem:[#allocation3 + $0x120] sm:$0xff] %vm743, %v4934
  %5026 = vst.msk [vmem:[#allocation3 + $0x128] sm:$0xff] %vm743, %v4936
  %5027 = vst.msk [vmem:[#allocation3 + $0x130] sm:$0xff] %vm743, %v4938
  %5028 = vst.msk [vmem:[#allocation3 + $0x138] sm:$0xff] %vm743, %v4940
  %5029 = vst.msk [vmem:[#allocation3 + $0x140] sm:$0xff] %vm743, %v4942
  %5030 = vst.msk [vmem:[#allocation3 + $0x148] sm:$0xff] %vm743, %v4944
  %5031 = vst.msk [vmem:[#allocation3 + $0x150] sm:$0xff] %vm743, %v4946
  %5032 = vst.msk [vmem:[#allocation3 + $0x158] sm:$0xff] %vm743, %v4948
  %5033 = vst.msk [vmem:[#allocation3 + $0x160] sm:$0xff] %vm743, %v4950
  %5034 = vst.msk [vmem:[#allocation3 + $0x168] sm:$0xff] %vm743, %v4952
  %5035 = vst.msk [vmem:[#allocation3 + $0x170] sm:$0xff] %vm743, %v4954
  %5036 = vst.msk [vmem:[#allocation3 + $0x178] sm:$0xff] %vm743, %v4956
  %5037 = vst.msk [vmem:[#allocation3 + $0x180] sm:$0xff] %vm743, %v4958
  %5038 = vst.msk [vmem:[#allocation3 + $0x188] sm:$0xff] %vm743, %v4960
  %5039 = vst.msk [vmem:[#allocation3 + $0x190] sm:$0xff] %vm743, %v4962
  %5040 = vst.msk [vmem:[#allocation3 + $0x198] sm:$0xff] %vm743, %v4964
  %5041 = vst.msk [vmem:[#allocation3 + $0x1a0] sm:$0xff] %vm743, %v4966
  %5042 = vst.msk [vmem:[#allocation3 + $0x1a8] sm:$0xff] %vm743, %v4968
  %5043 = vst.msk [vmem:[#allocation3 + $0x1b0] sm:$0xff] %vm743, %v4970
  %5044 = vst.msk [vmem:[#allocation3 + $0x1b8] sm:$0xff] %vm743, %v4972
  %5045 = vst.msk [vmem:[#allocation3 + $0x1c0] sm:$0xff] %vm743, %v4974
  %5046 = vst.msk [vmem:[#allocation3 + $0x1c8] sm:$0xff] %vm743, %v4976
  %5047 = vst.msk [vmem:[#allocation3 + $0x1d0] sm:$0xff] %vm743, %v4978
  %5048 = vst.msk [vmem:[#allocation3 + $0x1d8] sm:$0xff] %vm743, %v4980
  %5049 = vst.msk [vmem:[#allocation3 + $0x1e0] sm:$0xff] %vm743, %v4982
  %5050 = vst.msk [vmem:[#allocation3 + $0x1e8] sm:$0xff] %vm743, %v4984
  %5051 = vst.msk [vmem:[#allocation3 + $0x1f0] sm:$0xff] %vm743, %v4986
  %5052 = vst.msk [vmem:[#allocation3 + $0x1f8] sm:$0xff] %vm743, %v4988
  %v5053 = vld [vmem:[#allocation2 + $0x2] sm:$0xff]
  %v5054 = vld [vmem:[#allocation2 + $0xa] sm:$0xff]
  %v5055 = vld [vmem:[#allocation2 + $0x1a] sm:$0xff]
  %v5056 = vld [vmem:[#allocation2 + $0x22] sm:$0xff]
  %v5057 = vld [vmem:[#allocation2 + $0x32] sm:$0xff]
  %v5058 = vld [vmem:[#allocation2 + $0x3a] sm:$0xff]
  %v5059 = vld [vmem:[#allocation2 + $0x4a] sm:$0xff]
  %v5060 = vld [vmem:[#allocation2 + $0x52] sm:$0xff]
  %v5061 = vld [vmem:[#allocation2 + $0x62] sm:$0xff]
  %v5062 = vld [vmem:[#allocation2 + $0x6a] sm:$0xff]
  %v5063 = vld [vmem:[#allocation2 + $0x7a] sm:$0xff]
  %v5064 = vld [vmem:[#allocation2 + $0x82] sm:$0xff]
  %v5065 = vld [vmem:[#allocation2 + $0x92] sm:$0xff]
  %v5066 = vld [vmem:[#allocation2 + $0x9a] sm:$0xff]
  %v5067 = vld [vmem:[#allocation2 + $0xaa] sm:$0xff]
  %v5068 = vld [vmem:[#allocation2 + $0xb2] sm:$0xff]
  %v5069 = vld [vmem:[#allocation2 + $0xc2] sm:$0xff]
  %v5070 = vld [vmem:[#allocation2 + $0xca] sm:$0xff]
  %v5071 = vld [vmem:[#allocation2 + $0xda] sm:$0xff]
  %v5072 = vld [vmem:[#allocation2 + $0xe2] sm:$0xff]
  %v5073 = vld [vmem:[#allocation2 + $0xf2] sm:$0xff]
  %v5074 = vld [vmem:[#allocation2 + $0xfa] sm:$0xff]
  %v5075 = vld [vmem:[#allocation2 + $0x10a] sm:$0xff]
  %v5076 = vld [vmem:[#allocation2 + $0x112] sm:$0xff]
  %v5077 = vld [vmem:[#allocation2 + $0x122] sm:$0xff]
  %v5078 = vld [vmem:[#allocation2 + $0x12a] sm:$0xff]
  %v5079 = vld [vmem:[#allocation2 + $0x13a] sm:$0xff]
  %v5080 = vld [vmem:[#allocation2 + $0x142] sm:$0xff]
  %v5081 = vld [vmem:[#allocation2 + $0x152] sm:$0xff]
  %v5082 = vld [vmem:[#allocation2 + $0x15a] sm:$0xff]
  %v5083 = vld [vmem:[#allocation2 + $0x16a] sm:$0xff]
  %v5084 = vld [vmem:[#allocation2 + $0x172] sm:$0xff]
  %5117 = vrot.lane.b32.xlu0 %v5053, 8
  %v5118 = vpop.permute.xlu0 %5117
  %5119 = vrot.lane.b32.xlu0 %v5054, 8
  %v5120 = vpop.permute.xlu0 %5119
  %5121 = vrot.lane.b32.xlu0 %v5055, 8
  %v5122 = vpop.permute.xlu0 %5121
  %5123 = vrot.lane.b32.xlu0 %v5056, 8
  %v5124 = vpop.permute.xlu0 %5123
  %5125 = vrot.lane.b32.xlu0 %v5057, 8
  %v5126 = vpop.permute.xlu0 %5125
  %5127 = vrot.lane.b32.xlu0 %v5058, 8
  %v5128 = vpop.permute.xlu0 %5127
  %5129 = vrot.lane.b32.xlu0 %v5059, 8
  %v5130 = vpop.permute.xlu0 %5129
  %5131 = vrot.lane.b32.xlu0 %v5060, 8
  %v5132 = vpop.permute.xlu0 %5131
  %5133 = vrot.lane.b32.xlu0 %v5061, 8
  %v5134 = vpop.permute.xlu0 %5133
  %5135 = vrot.lane.b32.xlu0 %v5062, 8
  %v5136 = vpop.permute.xlu0 %5135
  %5137 = vrot.lane.b32.xlu0 %v5063, 8
  %v5138 = vpop.permute.xlu0 %5137
  %5139 = vrot.lane.b32.xlu0 %v5064, 8
  %v5140 = vpop.permute.xlu0 %5139
  %5141 = vrot.lane.b32.xlu0 %v5065, 8
  %v5142 = vpop.permute.xlu0 %5141
  %5143 = vrot.lane.b32.xlu0 %v5066, 8
  %v5144 = vpop.permute.xlu0 %5143
  %5145 = vrot.lane.b32.xlu0 %v5067, 8
  %v5146 = vpop.permute.xlu0 %5145
  %5147 = vrot.lane.b32.xlu0 %v5068, 8
  %v5148 = vpop.permute.xlu0 %5147
  %5149 = vrot.lane.b32.xlu0 %v5069, 8
  %v5150 = vpop.permute.xlu0 %5149
  %5151 = vrot.lane.b32.xlu0 %v5070, 8
  %v5152 = vpop.permute.xlu0 %5151
  %5153 = vrot.lane.b32.xlu0 %v5071, 8
  %v5154 = vpop.permute.xlu0 %5153
  %5155 = vrot.lane.b32.xlu0 %v5072, 8
  %v5156 = vpop.permute.xlu0 %5155
  %5157 = vrot.lane.b32.xlu0 %v5073, 8
  %v5158 = vpop.permute.xlu0 %5157
  %5159 = vrot.lane.b32.xlu0 %v5074, 8
  %v5160 = vpop.permute.xlu0 %5159
  %5161 = vrot.lane.b32.xlu0 %v5075, 8
  %v5162 = vpop.permute.xlu0 %5161
  %5163 = vrot.lane.b32.xlu0 %v5076, 8
  %v5164 = vpop.permute.xlu0 %5163
  %5165 = vrot.lane.b32.xlu0 %v5077, 8
  %v5166 = vpop.permute.xlu0 %5165
  %5167 = vrot.lane.b32.xlu0 %v5078, 8
  %v5168 = vpop.permute.xlu0 %5167
  %5169 = vrot.lane.b32.xlu0 %v5079, 8
  %v5170 = vpop.permute.xlu0 %5169
  %5171 = vrot.lane.b32.xlu0 %v5080, 8
  %v5172 = vpop.permute.xlu0 %5171
  %5173 = vrot.lane.b32.xlu0 %v5081, 8
  %v5174 = vpop.permute.xlu0 %5173
  %5175 = vrot.lane.b32.xlu0 %v5082, 8
  %v5176 = vpop.permute.xlu0 %5175
  %5177 = vrot.lane.b32.xlu0 %v5083, 8
  %v5178 = vpop.permute.xlu0 %5177
  %5179 = vrot.lane.b32.xlu0 %v5084, 8
  %v5180 = vpop.permute.xlu0 %5179
  %5213 = vst.msk [vmem:[#allocation3] sm:$0xff] %vm1128, %v5118
  %5214 = vst.msk [vmem:[#allocation3 + $0x8] sm:$0xff] %vm1128, %v5120
  %5215 = vst.msk [vmem:[#allocation3 + $0x10] sm:$0xff] %vm1128, %v5122
  %5216 = vst.msk [vmem:[#allocation3 + $0x18] sm:$0xff] %vm1128, %v5124
  %5217 = vst.msk [vmem:[#allocation3 + $0x20] sm:$0xff] %vm1128, %v5126
  %5218 = vst.msk [vmem:[#allocation3 + $0x28] sm:$0xff] %vm1128, %v5128
  %5219 = vst.msk [vmem:[#allocation3 + $0x30] sm:$0xff] %vm1128, %v5130
  %5220 = vst.msk [vmem:[#allocation3 + $0x38] sm:$0xff] %vm1128, %v5132
  %5221 = vst.msk [vmem:[#allocation3 + $0x40] sm:$0xff] %vm1128, %v5134
  %5222 = vst.msk [vmem:[#allocation3 + $0x48] sm:$0xff] %vm1128, %v5136
  %5223 = vst.msk [vmem:[#allocation3 + $0x50] sm:$0xff] %vm1128, %v5138
  %5224 = vst.msk [vmem:[#allocation3 + $0x58] sm:$0xff] %vm1128, %v5140
  %5225 = vst.msk [vmem:[#allocation3 + $0x60] sm:$0xff] %vm1128, %v5142
  %5226 = vst.msk [vmem:[#allocation3 + $0x68] sm:$0xff] %vm1128, %v5144
  %5227 = vst.msk [vmem:[#allocation3 + $0x70] sm:$0xff] %vm1128, %v5146
  %5228 = vst.msk [vmem:[#allocation3 + $0x78] sm:$0xff] %vm1128, %v5148
  %5229 = vst.msk [vmem:[#allocation3 + $0x80] sm:$0xff] %vm1128, %v5150
  %5230 = vst.msk [vmem:[#allocation3 + $0x88] sm:$0xff] %vm1128, %v5152
  %5231 = vst.msk [vmem:[#allocation3 + $0x90] sm:$0xff] %vm1128, %v5154
  %5232 = vst.msk [vmem:[#allocation3 + $0x98] sm:$0xff] %vm1128, %v5156
  %5233 = vst.msk [vmem:[#allocation3 + $0xa0] sm:$0xff] %vm1128, %v5158
  %5234 = vst.msk [vmem:[#allocation3 + $0xa8] sm:$0xff] %vm1128, %v5160
  %5235 = vst.msk [vmem:[#allocation3 + $0xb0] sm:$0xff] %vm1128, %v5162
  %5236 = vst.msk [vmem:[#allocation3 + $0xb8] sm:$0xff] %vm1128, %v5164
  %5237 = vst.msk [vmem:[#allocation3 + $0xc0] sm:$0xff] %vm1128, %v5166
  %5238 = vst.msk [vmem:[#allocation3 + $0xc8] sm:$0xff] %vm1128, %v5168
  %5239 = vst.msk [vmem:[#allocation3 + $0xd0] sm:$0xff] %vm1128, %v5170
  %5240 = vst.msk [vmem:[#allocation3 + $0xd8] sm:$0xff] %vm1128, %v5172
  %5241 = vst.msk [vmem:[#allocation3 + $0xe0] sm:$0xff] %vm1128, %v5174
  %5242 = vst.msk [vmem:[#allocation3 + $0xe8] sm:$0xff] %vm1128, %v5176
  %5243 = vst.msk [vmem:[#allocation3 + $0xf0] sm:$0xff] %vm1128, %v5178
  %5244 = vst.msk [vmem:[#allocation3 + $0xf8] sm:$0xff] %vm1128, %v5180
  %v5245 = vld [vmem:[%s233 + $0x2] sm:$0xff]
  %v5246 = vld [vmem:[%s233 + $0xa] sm:$0xff]
  %v5247 = vld [vmem:[%s233 + $0x1a] sm:$0xff]
  %v5248 = vld [vmem:[%s233 + $0x22] sm:$0xff]
  %v5249 = vld [vmem:[%s233 + $0x32] sm:$0xff]
  %v5250 = vld [vmem:[%s233 + $0x3a] sm:$0xff]
  %v5251 = vld [vmem:[%s233 + $0x4a] sm:$0xff]
  %v5252 = vld [vmem:[%s233 + $0x52] sm:$0xff]
  %v5253 = vld [vmem:[%s233 + $0x62] sm:$0xff]
  %v5254 = vld [vmem:[%s233 + $0x6a] sm:$0xff]
  %v5255 = vld [vmem:[%s233 + $0x7a] sm:$0xff]
  %v5256 = vld [vmem:[%s233 + $0x82] sm:$0xff]
  %v5257 = vld [vmem:[%s233 + $0x92] sm:$0xff]
  %v5258 = vld [vmem:[%s233 + $0x9a] sm:$0xff]
  %v5259 = vld [vmem:[%s233 + $0xaa] sm:$0xff]
  %v5260 = vld [vmem:[%s233 + $0xb2] sm:$0xff]
  %v5261 = vld [vmem:[%s233 + $0xc2] sm:$0xff]
  %v5262 = vld [vmem:[%s233 + $0xca] sm:$0xff]
  %v5263 = vld [vmem:[%s233 + $0xda] sm:$0xff]
  %v5264 = vld [vmem:[%s233 + $0xe2] sm:$0xff]
  %v5265 = vld [vmem:[%s233 + $0xf2] sm:$0xff]
  %v5266 = vld [vmem:[%s233 + $0xfa] sm:$0xff]
  %v5267 = vld [vmem:[%s233 + $0x10a] sm:$0xff]
  %v5268 = vld [vmem:[%s233 + $0x112] sm:$0xff]
  %v5269 = vld [vmem:[%s233 + $0x122] sm:$0xff]
  %v5270 = vld [vmem:[%s233 + $0x12a] sm:$0xff]
  %v5271 = vld [vmem:[%s233 + $0x13a] sm:$0xff]
  %v5272 = vld [vmem:[%s233 + $0x142] sm:$0xff]
  %v5273 = vld [vmem:[%s233 + $0x152] sm:$0xff]
  %v5274 = vld [vmem:[%s233 + $0x15a] sm:$0xff]
  %v5275 = vld [vmem:[%s233 + $0x16a] sm:$0xff]
  %v5276 = vld [vmem:[%s233 + $0x172] sm:$0xff]
  %5309 = vrot.lane.b32.xlu0 %v5245, 8
  %v5310 = vpop.permute.xlu0 %5309
  %5311 = vrot.lane.b32.xlu0 %v5246, 8
  %v5312 = vpop.permute.xlu0 %5311
  %5313 = vrot.lane.b32.xlu0 %v5247, 8
  %v5314 = vpop.permute.xlu0 %5313
  %5315 = vrot.lane.b32.xlu0 %v5248, 8
  %v5316 = vpop.permute.xlu0 %5315
  %5317 = vrot.lane.b32.xlu0 %v5249, 8
  %v5318 = vpop.permute.xlu0 %5317
  %5319 = vrot.lane.b32.xlu0 %v5250, 8
  %v5320 = vpop.permute.xlu0 %5319
  %5321 = vrot.lane.b32.xlu0 %v5251, 8
  %v5322 = vpop.permute.xlu0 %5321
  %5323 = vrot.lane.b32.xlu0 %v5252, 8
  %v5324 = vpop.permute.xlu0 %5323
  %5325 = vrot.lane.b32.xlu0 %v5253, 8
  %v5326 = vpop.permute.xlu0 %5325
  %5327 = vrot.lane.b32.xlu0 %v5254, 8
  %v5328 = vpop.permute.xlu0 %5327
  %5329 = vrot.lane.b32.xlu0 %v5255, 8
  %v5330 = vpop.permute.xlu0 %5329
  %5331 = vrot.lane.b32.xlu0 %v5256, 8
  %v5332 = vpop.permute.xlu0 %5331
  %5333 = vrot.lane.b32.xlu0 %v5257, 8
  %v5334 = vpop.permute.xlu0 %5333
  %5335 = vrot.lane.b32.xlu0 %v5258, 8
  %v5336 = vpop.permute.xlu0 %5335
  %5337 = vrot.lane.b32.xlu0 %v5259, 8
  %v5338 = vpop.permute.xlu0 %5337
  %5339 = vrot.lane.b32.xlu0 %v5260, 8
  %v5340 = vpop.permute.xlu0 %5339
  %5341 = vrot.lane.b32.xlu0 %v5261, 8
  %v5342 = vpop.permute.xlu0 %5341
  %5343 = vrot.lane.b32.xlu0 %v5262, 8
  %v5344 = vpop.permute.xlu0 %5343
  %5345 = vrot.lane.b32.xlu0 %v5263, 8
  %v5346 = vpop.permute.xlu0 %5345
  %5347 = vrot.lane.b32.xlu0 %v5264, 8
  %v5348 = vpop.permute.xlu0 %5347
  %5349 = vrot.lane.b32.xlu0 %v5265, 8
  %v5350 = vpop.permute.xlu0 %5349
  %5351 = vrot.lane.b32.xlu0 %v5266, 8
  %v5352 = vpop.permute.xlu0 %5351
  %5353 = vrot.lane.b32.xlu0 %v5267, 8
  %v5354 = vpop.permute.xlu0 %5353
  %5355 = vrot.lane.b32.xlu0 %v5268, 8
  %v5356 = vpop.permute.xlu0 %5355
  %5357 = vrot.lane.b32.xlu0 %v5269, 8
  %v5358 = vpop.permute.xlu0 %5357
  %5359 = vrot.lane.b32.xlu0 %v5270, 8
  %v5360 = vpop.permute.xlu0 %5359
  %5361 = vrot.lane.b32.xlu0 %v5271, 8
  %v5362 = vpop.permute.xlu0 %5361
  %5363 = vrot.lane.b32.xlu0 %v5272, 8
  %v5364 = vpop.permute.xlu0 %5363
  %5365 = vrot.lane.b32.xlu0 %v5273, 8
  %v5366 = vpop.permute.xlu0 %5365
  %5367 = vrot.lane.b32.xlu0 %v5274, 8
  %v5368 = vpop.permute.xlu0 %5367
  %5369 = vrot.lane.b32.xlu0 %v5275, 8
  %v5370 = vpop.permute.xlu0 %5369
  %5371 = vrot.lane.b32.xlu0 %v5276, 8
  %v5372 = vpop.permute.xlu0 %5371
  %5405 = vst.msk [vmem:[#allocation3 + $0x100] sm:$0xff] %vm1128, %v5310
  %5406 = vst.msk [vmem:[#allocation3 + $0x108] sm:$0xff] %vm1128, %v5312
  %5407 = vst.msk [vmem:[#allocation3 + $0x110] sm:$0xff] %vm1128, %v5314
  %5408 = vst.msk [vmem:[#allocation3 + $0x118] sm:$0xff] %vm1128, %v5316
  %5409 = vst.msk [vmem:[#allocation3 + $0x120] sm:$0xff] %vm1128, %v5318
  %5410 = vst.msk [vmem:[#allocation3 + $0x128] sm:$0xff] %vm1128, %v5320
  %5411 = vst.msk [vmem:[#allocation3 + $0x130] sm:$0xff] %vm1128, %v5322
  %5412 = vst.msk [vmem:[#allocation3 + $0x138] sm:$0xff] %vm1128, %v5324
  %5413 = vst.msk [vmem:[#allocation3 + $0x140] sm:$0xff] %vm1128, %v5326
  %5414 = vst.msk [vmem:[#allocation3 + $0x148] sm:$0xff] %vm1128, %v5328
  %5415 = vst.msk [vmem:[#allocation3 + $0x150] sm:$0xff] %vm1128, %v5330
  %5416 = vst.msk [vmem:[#allocation3 + $0x158] sm:$0xff] %vm1128, %v5332
  %5417 = vst.msk [vmem:[#allocation3 + $0x160] sm:$0xff] %vm1128, %v5334
  %5418 = vst.msk [vmem:[#allocation3 + $0x168] sm:$0xff] %vm1128, %v5336
  %5419 = vst.msk [vmem:[#allocation3 + $0x170] sm:$0xff] %vm1128, %v5338
  %5420 = vst.msk [vmem:[#allocation3 + $0x178] sm:$0xff] %vm1128, %v5340
  %5421 = vst.msk [vmem:[#allocation3 + $0x180] sm:$0xff] %vm1128, %v5342
  %5422 = vst.msk [vmem:[#allocation3 + $0x188] sm:$0xff] %vm1128, %v5344
  %5423 = vst.msk [vmem:[#allocation3 + $0x190] sm:$0xff] %vm1128, %v5346
  %5424 = vst.msk [vmem:[#allocation3 + $0x198] sm:$0xff] %vm1128, %v5348
  %5425 = vst.msk [vmem:[#allocation3 + $0x1a0] sm:$0xff] %vm1128, %v5350
  %5426 = vst.msk [vmem:[#allocation3 + $0x1a8] sm:$0xff] %vm1128, %v5352
  %5427 = vst.msk [vmem:[#allocation3 + $0x1b0] sm:$0xff] %vm1128, %v5354
  %5428 = vst.msk [vmem:[#allocation3 + $0x1b8] sm:$0xff] %vm1128, %v5356
  %5429 = vst.msk [vmem:[#allocation3 + $0x1c0] sm:$0xff] %vm1128, %v5358
  %5430 = vst.msk [vmem:[#allocation3 + $0x1c8] sm:$0xff] %vm1128, %v5360
  %5431 = vst.msk [vmem:[#allocation3 + $0x1d0] sm:$0xff] %vm1128, %v5362
  %5432 = vst.msk [vmem:[#allocation3 + $0x1d8] sm:$0xff] %vm1128, %v5364
  %5433 = vst.msk [vmem:[#allocation3 + $0x1e0] sm:$0xff] %vm1128, %v5366
  %5434 = vst.msk [vmem:[#allocation3 + $0x1e8] sm:$0xff] %vm1128, %v5368
  %5435 = vst.msk [vmem:[#allocation3 + $0x1f0] sm:$0xff] %vm1128, %v5370
  %5436 = vst.msk [vmem:[#allocation3 + $0x1f8] sm:$0xff] %vm1128, %v5372
  %v5437 = vld [vmem:[%s1353] sm:$0xff]
  %v5438 = vld [vmem:[%s1353 + $0x8] sm:$0xff]
  %v5439 = vld [vmem:[%s1353 + $0x18] sm:$0xff]
  %v5440 = vld [vmem:[%s1353 + $0x20] sm:$0xff]
  %v5441 = vld [vmem:[%s1353 + $0x30] sm:$0xff]
  %v5442 = vld [vmem:[%s1353 + $0x38] sm:$0xff]
  %v5443 = vld [vmem:[%s1353 + $0x48] sm:$0xff]
  %v5444 = vld [vmem:[%s1353 + $0x50] sm:$0xff]
  %v5445 = vld [vmem:[%s1353 + $0x60] sm:$0xff]
  %v5446 = vld [vmem:[%s1353 + $0x68] sm:$0xff]
  %v5447 = vld [vmem:[%s1353 + $0x78] sm:$0xff]
  %v5448 = vld [vmem:[%s1353 + $0x80] sm:$0xff]
  %v5449 = vld [vmem:[%s1353 + $0x90] sm:$0xff]
  %v5450 = vld [vmem:[%s1353 + $0x98] sm:$0xff]
  %v5451 = vld [vmem:[%s1353 + $0xa8] sm:$0xff]
  %v5452 = vld [vmem:[%s1353 + $0xb0] sm:$0xff]
  %v5453 = vld [vmem:[%s1353 + $0xc0] sm:$0xff]
  %v5454 = vld [vmem:[%s1353 + $0xc8] sm:$0xff]
  %v5455 = vld [vmem:[%s1353 + $0xd8] sm:$0xff]
  %v5456 = vld [vmem:[%s1353 + $0xe0] sm:$0xff]
  %v5457 = vld [vmem:[%s1353 + $0xf0] sm:$0xff]
  %v5458 = vld [vmem:[%s1353 + $0xf8] sm:$0xff]
  %v5459 = vld [vmem:[%s1353 + $0x108] sm:$0xff]
  %v5460 = vld [vmem:[%s1353 + $0x110] sm:$0xff]
  %v5461 = vld [vmem:[%s1353 + $0x120] sm:$0xff]
  %v5462 = vld [vmem:[%s1353 + $0x128] sm:$0xff]
  %v5463 = vld [vmem:[%s1353 + $0x138] sm:$0xff]
  %v5464 = vld [vmem:[%s1353 + $0x140] sm:$0xff]
  %v5465 = vld [vmem:[%s1353 + $0x150] sm:$0xff]
  %v5466 = vld [vmem:[%s1353 + $0x158] sm:$0xff]
  %v5467 = vld [vmem:[%s1353 + $0x168] sm:$0xff]
  %v5468 = vld [vmem:[%s1353 + $0x170] sm:$0xff]
  %5501 = vrot.lane.b32.xlu0 %v5437, 12
  %v5502 = vpop.permute.xlu0 %5501
  %5503 = vrot.lane.b32.xlu0 %v5438, 12
  %v5504 = vpop.permute.xlu0 %5503
  %5505 = vrot.lane.b32.xlu0 %v5439, 12
  %v5506 = vpop.permute.xlu0 %5505
  %5507 = vrot.lane.b32.xlu0 %v5440, 12
  %v5508 = vpop.permute.xlu0 %5507
  %5509 = vrot.lane.b32.xlu0 %v5441, 12
  %v5510 = vpop.permute.xlu0 %5509
  %5511 = vrot.lane.b32.xlu0 %v5442, 12
  %v5512 = vpop.permute.xlu0 %5511
  %5513 = vrot.lane.b32.xlu0 %v5443, 12
  %v5514 = vpop.permute.xlu0 %5513
  %5515 = vrot.lane.b32.xlu0 %v5444, 12
  %v5516 = vpop.permute.xlu0 %5515
  %5517 = vrot.lane.b32.xlu0 %v5445, 12
  %v5518 = vpop.permute.xlu0 %5517
  %5519 = vrot.lane.b32.xlu0 %v5446, 12
  %v5520 = vpop.permute.xlu0 %5519
  %5521 = vrot.lane.b32.xlu0 %v5447, 12
  %v5522 = vpop.permute.xlu0 %5521
  %5523 = vrot.lane.b32.xlu0 %v5448, 12
  %v5524 = vpop.permute.xlu0 %5523
  %5525 = vrot.lane.b32.xlu0 %v5449, 12
  %v5526 = vpop.permute.xlu0 %5525
  %5527 = vrot.lane.b32.xlu0 %v5450, 12
  %v5528 = vpop.permute.xlu0 %5527
  %5529 = vrot.lane.b32.xlu0 %v5451, 12
  %v5530 = vpop.permute.xlu0 %5529
  %5531 = vrot.lane.b32.xlu0 %v5452, 12
  %v5532 = vpop.permute.xlu0 %5531
  %5533 = vrot.lane.b32.xlu0 %v5453, 12
  %v5534 = vpop.permute.xlu0 %5533
  %5535 = vrot.lane.b32.xlu0 %v5454, 12
  %v5536 = vpop.permute.xlu0 %5535
  %5537 = vrot.lane.b32.xlu0 %v5455, 12
  %v5538 = vpop.permute.xlu0 %5537
  %5539 = vrot.lane.b32.xlu0 %v5456, 12
  %v5540 = vpop.permute.xlu0 %5539
  %5541 = vrot.lane.b32.xlu0 %v5457, 12
  %v5542 = vpop.permute.xlu0 %5541
  %5543 = vrot.lane.b32.xlu0 %v5458, 12
  %v5544 = vpop.permute.xlu0 %5543
  %5545 = vrot.lane.b32.xlu0 %v5459, 12
  %v5546 = vpop.permute.xlu0 %5545
  %5547 = vrot.lane.b32.xlu0 %v5460, 12
  %v5548 = vpop.permute.xlu0 %5547
  %5549 = vrot.lane.b32.xlu0 %v5461, 12
  %v5550 = vpop.permute.xlu0 %5549
  %5551 = vrot.lane.b32.xlu0 %v5462, 12
  %v5552 = vpop.permute.xlu0 %5551
  %5553 = vrot.lane.b32.xlu0 %v5463, 12
  %v5554 = vpop.permute.xlu0 %5553
  %5555 = vrot.lane.b32.xlu0 %v5464, 12
  %v5556 = vpop.permute.xlu0 %5555
  %5557 = vrot.lane.b32.xlu0 %v5465, 12
  %v5558 = vpop.permute.xlu0 %5557
  %5559 = vrot.lane.b32.xlu0 %v5466, 12
  %v5560 = vpop.permute.xlu0 %5559
  %5561 = vrot.lane.b32.xlu0 %v5467, 12
  %v5562 = vpop.permute.xlu0 %5561
  %5563 = vrot.lane.b32.xlu0 %v5468, 12
  %v5564 = vpop.permute.xlu0 %5563
  %5597 = vst.msk [vmem:[#allocation3] sm:$0xff] %vm1514, %v5502
  %5598 = vst.msk [vmem:[#allocation3 + $0x8] sm:$0xff] %vm1514, %v5504
  %5599 = vst.msk [vmem:[#allocation3 + $0x10] sm:$0xff] %vm1514, %v5506
  %5600 = vst.msk [vmem:[#allocation3 + $0x18] sm:$0xff] %vm1514, %v5508
  %5601 = vst.msk [vmem:[#allocation3 + $0x20] sm:$0xff] %vm1514, %v5510
  %5602 = vst.msk [vmem:[#allocation3 + $0x28] sm:$0xff] %vm1514, %v5512
  %5603 = vst.msk [vmem:[#allocation3 + $0x30] sm:$0xff] %vm1514, %v5514
  %5604 = vst.msk [vmem:[#allocation3 + $0x38] sm:$0xff] %vm1514, %v5516
  %5605 = vst.msk [vmem:[#allocation3 + $0x40] sm:$0xff] %vm1514, %v5518
  %5606 = vst.msk [vmem:[#allocation3 + $0x48] sm:$0xff] %vm1514, %v5520
  %5607 = vst.msk [vmem:[#allocation3 + $0x50] sm:$0xff] %vm1514, %v5522
  %5608 = vst.msk [vmem:[#allocation3 + $0x58] sm:$0xff] %vm1514, %v5524
  %5609 = vst.msk [vmem:[#allocation3 + $0x60] sm:$0xff] %vm1514, %v5526
  %5610 = vst.msk [vmem:[#allocation3 + $0x68] sm:$0xff] %vm1514, %v5528
  %5611 = vst.msk [vmem:[#allocation3 + $0x70] sm:$0xff] %vm1514, %v5530
  %5612 = vst.msk [vmem:[#allocation3 + $0x78] sm:$0xff] %vm1514, %v5532
  %5613 = vst.msk [vmem:[#allocation3 + $0x80] sm:$0xff] %vm1514, %v5534
  %5614 = vst.msk [vmem:[#allocation3 + $0x88] sm:$0xff] %vm1514, %v5536
  %5615 = vst.msk [vmem:[#allocation3 + $0x90] sm:$0xff] %vm1514, %v5538
  %5616 = vst.msk [vmem:[#allocation3 + $0x98] sm:$0xff] %vm1514, %v5540
  %5617 = vst.msk [vmem:[#allocation3 + $0xa0] sm:$0xff] %vm1514, %v5542
  %5618 = vst.msk [vmem:[#allocation3 + $0xa8] sm:$0xff] %vm1514, %v5544
  %5619 = vst.msk [vmem:[#allocation3 + $0xb0] sm:$0xff] %vm1514, %v5546
  %5620 = vst.msk [vmem:[#allocation3 + $0xb8] sm:$0xff] %vm1514, %v5548
  %5621 = vst.msk [vmem:[#allocation3 + $0xc0] sm:$0xff] %vm1514, %v5550
  %5622 = vst.msk [vmem:[#allocation3 + $0xc8] sm:$0xff] %vm1514, %v5552
  %5623 = vst.msk [vmem:[#allocation3 + $0xd0] sm:$0xff] %vm1514, %v5554
  %5624 = vst.msk [vmem:[#allocation3 + $0xd8] sm:$0xff] %vm1514, %v5556
  %5625 = vst.msk [vmem:[#allocation3 + $0xe0] sm:$0xff] %vm1514, %v5558
  %5626 = vst.msk [vmem:[#allocation3 + $0xe8] sm:$0xff] %vm1514, %v5560
  %5627 = vst.msk [vmem:[#allocation3 + $0xf0] sm:$0xff] %vm1514, %v5562
  %5628 = vst.msk [vmem:[#allocation3 + $0xf8] sm:$0xff] %vm1514, %v5564
  %v5629 = vld [vmem:[%s1547] sm:$0xff]
  %v5630 = vld [vmem:[%s1547 + $0x8] sm:$0xff]
  %v5631 = vld [vmem:[%s1547 + $0x18] sm:$0xff]
  %v5632 = vld [vmem:[%s1547 + $0x20] sm:$0xff]
  %v5633 = vld [vmem:[%s1547 + $0x30] sm:$0xff]
  %v5634 = vld [vmem:[%s1547 + $0x38] sm:$0xff]
  %v5635 = vld [vmem:[%s1547 + $0x48] sm:$0xff]
  %v5636 = vld [vmem:[%s1547 + $0x50] sm:$0xff]
  %v5637 = vld [vmem:[%s1547 + $0x60] sm:$0xff]
  %v5638 = vld [vmem:[%s1547 + $0x68] sm:$0xff]
  %v5639 = vld [vmem:[%s1547 + $0x78] sm:$0xff]
  %v5640 = vld [vmem:[%s1547 + $0x80] sm:$0xff]
  %v5641 = vld [vmem:[%s1547 + $0x90] sm:$0xff]
  %v5642 = vld [vmem:[%s1547 + $0x98] sm:$0xff]
  %v5643 = vld [vmem:[%s1547 + $0xa8] sm:$0xff]
  %v5644 = vld [vmem:[%s1547 + $0xb0] sm:$0xff]
  %v5645 = vld [vmem:[%s1547 + $0xc0] sm:$0xff]
  %v5646 = vld [vmem:[%s1547 + $0xc8] sm:$0xff]
  %v5647 = vld [vmem:[%s1547 + $0xd8] sm:$0xff]
  %v5648 = vld [vmem:[%s1547 + $0xe0] sm:$0xff]
  %v5649 = vld [vmem:[%s1547 + $0xf0] sm:$0xff]
  %v5650 = vld [vmem:[%s1547 + $0xf8] sm:$0xff]
  %v5651 = vld [vmem:[%s1547 + $0x108] sm:$0xff]
  %v5652 = vld [vmem:[%s1547 + $0x110] sm:$0xff]
  %v5653 = vld [vmem:[%s1547 + $0x120] sm:$0xff]
  %v5654 = vld [vmem:[%s1547 + $0x128] sm:$0xff]
  %v5655 = vld [vmem:[%s1547 + $0x138] sm:$0xff]
  %v5656 = vld [vmem:[%s1547 + $0x140] sm:$0xff]
  %v5657 = vld [vmem:[%s1547 + $0x150] sm:$0xff]
  %v5658 = vld [vmem:[%s1547 + $0x158] sm:$0xff]
  %v5659 = vld [vmem:[%s1547 + $0x168] sm:$0xff]
  %v5660 = vld [vmem:[%s1547 + $0x170] sm:$0xff]
  %5693 = vrot.lane.b32.xlu0 %v5629, 12
  %v5694 = vpop.permute.xlu0 %5693
  %5695 = vrot.lane.b32.xlu0 %v5630, 12
  %v5696 = vpop.permute.xlu0 %5695
  %5697 = vrot.lane.b32.xlu0 %v5631, 12
  %v5698 = vpop.permute.xlu0 %5697
  %5699 = vrot.lane.b32.xlu0 %v5632, 12
  %v5700 = vpop.permute.xlu0 %5699
  %5701 = vrot.lane.b32.xlu0 %v5633, 12
  %v5702 = vpop.permute.xlu0 %5701
  %5703 = vrot.lane.b32.xlu0 %v5634, 12
  %v5704 = vpop.permute.xlu0 %5703
  %5705 = vrot.lane.b32.xlu0 %v5635, 12
  %v5706 = vpop.permute.xlu0 %5705
  %5707 = vrot.lane.b32.xlu0 %v5636, 12
  %v5708 = vpop.permute.xlu0 %5707
  %5709 = vrot.lane.b32.xlu0 %v5637, 12
  %v5710 = vpop.permute.xlu0 %5709
  %5711 = vrot.lane.b32.xlu0 %v5638, 12
  %v5712 = vpop.permute.xlu0 %5711
  %5713 = vrot.lane.b32.xlu0 %v5639, 12
  %v5714 = vpop.permute.xlu0 %5713
  %5715 = vrot.lane.b32.xlu0 %v5640, 12
  %v5716 = vpop.permute.xlu0 %5715
  %5717 = vrot.lane.b32.xlu0 %v5641, 12
  %v5718 = vpop.permute.xlu0 %5717
  %5719 = vrot.lane.b32.xlu0 %v5642, 12
  %v5720 = vpop.permute.xlu0 %5719
  %5721 = vrot.lane.b32.xlu0 %v5643, 12
  %v5722 = vpop.permute.xlu0 %5721
  %5723 = vrot.lane.b32.xlu0 %v5644, 12
  %v5724 = vpop.permute.xlu0 %5723
  %5725 = vrot.lane.b32.xlu0 %v5645, 12
  %v5726 = vpop.permute.xlu0 %5725
  %5727 = vrot.lane.b32.xlu0 %v5646, 12
  %v5728 = vpop.permute.xlu0 %5727
  %5729 = vrot.lane.b32.xlu0 %v5647, 12
  %v5730 = vpop.permute.xlu0 %5729
  %5731 = vrot.lane.b32.xlu0 %v5648, 12
  %v5732 = vpop.permute.xlu0 %5731
  %5733 = vrot.lane.b32.xlu0 %v5649, 12
  %v5734 = vpop.permute.xlu0 %5733
  %5735 = vrot.lane.b32.xlu0 %v5650, 12
  %v5736 = vpop.permute.xlu0 %5735
  %5737 = vrot.lane.b32.xlu0 %v5651, 12
  %v5738 = vpop.permute.xlu0 %5737
  %5739 = vrot.lane.b32.xlu0 %v5652, 12
  %v5740 = vpop.permute.xlu0 %5739
  %5741 = vrot.lane.b32.xlu0 %v5653, 12
  %v5742 = vpop.permute.xlu0 %5741
  %5743 = vrot.lane.b32.xlu0 %v5654, 12
  %v5744 = vpop.permute.xlu0 %5743
  %5745 = vrot.lane.b32.xlu0 %v5655, 12
  %v5746 = vpop.permute.xlu0 %5745
  %5747 = vrot.lane.b32.xlu0 %v5656, 12
  %v5748 = vpop.permute.xlu0 %5747
  %5749 = vrot.lane.b32.xlu0 %v5657, 12
  %v5750 = vpop.permute.xlu0 %5749
  %5751 = vrot.lane.b32.xlu0 %v5658, 12
  %v5752 = vpop.permute.xlu0 %5751
  %5753 = vrot.lane.b32.xlu0 %v5659, 12
  %v5754 = vpop.permute.xlu0 %5753
  %5755 = vrot.lane.b32.xlu0 %v5660, 12
  %v5756 = vpop.permute.xlu0 %5755
  %5789 = vst.msk [vmem:[#allocation3 + $0x100] sm:$0xff] %vm1514, %v5694
  %5790 = vst.msk [vmem:[#allocation3 + $0x108] sm:$0xff] %vm1514, %v5696
  %5791 = vst.msk [vmem:[#allocation3 + $0x110] sm:$0xff] %vm1514, %v5698
  %5792 = vst.msk [vmem:[#allocation3 + $0x118] sm:$0xff] %vm1514, %v5700
  %5793 = vst.msk [vmem:[#allocation3 + $0x120] sm:$0xff] %vm1514, %v5702
  %5794 = vst.msk [vmem:[#allocation3 + $0x128] sm:$0xff] %vm1514, %v5704
  %5795 = vst.msk [vmem:[#allocation3 + $0x130] sm:$0xff] %vm1514, %v5706
  %5796 = vst.msk [vmem:[#allocation3 + $0x138] sm:$0xff] %vm1514, %v5708
  %5797 = vst.msk [vmem:[#allocation3 + $0x140] sm:$0xff] %vm1514, %v5710
  %5798 = vst.msk [vmem:[#allocation3 + $0x148] sm:$0xff] %vm1514, %v5712
  %5799 = vst.msk [vmem:[#allocation3 + $0x150] sm:$0xff] %vm1514, %v5714
  %5800 = vst.msk [vmem:[#allocation3 + $0x158] sm:$0xff] %vm1514, %v5716
  %5801 = vst.msk [vmem:[#allocation3 + $0x160] sm:$0xff] %vm1514, %v5718
  %5802 = vst.msk [vmem:[#allocation3 + $0x168] sm:$0xff] %vm1514, %v5720
  %5803 = vst.msk [vmem:[#allocation3 + $0x170] sm:$0xff] %vm1514, %v5722
  %5804 = vst.msk [vmem:[#allocation3 + $0x178] sm:$0xff] %vm1514, %v5724
  %5805 = vst.msk [vmem:[#allocation3 + $0x180] sm:$0xff] %vm1514, %v5726
  %5806 = vst.msk [vmem:[#allocation3 + $0x188] sm:$0xff] %vm1514, %v5728
  %5807 = vst.msk [vmem:[#allocation3 + $0x190] sm:$0xff] %vm1514, %v5730
  %5808 = vst.msk [vmem:[#allocation3 + $0x198] sm:$0xff] %vm1514, %v5732
  %5809 = vst.msk [vmem:[#allocation3 + $0x1a0] sm:$0xff] %vm1514, %v5734
  %5810 = vst.msk [vmem:[#allocation3 + $0x1a8] sm:$0xff] %vm1514, %v5736
  %5811 = vst.msk [vmem:[#allocation3 + $0x1b0] sm:$0xff] %vm1514, %v5738
  %5812 = vst.msk [vmem:[#allocation3 + $0x1b8] sm:$0xff] %vm1514, %v5740
  %5813 = vst.msk [vmem:[#allocation3 + $0x1c0] sm:$0xff] %vm1514, %v5742
  %5814 = vst.msk [vmem:[#allocation3 + $0x1c8] sm:$0xff] %vm1514, %v5744
  %5815 = vst.msk [vmem:[#allocation3 + $0x1d0] sm:$0xff] %vm1514, %v5746
  %5816 = vst.msk [vmem:[#allocation3 + $0x1d8] sm:$0xff] %vm1514, %v5748
  %5817 = vst.msk [vmem:[#allocation3 + $0x1e0] sm:$0xff] %vm1514, %v5750
  %5818 = vst.msk [vmem:[#allocation3 + $0x1e8] sm:$0xff] %vm1514, %v5752
  %5819 = vst.msk [vmem:[#allocation3 + $0x1f0] sm:$0xff] %vm1514, %v5754
  %5820 = vst.msk [vmem:[#allocation3 + $0x1f8] sm:$0xff] %vm1514, %v5756
  %v5821 = vld [vmem:[%s1353 + $0x1] sm:$0xff]
  %v5822 = vld [vmem:[%s1353 + $0x9] sm:$0xff]
  %v5823 = vld [vmem:[%s1353 + $0x19] sm:$0xff]
  %v5824 = vld [vmem:[%s1353 + $0x21] sm:$0xff]
  %v5825 = vld [vmem:[%s1353 + $0x31] sm:$0xff]
  %v5826 = vld [vmem:[%s1353 + $0x39] sm:$0xff]
  %v5827 = vld [vmem:[%s1353 + $0x49] sm:$0xff]
  %v5828 = vld [vmem:[%s1353 + $0x51] sm:$0xff]
  %v5829 = vld [vmem:[%s1353 + $0x61] sm:$0xff]
  %v5830 = vld [vmem:[%s1353 + $0x69] sm:$0xff]
  %v5831 = vld [vmem:[%s1353 + $0x79] sm:$0xff]
  %v5832 = vld [vmem:[%s1353 + $0x81] sm:$0xff]
  %v5833 = vld [vmem:[%s1353 + $0x91] sm:$0xff]
  %v5834 = vld [vmem:[%s1353 + $0x99] sm:$0xff]
  %v5835 = vld [vmem:[%s1353 + $0xa9] sm:$0xff]
  %v5836 = vld [vmem:[%s1353 + $0xb1] sm:$0xff]
  %v5837 = vld [vmem:[%s1353 + $0xc1] sm:$0xff]
  %v5838 = vld [vmem:[%s1353 + $0xc9] sm:$0xff]
  %v5839 = vld [vmem:[%s1353 + $0xd9] sm:$0xff]
  %v5840 = vld [vmem:[%s1353 + $0xe1] sm:$0xff]
  %v5841 = vld [vmem:[%s1353 + $0xf1] sm:$0xff]
  %v5842 = vld [vmem:[%s1353 + $0xf9] sm:$0xff]
  %v5843 = vld [vmem:[%s1353 + $0x109] sm:$0xff]
  %v5844 = vld [vmem:[%s1353 + $0x111] sm:$0xff]
  %v5845 = vld [vmem:[%s1353 + $0x121] sm:$0xff]
  %v5846 = vld [vmem:[%s1353 + $0x129] sm:$0xff]
  %v5847 = vld [vmem:[%s1353 + $0x139] sm:$0xff]
  %v5848 = vld [vmem:[%s1353 + $0x141] sm:$0xff]
  %v5849 = vld [vmem:[%s1353 + $0x151] sm:$0xff]
  %v5850 = vld [vmem:[%s1353 + $0x159] sm:$0xff]
  %v5851 = vld [vmem:[%s1353 + $0x169] sm:$0xff]
  %v5852 = vld [vmem:[%s1353 + $0x171] sm:$0xff]
  %5885 = vrot.lane.b32.xlu0 %v5821, 16
  %v5886 = vpop.permute.xlu0 %5885
  %5887 = vrot.lane.b32.xlu0 %v5822, 16
  %v5888 = vpop.permute.xlu0 %5887
  %5889 = vrot.lane.b32.xlu0 %v5823, 16
  %v5890 = vpop.permute.xlu0 %5889
  %5891 = vrot.lane.b32.xlu0 %v5824, 16
  %v5892 = vpop.permute.xlu0 %5891
  %5893 = vrot.lane.b32.xlu0 %v5825, 16
  %v5894 = vpop.permute.xlu0 %5893
  %5895 = vrot.lane.b32.xlu0 %v5826, 16
  %v5896 = vpop.permute.xlu0 %5895
  %5897 = vrot.lane.b32.xlu0 %v5827, 16
  %v5898 = vpop.permute.xlu0 %5897
  %5899 = vrot.lane.b32.xlu0 %v5828, 16
  %v5900 = vpop.permute.xlu0 %5899
  %5901 = vrot.lane.b32.xlu0 %v5829, 16
  %v5902 = vpop.permute.xlu0 %5901
  %5903 = vrot.lane.b32.xlu0 %v5830, 16
  %v5904 = vpop.permute.xlu0 %5903
  %5905 = vrot.lane.b32.xlu0 %v5831, 16
  %v5906 = vpop.permute.xlu0 %5905
  %5907 = vrot.lane.b32.xlu0 %v5832, 16
  %v5908 = vpop.permute.xlu0 %5907
  %5909 = vrot.lane.b32.xlu0 %v5833, 16
  %v5910 = vpop.permute.xlu0 %5909
  %5911 = vrot.lane.b32.xlu0 %v5834, 16
  %v5912 = vpop.permute.xlu0 %5911
  %5913 = vrot.lane.b32.xlu0 %v5835, 16
  %v5914 = vpop.permute.xlu0 %5913
  %5915 = vrot.lane.b32.xlu0 %v5836, 16
  %v5916 = vpop.permute.xlu0 %5915
  %5917 = vrot.lane.b32.xlu0 %v5837, 16
  %v5918 = vpop.permute.xlu0 %5917
  %5919 = vrot.lane.b32.xlu0 %v5838, 16
  %v5920 = vpop.permute.xlu0 %5919
  %5921 = vrot.lane.b32.xlu0 %v5839, 16
  %v5922 = vpop.permute.xlu0 %5921
  %5923 = vrot.lane.b32.xlu0 %v5840, 16
  %v5924 = vpop.permute.xlu0 %5923
  %5925 = vrot.lane.b32.xlu0 %v5841, 16
  %v5926 = vpop.permute.xlu0 %5925
  %5927 = vrot.lane.b32.xlu0 %v5842, 16
  %v5928 = vpop.permute.xlu0 %5927
  %5929 = vrot.lane.b32.xlu0 %v5843, 16
  %v5930 = vpop.permute.xlu0 %5929
  %5931 = vrot.lane.b32.xlu0 %v5844, 16
  %v5932 = vpop.permute.xlu0 %5931
  %5933 = vrot.lane.b32.xlu0 %v5845, 16
  %v5934 = vpop.permute.xlu0 %5933
  %5935 = vrot.lane.b32.xlu0 %v5846, 16
  %v5936 = vpop.permute.xlu0 %5935
  %5937 = vrot.lane.b32.xlu0 %v5847, 16
  %v5938 = vpop.permute.xlu0 %5937
  %5939 = vrot.lane.b32.xlu0 %v5848, 16
  %v5940 = vpop.permute.xlu0 %5939
  %5941 = vrot.lane.b32.xlu0 %v5849, 16
  %v5942 = vpop.permute.xlu0 %5941
  %5943 = vrot.lane.b32.xlu0 %v5850, 16
  %v5944 = vpop.permute.xlu0 %5943
  %5945 = vrot.lane.b32.xlu0 %v5851, 16
  %v5946 = vpop.permute.xlu0 %5945
  %5947 = vrot.lane.b32.xlu0 %v5852, 16
  %v5948 = vpop.permute.xlu0 %5947
  %5981 = vst.msk [vmem:[#allocation3] sm:$0xff] %vm1900, %v5886
  %5982 = vst.msk [vmem:[#allocation3 + $0x8] sm:$0xff] %vm1900, %v5888
  %5983 = vst.msk [vmem:[#allocation3 + $0x10] sm:$0xff] %vm1900, %v5890
  %5984 = vst.msk [vmem:[#allocation3 + $0x18] sm:$0xff] %vm1900, %v5892
  %5985 = vst.msk [vmem:[#allocation3 + $0x20] sm:$0xff] %vm1900, %v5894
  %5986 = vst.msk [vmem:[#allocation3 + $0x28] sm:$0xff] %vm1900, %v5896
  %5987 = vst.msk [vmem:[#allocation3 + $0x30] sm:$0xff] %vm1900, %v5898
  %5988 = vst.msk [vmem:[#allocation3 + $0x38] sm:$0xff] %vm1900, %v5900
  %5989 = vst.msk [vmem:[#allocation3 + $0x40] sm:$0xff] %vm1900, %v5902
  %5990 = vst.msk [vmem:[#allocation3 + $0x48] sm:$0xff] %vm1900, %v5904
  %5991 = vst.msk [vmem:[#allocation3 + $0x50] sm:$0xff] %vm1900, %v5906
  %5992 = vst.msk [vmem:[#allocation3 + $0x58] sm:$0xff] %vm1900, %v5908
  %5993 = vst.msk [vmem:[#allocation3 + $0x60] sm:$0xff] %vm1900, %v5910
  %5994 = vst.msk [vmem:[#allocation3 + $0x68] sm:$0xff] %vm1900, %v5912
  %5995 = vst.msk [vmem:[#allocation3 + $0x70] sm:$0xff] %vm1900, %v5914
  %5996 = vst.msk [vmem:[#allocation3 + $0x78] sm:$0xff] %vm1900, %v5916
  %5997 = vst.msk [vmem:[#allocation3 + $0x80] sm:$0xff] %vm1900, %v5918
  %5998 = vst.msk [vmem:[#allocation3 + $0x88] sm:$0xff] %vm1900, %v5920
  %5999 = vst.msk [vmem:[#allocation3 + $0x90] sm:$0xff] %vm1900, %v5922
  %6000 = vst.msk [vmem:[#allocation3 + $0x98] sm:$0xff] %vm1900, %v5924
  %6001 = vst.msk [vmem:[#allocation3 + $0xa0] sm:$0xff] %vm1900, %v5926
  %6002 = vst.msk [vmem:[#allocation3 + $0xa8] sm:$0xff] %vm1900, %v5928
  %6003 = vst.msk [vmem:[#allocation3 + $0xb0] sm:$0xff] %vm1900, %v5930
  %6004 = vst.msk [vmem:[#allocation3 + $0xb8] sm:$0xff] %vm1900, %v5932
  %6005 = vst.msk [vmem:[#allocation3 + $0xc0] sm:$0xff] %vm1900, %v5934
  %6006 = vst.msk [vmem:[#allocation3 + $0xc8] sm:$0xff] %vm1900, %v5936
  %6007 = vst.msk [vmem:[#allocation3 + $0xd0] sm:$0xff] %vm1900, %v5938
  %6008 = vst.msk [vmem:[#allocation3 + $0xd8] sm:$0xff] %vm1900, %v5940
  %6009 = vst.msk [vmem:[#allocation3 + $0xe0] sm:$0xff] %vm1900, %v5942
  %6010 = vst.msk [vmem:[#allocation3 + $0xe8] sm:$0xff] %vm1900, %v5944
  %6011 = vst.msk [vmem:[#allocation3 + $0xf0] sm:$0xff] %vm1900, %v5946
  %6012 = vst.msk [vmem:[#allocation3 + $0xf8] sm:$0xff] %vm1900, %v5948
  %v6013 = vld [vmem:[%s1547 + $0x1] sm:$0xff]
  %v6014 = vld [vmem:[%s1547 + $0x9] sm:$0xff]
  %v6015 = vld [vmem:[%s1547 + $0x19] sm:$0xff]
  %v6016 = vld [vmem:[%s1547 + $0x21] sm:$0xff]
  %v6017 = vld [vmem:[%s1547 + $0x31] sm:$0xff]
  %v6018 = vld [vmem:[%s1547 + $0x39] sm:$0xff]
  %v6019 = vld [vmem:[%s1547 + $0x49] sm:$0xff]
  %v6020 = vld [vmem:[%s1547 + $0x51] sm:$0xff]
  %v6021 = vld [vmem:[%s1547 + $0x61] sm:$0xff]
  %v6022 = vld [vmem:[%s1547 + $0x69] sm:$0xff]
  %v6023 = vld [vmem:[%s1547 + $0x79] sm:$0xff]
  %v6024 = vld [vmem:[%s1547 + $0x81] sm:$0xff]
  %v6025 = vld [vmem:[%s1547 + $0x91] sm:$0xff]
  %v6026 = vld [vmem:[%s1547 + $0x99] sm:$0xff]
  %v6027 = vld [vmem:[%s1547 + $0xa9] sm:$0xff]
  %v6028 = vld [vmem:[%s1547 + $0xb1] sm:$0xff]
  %v6029 = vld [vmem:[%s1547 + $0xc1] sm:$0xff]
  %v6030 = vld [vmem:[%s1547 + $0xc9] sm:$0xff]
  %v6031 = vld [vmem:[%s1547 + $0xd9] sm:$0xff]
  %v6032 = vld [vmem:[%s1547 + $0xe1] sm:$0xff]
  %v6033 = vld [vmem:[%s1547 + $0xf1] sm:$0xff]
  %v6034 = vld [vmem:[%s1547 + $0xf9] sm:$0xff]
  %v6035 = vld [vmem:[%s1547 + $0x109] sm:$0xff]
  %v6036 = vld [vmem:[%s1547 + $0x111] sm:$0xff]
  %v6037 = vld [vmem:[%s1547 + $0x121] sm:$0xff]
  %v6038 = vld [vmem:[%s1547 + $0x129] sm:$0xff]
  %v6039 = vld [vmem:[%s1547 + $0x139] sm:$0xff]
  %v6040 = vld [vmem:[%s1547 + $0x141] sm:$0xff]
  %v6041 = vld [vmem:[%s1547 + $0x151] sm:$0xff]
  %v6042 = vld [vmem:[%s1547 + $0x159] sm:$0xff]
  %v6043 = vld [vmem:[%s1547 + $0x169] sm:$0xff]
  %v6044 = vld [vmem:[%s1547 + $0x171] sm:$0xff]
  %6077 = vrot.lane.b32.xlu0 %v6013, 16
  %v6078 = vpop.permute.xlu0 %6077
  %6079 = vrot.lane.b32.xlu0 %v6014, 16
  %v6080 = vpop.permute.xlu0 %6079
  %6081 = vrot.lane.b32.xlu0 %v6015, 16
  %v6082 = vpop.permute.xlu0 %6081
  %6083 = vrot.lane.b32.xlu0 %v6016, 16
  %v6084 = vpop.permute.xlu0 %6083
  %6085 = vrot.lane.b32.xlu0 %v6017, 16
  %v6086 = vpop.permute.xlu0 %6085
  %6087 = vrot.lane.b32.xlu0 %v6018, 16
  %v6088 = vpop.permute.xlu0 %6087
  %6089 = vrot.lane.b32.xlu0 %v6019, 16
  %v6090 = vpop.permute.xlu0 %6089
  %6091 = vrot.lane.b32.xlu0 %v6020, 16
  %v6092 = vpop.permute.xlu0 %6091
  %6093 = vrot.lane.b32.xlu0 %v6021, 16
  %v6094 = vpop.permute.xlu0 %6093
  %6095 = vrot.lane.b32.xlu0 %v6022, 16
  %v6096 = vpop.permute.xlu0 %6095
  %6097 = vrot.lane.b32.xlu0 %v6023, 16
  %v6098 = vpop.permute.xlu0 %6097
  %6099 = vrot.lane.b32.xlu0 %v6024, 16
  %v6100 = vpop.permute.xlu0 %6099
  %6101 = vrot.lane.b32.xlu0 %v6025, 16
  %v6102 = vpop.permute.xlu0 %6101
  %6103 = vrot.lane.b32.xlu0 %v6026, 16
  %v6104 = vpop.permute.xlu0 %6103
  %6105 = vrot.lane.b32.xlu0 %v6027, 16
  %v6106 = vpop.permute.xlu0 %6105
  %6107 = vrot.lane.b32.xlu0 %v6028, 16
  %v6108 = vpop.permute.xlu0 %6107
  %6109 = vrot.lane.b32.xlu0 %v6029, 16
  %v6110 = vpop.permute.xlu0 %6109
  %6111 = vrot.lane.b32.xlu0 %v6030, 16
  %v6112 = vpop.permute.xlu0 %6111
  %6113 = vrot.lane.b32.xlu0 %v6031, 16
  %v6114 = vpop.permute.xlu0 %6113
  %6115 = vrot.lane.b32.xlu0 %v6032, 16
  %v6116 = vpop.permute.xlu0 %6115
  %6117 = vrot.lane.b32.xlu0 %v6033, 16
  %v6118 = vpop.permute.xlu0 %6117
  %6119 = vrot.lane.b32.xlu0 %v6034, 16
  %v6120 = vpop.permute.xlu0 %6119
  %6121 = vrot.lane.b32.xlu0 %v6035, 16
  %v6122 = vpop.permute.xlu0 %6121
  %6123 = vrot.lane.b32.xlu0 %v6036, 16
  %v6124 = vpop.permute.xlu0 %6123
  %6125 = vrot.lane.b32.xlu0 %v6037, 16
  %v6126 = vpop.permute.xlu0 %6125
  %6127 = vrot.lane.b32.xlu0 %v6038, 16
  %v6128 = vpop.permute.xlu0 %6127
  %6129 = vrot.lane.b32.xlu0 %v6039, 16
  %v6130 = vpop.permute.xlu0 %6129
  %6131 = vrot.lane.b32.xlu0 %v6040, 16
  %v6132 = vpop.permute.xlu0 %6131
  %6133 = vrot.lane.b32.xlu0 %v6041, 16
  %v6134 = vpop.permute.xlu0 %6133
  %6135 = vrot.lane.b32.xlu0 %v6042, 16
  %v6136 = vpop.permute.xlu0 %6135
  %6137 = vrot.lane.b32.xlu0 %v6043, 16
  %v6138 = vpop.permute.xlu0 %6137
  %6139 = vrot.lane.b32.xlu0 %v6044, 16
  %v6140 = vpop.permute.xlu0 %6139
  %6173 = vst.msk [vmem:[#allocation3 + $0x100] sm:$0xff] %vm1900, %v6078
  %6174 = vst.msk [vmem:[#allocation3 + $0x108] sm:$0xff] %vm1900, %v6080
  %6175 = vst.msk [vmem:[#allocation3 + $0x110] sm:$0xff] %vm1900, %v6082
  %6176 = vst.msk [vmem:[#allocation3 + $0x118] sm:$0xff] %vm1900, %v6084
  %6177 = vst.msk [vmem:[#allocation3 + $0x120] sm:$0xff] %vm1900, %v6086
  %6178 = vst.msk [vmem:[#allocation3 + $0x128] sm:$0xff] %vm1900, %v6088
  %6179 = vst.msk [vmem:[#allocation3 + $0x130] sm:$0xff] %vm1900, %v6090
  %6180 = vst.msk [vmem:[#allocation3 + $0x138] sm:$0xff] %vm1900, %v6092
  %6181 = vst.msk [vmem:[#allocation3 + $0x140] sm:$0xff] %vm1900, %v6094
  %6182 = vst.msk [vmem:[#allocation3 + $0x148] sm:$0xff] %vm1900, %v6096
  %6183 = vst.msk [vmem:[#allocation3 + $0x150] sm:$0xff] %vm1900, %v6098
  %6184 = vst.msk [vmem:[#allocation3 + $0x158] sm:$0xff] %vm1900, %v6100
  %6185 = vst.msk [vmem:[#allocation3 + $0x160] sm:$0xff] %vm1900, %v6102
  %6186 = vst.msk [vmem:[#allocation3 + $0x168] sm:$0xff] %vm1900, %v6104
  %6187 = vst.msk [vmem:[#allocation3 + $0x170] sm:$0xff] %vm1900, %v6106
  %6188 = vst.msk [vmem:[#allocation3 + $0x178] sm:$0xff] %vm1900, %v6108
  %6189 = vst.msk [vmem:[#allocation3 + $0x180] sm:$0xff] %vm1900, %v6110
  %6190 = vst.msk [vmem:[#allocation3 + $0x188] sm:$0xff] %vm1900, %v6112
  %6191 = vst.msk [vmem:[#allocation3 + $0x190] sm:$0xff] %vm1900, %v6114
  %6192 = vst.msk [vmem:[#allocation3 + $0x198] sm:$0xff] %vm1900, %v6116
  %6193 = vst.msk [vmem:[#allocation3 + $0x1a0] sm:$0xff] %vm1900, %v6118
  %6194 = vst.msk [vmem:[#allocation3 + $0x1a8] sm:$0xff] %vm1900, %v6120
  %6195 = vst.msk [vmem:[#allocation3 + $0x1b0] sm:$0xff] %vm1900, %v6122
  %6196 = vst.msk [vmem:[#allocation3 + $0x1b8] sm:$0xff] %vm1900, %v6124
  %6197 = vst.msk [vmem:[#allocation3 + $0x1c0] sm:$0xff] %vm1900, %v6126
  %6198 = vst.msk [vmem:[#allocation3 + $0x1c8] sm:$0xff] %vm1900, %v6128
  %6199 = vst.msk [vmem:[#allocation3 + $0x1d0] sm:$0xff] %vm1900, %v6130
  %6200 = vst.msk [vmem:[#allocation3 + $0x1d8] sm:$0xff] %vm1900, %v6132
  %6201 = vst.msk [vmem:[#allocation3 + $0x1e0] sm:$0xff] %vm1900, %v6134
  %6202 = vst.msk [vmem:[#allocation3 + $0x1e8] sm:$0xff] %vm1900, %v6136
  %6203 = vst.msk [vmem:[#allocation3 + $0x1f0] sm:$0xff] %vm1900, %v6138
  %6204 = vst.msk [vmem:[#allocation3 + $0x1f8] sm:$0xff] %vm1900, %v6140
  %v6205 = vld [vmem:[%s1353 + $0x2] sm:$0xff]
  %v6206 = vld [vmem:[%s1353 + $0xa] sm:$0xff]
  %v6207 = vld [vmem:[%s1353 + $0x1a] sm:$0xff]
  %v6208 = vld [vmem:[%s1353 + $0x22] sm:$0xff]
  %v6209 = vld [vmem:[%s1353 + $0x32] sm:$0xff]
  %v6210 = vld [vmem:[%s1353 + $0x3a] sm:$0xff]
  %v6211 = vld [vmem:[%s1353 + $0x4a] sm:$0xff]
  %v6212 = vld [vmem:[%s1353 + $0x52] sm:$0xff]
  %v6213 = vld [vmem:[%s1353 + $0x62] sm:$0xff]
  %v6214 = vld [vmem:[%s1353 + $0x6a] sm:$0xff]
  %v6215 = vld [vmem:[%s1353 + $0x7a] sm:$0xff]
  %v6216 = vld [vmem:[%s1353 + $0x82] sm:$0xff]
  %v6217 = vld [vmem:[%s1353 + $0x92] sm:$0xff]
  %v6218 = vld [vmem:[%s1353 + $0x9a] sm:$0xff]
  %v6219 = vld [vmem:[%s1353 + $0xaa] sm:$0xff]
  %v6220 = vld [vmem:[%s1353 + $0xb2] sm:$0xff]
  %v6221 = vld [vmem:[%s1353 + $0xc2] sm:$0xff]
  %v6222 = vld [vmem:[%s1353 + $0xca] sm:$0xff]
  %v6223 = vld [vmem:[%s1353 + $0xda] sm:$0xff]
  %v6224 = vld [vmem:[%s1353 + $0xe2] sm:$0xff]
  %v6225 = vld [vmem:[%s1353 + $0xf2] sm:$0xff]
  %v6226 = vld [vmem:[%s1353 + $0xfa] sm:$0xff]
  %v6227 = vld [vmem:[%s1353 + $0x10a] sm:$0xff]
  %v6228 = vld [vmem:[%s1353 + $0x112] sm:$0xff]
  %v6229 = vld [vmem:[%s1353 + $0x122] sm:$0xff]
  %v6230 = vld [vmem:[%s1353 + $0x12a] sm:$0xff]
  %v6231 = vld [vmem:[%s1353 + $0x13a] sm:$0xff]
  %v6232 = vld [vmem:[%s1353 + $0x142] sm:$0xff]
  %v6233 = vld [vmem:[%s1353 + $0x152] sm:$0xff]
  %v6234 = vld [vmem:[%s1353 + $0x15a] sm:$0xff]
  %v6235 = vld [vmem:[%s1353 + $0x16a] sm:$0xff]
  %v6236 = vld [vmem:[%s1353 + $0x172] sm:$0xff]
  %6269 = vrot.lane.b32.xlu0 %v6205, 20
  %v6270 = vpop.permute.xlu0 %6269
  %6271 = vrot.lane.b32.xlu0 %v6206, 20
  %v6272 = vpop.permute.xlu0 %6271
  %6273 = vrot.lane.b32.xlu0 %v6207, 20
  %v6274 = vpop.permute.xlu0 %6273
  %6275 = vrot.lane.b32.xlu0 %v6208, 20
  %v6276 = vpop.permute.xlu0 %6275
  %6277 = vrot.lane.b32.xlu0 %v6209, 20
  %v6278 = vpop.permute.xlu0 %6277
  %6279 = vrot.lane.b32.xlu0 %v6210, 20
  %v6280 = vpop.permute.xlu0 %6279
  %6281 = vrot.lane.b32.xlu0 %v6211, 20
  %v6282 = vpop.permute.xlu0 %6281
  %6283 = vrot.lane.b32.xlu0 %v6212, 20
  %v6284 = vpop.permute.xlu0 %6283
  %6285 = vrot.lane.b32.xlu0 %v6213, 20
  %v6286 = vpop.permute.xlu0 %6285
  %6287 = vrot.lane.b32.xlu0 %v6214, 20
  %v6288 = vpop.permute.xlu0 %6287
  %6289 = vrot.lane.b32.xlu0 %v6215, 20
  %v6290 = vpop.permute.xlu0 %6289
  %6291 = vrot.lane.b32.xlu0 %v6216, 20
  %v6292 = vpop.permute.xlu0 %6291
  %6293 = vrot.lane.b32.xlu0 %v6217, 20
  %v6294 = vpop.permute.xlu0 %6293
  %6295 = vrot.lane.b32.xlu0 %v6218, 20
  %v6296 = vpop.permute.xlu0 %6295
  %6297 = vrot.lane.b32.xlu0 %v6219, 20
  %v6298 = vpop.permute.xlu0 %6297
  %6299 = vrot.lane.b32.xlu0 %v6220, 20
  %v6300 = vpop.permute.xlu0 %6299
  %6301 = vrot.lane.b32.xlu0 %v6221, 20
  %v6302 = vpop.permute.xlu0 %6301
  %6303 = vrot.lane.b32.xlu0 %v6222, 20
  %v6304 = vpop.permute.xlu0 %6303
  %6305 = vrot.lane.b32.xlu0 %v6223, 20
  %v6306 = vpop.permute.xlu0 %6305
  %6307 = vrot.lane.b32.xlu0 %v6224, 20
  %v6308 = vpop.permute.xlu0 %6307
  %6309 = vrot.lane.b32.xlu0 %v6225, 20
  %v6310 = vpop.permute.xlu0 %6309
  %6311 = vrot.lane.b32.xlu0 %v6226, 20
  %v6312 = vpop.permute.xlu0 %6311
  %6313 = vrot.lane.b32.xlu0 %v6227, 20
  %v6314 = vpop.permute.xlu0 %6313
  %6315 = vrot.lane.b32.xlu0 %v6228, 20
  %v6316 = vpop.permute.xlu0 %6315
  %6317 = vrot.lane.b32.xlu0 %v6229, 20
  %v6318 = vpop.permute.xlu0 %6317
  %6319 = vrot.lane.b32.xlu0 %v6230, 20
  %v6320 = vpop.permute.xlu0 %6319
  %6321 = vrot.lane.b32.xlu0 %v6231, 20
  %v6322 = vpop.permute.xlu0 %6321
  %6323 = vrot.lane.b32.xlu0 %v6232, 20
  %v6324 = vpop.permute.xlu0 %6323
  %6325 = vrot.lane.b32.xlu0 %v6233, 20
  %v6326 = vpop.permute.xlu0 %6325
  %6327 = vrot.lane.b32.xlu0 %v6234, 20
  %v6328 = vpop.permute.xlu0 %6327
  %6329 = vrot.lane.b32.xlu0 %v6235, 20
  %v6330 = vpop.permute.xlu0 %6329
  %6331 = vrot.lane.b32.xlu0 %v6236, 20
  %v6332 = vpop.permute.xlu0 %6331
  %6365 = vst.msk [vmem:[#allocation3] sm:$0xff] %vm2285, %v6270
  %6366 = vst.msk [vmem:[#allocation3 + $0x8] sm:$0xff] %vm2285, %v6272
  %6367 = vst.msk [vmem:[#allocation3 + $0x10] sm:$0xff] %vm2285, %v6274
  %6368 = vst.msk [vmem:[#allocation3 + $0x18] sm:$0xff] %vm2285, %v6276
  %6369 = vst.msk [vmem:[#allocation3 + $0x20] sm:$0xff] %vm2285, %v6278
  %6370 = vst.msk [vmem:[#allocation3 + $0x28] sm:$0xff] %vm2285, %v6280
  %6371 = vst.msk [vmem:[#allocation3 + $0x30] sm:$0xff] %vm2285, %v6282
  %6372 = vst.msk [vmem:[#allocation3 + $0x38] sm:$0xff] %vm2285, %v6284
  %6373 = vst.msk [vmem:[#allocation3 + $0x40] sm:$0xff] %vm2285, %v6286
  %6374 = vst.msk [vmem:[#allocation3 + $0x48] sm:$0xff] %vm2285, %v6288
  %6375 = vst.msk [vmem:[#allocation3 + $0x50] sm:$0xff] %vm2285, %v6290
  %6376 = vst.msk [vmem:[#allocation3 + $0x58] sm:$0xff] %vm2285, %v6292
  %6377 = vst.msk [vmem:[#allocation3 + $0x60] sm:$0xff] %vm2285, %v6294
  %6378 = vst.msk [vmem:[#allocation3 + $0x68] sm:$0xff] %vm2285, %v6296
  %6379 = vst.msk [vmem:[#allocation3 + $0x70] sm:$0xff] %vm2285, %v6298
  %6380 = vst.msk [vmem:[#allocation3 + $0x78] sm:$0xff] %vm2285, %v6300
  %6381 = vst.msk [vmem:[#allocation3 + $0x80] sm:$0xff] %vm2285, %v6302
  %6382 = vst.msk [vmem:[#allocation3 + $0x88] sm:$0xff] %vm2285, %v6304
  %6383 = vst.msk [vmem:[#allocation3 + $0x90] sm:$0xff] %vm2285, %v6306
  %6384 = vst.msk [vmem:[#allocation3 + $0x98] sm:$0xff] %vm2285, %v6308
  %6385 = vst.msk [vmem:[#allocation3 + $0xa0] sm:$0xff] %vm2285, %v6310
  %6386 = vst.msk [vmem:[#allocation3 + $0xa8] sm:$0xff] %vm2285, %v6312
  %6387 = vst.msk [vmem:[#allocation3 + $0xb0] sm:$0xff] %vm2285, %v6314
  %6388 = vst.msk [vmem:[#allocation3 + $0xb8] sm:$0xff] %vm2285, %v6316
  %6389 = vst.msk [vmem:[#allocation3 + $0xc0] sm:$0xff] %vm2285, %v6318
  %6390 = vst.msk [vmem:[#allocation3 + $0xc8] sm:$0xff] %vm2285, %v6320
  %6391 = vst.msk [vmem:[#allocation3 + $0xd0] sm:$0xff] %vm2285, %v6322
  %6392 = vst.msk [vmem:[#allocation3 + $0xd8] sm:$0xff] %vm2285, %v6324
  %6393 = vst.msk [vmem:[#allocation3 + $0xe0] sm:$0xff] %vm2285, %v6326
  %6394 = vst.msk [vmem:[#allocation3 + $0xe8] sm:$0xff] %vm2285, %v6328
  %6395 = vst.msk [vmem:[#allocation3 + $0xf0] sm:$0xff] %vm2285, %v6330
  %6396 = vst.msk [vmem:[#allocation3 + $0xf8] sm:$0xff] %vm2285, %v6332
  %v6397 = vld [vmem:[%s1547 + $0x2] sm:$0xff]
  %v6398 = vld [vmem:[%s1547 + $0xa] sm:$0xff]
  %v6399 = vld [vmem:[%s1547 + $0x1a] sm:$0xff]
  %v6400 = vld [vmem:[%s1547 + $0x22] sm:$0xff]
  %v6401 = vld [vmem:[%s1547 + $0x32] sm:$0xff]
  %v6402 = vld [vmem:[%s1547 + $0x3a] sm:$0xff]
  %v6403 = vld [vmem:[%s1547 + $0x4a] sm:$0xff]
  %v6404 = vld [vmem:[%s1547 + $0x52] sm:$0xff]
  %v6405 = vld [vmem:[%s1547 + $0x62] sm:$0xff]
  %v6406 = vld [vmem:[%s1547 + $0x6a] sm:$0xff]
  %v6407 = vld [vmem:[%s1547 + $0x7a] sm:$0xff]
  %v6408 = vld [vmem:[%s1547 + $0x82] sm:$0xff]
  %v6409 = vld [vmem:[%s1547 + $0x92] sm:$0xff]
  %v6410 = vld [vmem:[%s1547 + $0x9a] sm:$0xff]
  %v6411 = vld [vmem:[%s1547 + $0xaa] sm:$0xff]
  %v6412 = vld [vmem:[%s1547 + $0xb2] sm:$0xff]
  %v6413 = vld [vmem:[%s1547 + $0xc2] sm:$0xff]
  %v6414 = vld [vmem:[%s1547 + $0xca] sm:$0xff]
  %v6415 = vld [vmem:[%s1547 + $0xda] sm:$0xff]
  %v6416 = vld [vmem:[%s1547 + $0xe2] sm:$0xff]
  %v6417 = vld [vmem:[%s1547 + $0xf2] sm:$0xff]
  %v6418 = vld [vmem:[%s1547 + $0xfa] sm:$0xff]
  %v6419 = vld [vmem:[%s1547 + $0x10a] sm:$0xff]
  %v6420 = vld [vmem:[%s1547 + $0x112] sm:$0xff]
  %v6421 = vld [vmem:[%s1547 + $0x122] sm:$0xff]
  %v6422 = vld [vmem:[%s1547 + $0x12a] sm:$0xff]
  %v6423 = vld [vmem:[%s1547 + $0x13a] sm:$0xff]
  %v6424 = vld [vmem:[%s1547 + $0x142] sm:$0xff]
  %v6425 = vld [vmem:[%s1547 + $0x152] sm:$0xff]
  %v6426 = vld [vmem:[%s1547 + $0x15a] sm:$0xff]
  %v6427 = vld [vmem:[%s1547 + $0x16a] sm:$0xff]
  %v6428 = vld [vmem:[%s1547 + $0x172] sm:$0xff]
  %6461 = vrot.lane.b32.xlu0 %v6397, 20
  %v6462 = vpop.permute.xlu0 %6461
  %6463 = vrot.lane.b32.xlu0 %v6398, 20
  %v6464 = vpop.permute.xlu0 %6463
  %6465 = vrot.lane.b32.xlu0 %v6399, 20
  %v6466 = vpop.permute.xlu0 %6465
  %6467 = vrot.lane.b32.xlu0 %v6400, 20
  %v6468 = vpop.permute.xlu0 %6467
  %6469 = vrot.lane.b32.xlu0 %v6401, 20
  %v6470 = vpop.permute.xlu0 %6469
  %6471 = vrot.lane.b32.xlu0 %v6402, 20
  %v6472 = vpop.permute.xlu0 %6471
  %6473 = vrot.lane.b32.xlu0 %v6403, 20
  %v6474 = vpop.permute.xlu0 %6473
  %6475 = vrot.lane.b32.xlu0 %v6404, 20
  %v6476 = vpop.permute.xlu0 %6475
  %6477 = vrot.lane.b32.xlu0 %v6405, 20
  %v6478 = vpop.permute.xlu0 %6477
  %6479 = vrot.lane.b32.xlu0 %v6406, 20
  %v6480 = vpop.permute.xlu0 %6479
  %6481 = vrot.lane.b32.xlu0 %v6407, 20
  %v6482 = vpop.permute.xlu0 %6481
  %6483 = vrot.lane.b32.xlu0 %v6408, 20
  %v6484 = vpop.permute.xlu0 %6483
  %6485 = vrot.lane.b32.xlu0 %v6409, 20
  %v6486 = vpop.permute.xlu0 %6485
  %6487 = vrot.lane.b32.xlu0 %v6410, 20
  %v6488 = vpop.permute.xlu0 %6487
  %6489 = vrot.lane.b32.xlu0 %v6411, 20
  %v6490 = vpop.permute.xlu0 %6489
  %6491 = vrot.lane.b32.xlu0 %v6412, 20
  %v6492 = vpop.permute.xlu0 %6491
  %6493 = vrot.lane.b32.xlu0 %v6413, 20
  %v6494 = vpop.permute.xlu0 %6493
  %6495 = vrot.lane.b32.xlu0 %v6414, 20
  %v6496 = vpop.permute.xlu0 %6495
  %6497 = vrot.lane.b32.xlu0 %v6415, 20
  %v6498 = vpop.permute.xlu0 %6497
  %6499 = vrot.lane.b32.xlu0 %v6416, 20
  %v6500 = vpop.permute.xlu0 %6499
  %6501 = vrot.lane.b32.xlu0 %v6417, 20
  %v6502 = vpop.permute.xlu0 %6501
  %6503 = vrot.lane.b32.xlu0 %v6418, 20
  %v6504 = vpop.permute.xlu0 %6503
  %6505 = vrot.lane.b32.xlu0 %v6419, 20
  %v6506 = vpop.permute.xlu0 %6505
  %6507 = vrot.lane.b32.xlu0 %v6420, 20
  %v6508 = vpop.permute.xlu0 %6507
  %6509 = vrot.lane.b32.xlu0 %v6421, 20
  %v6510 = vpop.permute.xlu0 %6509
  %6511 = vrot.lane.b32.xlu0 %v6422, 20
  %v6512 = vpop.permute.xlu0 %6511
  %6513 = vrot.lane.b32.xlu0 %v6423, 20
  %v6514 = vpop.permute.xlu0 %6513
  %6515 = vrot.lane.b32.xlu0 %v6424, 20
  %v6516 = vpop.permute.xlu0 %6515
  %6517 = vrot.lane.b32.xlu0 %v6425, 20
  %v6518 = vpop.permute.xlu0 %6517
  %6519 = vrot.lane.b32.xlu0 %v6426, 20
  %v6520 = vpop.permute.xlu0 %6519
  %6521 = vrot.lane.b32.xlu0 %v6427, 20
  %v6522 = vpop.permute.xlu0 %6521
  %6523 = vrot.lane.b32.xlu0 %v6428, 20
  %v6524 = vpop.permute.xlu0 %6523
  %6557 = vst.msk [vmem:[#allocation3 + $0x100] sm:$0xff] %vm2285, %v6462
  %6558 = vst.msk [vmem:[#allocation3 + $0x108] sm:$0xff] %vm2285, %v6464
  %6559 = vst.msk [vmem:[#allocation3 + $0x110] sm:$0xff] %vm2285, %v6466
  %6560 = vst.msk [vmem:[#allocation3 + $0x118] sm:$0xff] %vm2285, %v6468
  %6561 = vst.msk [vmem:[#allocation3 + $0x120] sm:$0xff] %vm2285, %v6470
  %6562 = vst.msk [vmem:[#allocation3 + $0x128] sm:$0xff] %vm2285, %v6472
  %6563 = vst.msk [vmem:[#allocation3 + $0x130] sm:$0xff] %vm2285, %v6474
  %6564 = vst.msk [vmem:[#allocation3 + $0x138] sm:$0xff] %vm2285, %v6476
  %6565 = vst.msk [vmem:[#allocation3 + $0x140] sm:$0xff] %vm2285, %v6478
  %6566 = vst.msk [vmem:[#allocation3 + $0x148] sm:$0xff] %vm2285, %v6480
  %6567 = vst.msk [vmem:[#allocation3 + $0x150] sm:$0xff] %vm2285, %v6482
  %6568 = vst.msk [vmem:[#allocation3 + $0x158] sm:$0xff] %vm2285, %v6484
  %6569 = vst.msk [vmem:[#allocation3 + $0x160] sm:$0xff] %vm2285, %v6486
  %6570 = vst.msk [vmem:[#allocation3 + $0x168] sm:$0xff] %vm2285, %v6488
  %6571 = vst.msk [vmem:[#allocation3 + $0x170] sm:$0xff] %vm2285, %v6490
  %6572 = vst.msk [vmem:[#allocation3 + $0x178] sm:$0xff] %vm2285, %v6492
  %6573 = vst.msk [vmem:[#allocation3 + $0x180] sm:$0xff] %vm2285, %v6494
  %6574 = vst.msk [vmem:[#allocation3 + $0x188] sm:$0xff] %vm2285, %v6496
  %6575 = vst.msk [vmem:[#allocation3 + $0x190] sm:$0xff] %vm2285, %v6498
  %6576 = vst.msk [vmem:[#allocation3 + $0x198] sm:$0xff] %vm2285, %v6500
  %6577 = vst.msk [vmem:[#allocation3 + $0x1a0] sm:$0xff] %vm2285, %v6502
  %6578 = vst.msk [vmem:[#allocation3 + $0x1a8] sm:$0xff] %vm2285, %v6504
  %6579 = vst.msk [vmem:[#allocation3 + $0x1b0] sm:$0xff] %vm2285, %v6506
  %6580 = vst.msk [vmem:[#allocation3 + $0x1b8] sm:$0xff] %vm2285, %v6508
  %6581 = vst.msk [vmem:[#allocation3 + $0x1c0] sm:$0xff] %vm2285, %v6510
  %6582 = vst.msk [vmem:[#allocation3 + $0x1c8] sm:$0xff] %vm2285, %v6512
  %6583 = vst.msk [vmem:[#allocation3 + $0x1d0] sm:$0xff] %vm2285, %v6514
  %6584 = vst.msk [vmem:[#allocation3 + $0x1d8] sm:$0xff] %vm2285, %v6516
  %6585 = vst.msk [vmem:[#allocation3 + $0x1e0] sm:$0xff] %vm2285, %v6518
  %6586 = vst.msk [vmem:[#allocation3 + $0x1e8] sm:$0xff] %vm2285, %v6520
  %6587 = vst.msk [vmem:[#allocation3 + $0x1f0] sm:$0xff] %vm2285, %v6522
  %6588 = vst.msk [vmem:[#allocation3 + $0x1f8] sm:$0xff] %vm2285, %v6524
  %v6589 = vld [vmem:[%s92] sm:$0xff]
  %v6590 = vld [vmem:[%s92 + $0x8] sm:$0xff]
  %v6591 = vld [vmem:[%s92 + $0x18] sm:$0xff]
  %v6592 = vld [vmem:[%s92 + $0x20] sm:$0xff]
  %v6593 = vld [vmem:[%s92 + $0x30] sm:$0xff]
  %v6594 = vld [vmem:[%s92 + $0x38] sm:$0xff]
  %v6595 = vld [vmem:[%s92 + $0x48] sm:$0xff]
  %v6596 = vld [vmem:[%s92 + $0x50] sm:$0xff]
  %v6597 = vld [vmem:[%s92 + $0x60] sm:$0xff]
  %v6598 = vld [vmem:[%s92 + $0x68] sm:$0xff]
  %v6599 = vld [vmem:[%s92 + $0x78] sm:$0xff]
  %v6600 = vld [vmem:[%s92 + $0x80] sm:$0xff]
  %v6601 = vld [vmem:[%s92 + $0x90] sm:$0xff]
  %v6602 = vld [vmem:[%s92 + $0x98] sm:$0xff]
  %v6603 = vld [vmem:[%s92 + $0xa8] sm:$0xff]
  %v6604 = vld [vmem:[%s92 + $0xb0] sm:$0xff]
  %v6605 = vld [vmem:[%s92 + $0xc0] sm:$0xff]
  %v6606 = vld [vmem:[%s92 + $0xc8] sm:$0xff]
  %v6607 = vld [vmem:[%s92 + $0xd8] sm:$0xff]
  %v6608 = vld [vmem:[%s92 + $0xe0] sm:$0xff]
  %v6609 = vld [vmem:[%s92 + $0xf0] sm:$0xff]
  %v6610 = vld [vmem:[%s92 + $0xf8] sm:$0xff]
  %v6611 = vld [vmem:[%s92 + $0x108] sm:$0xff]
  %v6612 = vld [vmem:[%s92 + $0x110] sm:$0xff]
  %v6613 = vld [vmem:[%s92 + $0x120] sm:$0xff]
  %v6614 = vld [vmem:[%s92 + $0x128] sm:$0xff]
  %v6615 = vld [vmem:[%s92 + $0x138] sm:$0xff]
  %v6616 = vld [vmem:[%s92 + $0x140] sm:$0xff]
  %v6617 = vld [vmem:[%s92 + $0x150] sm:$0xff]
  %v6618 = vld [vmem:[%s92 + $0x158] sm:$0xff]
  %v6619 = vld [vmem:[%s92 + $0x168] sm:$0xff]
  %v6620 = vld [vmem:[%s92 + $0x170] sm:$0xff]
  %6653 = vrot.lane.b32.xlu0 %v6589, 24
  %v6654 = vpop.permute.xlu0 %6653
  %6655 = vrot.lane.b32.xlu0 %v6590, 24
  %v6656 = vpop.permute.xlu0 %6655
  %6657 = vrot.lane.b32.xlu0 %v6591, 24
  %v6658 = vpop.permute.xlu0 %6657
  %6659 = vrot.lane.b32.xlu0 %v6592, 24
  %v6660 = vpop.permute.xlu0 %6659
  %6661 = vrot.lane.b32.xlu0 %v6593, 24
  %v6662 = vpop.permute.xlu0 %6661
  %6663 = vrot.lane.b32.xlu0 %v6594, 24
  %v6664 = vpop.permute.xlu0 %6663
  %6665 = vrot.lane.b32.xlu0 %v6595, 24
  %v6666 = vpop.permute.xlu0 %6665
  %6667 = vrot.lane.b32.xlu0 %v6596, 24
  %v6668 = vpop.permute.xlu0 %6667
  %6669 = vrot.lane.b32.xlu0 %v6597, 24
  %v6670 = vpop.permute.xlu0 %6669
  %6671 = vrot.lane.b32.xlu0 %v6598, 24
  %v6672 = vpop.permute.xlu0 %6671
  %6673 = vrot.lane.b32.xlu0 %v6599, 24
  %v6674 = vpop.permute.xlu0 %6673
  %6675 = vrot.lane.b32.xlu0 %v6600, 24
  %v6676 = vpop.permute.xlu0 %6675
  %6677 = vrot.lane.b32.xlu0 %v6601, 24
  %v6678 = vpop.permute.xlu0 %6677
  %6679 = vrot.lane.b32.xlu0 %v6602, 24
  %v6680 = vpop.permute.xlu0 %6679
  %6681 = vrot.lane.b32.xlu0 %v6603, 24
  %v6682 = vpop.permute.xlu0 %6681
  %6683 = vrot.lane.b32.xlu0 %v6604, 24
  %v6684 = vpop.permute.xlu0 %6683
  %6685 = vrot.lane.b32.xlu0 %v6605, 24
  %v6686 = vpop.permute.xlu0 %6685
  %6687 = vrot.lane.b32.xlu0 %v6606, 24
  %v6688 = vpop.permute.xlu0 %6687
  %6689 = vrot.lane.b32.xlu0 %v6607, 24
  %v6690 = vpop.permute.xlu0 %6689
  %6691 = vrot.lane.b32.xlu0 %v6608, 24
  %v6692 = vpop.permute.xlu0 %6691
  %6693 = vrot.lane.b32.xlu0 %v6609, 24
  %v6694 = vpop.permute.xlu0 %6693
  %6695 = vrot.lane.b32.xlu0 %v6610, 24
  %v6696 = vpop.permute.xlu0 %6695
  %6697 = vrot.lane.b32.xlu0 %v6611, 24
  %v6698 = vpop.permute.xlu0 %6697
  %6699 = vrot.lane.b32.xlu0 %v6612, 24
  %v6700 = vpop.permute.xlu0 %6699
  %6701 = vrot.lane.b32.xlu0 %v6613, 24
  %v6702 = vpop.permute.xlu0 %6701
  %6703 = vrot.lane.b32.xlu0 %v6614, 24
  %v6704 = vpop.permute.xlu0 %6703
  %6705 = vrot.lane.b32.xlu0 %v6615, 24
  %v6706 = vpop.permute.xlu0 %6705
  %6707 = vrot.lane.b32.xlu0 %v6616, 24
  %v6708 = vpop.permute.xlu0 %6707
  %6709 = vrot.lane.b32.xlu0 %v6617, 24
  %v6710 = vpop.permute.xlu0 %6709
  %6711 = vrot.lane.b32.xlu0 %v6618, 24
  %v6712 = vpop.permute.xlu0 %6711
  %6713 = vrot.lane.b32.xlu0 %v6619, 24
  %v6714 = vpop.permute.xlu0 %6713
  %6715 = vrot.lane.b32.xlu0 %v6620, 24
  %v6716 = vpop.permute.xlu0 %6715
  %6749 = vst.msk [vmem:[#allocation3] sm:$0xff] %vm2670, %v6654
  %6750 = vst.msk [vmem:[#allocation3 + $0x8] sm:$0xff] %vm2670, %v6656
  %6751 = vst.msk [vmem:[#allocation3 + $0x10] sm:$0xff] %vm2670, %v6658
  %6752 = vst.msk [vmem:[#allocation3 + $0x18] sm:$0xff] %vm2670, %v6660
  %6753 = vst.msk [vmem:[#allocation3 + $0x20] sm:$0xff] %vm2670, %v6662
  %6754 = vst.msk [vmem:[#allocation3 + $0x28] sm:$0xff] %vm2670, %v6664
  %6755 = vst.msk [vmem:[#allocation3 + $0x30] sm:$0xff] %vm2670, %v6666
  %6756 = vst.msk [vmem:[#allocation3 + $0x38] sm:$0xff] %vm2670, %v6668
  %6757 = vst.msk [vmem:[#allocation3 + $0x40] sm:$0xff] %vm2670, %v6670
  %6758 = vst.msk [vmem:[#allocation3 + $0x48] sm:$0xff] %vm2670, %v6672
  %6759 = vst.msk [vmem:[#allocation3 + $0x50] sm:$0xff] %vm2670, %v6674
  %6760 = vst.msk [vmem:[#allocation3 + $0x58] sm:$0xff] %vm2670, %v6676
  %6761 = vst.msk [vmem:[#allocation3 + $0x60] sm:$0xff] %vm2670, %v6678
  %6762 = vst.msk [vmem:[#allocation3 + $0x68] sm:$0xff] %vm2670, %v6680
  %6763 = vst.msk [vmem:[#allocation3 + $0x70] sm:$0xff] %vm2670, %v6682
  %6764 = vst.msk [vmem:[#allocation3 + $0x78] sm:$0xff] %vm2670, %v6684
  %6765 = vst.msk [vmem:[#allocation3 + $0x80] sm:$0xff] %vm2670, %v6686
  %6766 = vst.msk [vmem:[#allocation3 + $0x88] sm:$0xff] %vm2670, %v6688
  %6767 = vst.msk [vmem:[#allocation3 + $0x90] sm:$0xff] %vm2670, %v6690
  %6768 = vst.msk [vmem:[#allocation3 + $0x98] sm:$0xff] %vm2670, %v6692
  %6769 = vst.msk [vmem:[#allocation3 + $0xa0] sm:$0xff] %vm2670, %v6694
  %6770 = vst.msk [vmem:[#allocation3 + $0xa8] sm:$0xff] %vm2670, %v6696
  %6771 = vst.msk [vmem:[#allocation3 + $0xb0] sm:$0xff] %vm2670, %v6698
  %6772 = vst.msk [vmem:[#allocation3 + $0xb8] sm:$0xff] %vm2670, %v6700
  %6773 = vst.msk [vmem:[#allocation3 + $0xc0] sm:$0xff] %vm2670, %v6702
  %6774 = vst.msk [vmem:[#allocation3 + $0xc8] sm:$0xff] %vm2670, %v6704
  %6775 = vst.msk [vmem:[#allocation3 + $0xd0] sm:$0xff] %vm2670, %v6706
  %6776 = vst.msk [vmem:[#allocation3 + $0xd8] sm:$0xff] %vm2670, %v6708
  %6777 = vst.msk [vmem:[#allocation3 + $0xe0] sm:$0xff] %vm2670, %v6710
  %6778 = vst.msk [vmem:[#allocation3 + $0xe8] sm:$0xff] %vm2670, %v6712
  %6779 = vst.msk [vmem:[#allocation3 + $0xf0] sm:$0xff] %vm2670, %v6714
  %6780 = vst.msk [vmem:[#allocation3 + $0xf8] sm:$0xff] %vm2670, %v6716
  %v6781 = vld [vmem:[%s200] sm:$0xff]
  %v6782 = vld [vmem:[%s200 + $0x8] sm:$0xff]
  %v6783 = vld [vmem:[%s200 + $0x18] sm:$0xff]
  %v6784 = vld [vmem:[%s200 + $0x20] sm:$0xff]
  %v6785 = vld [vmem:[%s200 + $0x30] sm:$0xff]
  %v6786 = vld [vmem:[%s200 + $0x38] sm:$0xff]
  %v6787 = vld [vmem:[%s200 + $0x48] sm:$0xff]
  %v6788 = vld [vmem:[%s200 + $0x50] sm:$0xff]
  %v6789 = vld [vmem:[%s200 + $0x60] sm:$0xff]
  %v6790 = vld [vmem:[%s200 + $0x68] sm:$0xff]
  %v6791 = vld [vmem:[%s200 + $0x78] sm:$0xff]
  %v6792 = vld [vmem:[%s200 + $0x80] sm:$0xff]
  %v6793 = vld [vmem:[%s200 + $0x90] sm:$0xff]
  %v6794 = vld [vmem:[%s200 + $0x98] sm:$0xff]
  %v6795 = vld [vmem:[%s200 + $0xa8] sm:$0xff]
  %v6796 = vld [vmem:[%s200 + $0xb0] sm:$0xff]
  %v6797 = vld [vmem:[%s200 + $0xc0] sm:$0xff]
  %v6798 = vld [vmem:[%s200 + $0xc8] sm:$0xff]
  %v6799 = vld [vmem:[%s200 + $0xd8] sm:$0xff]
  %v6800 = vld [vmem:[%s200 + $0xe0] sm:$0xff]
  %v6801 = vld [vmem:[%s200 + $0xf0] sm:$0xff]
  %v6802 = vld [vmem:[%s200 + $0xf8] sm:$0xff]
  %v6803 = vld [vmem:[%s200 + $0x108] sm:$0xff]
  %v6804 = vld [vmem:[%s200 + $0x110] sm:$0xff]
  %v6805 = vld [vmem:[%s200 + $0x120] sm:$0xff]
  %v6806 = vld [vmem:[%s200 + $0x128] sm:$0xff]
  %v6807 = vld [vmem:[%s200 + $0x138] sm:$0xff]
  %v6808 = vld [vmem:[%s200 + $0x140] sm:$0xff]
  %v6809 = vld [vmem:[%s200 + $0x150] sm:$0xff]
  %v6810 = vld [vmem:[%s200 + $0x158] sm:$0xff]
  %v6811 = vld [vmem:[%s200 + $0x168] sm:$0xff]
  %v6812 = vld [vmem:[%s200 + $0x170] sm:$0xff]
  %6845 = vrot.lane.b32.xlu0 %v6781, 24
  %v6846 = vpop.permute.xlu0 %6845
  %6847 = vrot.lane.b32.xlu0 %v6782, 24
  %v6848 = vpop.permute.xlu0 %6847
  %6849 = vrot.lane.b32.xlu0 %v6783, 24
  %v6850 = vpop.permute.xlu0 %6849
  %6851 = vrot.lane.b32.xlu0 %v6784, 24
  %v6852 = vpop.permute.xlu0 %6851
  %6853 = vrot.lane.b32.xlu0 %v6785, 24
  %v6854 = vpop.permute.xlu0 %6853
  %6855 = vrot.lane.b32.xlu0 %v6786, 24
  %v6856 = vpop.permute.xlu0 %6855
  %6857 = vrot.lane.b32.xlu0 %v6787, 24
  %v6858 = vpop.permute.xlu0 %6857
  %6859 = vrot.lane.b32.xlu0 %v6788, 24
  %v6860 = vpop.permute.xlu0 %6859
  %6861 = vrot.lane.b32.xlu0 %v6789, 24
  %v6862 = vpop.permute.xlu0 %6861
  %6863 = vrot.lane.b32.xlu0 %v6790, 24
  %v6864 = vpop.permute.xlu0 %6863
  %6865 = vrot.lane.b32.xlu0 %v6791, 24
  %v6866 = vpop.permute.xlu0 %6865
  %6867 = vrot.lane.b32.xlu0 %v6792, 24
  %v6868 = vpop.permute.xlu0 %6867
  %6869 = vrot.lane.b32.xlu0 %v6793, 24
  %v6870 = vpop.permute.xlu0 %6869
  %6871 = vrot.lane.b32.xlu0 %v6794, 24
  %v6872 = vpop.permute.xlu0 %6871
  %6873 = vrot.lane.b32.xlu0 %v6795, 24
  %v6874 = vpop.permute.xlu0 %6873
  %6875 = vrot.lane.b32.xlu0 %v6796, 24
  %v6876 = vpop.permute.xlu0 %6875
  %6877 = vrot.lane.b32.xlu0 %v6797, 24
  %v6878 = vpop.permute.xlu0 %6877
  %6879 = vrot.lane.b32.xlu0 %v6798, 24
  %v6880 = vpop.permute.xlu0 %6879
  %6881 = vrot.lane.b32.xlu0 %v6799, 24
  %v6882 = vpop.permute.xlu0 %6881
  %6883 = vrot.lane.b32.xlu0 %v6800, 24
  %v6884 = vpop.permute.xlu0 %6883
  %6885 = vrot.lane.b32.xlu0 %v6801, 24
  %v6886 = vpop.permute.xlu0 %6885
  %6887 = vrot.lane.b32.xlu0 %v6802, 24
  %v6888 = vpop.permute.xlu0 %6887
  %6889 = vrot.lane.b32.xlu0 %v6803, 24
  %v6890 = vpop.permute.xlu0 %6889
  %6891 = vrot.lane.b32.xlu0 %v6804, 24
  %v6892 = vpop.permute.xlu0 %6891
  %6893 = vrot.lane.b32.xlu0 %v6805, 24
  %v6894 = vpop.permute.xlu0 %6893
  %6895 = vrot.lane.b32.xlu0 %v6806, 24
  %v6896 = vpop.permute.xlu0 %6895
  %6897 = vrot.lane.b32.xlu0 %v6807, 24
  %v6898 = vpop.permute.xlu0 %6897
  %6899 = vrot.lane.b32.xlu0 %v6808, 24
  %v6900 = vpop.permute.xlu0 %6899
  %6901 = vrot.lane.b32.xlu0 %v6809, 24
  %v6902 = vpop.permute.xlu0 %6901
  %6903 = vrot.lane.b32.xlu0 %v6810, 24
  %v6904 = vpop.permute.xlu0 %6903
  %6905 = vrot.lane.b32.xlu0 %v6811, 24
  %v6906 = vpop.permute.xlu0 %6905
  %6907 = vrot.lane.b32.xlu0 %v6812, 24
  %v6908 = vpop.permute.xlu0 %6907
  %6941 = vst.msk [vmem:[#allocation3 + $0x100] sm:$0xff] %vm2670, %v6846
  %6942 = vst.msk [vmem:[#allocation3 + $0x108] sm:$0xff] %vm2670, %v6848
  %6943 = vst.msk [vmem:[#allocation3 + $0x110] sm:$0xff] %vm2670, %v6850
  %6944 = vst.msk [vmem:[#allocation3 + $0x118] sm:$0xff] %vm2670, %v6852
  %6945 = vst.msk [vmem:[#allocation3 + $0x120] sm:$0xff] %vm2670, %v6854
  %6946 = vst.msk [vmem:[#allocation3 + $0x128] sm:$0xff] %vm2670, %v6856
  %6947 = vst.msk [vmem:[#allocation3 + $0x130] sm:$0xff] %vm2670, %v6858
  %6948 = vst.msk [vmem:[#allocation3 + $0x138] sm:$0xff] %vm2670, %v6860
  %6949 = vst.msk [vmem:[#allocation3 + $0x140] sm:$0xff] %vm2670, %v6862
  %6950 = vst.msk [vmem:[#allocation3 + $0x148] sm:$0xff] %vm2670, %v6864
  %6951 = vst.msk [vmem:[#allocation3 + $0x150] sm:$0xff] %vm2670, %v6866
  %6952 = vst.msk [vmem:[#allocation3 + $0x158] sm:$0xff] %vm2670, %v6868
  %6953 = vst.msk [vmem:[#allocation3 + $0x160] sm:$0xff] %vm2670, %v6870
  %6954 = vst.msk [vmem:[#allocation3 + $0x168] sm:$0xff] %vm2670, %v6872
  %6955 = vst.msk [vmem:[#allocation3 + $0x170] sm:$0xff] %vm2670, %v6874
  %6956 = vst.msk [vmem:[#allocation3 + $0x178] sm:$0xff] %vm2670, %v6876
  %6957 = vst.msk [vmem:[#allocation3 + $0x180] sm:$0xff] %vm2670, %v6878
  %6958 = vst.msk [vmem:[#allocation3 + $0x188] sm:$0xff] %vm2670, %v6880
  %6959 = vst.msk [vmem:[#allocation3 + $0x190] sm:$0xff] %vm2670, %v6882
  %6960 = vst.msk [vmem:[#allocation3 + $0x198] sm:$0xff] %vm2670, %v6884
  %6961 = vst.msk [vmem:[#allocation3 + $0x1a0] sm:$0xff] %vm2670, %v6886
  %6962 = vst.msk [vmem:[#allocation3 + $0x1a8] sm:$0xff] %vm2670, %v6888
  %6963 = vst.msk [vmem:[#allocation3 + $0x1b0] sm:$0xff] %vm2670, %v6890
  %6964 = vst.msk [vmem:[#allocation3 + $0x1b8] sm:$0xff] %vm2670, %v6892
  %6965 = vst.msk [vmem:[#allocation3 + $0x1c0] sm:$0xff] %vm2670, %v6894
  %6966 = vst.msk [vmem:[#allocation3 + $0x1c8] sm:$0xff] %vm2670, %v6896
  %6967 = vst.msk [vmem:[#allocation3 + $0x1d0] sm:$0xff] %vm2670, %v6898
  %6968 = vst.msk [vmem:[#allocation3 + $0x1d8] sm:$0xff] %vm2670, %v6900
  %6969 = vst.msk [vmem:[#allocation3 + $0x1e0] sm:$0xff] %vm2670, %v6902
  %6970 = vst.msk [vmem:[#allocation3 + $0x1e8] sm:$0xff] %vm2670, %v6904
  %6971 = vst.msk [vmem:[#allocation3 + $0x1f0] sm:$0xff] %vm2670, %v6906
  %6972 = vst.msk [vmem:[#allocation3 + $0x1f8] sm:$0xff] %vm2670, %v6908
  %v6973 = vld [vmem:[%s92 + $0x1] sm:$0xff]
  %v6974 = vld [vmem:[%s92 + $0x9] sm:$0xff]
  %v6975 = vld [vmem:[%s92 + $0x19] sm:$0xff]
  %v6976 = vld [vmem:[%s92 + $0x21] sm:$0xff]
  %v6977 = vld [vmem:[%s92 + $0x31] sm:$0xff]
  %v6978 = vld [vmem:[%s92 + $0x39] sm:$0xff]
  %v6979 = vld [vmem:[%s92 + $0x49] sm:$0xff]
  %v6980 = vld [vmem:[%s92 + $0x51] sm:$0xff]
  %v6981 = vld [vmem:[%s92 + $0x61] sm:$0xff]
  %v6982 = vld [vmem:[%s92 + $0x69] sm:$0xff]
  %v6983 = vld [vmem:[%s92 + $0x79] sm:$0xff]
  %v6984 = vld [vmem:[%s92 + $0x81] sm:$0xff]
  %v6985 = vld [vmem:[%s92 + $0x91] sm:$0xff]
  %v6986 = vld [vmem:[%s92 + $0x99] sm:$0xff]
  %v6987 = vld [vmem:[%s92 + $0xa9] sm:$0xff]
  %v6988 = vld [vmem:[%s92 + $0xb1] sm:$0xff]
  %v6989 = vld [vmem:[%s92 + $0xc1] sm:$0xff]
  %v6990 = vld [vmem:[%s92 + $0xc9] sm:$0xff]
  %v6991 = vld [vmem:[%s92 + $0xd9] sm:$0xff]
  %v6992 = vld [vmem:[%s92 + $0xe1] sm:$0xff]
  %v6993 = vld [vmem:[%s92 + $0xf1] sm:$0xff]
  %v6994 = vld [vmem:[%s92 + $0xf9] sm:$0xff]
  %v6995 = vld [vmem:[%s92 + $0x109] sm:$0xff]
  %v6996 = vld [vmem:[%s92 + $0x111] sm:$0xff]
  %v6997 = vld [vmem:[%s92 + $0x121] sm:$0xff]
  %v6998 = vld [vmem:[%s92 + $0x129] sm:$0xff]
  %v6999 = vld [vmem:[%s92 + $0x139] sm:$0xff]
  %v7000 = vld [vmem:[%s92 + $0x141] sm:$0xff]
  %v7001 = vld [vmem:[%s92 + $0x151] sm:$0xff]
  %v7002 = vld [vmem:[%s92 + $0x159] sm:$0xff]
  %v7003 = vld [vmem:[%s92 + $0x169] sm:$0xff]
  %v7004 = vld [vmem:[%s92 + $0x171] sm:$0xff]
  %7037 = vrot.lane.b32.xlu0 %v6973, 28
  %v7038 = vpop.permute.xlu0 %7037
  %7039 = vrot.lane.b32.xlu0 %v6974, 28
  %v7040 = vpop.permute.xlu0 %7039
  %7041 = vrot.lane.b32.xlu0 %v6975, 28
  %v7042 = vpop.permute.xlu0 %7041
  %7043 = vrot.lane.b32.xlu0 %v6976, 28
  %v7044 = vpop.permute.xlu0 %7043
  %7045 = vrot.lane.b32.xlu0 %v6977, 28
  %v7046 = vpop.permute.xlu0 %7045
  %7047 = vrot.lane.b32.xlu0 %v6978, 28
  %v7048 = vpop.permute.xlu0 %7047
  %7049 = vrot.lane.b32.xlu0 %v6979, 28
  %v7050 = vpop.permute.xlu0 %7049
  %7051 = vrot.lane.b32.xlu0 %v6980, 28
  %v7052 = vpop.permute.xlu0 %7051
  %7053 = vrot.lane.b32.xlu0 %v6981, 28
  %v7054 = vpop.permute.xlu0 %7053
  %7055 = vrot.lane.b32.xlu0 %v6982, 28
  %v7056 = vpop.permute.xlu0 %7055
  %7057 = vrot.lane.b32.xlu0 %v6983, 28
  %v7058 = vpop.permute.xlu0 %7057
  %7059 = vrot.lane.b32.xlu0 %v6984, 28
  %v7060 = vpop.permute.xlu0 %7059
  %7061 = vrot.lane.b32.xlu0 %v6985, 28
  %v7062 = vpop.permute.xlu0 %7061
  %7063 = vrot.lane.b32.xlu0 %v6986, 28
  %v7064 = vpop.permute.xlu0 %7063
  %7065 = vrot.lane.b32.xlu0 %v6987, 28
  %v7066 = vpop.permute.xlu0 %7065
  %7067 = vrot.lane.b32.xlu0 %v6988, 28
  %v7068 = vpop.permute.xlu0 %7067
  %7069 = vrot.lane.b32.xlu0 %v6989, 28
  %v7070 = vpop.permute.xlu0 %7069
  %7071 = vrot.lane.b32.xlu0 %v6990, 28
  %v7072 = vpop.permute.xlu0 %7071
  %7073 = vrot.lane.b32.xlu0 %v6991, 28
  %v7074 = vpop.permute.xlu0 %7073
  %7075 = vrot.lane.b32.xlu0 %v6992, 28
  %v7076 = vpop.permute.xlu0 %7075
  %7077 = vrot.lane.b32.xlu0 %v6993, 28
  %v7078 = vpop.permute.xlu0 %7077
  %7079 = vrot.lane.b32.xlu0 %v6994, 28
  %v7080 = vpop.permute.xlu0 %7079
  %7081 = vrot.lane.b32.xlu0 %v6995, 28
  %v7082 = vpop.permute.xlu0 %7081
  %7083 = vrot.lane.b32.xlu0 %v6996, 28
  %v7084 = vpop.permute.xlu0 %7083
  %7085 = vrot.lane.b32.xlu0 %v6997, 28
  %v7086 = vpop.permute.xlu0 %7085
  %7087 = vrot.lane.b32.xlu0 %v6998, 28
  %v7088 = vpop.permute.xlu0 %7087
  %7089 = vrot.lane.b32.xlu0 %v6999, 28
  %v7090 = vpop.permute.xlu0 %7089
  %7091 = vrot.lane.b32.xlu0 %v7000, 28
  %v7092 = vpop.permute.xlu0 %7091
  %7093 = vrot.lane.b32.xlu0 %v7001, 28
  %v7094 = vpop.permute.xlu0 %7093
  %7095 = vrot.lane.b32.xlu0 %v7002, 28
  %v7096 = vpop.permute.xlu0 %7095
  %7097 = vrot.lane.b32.xlu0 %v7003, 28
  %v7098 = vpop.permute.xlu0 %7097
  %7099 = vrot.lane.b32.xlu0 %v7004, 28
  %v7100 = vpop.permute.xlu0 %7099
  %7133 = vst.msk [vmem:[#allocation3] sm:$0xff] %vm3055, %v7038
  %7134 = vst.msk [vmem:[#allocation3 + $0x8] sm:$0xff] %vm3055, %v7040
  %7135 = vst.msk [vmem:[#allocation3 + $0x10] sm:$0xff] %vm3055, %v7042
  %7136 = vst.msk [vmem:[#allocation3 + $0x18] sm:$0xff] %vm3055, %v7044
  %7137 = vst.msk [vmem:[#allocation3 + $0x20] sm:$0xff] %vm3055, %v7046
  %7138 = vst.msk [vmem:[#allocation3 + $0x28] sm:$0xff] %vm3055, %v7048
  %7139 = vst.msk [vmem:[#allocation3 + $0x30] sm:$0xff] %vm3055, %v7050
  %7140 = vst.msk [vmem:[#allocation3 + $0x38] sm:$0xff] %vm3055, %v7052
  %7141 = vst.msk [vmem:[#allocation3 + $0x40] sm:$0xff] %vm3055, %v7054
  %7142 = vst.msk [vmem:[#allocation3 + $0x48] sm:$0xff] %vm3055, %v7056
  %7143 = vst.msk [vmem:[#allocation3 + $0x50] sm:$0xff] %vm3055, %v7058
  %7144 = vst.msk [vmem:[#allocation3 + $0x58] sm:$0xff] %vm3055, %v7060
  %7145 = vst.msk [vmem:[#allocation3 + $0x60] sm:$0xff] %vm3055, %v7062
  %7146 = vst.msk [vmem:[#allocation3 + $0x68] sm:$0xff] %vm3055, %v7064
  %7147 = vst.msk [vmem:[#allocation3 + $0x70] sm:$0xff] %vm3055, %v7066
  %7148 = vst.msk [vmem:[#allocation3 + $0x78] sm:$0xff] %vm3055, %v7068
  %7149 = vst.msk [vmem:[#allocation3 + $0x80] sm:$0xff] %vm3055, %v7070
  %7150 = vst.msk [vmem:[#allocation3 + $0x88] sm:$0xff] %vm3055, %v7072
  %7151 = vst.msk [vmem:[#allocation3 + $0x90] sm:$0xff] %vm3055, %v7074
  %7152 = vst.msk [vmem:[#allocation3 + $0x98] sm:$0xff] %vm3055, %v7076
  %7153 = vst.msk [vmem:[#allocation3 + $0xa0] sm:$0xff] %vm3055, %v7078
  %7154 = vst.msk [vmem:[#allocation3 + $0xa8] sm:$0xff] %vm3055, %v7080
  %7155 = vst.msk [vmem:[#allocation3 + $0xb0] sm:$0xff] %vm3055, %v7082
  %7156 = vst.msk [vmem:[#allocation3 + $0xb8] sm:$0xff] %vm3055, %v7084
  %7157 = vst.msk [vmem:[#allocation3 + $0xc0] sm:$0xff] %vm3055, %v7086
  %7158 = vst.msk [vmem:[#allocation3 + $0xc8] sm:$0xff] %vm3055, %v7088
  %7159 = vst.msk [vmem:[#allocation3 + $0xd0] sm:$0xff] %vm3055, %v7090
  %7160 = vst.msk [vmem:[#allocation3 + $0xd8] sm:$0xff] %vm3055, %v7092
  %7161 = vst.msk [vmem:[#allocation3 + $0xe0] sm:$0xff] %vm3055, %v7094
  %7162 = vst.msk [vmem:[#allocation3 + $0xe8] sm:$0xff] %vm3055, %v7096
  %7163 = vst.msk [vmem:[#allocation3 + $0xf0] sm:$0xff] %vm3055, %v7098
  %7164 = vst.msk [vmem:[#allocation3 + $0xf8] sm:$0xff] %vm3055, %v7100
  %v7165 = vld [vmem:[%s200 + $0x1] sm:$0xff]
  %v7166 = vld [vmem:[%s200 + $0x9] sm:$0xff]
  %v7167 = vld [vmem:[%s200 + $0x19] sm:$0xff]
  %v7168 = vld [vmem:[%s200 + $0x21] sm:$0xff]
  %v7169 = vld [vmem:[%s200 + $0x31] sm:$0xff]
  %v7170 = vld [vmem:[%s200 + $0x39] sm:$0xff]
  %v7171 = vld [vmem:[%s200 + $0x49] sm:$0xff]
  %v7172 = vld [vmem:[%s200 + $0x51] sm:$0xff]
  %v7173 = vld [vmem:[%s200 + $0x61] sm:$0xff]
  %v7174 = vld [vmem:[%s200 + $0x69] sm:$0xff]
  %v7175 = vld [vmem:[%s200 + $0x79] sm:$0xff]
  %v7176 = vld [vmem:[%s200 + $0x81] sm:$0xff]
  %v7177 = vld [vmem:[%s200 + $0x91] sm:$0xff]
  %v7178 = vld [vmem:[%s200 + $0x99] sm:$0xff]
  %v7179 = vld [vmem:[%s200 + $0xa9] sm:$0xff]
  %v7180 = vld [vmem:[%s200 + $0xb1] sm:$0xff]
  %v7181 = vld [vmem:[%s200 + $0xc1] sm:$0xff]
  %v7182 = vld [vmem:[%s200 + $0xc9] sm:$0xff]
  %v7183 = vld [vmem:[%s200 + $0xd9] sm:$0xff]
  %v7184 = vld [vmem:[%s200 + $0xe1] sm:$0xff]
  %v7185 = vld [vmem:[%s200 + $0xf1] sm:$0xff]
  %v7186 = vld [vmem:[%s200 + $0xf9] sm:$0xff]
  %v7187 = vld [vmem:[%s200 + $0x109] sm:$0xff]
  %v7188 = vld [vmem:[%s200 + $0x111] sm:$0xff]
  %v7189 = vld [vmem:[%s200 + $0x121] sm:$0xff]
  %v7190 = vld [vmem:[%s200 + $0x129] sm:$0xff]
  %v7191 = vld [vmem:[%s200 + $0x139] sm:$0xff]
  %v7192 = vld [vmem:[%s200 + $0x141] sm:$0xff]
  %v7193 = vld [vmem:[%s200 + $0x151] sm:$0xff]
  %v7194 = vld [vmem:[%s200 + $0x159] sm:$0xff]
  %v7195 = vld [vmem:[%s200 + $0x169] sm:$0xff]
  %v7196 = vld [vmem:[%s200 + $0x171] sm:$0xff]
  %7229 = vrot.lane.b32.xlu0 %v7165, 28
  %v7230 = vpop.permute.xlu0 %7229
  %7231 = vrot.lane.b32.xlu0 %v7166, 28
  %v7232 = vpop.permute.xlu0 %7231
  %7233 = vrot.lane.b32.xlu0 %v7167, 28
  %v7234 = vpop.permute.xlu0 %7233
  %7235 = vrot.lane.b32.xlu0 %v7168, 28
  %v7236 = vpop.permute.xlu0 %7235
  %7237 = vrot.lane.b32.xlu0 %v7169, 28
  %v7238 = vpop.permute.xlu0 %7237
  %7239 = vrot.lane.b32.xlu0 %v7170, 28
  %v7240 = vpop.permute.xlu0 %7239
  %7241 = vrot.lane.b32.xlu0 %v7171, 28
  %v7242 = vpop.permute.xlu0 %7241
  %7243 = vrot.lane.b32.xlu0 %v7172, 28
  %v7244 = vpop.permute.xlu0 %7243
  %7245 = vrot.lane.b32.xlu0 %v7173, 28
  %v7246 = vpop.permute.xlu0 %7245
  %7247 = vrot.lane.b32.xlu0 %v7174, 28
  %v7248 = vpop.permute.xlu0 %7247
  %7249 = vrot.lane.b32.xlu0 %v7175, 28
  %v7250 = vpop.permute.xlu0 %7249
  %7251 = vrot.lane.b32.xlu0 %v7176, 28
  %v7252 = vpop.permute.xlu0 %7251
  %7253 = vrot.lane.b32.xlu0 %v7177, 28
  %v7254 = vpop.permute.xlu0 %7253
  %7255 = vrot.lane.b32.xlu0 %v7178, 28
  %v7256 = vpop.permute.xlu0 %7255
  %7257 = vrot.lane.b32.xlu0 %v7179, 28
  %v7258 = vpop.permute.xlu0 %7257
  %7259 = vrot.lane.b32.xlu0 %v7180, 28
  %v7260 = vpop.permute.xlu0 %7259
  %7261 = vrot.lane.b32.xlu0 %v7181, 28
  %v7262 = vpop.permute.xlu0 %7261
  %7263 = vrot.lane.b32.xlu0 %v7182, 28
  %v7264 = vpop.permute.xlu0 %7263
  %7265 = vrot.lane.b32.xlu0 %v7183, 28
  %v7266 = vpop.permute.xlu0 %7265
  %7267 = vrot.lane.b32.xlu0 %v7184, 28
  %v7268 = vpop.permute.xlu0 %7267
  %7269 = vrot.lane.b32.xlu0 %v7185, 28
  %v7270 = vpop.permute.xlu0 %7269
  %7271 = vrot.lane.b32.xlu0 %v7186, 28
  %v7272 = vpop.permute.xlu0 %7271
  %7273 = vrot.lane.b32.xlu0 %v7187, 28
  %v7274 = vpop.permute.xlu0 %7273
  %7275 = vrot.lane.b32.xlu0 %v7188, 28
  %v7276 = vpop.permute.xlu0 %7275
  %7277 = vrot.lane.b32.xlu0 %v7189, 28
  %v7278 = vpop.permute.xlu0 %7277
  %7279 = vrot.lane.b32.xlu0 %v7190, 28
  %v7280 = vpop.permute.xlu0 %7279
  %7281 = vrot.lane.b32.xlu0 %v7191, 28
  %v7282 = vpop.permute.xlu0 %7281
  %7283 = vrot.lane.b32.xlu0 %v7192, 28
  %v7284 = vpop.permute.xlu0 %7283
  %7285 = vrot.lane.b32.xlu0 %v7193, 28
  %v7286 = vpop.permute.xlu0 %7285
  %7287 = vrot.lane.b32.xlu0 %v7194, 28
  %v7288 = vpop.permute.xlu0 %7287
  %7289 = vrot.lane.b32.xlu0 %v7195, 28
  %v7290 = vpop.permute.xlu0 %7289
  %7291 = vrot.lane.b32.xlu0 %v7196, 28
  %v7292 = vpop.permute.xlu0 %7291
  %7325 = vst.msk [vmem:[#allocation3 + $0x100] sm:$0xff] %vm3055, %v7230
  %7326 = vst.msk [vmem:[#allocation3 + $0x108] sm:$0xff] %vm3055, %v7232
  %7327 = vst.msk [vmem:[#allocation3 + $0x110] sm:$0xff] %vm3055, %v7234
  %7328 = vst.msk [vmem:[#allocation3 + $0x118] sm:$0xff] %vm3055, %v7236
  %7329 = vst.msk [vmem:[#allocation3 + $0x120] sm:$0xff] %vm3055, %v7238
  %7330 = vst.msk [vmem:[#allocation3 + $0x128] sm:$0xff] %vm3055, %v7240
  %7331 = vst.msk [vmem:[#allocation3 + $0x130] sm:$0xff] %vm3055, %v7242
  %7332 = vst.msk [vmem:[#allocation3 + $0x138] sm:$0xff] %vm3055, %v7244
  %7333 = vst.msk [vmem:[#allocation3 + $0x140] sm:$0xff] %vm3055, %v7246
  %7334 = vst.msk [vmem:[#allocation3 + $0x148] sm:$0xff] %vm3055, %v7248
  %7335 = vst.msk [vmem:[#allocation3 + $0x150] sm:$0xff] %vm3055, %v7250
  %7336 = vst.msk [vmem:[#allocation3 + $0x158] sm:$0xff] %vm3055, %v7252
  %7337 = vst.msk [vmem:[#allocation3 + $0x160] sm:$0xff] %vm3055, %v7254
  %7338 = vst.msk [vmem:[#allocation3 + $0x168] sm:$0xff] %vm3055, %v7256
  %7339 = vst.msk [vmem:[#allocation3 + $0x170] sm:$0xff] %vm3055, %v7258
  %7340 = vst.msk [vmem:[#allocation3 + $0x178] sm:$0xff] %vm3055, %v7260
  %7341 = vst.msk [vmem:[#allocation3 + $0x180] sm:$0xff] %vm3055, %v7262
  %7342 = vst.msk [vmem:[#allocation3 + $0x188] sm:$0xff] %vm3055, %v7264
  %7343 = vst.msk [vmem:[#allocation3 + $0x190] sm:$0xff] %vm3055, %v7266
  %7344 = vst.msk [vmem:[#allocation3 + $0x198] sm:$0xff] %vm3055, %v7268
  %7345 = vst.msk [vmem:[#allocation3 + $0x1a0] sm:$0xff] %vm3055, %v7270
  %7346 = vst.msk [vmem:[#allocation3 + $0x1a8] sm:$0xff] %vm3055, %v7272
  %7347 = vst.msk [vmem:[#allocation3 + $0x1b0] sm:$0xff] %vm3055, %v7274
  %7348 = vst.msk [vmem:[#allocation3 + $0x1b8] sm:$0xff] %vm3055, %v7276
  %7349 = vst.msk [vmem:[#allocation3 + $0x1c0] sm:$0xff] %vm3055, %v7278
  %7350 = vst.msk [vmem:[#allocation3 + $0x1c8] sm:$0xff] %vm3055, %v7280
  %7351 = vst.msk [vmem:[#allocation3 + $0x1d0] sm:$0xff] %vm3055, %v7282
  %7352 = vst.msk [vmem:[#allocation3 + $0x1d8] sm:$0xff] %vm3055, %v7284
  %7353 = vst.msk [vmem:[#allocation3 + $0x1e0] sm:$0xff] %vm3055, %v7286
  %7354 = vst.msk [vmem:[#allocation3 + $0x1e8] sm:$0xff] %vm3055, %v7288
  %7355 = vst.msk [vmem:[#allocation3 + $0x1f0] sm:$0xff] %vm3055, %v7290
  %7356 = vst.msk [vmem:[#allocation3 + $0x1f8] sm:$0xff] %vm3055, %v7292
  %v7357 = vld [vmem:[%s92 + $0x2] sm:$0xff]
  %v7358 = vld [vmem:[%s92 + $0xa] sm:$0xff]
  %v7359 = vld [vmem:[%s92 + $0x1a] sm:$0xff]
  %v7360 = vld [vmem:[%s92 + $0x22] sm:$0xff]
  %v7361 = vld [vmem:[%s92 + $0x32] sm:$0xff]
  %v7362 = vld [vmem:[%s92 + $0x3a] sm:$0xff]
  %v7363 = vld [vmem:[%s92 + $0x4a] sm:$0xff]
  %v7364 = vld [vmem:[%s92 + $0x52] sm:$0xff]
  %v7365 = vld [vmem:[%s92 + $0x62] sm:$0xff]
  %v7366 = vld [vmem:[%s92 + $0x6a] sm:$0xff]
  %v7367 = vld [vmem:[%s92 + $0x7a] sm:$0xff]
  %v7368 = vld [vmem:[%s92 + $0x82] sm:$0xff]
  %v7369 = vld [vmem:[%s92 + $0x92] sm:$0xff]
  %v7370 = vld [vmem:[%s92 + $0x9a] sm:$0xff]
  %v7371 = vld [vmem:[%s92 + $0xaa] sm:$0xff]
  %v7372 = vld [vmem:[%s92 + $0xb2] sm:$0xff]
  %v7373 = vld [vmem:[%s92 + $0xc2] sm:$0xff]
  %v7374 = vld [vmem:[%s92 + $0xca] sm:$0xff]
  %v7375 = vld [vmem:[%s92 + $0xda] sm:$0xff]
  %v7376 = vld [vmem:[%s92 + $0xe2] sm:$0xff]
  %v7377 = vld [vmem:[%s92 + $0xf2] sm:$0xff]
  %v7378 = vld [vmem:[%s92 + $0xfa] sm:$0xff]
  %v7379 = vld [vmem:[%s92 + $0x10a] sm:$0xff]
  %v7380 = vld [vmem:[%s92 + $0x112] sm:$0xff]
  %v7381 = vld [vmem:[%s92 + $0x122] sm:$0xff]
  %v7382 = vld [vmem:[%s92 + $0x12a] sm:$0xff]
  %v7383 = vld [vmem:[%s92 + $0x13a] sm:$0xff]
  %v7384 = vld [vmem:[%s92 + $0x142] sm:$0xff]
  %v7385 = vld [vmem:[%s92 + $0x152] sm:$0xff]
  %v7386 = vld [vmem:[%s92 + $0x15a] sm:$0xff]
  %v7387 = vld [vmem:[%s92 + $0x16a] sm:$0xff]
  %v7388 = vld [vmem:[%s92 + $0x172] sm:$0xff]
  %7421 = vrot.lane.b32.xlu0 %v7357, 32
  %v7422 = vpop.permute.xlu0 %7421
  %7423 = vrot.lane.b32.xlu0 %v7358, 32
  %v7424 = vpop.permute.xlu0 %7423
  %7425 = vrot.lane.b32.xlu0 %v7359, 32
  %v7426 = vpop.permute.xlu0 %7425
  %7427 = vrot.lane.b32.xlu0 %v7360, 32
  %v7428 = vpop.permute.xlu0 %7427
  %7429 = vrot.lane.b32.xlu0 %v7361, 32
  %v7430 = vpop.permute.xlu0 %7429
  %7431 = vrot.lane.b32.xlu0 %v7362, 32
  %v7432 = vpop.permute.xlu0 %7431
  %7433 = vrot.lane.b32.xlu0 %v7363, 32
  %v7434 = vpop.permute.xlu0 %7433
  %7435 = vrot.lane.b32.xlu0 %v7364, 32
  %v7436 = vpop.permute.xlu0 %7435
  %7437 = vrot.lane.b32.xlu0 %v7365, 32
  %v7438 = vpop.permute.xlu0 %7437
  %7439 = vrot.lane.b32.xlu0 %v7366, 32
  %v7440 = vpop.permute.xlu0 %7439
  %7441 = vrot.lane.b32.xlu0 %v7367, 32
  %v7442 = vpop.permute.xlu0 %7441
  %7443 = vrot.lane.b32.xlu0 %v7368, 32
  %v7444 = vpop.permute.xlu0 %7443
  %7445 = vrot.lane.b32.xlu0 %v7369, 32
  %v7446 = vpop.permute.xlu0 %7445
  %7447 = vrot.lane.b32.xlu0 %v7370, 32
  %v7448 = vpop.permute.xlu0 %7447
  %7449 = vrot.lane.b32.xlu0 %v7371, 32
  %v7450 = vpop.permute.xlu0 %7449
  %7451 = vrot.lane.b32.xlu0 %v7372, 32
  %v7452 = vpop.permute.xlu0 %7451
  %7453 = vrot.lane.b32.xlu0 %v7373, 32
  %v7454 = vpop.permute.xlu0 %7453
  %7455 = vrot.lane.b32.xlu0 %v7374, 32
  %v7456 = vpop.permute.xlu0 %7455
  %7457 = vrot.lane.b32.xlu0 %v7375, 32
  %v7458 = vpop.permute.xlu0 %7457
  %7459 = vrot.lane.b32.xlu0 %v7376, 32
  %v7460 = vpop.permute.xlu0 %7459
  %7461 = vrot.lane.b32.xlu0 %v7377, 32
  %v7462 = vpop.permute.xlu0 %7461
  %7463 = vrot.lane.b32.xlu0 %v7378, 32
  %v7464 = vpop.permute.xlu0 %7463
  %7465 = vrot.lane.b32.xlu0 %v7379, 32
  %v7466 = vpop.permute.xlu0 %7465
  %7467 = vrot.lane.b32.xlu0 %v7380, 32
  %v7468 = vpop.permute.xlu0 %7467
  %7469 = vrot.lane.b32.xlu0 %v7381, 32
  %v7470 = vpop.permute.xlu0 %7469
  %7471 = vrot.lane.b32.xlu0 %v7382, 32
  %v7472 = vpop.permute.xlu0 %7471
  %7473 = vrot.lane.b32.xlu0 %v7383, 32
  %v7474 = vpop.permute.xlu0 %7473
  %7475 = vrot.lane.b32.xlu0 %v7384, 32
  %v7476 = vpop.permute.xlu0 %7475
  %7477 = vrot.lane.b32.xlu0 %v7385, 32
  %v7478 = vpop.permute.xlu0 %7477
  %7479 = vrot.lane.b32.xlu0 %v7386, 32
  %v7480 = vpop.permute.xlu0 %7479
  %7481 = vrot.lane.b32.xlu0 %v7387, 32
  %v7482 = vpop.permute.xlu0 %7481
  %7483 = vrot.lane.b32.xlu0 %v7388, 32
  %v7484 = vpop.permute.xlu0 %7483
  %7517 = vst.msk [vmem:[#allocation3] sm:$0xff] %vm3440, %v7422
  %7518 = vst.msk [vmem:[#allocation3 + $0x8] sm:$0xff] %vm3440, %v7424
  %7519 = vst.msk [vmem:[#allocation3 + $0x10] sm:$0xff] %vm3440, %v7426
  %7520 = vst.msk [vmem:[#allocation3 + $0x18] sm:$0xff] %vm3440, %v7428
  %7521 = vst.msk [vmem:[#allocation3 + $0x20] sm:$0xff] %vm3440, %v7430
  %7522 = vst.msk [vmem:[#allocation3 + $0x28] sm:$0xff] %vm3440, %v7432
  %7523 = vst.msk [vmem:[#allocation3 + $0x30] sm:$0xff] %vm3440, %v7434
  %7524 = vst.msk [vmem:[#allocation3 + $0x38] sm:$0xff] %vm3440, %v7436
  %7525 = vst.msk [vmem:[#allocation3 + $0x40] sm:$0xff] %vm3440, %v7438
  %7526 = vst.msk [vmem:[#allocation3 + $0x48] sm:$0xff] %vm3440, %v7440
  %7527 = vst.msk [vmem:[#allocation3 + $0x50] sm:$0xff] %vm3440, %v7442
  %7528 = vst.msk [vmem:[#allocation3 + $0x58] sm:$0xff] %vm3440, %v7444
  %7529 = vst.msk [vmem:[#allocation3 + $0x60] sm:$0xff] %vm3440, %v7446
  %7530 = vst.msk [vmem:[#allocation3 + $0x68] sm:$0xff] %vm3440, %v7448
  %7531 = vst.msk [vmem:[#allocation3 + $0x70] sm:$0xff] %vm3440, %v7450
  %7532 = vst.msk [vmem:[#allocation3 + $0x78] sm:$0xff] %vm3440, %v7452
  %7533 = vst.msk [vmem:[#allocation3 + $0x80] sm:$0xff] %vm3440, %v7454
  %7534 = vst.msk [vmem:[#allocation3 + $0x88] sm:$0xff] %vm3440, %v7456
  %7535 = vst.msk [vmem:[#allocation3 + $0x90] sm:$0xff] %vm3440, %v7458
  %7536 = vst.msk [vmem:[#allocation3 + $0x98] sm:$0xff] %vm3440, %v7460
  %7537 = vst.msk [vmem:[#allocation3 + $0xa0] sm:$0xff] %vm3440, %v7462
  %7538 = vst.msk [vmem:[#allocation3 + $0xa8] sm:$0xff] %vm3440, %v7464
  %7539 = vst.msk [vmem:[#allocation3 + $0xb0] sm:$0xff] %vm3440, %v7466
  %7540 = vst.msk [vmem:[#allocation3 + $0xb8] sm:$0xff] %vm3440, %v7468
  %7541 = vst.msk [vmem:[#allocation3 + $0xc0] sm:$0xff] %vm3440, %v7470
  %7542 = vst.msk [vmem:[#allocation3 + $0xc8] sm:$0xff] %vm3440, %v7472
  %7543 = vst.msk [vmem:[#allocation3 + $0xd0] sm:$0xff] %vm3440, %v7474
  %7544 = vst.msk [vmem:[#allocation3 + $0xd8] sm:$0xff] %vm3440, %v7476
  %7545 = vst.msk [vmem:[#allocation3 + $0xe0] sm:$0xff] %vm3440, %v7478
  %7546 = vst.msk [vmem:[#allocation3 + $0xe8] sm:$0xff] %vm3440, %v7480
  %7547 = vst.msk [vmem:[#allocation3 + $0xf0] sm:$0xff] %vm3440, %v7482
  %7548 = vst.msk [vmem:[#allocation3 + $0xf8] sm:$0xff] %vm3440, %v7484
  %v7549 = vld [vmem:[%s200 + $0x2] sm:$0xff]
  %v7550 = vld [vmem:[%s200 + $0xa] sm:$0xff]
  %v7551 = vld [vmem:[%s200 + $0x1a] sm:$0xff]
  %v7552 = vld [vmem:[%s200 + $0x22] sm:$0xff]
  %v7553 = vld [vmem:[%s200 + $0x32] sm:$0xff]
  %v7554 = vld [vmem:[%s200 + $0x3a] sm:$0xff]
  %v7555 = vld [vmem:[%s200 + $0x4a] sm:$0xff]
  %v7556 = vld [vmem:[%s200 + $0x52] sm:$0xff]
  %v7557 = vld [vmem:[%s200 + $0x62] sm:$0xff]
  %v7558 = vld [vmem:[%s200 + $0x6a] sm:$0xff]
  %v7559 = vld [vmem:[%s200 + $0x7a] sm:$0xff]
  %v7560 = vld [vmem:[%s200 + $0x82] sm:$0xff]
  %v7561 = vld [vmem:[%s200 + $0x92] sm:$0xff]
  %v7562 = vld [vmem:[%s200 + $0x9a] sm:$0xff]
  %v7563 = vld [vmem:[%s200 + $0xaa] sm:$0xff]
  %v7564 = vld [vmem:[%s200 + $0xb2] sm:$0xff]
  %v7565 = vld [vmem:[%s200 + $0xc2] sm:$0xff]
  %v7566 = vld [vmem:[%s200 + $0xca] sm:$0xff]
  %v7567 = vld [vmem:[%s200 + $0xda] sm:$0xff]
  %v7568 = vld [vmem:[%s200 + $0xe2] sm:$0xff]
  %v7569 = vld [vmem:[%s200 + $0xf2] sm:$0xff]
  %v7570 = vld [vmem:[%s200 + $0xfa] sm:$0xff]
  %v7571 = vld [vmem:[%s200 + $0x10a] sm:$0xff]
  %v7572 = vld [vmem:[%s200 + $0x112] sm:$0xff]
  %v7573 = vld [vmem:[%s200 + $0x122] sm:$0xff]
  %v7574 = vld [vmem:[%s200 + $0x12a] sm:$0xff]
  %v7575 = vld [vmem:[%s200 + $0x13a] sm:$0xff]
  %v7576 = vld [vmem:[%s200 + $0x142] sm:$0xff]
  %v7577 = vld [vmem:[%s200 + $0x152] sm:$0xff]
  %v7578 = vld [vmem:[%s200 + $0x15a] sm:$0xff]
  %v7579 = vld [vmem:[%s200 + $0x16a] sm:$0xff]
  %v7580 = vld [vmem:[%s200 + $0x172] sm:$0xff]
  %7613 = vrot.lane.b32.xlu0 %v7549, 32
  %v7614 = vpop.permute.xlu0 %7613
  %7615 = vrot.lane.b32.xlu0 %v7550, 32
  %v7616 = vpop.permute.xlu0 %7615
  %7617 = vrot.lane.b32.xlu0 %v7551, 32
  %v7618 = vpop.permute.xlu0 %7617
  %7619 = vrot.lane.b32.xlu0 %v7552, 32
  %v7620 = vpop.permute.xlu0 %7619
  %7621 = vrot.lane.b32.xlu0 %v7553, 32
  %v7622 = vpop.permute.xlu0 %7621
  %7623 = vrot.lane.b32.xlu0 %v7554, 32
  %v7624 = vpop.permute.xlu0 %7623
  %7625 = vrot.lane.b32.xlu0 %v7555, 32
  %v7626 = vpop.permute.xlu0 %7625
  %7627 = vrot.lane.b32.xlu0 %v7556, 32
  %v7628 = vpop.permute.xlu0 %7627
  %7629 = vrot.lane.b32.xlu0 %v7557, 32
  %v7630 = vpop.permute.xlu0 %7629
  %7631 = vrot.lane.b32.xlu0 %v7558, 32
  %v7632 = vpop.permute.xlu0 %7631
  %7633 = vrot.lane.b32.xlu0 %v7559, 32
  %v7634 = vpop.permute.xlu0 %7633
  %7635 = vrot.lane.b32.xlu0 %v7560, 32
  %v7636 = vpop.permute.xlu0 %7635
  %7637 = vrot.lane.b32.xlu0 %v7561, 32
  %v7638 = vpop.permute.xlu0 %7637
  %7639 = vrot.lane.b32.xlu0 %v7562, 32
  %v7640 = vpop.permute.xlu0 %7639
  %7641 = vrot.lane.b32.xlu0 %v7563, 32
  %v7642 = vpop.permute.xlu0 %7641
  %7643 = vrot.lane.b32.xlu0 %v7564, 32
  %v7644 = vpop.permute.xlu0 %7643
  %7645 = vrot.lane.b32.xlu0 %v7565, 32
  %v7646 = vpop.permute.xlu0 %7645
  %7647 = vrot.lane.b32.xlu0 %v7566, 32
  %v7648 = vpop.permute.xlu0 %7647
  %7649 = vrot.lane.b32.xlu0 %v7567, 32
  %v7650 = vpop.permute.xlu0 %7649
  %7651 = vrot.lane.b32.xlu0 %v7568, 32
  %v7652 = vpop.permute.xlu0 %7651
  %7653 = vrot.lane.b32.xlu0 %v7569, 32
  %v7654 = vpop.permute.xlu0 %7653
  %7655 = vrot.lane.b32.xlu0 %v7570, 32
  %v7656 = vpop.permute.xlu0 %7655
  %7657 = vrot.lane.b32.xlu0 %v7571, 32
  %v7658 = vpop.permute.xlu0 %7657
  %7659 = vrot.lane.b32.xlu0 %v7572, 32
  %v7660 = vpop.permute.xlu0 %7659
  %7661 = vrot.lane.b32.xlu0 %v7573, 32
  %v7662 = vpop.permute.xlu0 %7661
  %7663 = vrot.lane.b32.xlu0 %v7574, 32
  %v7664 = vpop.permute.xlu0 %7663
  %7665 = vrot.lane.b32.xlu0 %v7575, 32
  %v7666 = vpop.permute.xlu0 %7665
  %7667 = vrot.lane.b32.xlu0 %v7576, 32
  %v7668 = vpop.permute.xlu0 %7667
  %7669 = vrot.lane.b32.xlu0 %v7577, 32
  %v7670 = vpop.permute.xlu0 %7669
  %7671 = vrot.lane.b32.xlu0 %v7578, 32
  %v7672 = vpop.permute.xlu0 %7671
  %7673 = vrot.lane.b32.xlu0 %v7579, 32
  %v7674 = vpop.permute.xlu0 %7673
  %7675 = vrot.lane.b32.xlu0 %v7580, 32
  %v7676 = vpop.permute.xlu0 %7675
  %7709 = vst.msk [vmem:[#allocation3 + $0x100] sm:$0xff] %vm3440, %v7614
  %7710 = vst.msk [vmem:[#allocation3 + $0x108] sm:$0xff] %vm3440, %v7616
  %7711 = vst.msk [vmem:[#allocation3 + $0x110] sm:$0xff] %vm3440, %v7618
  %7712 = vst.msk [vmem:[#allocation3 + $0x118] sm:$0xff] %vm3440, %v7620
  %7713 = vst.msk [vmem:[#allocation3 + $0x120] sm:$0xff] %vm3440, %v7622
  %7714 = vst.msk [vmem:[#allocation3 + $0x128] sm:$0xff] %vm3440, %v7624
  %7715 = vst.msk [vmem:[#allocation3 + $0x130] sm:$0xff] %vm3440, %v7626
  %7716 = vst.msk [vmem:[#allocation3 + $0x138] sm:$0xff] %vm3440, %v7628
  %7717 = vst.msk [vmem:[#allocation3 + $0x140] sm:$0xff] %vm3440, %v7630
  %7718 = vst.msk [vmem:[#allocation3 + $0x148] sm:$0xff] %vm3440, %v7632
  %7719 = vst.msk [vmem:[#allocation3 + $0x150] sm:$0xff] %vm3440, %v7634
  %7720 = vst.msk [vmem:[#allocation3 + $0x158] sm:$0xff] %vm3440, %v7636
  %7721 = vst.msk [vmem:[#allocation3 + $0x160] sm:$0xff] %vm3440, %v7638
  %7722 = vst.msk [vmem:[#allocation3 + $0x168] sm:$0xff] %vm3440, %v7640
  %7723 = vst.msk [vmem:[#allocation3 + $0x170] sm:$0xff] %vm3440, %v7642
  %7724 = vst.msk [vmem:[#allocation3 + $0x178] sm:$0xff] %vm3440, %v7644
  %7725 = vst.msk [vmem:[#allocation3 + $0x180] sm:$0xff] %vm3440, %v7646
  %7726 = vst.msk [vmem:[#allocation3 + $0x188] sm:$0xff] %vm3440, %v7648
  %7727 = vst.msk [vmem:[#allocation3 + $0x190] sm:$0xff] %vm3440, %v7650
  %7728 = vst.msk [vmem:[#allocation3 + $0x198] sm:$0xff] %vm3440, %v7652
  %7729 = vst.msk [vmem:[#allocation3 + $0x1a0] sm:$0xff] %vm3440, %v7654
  %7730 = vst.msk [vmem:[#allocation3 + $0x1a8] sm:$0xff] %vm3440, %v7656
  %7731 = vst.msk [vmem:[#allocation3 + $0x1b0] sm:$0xff] %vm3440, %v7658
  %7732 = vst.msk [vmem:[#allocation3 + $0x1b8] sm:$0xff] %vm3440, %v7660
  %7733 = vst.msk [vmem:[#allocation3 + $0x1c0] sm:$0xff] %vm3440, %v7662
  %7734 = vst.msk [vmem:[#allocation3 + $0x1c8] sm:$0xff] %vm3440, %v7664
  %7735 = vst.msk [vmem:[#allocation3 + $0x1d0] sm:$0xff] %vm3440, %v7666
  %7736 = vst.msk [vmem:[#allocation3 + $0x1d8] sm:$0xff] %vm3440, %v7668
  %7737 = vst.msk [vmem:[#allocation3 + $0x1e0] sm:$0xff] %vm3440, %v7670
  %7738 = vst.msk [vmem:[#allocation3 + $0x1e8] sm:$0xff] %vm3440, %v7672
  %7739 = vst.msk [vmem:[#allocation3 + $0x1f0] sm:$0xff] %vm3440, %v7674
  %7740 = vst.msk [vmem:[#allocation3 + $0x1f8] sm:$0xff] %vm3440, %v7676
  %v7741 = vld [vmem:[#allocation3] sm:$0xff]
  %v7742 = vld [vmem:[#allocation3 + $0x8] sm:$0xff]
  %v7743 = vld [vmem:[#allocation3 + $0x10] sm:$0xff]
  %v7744 = vld [vmem:[#allocation3 + $0x18] sm:$0xff]
  %v7745 = vld [vmem:[#allocation3 + $0x20] sm:$0xff]
  %v7746 = vld [vmem:[#allocation3 + $0x28] sm:$0xff]
  %v7747 = vld [vmem:[#allocation3 + $0x30] sm:$0xff]
  %v7748 = vld [vmem:[#allocation3 + $0x38] sm:$0xff]
  %v7749 = vld [vmem:[#allocation3 + $0x40] sm:$0xff]
  %v7750 = vld [vmem:[#allocation3 + $0x48] sm:$0xff]
  %v7751 = vld [vmem:[#allocation3 + $0x50] sm:$0xff]
  %v7752 = vld [vmem:[#allocation3 + $0x58] sm:$0xff]
  %v7753 = vld [vmem:[#allocation3 + $0x60] sm:$0xff]
  %v7754 = vld [vmem:[#allocation3 + $0x68] sm:$0xff]
  %v7755 = vld [vmem:[#allocation3 + $0x70] sm:$0xff]
  %v7756 = vld [vmem:[#allocation3 + $0x78] sm:$0xff]
  %v7757 = vld [vmem:[#allocation3 + $0x80] sm:$0xff]
  %v7758 = vld [vmem:[#allocation3 + $0x88] sm:$0xff]
  %v7759 = vld [vmem:[#allocation3 + $0x90] sm:$0xff]
  %v7760 = vld [vmem:[#allocation3 + $0x98] sm:$0xff]
  %v7761 = vld [vmem:[#allocation3 + $0xa0] sm:$0xff]
  %v7762 = vld [vmem:[#allocation3 + $0xa8] sm:$0xff]
  %v7763 = vld [vmem:[#allocation3 + $0xb0] sm:$0xff]
  %v7764 = vld [vmem:[#allocation3 + $0xb8] sm:$0xff]
  %v7765 = vld [vmem:[#allocation3 + $0xc0] sm:$0xff]
  %v7766 = vld [vmem:[#allocation3 + $0xc8] sm:$0xff]
  %v7767 = vld [vmem:[#allocation3 + $0xd0] sm:$0xff]
  %v7768 = vld [vmem:[#allocation3 + $0xd8] sm:$0xff]
  %v7769 = vld [vmem:[#allocation3 + $0xe0] sm:$0xff]
  %v7770 = vld [vmem:[#allocation3 + $0xe8] sm:$0xff]
  %v7771 = vld [vmem:[#allocation3 + $0xf0] sm:$0xff]
  %v7772 = vld [vmem:[#allocation3 + $0xf8] sm:$0xff]
  %v7773 = vld [vmem:[#allocation3 + $0x100] sm:$0xff]
  %v7774 = vld [vmem:[#allocation3 + $0x108] sm:$0xff]
  %v7775 = vld [vmem:[#allocation3 + $0x110] sm:$0xff]
  %v7776 = vld [vmem:[#allocation3 + $0x118] sm:$0xff]
  %v7777 = vld [vmem:[#allocation3 + $0x120] sm:$0xff]
  %v7778 = vld [vmem:[#allocation3 + $0x128] sm:$0xff]
  %v7779 = vld [vmem:[#allocation3 + $0x130] sm:$0xff]
  %v7780 = vld [vmem:[#allocation3 + $0x138] sm:$0xff]
  %v7781 = vld [vmem:[#allocation3 + $0x140] sm:$0xff]
  %v7782 = vld [vmem:[#allocation3 + $0x148] sm:$0xff]
  %v7783 = vld [vmem:[#allocation3 + $0x150] sm:$0xff]
  %v7784 = vld [vmem:[#allocation3 + $0x158] sm:$0xff]
  %v7785 = vld [vmem:[#allocation3 + $0x160] sm:$0xff]
  %v7786 = vld [vmem:[#allocation3 + $0x168] sm:$0xff]
  %v7787 = vld [vmem:[#allocation3 + $0x170] sm:$0xff]
  %v7788 = vld [vmem:[#allocation3 + $0x178] sm:$0xff]
  %v7789 = vld [vmem:[#allocation3 + $0x180] sm:$0xff]
  %v7790 = vld [vmem:[#allocation3 + $0x188] sm:$0xff]
  %v7791 = vld [vmem:[#allocation3 + $0x190] sm:$0xff]
  %v7792 = vld [vmem:[#allocation3 + $0x198] sm:$0xff]
  %v7793 = vld [vmem:[#allocation3 + $0x1a0] sm:$0xff]
  %v7794 = vld [vmem:[#allocation3 + $0x1a8] sm:$0xff]
  %v7795 = vld [vmem:[#allocation3 + $0x1b0] sm:$0xff]
  %v7796 = vld [vmem:[#allocation3 + $0x1b8] sm:$0xff]
  %v7797 = vld [vmem:[#allocation3 + $0x1c0] sm:$0xff]
  %v7798 = vld [vmem:[#allocation3 + $0x1c8] sm:$0xff]
  %v7799 = vld [vmem:[#allocation3 + $0x1d0] sm:$0xff]
  %v7800 = vld [vmem:[#allocation3 + $0x1d8] sm:$0xff]
  %v7801 = vld [vmem:[#allocation3 + $0x1e0] sm:$0xff]
  %v7802 = vld [vmem:[#allocation3 + $0x1e8] sm:$0xff]
  %v7803 = vld [vmem:[#allocation3 + $0x1f0] sm:$0xff]
  %v7804 = vld [vmem:[#allocation3 + $0x1f8] sm:$0xff]
  %v7805 = vld [vmem:[%s4] sm:$0xf]
  %v7807 = vsel %vm3730, %v7805, 0
  %v7810 = vsel %vm3730, %v7741, 0
  %v7813 = vsel %vm3730, %v7742, 0
  %v7816 = vsel %vm3730, %v7743, 0
  %v7819 = vsel %vm3730, %v7744, 0
  %v7822 = vsel %vm3730, %v7745, 0
  %v7825 = vsel %vm3730, %v7746, 0
  %v7828 = vsel %vm3730, %v7747, 0
  %v7831 = vsel %vm3730, %v7748, 0
  %v7834 = vsel %vm3730, %v7749, 0
  %v7837 = vsel %vm3730, %v7750, 0
  %v7840 = vsel %vm3730, %v7751, 0
  %v7843 = vsel %vm3730, %v7752, 0
  %v7846 = vsel %vm3730, %v7753, 0
  %v7849 = vsel %vm3730, %v7754, 0
  %v7852 = vsel %vm3730, %v7755, 0
  %v7855 = vsel %vm3730, %v7756, 0
  %v7858 = vsel %vm3730, %v7757, 0
  %v7861 = vsel %vm3730, %v7758, 0
  %v7864 = vsel %vm3730, %v7759, 0
  %v7867 = vsel %vm3730, %v7760, 0
  %v7870 = vsel %vm3730, %v7761, 0
  %v7873 = vsel %vm3730, %v7762, 0
  %v7876 = vsel %vm3730, %v7763, 0
  %v7879 = vsel %vm3730, %v7764, 0
  %v7882 = vsel %vm3730, %v7765, 0
  %v7885 = vsel %vm3730, %v7766, 0
  %v7888 = vsel %vm3730, %v7767, 0
  %v7891 = vsel %vm3730, %v7768, 0
  %v7894 = vsel %vm3730, %v7769, 0
  %v7897 = vsel %vm3730, %v7770, 0
  %v7900 = vsel %vm3730, %v7771, 0
  %v7903 = vsel %vm3730, %v7772, 0
  %v7906 = vsel %vm3730, %v7773, 0
  %v7909 = vsel %vm3730, %v7774, 0
  %v7912 = vsel %vm3730, %v7775, 0
  %v7915 = vsel %vm3730, %v7776, 0
  %v7918 = vsel %vm3730, %v7777, 0
  %v7921 = vsel %vm3730, %v7778, 0
  %v7924 = vsel %vm3730, %v7779, 0
  %v7927 = vsel %vm3730, %v7780, 0
  %v7930 = vsel %vm3730, %v7781, 0
  %v7933 = vsel %vm3730, %v7782, 0
  %v7936 = vsel %vm3730, %v7783, 0
  %v7939 = vsel %vm3730, %v7784, 0
  %v7942 = vsel %vm3730, %v7785, 0
  %v7945 = vsel %vm3730, %v7786, 0
  %v7948 = vsel %vm3730, %v7787, 0
  %v7951 = vsel %vm3730, %v7788, 0
  %v7954 = vsel %vm3730, %v7789, 0
  %v7957 = vsel %vm3730, %v7790, 0
  %v7960 = vsel %vm3730, %v7791, 0
  %v7963 = vsel %vm3730, %v7792, 0
  %v7966 = vsel %vm3730, %v7793, 0
  %v7969 = vsel %vm3730, %v7794, 0
  %v7972 = vsel %vm3730, %v7795, 0
  %v7975 = vsel %vm3730, %v7796, 0
  %v7978 = vsel %vm3730, %v7797, 0
  %v7981 = vsel %vm3730, %v7798, 0
  %v7984 = vsel %vm3730, %v7799, 0
  %v7987 = vsel %vm3730, %v7800, 0
  %v7990 = vsel %vm3730, %v7801, 0
  %v7993 = vsel %vm3730, %v7802, 0
  %v7996 = vsel %vm3730, %v7803, 0
  %v7999 = vsel %vm3730, %v7804, 0
  %8001 = vmatprep.subr.mxu0 0.0
  %8002 = vmatpush1.xpose.msra.mxu0 %v7810
  %8003 = vmatprep.subr.mxu0 0.0
  %8004 = vmatpush1.xpose.msra.mxu0 %v7813
  %8005 = vmatprep.subr.mxu0 0.0
  %8006 = vmatpush1.xpose.msra.mxu0 %v7816
  %8007 = vmatprep.subr.mxu0 0.0
  %8008 = vmatpush1.xpose.msra.mxu0 %v7819
  %8009 = vmatprep.subr.mxu0 0.0
  %8010 = vmatpush1.xpose.msra.mxu0 %v7822
  %8011 = vmatprep.subr.mxu0 0.0
  %8012 = vmatpush1.xpose.msra.mxu0 %v7825
  %8013 = vmatprep.subr.mxu0 0.0
  %8014 = vmatpush1.xpose.msra.mxu0 %v7828
  %8015 = vmatprep.subr.mxu0 0.0
  %8016 = vmatpush1.xpose.msra.mxu0 %v7831
  %8017 = vmatprep.subr.mxu0 0.0
  %8018 = vmatpush1.xpose.msra.mxu0 %v7834
  %8019 = vmatprep.subr.mxu0 0.0
  %8020 = vmatpush1.xpose.msra.mxu0 %v7837
  %8021 = vmatprep.subr.mxu0 0.0
  %8022 = vmatpush1.xpose.msra.mxu0 %v7840
  %8023 = vmatprep.subr.mxu0 0.0
  %8024 = vmatpush1.xpose.msra.mxu0 %v7843
  %8025 = vmatprep.subr.mxu0 0.0
  %8026 = vmatpush1.xpose.msra.mxu0 %v7846
  %8027 = vmatprep.subr.mxu0 0.0
  %8028 = vmatpush1.xpose.msra.mxu0 %v7849
  %8029 = vmatprep.subr.mxu0 0.0
  %8030 = vmatpush1.xpose.msra.mxu0 %v7852
  %8031 = vmatprep.subr.mxu0 0.0
  %8032 = vmatpush1.xpose.msra.mxu0 %v7855
  %8033 = vmatprep.subr.mxu0 0.0
  %8034 = vmatpush1.xpose.msra.mxu0 %v7858
  %8035 = vmatprep.subr.mxu0 0.0
  %8036 = vmatpush1.xpose.msra.mxu0 %v7861
  %8037 = vmatprep.subr.mxu0 0.0
  %8038 = vmatpush1.xpose.msra.mxu0 %v7864
  %8039 = vmatprep.subr.mxu0 0.0
  %8040 = vmatpush1.xpose.msra.mxu0 %v7867
  %8041 = vmatprep.subr.mxu0 0.0
  %8042 = vmatpush1.xpose.msra.mxu0 %v7870
  %8043 = vmatprep.subr.mxu0 0.0
  %8044 = vmatpush1.xpose.msra.mxu0 %v7873
  %8045 = vmatprep.subr.mxu0 0.0
  %8046 = vmatpush1.xpose.msra.mxu0 %v7876
  %8047 = vmatprep.subr.mxu0 0.0
  %8048 = vmatpush1.xpose.msra.mxu0 %v7879
  %8049 = vmatprep.subr.mxu0 0.0
  %8050 = vmatpush1.xpose.msra.mxu0 %v7882
  %8051 = vmatprep.subr.mxu0 0.0
  %8052 = vmatpush1.xpose.msra.mxu0 %v7885
  %8053 = vmatprep.subr.mxu0 0.0
  %8054 = vmatpush1.xpose.msra.mxu0 %v7888
  %8055 = vmatprep.subr.mxu0 0.0
  %8056 = vmatpush1.xpose.msra.mxu0 %v7891
  %8057 = vmatprep.subr.mxu0 0.0
  %8058 = vmatpush1.xpose.msra.mxu0 %v7894
  %8059 = vmatprep.subr.mxu0 0.0
  %8060 = vmatpush1.xpose.msra.mxu0 %v7897
  %8061 = vmatprep.subr.mxu0 0.0
  %8062 = vmatpush1.xpose.msra.mxu0 %v7900
  %8063 = vmatprep.subr.mxu0 0.0
  %8064 = vmatpush1.xpose.msra.mxu0 %v7903
  %8065 = vmatprep.mubr.f32.mxu0 0.0
  %8066 = vmatmul.mubr.f32.gmra.mrb[0].mxu0 %v7807
  %v8067 = vpop.f32.mrb[0].mxu0
  %v8068 = vadd.f32 0.0, %v8067
  %v8069 = vpop.f32.mrb[0].mxu0
  %v8070 = vadd.f32 0.0, %v8069
  %8071 = vdwg.mxu0
  %8072 = vmatprep.subr.mxu0 0.0
  %8073 = vmatpush1.xpose.msra.mxu0 %v7906
  %8074 = vmatprep.subr.mxu0 0.0
  %8075 = vmatpush1.xpose.msra.mxu0 %v7909
  %8076 = vmatprep.subr.mxu0 0.0
  %8077 = vmatpush1.xpose.msra.mxu0 %v7912
  %8078 = vmatprep.subr.mxu0 0.0
  %8079 = vmatpush1.xpose.msra.mxu0 %v7915
  %8080 = vmatprep.subr.mxu0 0.0
  %8081 = vmatpush1.xpose.msra.mxu0 %v7918
  %8082 = vmatprep.subr.mxu0 0.0
  %8083 = vmatpush1.xpose.msra.mxu0 %v7921
  %8084 = vmatprep.subr.mxu0 0.0
  %8085 = vmatpush1.xpose.msra.mxu0 %v7924
  %8086 = vmatprep.subr.mxu0 0.0
  %8087 = vmatpush1.xpose.msra.mxu0 %v7927
  %8088 = vmatprep.subr.mxu0 0.0
  %8089 = vmatpush1.xpose.msra.mxu0 %v7930
  %8090 = vmatprep.subr.mxu0 0.0
  %8091 = vmatpush1.xpose.msra.mxu0 %v7933
  %8092 = vmatprep.subr.mxu0 0.0
  %8093 = vmatpush1.xpose.msra.mxu0 %v7936
  %8094 = vmatprep.subr.mxu0 0.0
  %8095 = vmatpush1.xpose.msra.mxu0 %v7939
  %8096 = vmatprep.subr.mxu0 0.0
  %8097 = vmatpush1.xpose.msra.mxu0 %v7942
  %8098 = vmatprep.subr.mxu0 0.0
  %8099 = vmatpush1.xpose.msra.mxu0 %v7945
  %8100 = vmatprep.subr.mxu0 0.0
  %8101 = vmatpush1.xpose.msra.mxu0 %v7948
  %8102 = vmatprep.subr.mxu0 0.0
  %8103 = vmatpush1.xpose.msra.mxu0 %v7951
  %8104 = vmatprep.subr.mxu0 0.0
  %8105 = vmatpush1.xpose.msra.mxu0 %v7954
  %8106 = vmatprep.subr.mxu0 0.0
  %8107 = vmatpush1.xpose.msra.mxu0 %v7957
  %8108 = vmatprep.subr.mxu0 0.0
  %8109 = vmatpush1.xpose.msra.mxu0 %v7960
  %8110 = vmatprep.subr.mxu0 0.0
  %8111 = vmatpush1.xpose.msra.mxu0 %v7963
  %8112 = vmatprep.subr.mxu0 0.0
  %8113 = vmatpush1.xpose.msra.mxu0 %v7966
  %8114 = vmatprep.subr.mxu0 0.0
  %8115 = vmatpush1.xpose.msra.mxu0 %v7969
  %8116 = vmatprep.subr.mxu0 0.0
  %8117 = vmatpush1.xpose.msra.mxu0 %v7972
  %8118 = vmatprep.subr.mxu0 0.0
  %8119 = vmatpush1.xpose.msra.mxu0 %v7975
  %8120 = vmatprep.subr.mxu0 0.0
  %8121 = vmatpush1.xpose.msra.mxu0 %v7978
  %8122 = vmatprep.subr.mxu0 0.0
  %8123 = vmatpush1.xpose.msra.mxu0 %v7981
  %8124 = vmatprep.subr.mxu0 0.0
  %8125 = vmatpush1.xpose.msra.mxu0 %v7984
  %8126 = vmatprep.subr.mxu0 0.0
  %8127 = vmatpush1.xpose.msra.mxu0 %v7987
  %8128 = vmatprep.subr.mxu0 0.0
  %8129 = vmatpush1.xpose.msra.mxu0 %v7990
  %8130 = vmatprep.subr.mxu0 0.0
  %8131 = vmatpush1.xpose.msra.mxu0 %v7993
  %8132 = vmatprep.subr.mxu0 0.0
  %8133 = vmatpush1.xpose.msra.mxu0 %v7996
  %8134 = vmatprep.subr.mxu0 0.0
  %8135 = vmatpush1.xpose.msra.mxu0 %v7999
  %8136 = vmatprep.mubr.f32.mxu0 0.0
  %8137 = vmatmul.mubr.f32.gmra.mrb[0].mxu0 %v7807
  %v8138 = vpop.f32.mrb[0].mxu0
  %v8139 = vadd.f32 0.0, %v8138
  %v8140 = vpop.f32.mrb[0].mxu0
  %v8141 = vadd.f32 0.0, %v8140
  %8142 = vdwg.mxu0
  %v8143 = vld [vmem:[%s5] sm:$0xf]
  %v8144 = vld [vmem:[%s6] sm:$0xf]
  %v8145 = vsel %vm4070, %v8068, 0.0
  %v8146 = vsel %vm4070, %v8070, 0.0
  %v8147 = vadd.f32 %v8145, %v8146
  %v8148 = vsel %vm4070, %v8139, 0.0
  %v8149 = vadd.f32 %v8147, %v8148
  %v8150 = vsel %vm4070, %v8141, 0.0
  %v8151 = vadd.f32 %v8149, %v8150
  %8152 = vadd.xlane.f32.xlu0 %v8151
  %v8153 = vpop.xlane.xlu0 %8152
  %v8154 = vmul.f32 %v8153, %v4080
  %v8155 = vsub.f32 %v8068, %v8154
  %v8156 = vsub.f32 %v8070, %v8154
  %v8157 = vsub.f32 %v8139, %v8154
  %v8158 = vsub.f32 %v8141, %v8154
  %v8159 = vmul.f32 %v8155, %v8155
  %v8160 = vmul.f32 %v8156, %v8156
  %v8161 = vmul.f32 %v8157, %v8157
  %v8162 = vmul.f32 %v8158, %v8158
  %v8163 = vsel %vm4070, %v8159, 0.0
  %v8164 = vsel %vm4070, %v8160, 0.0
  %v8165 = vadd.f32 %v8163, %v8164
  %v8166 = vsel %vm4070, %v8161, 0.0
  %v8167 = vadd.f32 %v8165, %v8166
  %v8168 = vsel %vm4070, %v8162, 0.0
  %v8169 = vadd.f32 %v8167, %v8168
  %8170 = vadd.xlane.f32.xlu0 %v8169
  %v8171 = vpop.xlane.xlu0 %8170
  %v8172 = vmul.f32 %v8171, %v4080
  %v8173 = vadd.f32 %v8172, 1e-05
  %v8174 = vrsqrt.pop %v8173
  %v8175 = vmul.f32 %v8143, %v8174
  %8177 = vset.pattern.permute.xlu0 0
  %8178 = vperm.xlu0 %8177, %v8175
  %v8179 = vpop.permute.xlu0 %8178
  %v8181 = vmul.f32 %v8155, %v8179
  %v8182 = vmul.f32 %v8156, %v8179
  %v8183 = vmul.f32 %v8157, %v8179
  %v8184 = vmul.f32 %v8158, %v8179
  %8186 = vset.pattern.permute.xlu0 0
  %8187 = vperm.xlu0 %8186, %v8144
  %v8188 = vpop.permute.xlu0 %8187
  %v8190 = vadd.f32 %v8181, %v8188
  %v8191 = vadd.f32 %v8182, %v8188
  %v8192 = vadd.f32 %v8183, %v8188
  %v8193 = vadd.f32 %v8184, %v8188
  %v8194 = vadd.f32 %v26, %v8190
  %v8195 = vadd.f32 %v27, %v8191
  %8196 = vst [vmem:[%s7] sm:$0xf] %v8194
  %8197 = vst [vmem:[%s7 + $0x8] sm:$0xf] %v8195
  %v8200 = vrot.slane %v8192, 4
  %v8201 = vrot.slane %v8193, 4
  %v8204 = vadd.f32 %v26, %v8200
  %v8205 = vadd.f32 %v27, %v8201
  %8206 = vst [vmem:[%s7] sm:$0xf0] %v8204
  %8207 = vst [vmem:[%s7 + $0x8] sm:$0xf0] %v8205
  // Predicated region
  $region30: #{boundary_refinement.1} parent=0 // pred_check
    _
  $region31: #{boundary_refinement.1} parent=0 // pred_check_branch
    %8209 = sbr.rel (0) target = $region33
  $region32: #{boundary_refinement.1} parent=0 // pred_region
    _
  $region33: #{boundary_refinement.1} parent=0 // pred_fallthru
    _
  // Predicated region
  $region34: #{boundary_refinement.1} parent=0 // pred_check
    _
  $region35: #{boundary_refinement.1} parent=0 // pred_check_branch
    %8211 = sbr.rel (0) target = $region37
  $region36: #{boundary_refinement.1} parent=0 // pred_region
    _
  $region37: #{boundary_refinement.1} parent=0 // pred_fallthru
    _

</llo_original>
